<compile_context>
chip_gen: v7x
topology: tpu7x:2x2x1
jax: 0.10.0
libtpu: 0.0.40
codegen_flags: <defaults>
</compile_context>

<pallas_src>
import functools

import jax
import jax.numpy as jnp
from jax.experimental import pallas as pl
from jax.experimental.pallas import tpu as pltpu


def _round_up(x, m):
    return ((x + m - 1) // m) * m


def _cdiv(a, b):
    return -(-a // b)


def _num_tensorcores_per_device():
    """2 TensorCores behind one JAX device on v4 / v7x-class chips (megacore)."""
    try:
        kind = jax.devices()[0].device_kind.lower()
    except Exception:
        return 1
    return 2 if ("v4" in kind or "v7" in kind or "7x" in kind) else 1


# -----------------------------------------------------------------------------
# Pallas kernel: fused GEMM + bias + LeakyReLU
#   out[Cp, M] = act( W[Cp, K] @ X[K, M] + b[Cp, 1] )
# Rows (channels, padded to a multiple of 8) sit on sublanes, the large spatial
# axis M sits on the 128-wide lane axis -> lane-dense stores.  Inputs are bf16,
# the MXU accumulates in f32; the store dtype is o_ref.dtype (bf16 between
# layers, f32 for the returned logits).
# -----------------------------------------------------------------------------
def _gemm_bias_act_kernel(w_ref, x_ref, b_ref, o_ref, *, negative_slope, apply_act):
    acc = jnp.dot(w_ref[...], x_ref[...], preferred_element_type=jnp.float32)
    acc = acc + b_ref[...]
    if apply_act:
        acc = jnp.where(acc >= 0.0, acc, negative_slope * acc)
    o_ref[...] = acc.astype(o_ref.dtype)


def gemm_bias_act(wt, xt, b, *, apply_act, out_dtype, num_m_tiles=1,
                  negative_slope=0.2):
    """wt: [Cp, K] bf16, xt: [K, M] bf16, b: [Cp, 1] f32 -> [Cp, M] out_dtype."""
    Cp, K = wt.shape
    K2, M = xt.shape
    assert K == K2

    # Default: one exact-shape full block (no pad, no post-slice).  Only split
    # M when there are 2 TensorCores to feed (v4 / v7x).
    nt, tm = 1, M
    if num_m_tiles > 1:
        t = _round_up(_cdiv(M, num_m_tiles), 128)
        if t < M:
            tm = t
            nt = _cdiv(M, tm)
    Mp = nt * tm
    if Mp != M:
        xt = jnp.pad(xt, ((0, 0), (0, Mp - M)))

    kernel = functools.partial(_gemm_bias_act_kernel,
                               negative_slope=negative_slope,
                               apply_act=apply_act)
    out = pl.pallas_call(
        kernel,
        out_shape=jax.ShapeDtypeStruct((Cp, Mp), out_dtype),
        grid=(nt,),
        in_specs=[
            pl.BlockSpec((Cp, K), lambda i: (0, 0)),   # weights (resident)
            pl.BlockSpec((K, tm), lambda i: (0, i)),   # activation tile (lanes = M)
            pl.BlockSpec((Cp, 1), lambda i: (0, 0)),   # bias
        ],
        out_specs=pl.BlockSpec((Cp, tm), lambda i: (0, i)),
        compiler_params=pltpu.CompilerParams(
            dimension_semantics=("parallel",)),
    )(wt, xt, b)
    return out if Mp == M else out[:, :M]


# -----------------------------------------------------------------------------
# Channel-major 2D conv: [Cin, B, H, W] -> [Cout, B, Ho, Wo]  (no transposes)
# im2col stacks tap slices on a leading axis so K is the leading dim of the
# GEMM input; the weight K ordering matches (tap-major, channel-minor).
# -----------------------------------------------------------------------------
def conv2d_cm(layer, z, *, out_dtype, num_m_tiles):
    kh, kw = layer["kh"], layer["kw"]
    sh, sw = layer["stride"]
    dh, dw = layer["dilation"]
    ph, pw = layer["padding"]
    Cin, B, H, W = z.shape
    zp = jnp.pad(z, ((0, 0), (0, 0), (ph, ph), (pw, pw)))
    Hp, Wp = H + 2 * ph, W + 2 * pw
    Ho = (Hp - dh * (kh - 1) - 1) // sh + 1
    Wo = (Wp - dw * (kw - 1) - 1) // sw + 1
    taps = []
    for i in range(kh):
        for j in range(kw):
            taps.append(jax.lax.slice(
                zp, (0, 0, i * dh, j * dw),
                (Cin, B, i * dh + (Ho - 1) * sh + 1, j * dw + (Wo - 1) * sw + 1),
                (1, 1, sh, sw)))
    xt = jnp.stack(taps, axis=0).reshape(kh * kw * Cin, B * Ho * Wo)   # [K, M]
    xt = xt.astype(jnp.bfloat16)
    out = gemm_bias_act(layer["wt"], xt, layer["b"], apply_act=layer["act"],
                        out_dtype=out_dtype, num_m_tiles=num_m_tiles)
    return out[:layer["cout"]].reshape(layer["cout"], B, Ho, Wo)


# -----------------------------------------------------------------------------
# STFT: strided framing (K = n_fft leading, no big transpose) + GEMM against a
# windowed / L2-normalized DFT basis.  Matches torchaudio Spectrogram
# (center=False, power=None, normalized=True, periodic hann window).
# -----------------------------------------------------------------------------
def frame_signal_cm(x_bt, n_fft, hop):
    """x_bt: [B, T] -> frames [n_fft, B * n_frames]."""
    B, T = x_bt.shape
    nf = (T - n_fft) // hop + 1
    assert nf >= 1, "sequence too short for this n_fft / hop"
    if n_fft % hop == 0 and T % hop == 0:
        # One tiny [B, T] transpose of the raw signal, then q in-chunk slices.
        q = n_fft // hop
        chunks_t = jnp.transpose(x_bt.reshape(B, T // hop, hop), (2, 0, 1))  # [hop,B,T//hop]
        parts = [jax.lax.slice(chunks_t, (0, 0, j), (hop, B, j + nf))
                 for j in range(q)]                                           # [hop,B,nf]
        frames_t = jnp.stack(parts, axis=0).reshape(n_fft, B * nf)
    else:
        # Correct fallback (more XLA glue: one strided slice per tap).
        taps = [jax.lax.slice(x_bt, (0, k), (B, k + (nf - 1) * hop + 1), (1, hop))
                for k in range(n_fft)]
        frames_t = jnp.stack(taps, axis=0).reshape(n_fft, B * nf)
    return frames_t, nf


def make_stft_basis_t(n_fft, win_length):
    """Windowed, L2-normalized real-DFT basis: [2F_pad8, n_fft] bf16."""
    F = n_fft // 2 + 1
    n = jnp.arange(win_length, dtype=jnp.float32)
    win = 0.5 - 0.5 * jnp.cos(2.0 * jnp.pi * n / win_length)        # periodic hann
    if win_length < n_fft:
        lpad = (n_fft - win_length) // 2
        win = jnp.pad(win, (lpad, n_fft - win_length - lpad))
    scale = 1.0 / jnp.sqrt(jnp.sum(win * win))                      # normalized=True
    k = jnp.arange(n_fft, dtype=jnp.float32)[None, :]
    f = jnp.arange(F, dtype=jnp.float32)[:, None]
    ang = 2.0 * jnp.pi * f * k / float(n_fft)
    wrow = (win * scale)[None, :]
    basis_t = jnp.concatenate([jnp.cos(ang) * wrow,                 # rows 0..F-1: real
                               -jnp.sin(ang) * wrow], axis=0)       # rows F..2F-1: imag
    rows = 2 * F
    rp = _round_up(rows, 8)
    basis_tp = jnp.zeros((rp, n_fft), jnp.bfloat16).at[:rows].set(
        basis_t.astype(jnp.bfloat16))
    bias = jnp.zeros((rp, 1), jnp.float32)
    return dict(basis_t=basis_tp, b=bias, F=F)


# -----------------------------------------------------------------------------
# DiscriminatorSTFT / MultiScaleSTFTDiscriminator parameters + forward
# -----------------------------------------------------------------------------
def get_2d_padding(kernel_size, dilation=(1, 1)):
    return ((kernel_size[0] - 1) * dilation[0] // 2,
            (kernel_size[1] - 1) * dilation[1] // 2)


def _conv_layer_params(key, ksz, cin, cout, stride, dilation, padding, act):
    """Synthetic HWIO weights, pre-reshaped/transposed to [Cout_pad8, K] bf16.

    NOTE: weight_norm(g, v) equals the raw weight at init; loading real
    checkpoints would require folding g * v / ||v|| into wt before this
    reshape.  bf16 activations + f32 MXU accumulation may drift slightly vs a
    pure-f32 reference over 6 stacked layers.
    """
    kh, kw = ksz
    kkey, bkey = jax.random.split(key)
    w = jax.random.normal(kkey, (kh, kw, cin, cout), jnp.float32) * 0.05   # HWIO
    b = jax.random.normal(bkey, (cout,), jnp.float32) * 0.01
    K = kh * kw * cin
    cp = _round_up(cout, 8)
    wt = jnp.zeros((cp, K), jnp.bfloat16).at[:cout].set(
        w.reshape(K, cout).T.astype(jnp.bfloat16))                  # (tap, cin)-major K
    bp = jnp.zeros((cp, 1), jnp.float32).at[:cout, 0].set(b)
    return dict(wt=wt, b=bp, cout=cout, kh=kh, kw=kw, stride=stride,
                dilation=dilation, padding=padding, act=act)


def make_disc_stft_params(key, filters, in_channels, out_channels, n_fft,
                          hop_length, win_length, kernel_size=(3, 9),
                          dilations=(1, 2, 4), stride=(1, 2),
                          filters_scale=1, max_filters=1024):
    assert in_channels == 1, "kernel assumes mono input (in_channels == 1)"
    kh, kw = kernel_size
    spec_channels = 2 * in_channels
    keys = jax.random.split(key, len(dilations) + 3)
    convs = []
    ki = 0
    convs.append(_conv_layer_params(keys[ki], (kh, kw), spec_channels, filters,
                                    (1, 1), (1, 1), get_2d_padding((kh, kw)), True))
    ki += 1
    in_chs = min(filters_scale * filters, max_filters)
    for i, d in enumerate(dilations):
        out_chs = min(filters_scale ** (i + 1) * filters, max_filters)
        convs.append(_conv_layer_params(keys[ki], (kh, kw), in_chs, out_chs,
                                        stride, (d, 1),
                                        get_2d_padding((kh, kw), (d, 1)), True))
        ki += 1
        in_chs = out_chs
    out_chs = min(filters_scale ** (len(dilations) + 1) * filters, max_filters)
    convs.append(_conv_layer_params(keys[ki], (kh, kh), in_chs, out_chs,
                                    (1, 1), (1, 1), get_2d_padding((kh, kh)), True))
    ki += 1
    conv_post = _conv_layer_params(keys[ki], (kh, kh), out_chs, out_channels,
                                   (1, 1), (1, 1), get_2d_padding((kh, kh)), False)
    return dict(stft=make_stft_basis_t(n_fft, win_length),
                n_fft=n_fft, hop_length=hop_length, win_length=win_length,
                convs=convs, conv_post=conv_post)


def disc_stft_forward(dp, x_b1t, *, num_m_tiles):
    """x_b1t: [B, 1, T] -> (logits NCHW f32, fmap list of NCHW f32)."""
    n_fft, hop = dp["n_fft"], dp["hop_length"]
    x = x_b1t[:, 0, :]                                              # in_channels == 1
    B = x.shape[0]
    frames_t, nf = frame_signal_cm(x, n_fft, hop)                   # [n_fft, B*nf]
    F = dp["stft"]["F"]
    spec = gemm_bias_act(dp["stft"]["basis_t"], frames_t.astype(jnp.bfloat16),
                         dp["stft"]["b"], apply_act=False,
                         out_dtype=jnp.bfloat16,
                         num_m_tiles=num_m_tiles)                   # [2F_pad8, B*nf]
    # rows 0..F-1 real, F..2F-1 imag  ->  channel-major conv input [2, B, T'=nf, F]
    z = spec[:2 * F].reshape(2, F, B, nf).transpose(0, 2, 3, 1)
    fmap = []
    for layer in dp["convs"]:
        z = conv2d_cm(layer, z, out_dtype=jnp.bfloat16, num_m_tiles=num_m_tiles)
        fmap.append(jnp.transpose(z, (1, 0, 2, 3)).astype(jnp.float32))   # NCHW f32
    logits = conv2d_cm(dp["conv_post"], z, out_dtype=jnp.float32,
                       num_m_tiles=num_m_tiles)
    return jnp.transpose(logits, (1, 0, 2, 3)), fmap


def make_ms_stft_params(key, filters=8, in_channels=1, out_channels=1,
                        n_ffts=(64, 128, 32), hop_lengths=(16, 32, 16),
                        win_lengths=(64, 128, 32)):
    assert len(n_ffts) == len(hop_lengths) == len(win_lengths)
    return [make_disc_stft_params(jax.random.fold_in(key, i), filters,
                                  in_channels, out_channels,
                                  n_ffts[i], hop_lengths[i], win_lengths[i])
            for i in range(len(n_ffts))]


def ms_stft_discriminator_forward(discs, y, y_hat, *, num_m_tiles=None):
    """y, y_hat: [B, 1, T] -> (y_d_rs, y_d_gs, fmap_rs, fmap_gs)."""
    B = y.shape[0]
    if num_m_tiles is None:
        num_m_tiles = _num_tensorcores_per_device()   # trace-time Python query
    # Batch y and y_hat through every discriminator together (2x lanes per GEMM,
    # half the kernel launches); results are split back per half afterwards.
    x = jnp.concatenate([y, y_hat], axis=0)                         # [2B, 1, T]
    y_d_rs, y_d_gs, fmap_rs, fmap_gs = [], [], [], []
    for dp in discs:
        logits, fmap = disc_stft_forward(dp, x, num_m_tiles=num_m_tiles)
        y_d_rs.append(logits[:B])
        y_d_gs.append(logits[B:])
        fmap_rs.append([f[:B] for f in fmap])
        fmap_gs.append([f[B:] for f in fmap])
    return y_d_rs, y_d_gs, fmap_rs, fmap_gs


# -----------------------------------------------------------------------------
if __name__ == "__main__":
    key = jax.random.PRNGKey(0)
    k_y, k_g, k_p = jax.random.split(key, 3)

    B, T = 2, 256
    y = jax.random.normal(k_y, (B, 1, T), jnp.float32)
    y_hat = jax.random.normal(k_g, (B, 1, T), jnp.float32)

    # Small, structure-preserving scales (n_ffts / hops / wins shrunk vs. defaults).
    discs = make_ms_stft_params(k_p, filters=8, in_channels=1, out_channels=1,
                                n_ffts=(64, 128, 32), hop_lengths=(16, 32, 16),
                                win_lengths=(64, 128, 32))

    # One jit over the whole multi-scale forward: all glue (framing, im2col,
    # pads, stacks, NCHW transposes) is compiled and fused around the Pallas
    # GEMM kernels.
    forward = jax.jit(functools.partial(ms_stft_discriminator_forward, discs))

    y_d_rs, y_d_gs, fmap_rs, fmap_gs = forward(y, y_hat)

    # Block on every output.
    for t in jax.tree_util.tree_leaves((y_d_rs, y_d_gs, fmap_rs, fmap_gs)):
        jax.block_until_ready(t)

    print("KERNEL_OK")
</pallas_src>

<mosaic_0001>
module attributes {stable_mosaic.version = 11 : i64} {
  func.func @_gemm_bias_act_kernel(%arg0: i32, %arg1: memref<72x64xbf16, #tpu.memory_space<vmem>>, %arg2: memref<64x52xbf16, #tpu.memory_space<vmem>>, %arg3: memref<72x1xf32, #tpu.memory_space<vmem>>, %arg4: memref<72x52xbf16, #tpu.memory_space<vmem>>) attributes {dimension_semantics = [#tpu.dimension_semantics<parallel>], iteration_bounds = array<i64: 1>, scalar_prefetch = 0 : i64, scratch_operands = 0 : i64, tpu.core_type = #tpu.core_type<tc>, window_params = [{pipeline_mode = #tpu.pipeline_mode<synchronous>, transform_indices = @transform_0, window_bounds = array<i64: 72, 64>}, {transform_indices = @transform_1, window_bounds = array<i64: 64, 52>}, {pipeline_mode = #tpu.pipeline_mode<synchronous>, transform_indices = @transform_2, window_bounds = array<i64: 72, 1>}, {transform_indices = @transform_3, window_bounds = array<i64: 72, 52>}]} {
    %c0 = arith.constant 0 : index
    %c0_0 = arith.constant 0 : index
    %0 = vector.load %arg1[%c0, %c0_0] : memref<72x64xbf16, #tpu.memory_space<vmem>>, vector<72x64xbf16>
    %c0_1 = arith.constant 0 : index
    %c0_2 = arith.constant 0 : index
    %1 = vector.load %arg2[%c0_1, %c0_2] : memref<64x52xbf16, #tpu.memory_space<vmem>>, vector<64x52xbf16>
    %cst = arith.constant dense<0.000000e+00> : vector<72x52xf32>
    %2 = tpu.matmul %0, %1, %cst {dimension_numbers = #tpu.dot_dimension_numbers<[1], [0], [0], [1], [0, 0, 1, 1], [], []>} : vector<72x64xbf16>, vector<64x52xbf16>, vector<72x52xf32> -> vector<72x52xf32>
    %c0_3 = arith.constant 0 : index
    %c0_4 = arith.constant 0 : index
    %3 = vector.load %arg3[%c0_3, %c0_4] : memref<72x1xf32, #tpu.memory_space<vmem>>, vector<72x1xf32>
    %4 = vector.broadcast %3 : vector<72x1xf32> to vector<72x52xf32>
    %5 = arith.addf %2, %4 : vector<72x52xf32>
    %6 = arith.truncf %5 : vector<72x52xf32> to vector<72x52xbf16>
    %c0_5 = arith.constant 0 : index
    %c0_6 = arith.constant 0 : index
    %7 = vector.load %arg4[%c0_5, %c0_6] : memref<72x52xbf16, #tpu.memory_space<vmem>>, vector<72x52xbf16>
    tpu.vector_store %arg4[%c0_5, %c0_6], %6 {strides = array<i32>} : memref<72x52xbf16, #tpu.memory_space<vmem>>, vector<72x52xbf16>,
    return
  }
  func.func @transform_0(%arg0: i32) -> (i32, i32) {
    %c0_i32 = arith.constant 0 : i32
    %c0_i32_0 = arith.constant 0 : i32
    %c0_i32_1 = arith.constant 0 : i32
    return %c0_i32, %c0_i32_0 : i32, i32
  }
  func.func @transform_1(%arg0: i32) -> (i32, i32) {
    %c0_i32 = arith.constant 0 : i32
    %c0_i32_0 = arith.constant 0 : i32
    return %c0_i32, %arg0 : i32, i32
  }
  func.func @transform_2(%arg0: i32) -> (i32, i32) {
    %c0_i32 = arith.constant 0 : i32
    %c0_i32_0 = arith.constant 0 : i32
    %c0_i32_1 = arith.constant 0 : i32
    return %c0_i32, %c0_i32_0 : i32, i32
  }
  func.func @transform_3(%arg0: i32) -> (i32, i32) {
    %c0_i32 = arith.constant 0 : i32
    %c0_i32_0 = arith.constant 0 : i32
    return %c0_i32, %arg0 : i32, i32
  }
}

module attributes {stable_mosaic.version = 11 : i64} {
  func.func @_gemm_bias_act_kernel(%arg0: i32, %arg1: memref<8x54xbf16, #tpu.memory_space<vmem>>, %arg2: memref<54x1716xbf16, #tpu.memory_space<vmem>>, %arg3: memref<8x1xf32, #tpu.memory_space<vmem>>, %arg4: memref<8x1716xbf16, #tpu.memory_space<vmem>>) attributes {dimension_semantics = [#tpu.dimension_semantics<parallel>], iteration_bounds = array<i64: 1>, scalar_prefetch = 0 : i64, scratch_operands = 0 : i64, tpu.core_type = #tpu.core_type<tc>, window_params = [{pipeline_mode = #tpu.pipeline_mode<synchronous>, transform_indices = @transform_0, window_bounds = array<i64: 8, 54>}, {transform_indices = @transform_1, window_bounds = array<i64: 54, 1716>}, {pipeline_mode = #tpu.pipeline_mode<synchronous>, transform_indices = @transform_2, window_bounds = array<i64: 8, 1>}, {transform_indices = @transform_3, window_bounds = array<i64: 8, 1716>}]} {
    %c0 = arith.constant 0 : index
    %c0_0 = arith.constant 0 : index
    %0 = vector.load %arg1[%c0, %c0_0] : memref<8x54xbf16, #tpu.memory_space<vmem>>, vector<8x54xbf16>
    %c0_1 = arith.constant 0 : index
    %c0_2 = arith.constant 0 : index
    %1 = vector.load %arg2[%c0_1, %c0_2] : memref<54x1716xbf16, #tpu.memory_space<vmem>>, vector<54x1716xbf16>
    %cst = arith.constant dense<0.000000e+00> : vector<8x1716xf32>
    %2 = tpu.matmul %0, %1, %cst {dimension_numbers = #tpu.dot_dimension_numbers<[1], [0], [0], [1], [0, 0, 1, 1], [], []>} : vector<8x54xbf16>, vector<54x1716xbf16>, vector<8x1716xf32> -> vector<8x1716xf32>
    %c0_3 = arith.constant 0 : index
    %c0_4 = arith.constant 0 : index
    %3 = vector.load %arg3[%c0_3, %c0_4] : memref<8x1xf32, #tpu.memory_space<vmem>>, vector<8x1xf32>
    %4 = vector.broadcast %3 : vector<8x1xf32> to vector<8x1716xf32>
    %5 = arith.addf %2, %4 : vector<8x1716xf32>
    %cst_5 = arith.constant 0.000000e+00 : f32
    %6 = vector.broadcast %cst_5 : f32 to vector<8x1716xf32>
    %7 = arith.cmpf oge, %5, %6 : vector<8x1716xf32>
    %cst_6 = arith.constant 2.000000e-01 : f32
    %8 = vector.broadcast %cst_6 : f32 to vector<8x1716xf32>
    %9 = arith.mulf %8, %5 : vector<8x1716xf32>
    %10 = arith.select %7, %5, %9 : vector<8x1716xi1>, vector<8x1716xf32>
    %11 = arith.truncf %10 : vector<8x1716xf32> to vector<8x1716xbf16>
    %c0_7 = arith.constant 0 : index
    %c0_8 = arith.constant 0 : index
    %12 = vector.load %arg4[%c0_7, %c0_8] : memref<8x1716xbf16, #tpu.memory_space<vmem>>, vector<8x1716xbf16>
    tpu.vector_store %arg4[%c0_7, %c0_8], %11 {strides = array<i32>} : memref<8x1716xbf16, #tpu.memory_space<vmem>>, vector<8x1716xbf16>,
    return
  }
  func.func @transform_0(%arg0: i32) -> (i32, i32) {
    %c0_i32 = arith.constant 0 : i32
    %c0_i32_0 = arith.constant 0 : i32
    %c0_i32_1 = arith.constant 0 : i32
    return %c0_i32, %c0_i32_0 : i32, i32
  }
  func.func @transform_1(%arg0: i32) -> (i32, i32) {
    %c0_i32 = arith.constant 0 : i32
    %c0_i32_0 = arith.constant 0 : i32
    return %c0_i32, %arg0 : i32, i32
  }
  func.func @transform_2(%arg0: i32) -> (i32, i32) {
    %c0_i32 = arith.constant 0 : i32
    %c0_i32_0 = arith.constant 0 : i32
    %c0_i32_1 = arith.constant 0 : i32
    return %c0_i32, %c0_i32_0 : i32, i32
  }
  func.func @transform_3(%arg0: i32) -> (i32, i32) {
    %c0_i32 = arith.constant 0 : i32
    %c0_i32_0 = arith.constant 0 : i32
    return %c0_i32, %arg0 : i32, i32
  }
}

module attributes {stable_mosaic.version = 11 : i64} {
  func.func @_gemm_bias_act_kernel(%arg0: i32, %arg1: memref<8x216xbf16, #tpu.memory_space<vmem>>, %arg2: memref<216x884xbf16, #tpu.memory_space<vmem>>, %arg3: memref<8x1xf32, #tpu.memory_space<vmem>>, %arg4: memref<8x884xbf16, #tpu.memory_space<vmem>>) attributes {dimension_semantics = [#tpu.dimension_semantics<parallel>], iteration_bounds = array<i64: 1>, scalar_prefetch = 0 : i64, scratch_operands = 0 : i64, tpu.core_type = #tpu.core_type<tc>, window_params = [{pipeline_mode = #tpu.pipeline_mode<synchronous>, transform_indices = @transform_0, window_bounds = array<i64: 8, 216>}, {transform_indices = @transform_1, window_bounds = array<i64: 216, 884>}, {pipeline_mode = #tpu.pipeline_mode<synchronous>, transform_indices = @transform_2, window_bounds = array<i64: 8, 1>}, {transform_indices = @transform_3, window_bounds = array<i64: 8, 884>}]} {
    %c0 = arith.constant 0 : index
    %c0_0 = arith.constant 0 : index
    %0 = vector.load %arg1[%c0, %c0_0] : memref<8x216xbf16, #tpu.memory_space<vmem>>, vector<8x216xbf16>
    %c0_1 = arith.constant 0 : index
    %c0_2 = arith.constant 0 : index
    %1 = vector.load %arg2[%c0_1, %c0_2] : memref<216x884xbf16, #tpu.memory_space<vmem>>, vector<216x884xbf16>
    %cst = arith.constant dense<0.000000e+00> : vector<8x884xf32>
    %2 = tpu.matmul %0, %1, %cst {dimension_numbers = #tpu.dot_dimension_numbers<[1], [0], [0], [1], [0, 0, 1, 1], [], []>} : vector<8x216xbf16>, vector<216x884xbf16>, vector<8x884xf32> -> vector<8x884xf32>
    %c0_3 = arith.constant 0 : index
    %c0_4 = arith.constant 0 : index
    %3 = vector.load %arg3[%c0_3, %c0_4] : memref<8x1xf32, #tpu.memory_space<vmem>>, vector<8x1xf32>
    %4 = vector.broadcast %3 : vector<8x1xf32> to vector<8x884xf32>
    %5 = arith.addf %2, %4 : vector<8x884xf32>
    %cst_5 = arith.constant 0.000000e+00 : f32
    %6 = vector.broadcast %cst_5 : f32 to vector<8x884xf32>
    %7 = arith.cmpf oge, %5, %6 : vector<8x884xf32>
    %cst_6 = arith.constant 2.000000e-01 : f32
    %8 = vector.broadcast %cst_6 : f32 to vector<8x884xf32>
    %9 = arith.mulf %8, %5 : vector<8x884xf32>
    %10 = arith.select %7, %5, %9 : vector<8x884xi1>, vector<8x884xf32>
    %11 = arith.truncf %10 : vector<8x884xf32> to vector<8x884xbf16>
    %c0_7 = arith.constant 0 : index
    %c0_8 = arith.constant 0 : index
    %12 = vector.load %arg4[%c0_7, %c0_8] : memref<8x884xbf16, #tpu.memory_space<vmem>>, vector<8x884xbf16>
    tpu.vector_store %arg4[%c0_7, %c0_8], %11 {strides = array<i32>} : memref<8x884xbf16, #tpu.memory_space<vmem>>, vector<8x884xbf16>,
    return
  }
  func.func @transform_0(%arg0: i32) -> (i32, i32) {
    %c0_i32 = arith.constant 0 : i32
    %c0_i32_0 = arith.constant 0 : i32
    %c0_i32_1 = arith.constant 0 : i32
    return %c0_i32, %c0_i32_0 : i32, i32
  }
  func.func @transform_1(%arg0: i32) -> (i32, i32) {
    %c0_i32 = arith.constant 0 : i32
    %c0_i32_0 = arith.constant 0 : i32
    return %c0_i32, %arg0 : i32, i32
  }
  func.func @transform_2(%arg0: i32) -> (i32, i32) {
    %c0_i32 = arith.constant 0 : i32
    %c0_i32_0 = arith.constant 0 : i32
    %c0_i32_1 = arith.constant 0 : i32
    return %c0_i32, %c0_i32_0 : i32, i32
  }
  func.func @transform_3(%arg0: i32) -> (i32, i32) {
    %c0_i32 = arith.constant 0 : i32
    %c0_i32_0 = arith.constant 0 : i32
    return %c0_i32, %arg0 : i32, i32
  }
}

module attributes {stable_mosaic.version = 11 : i64} {
  func.func @_gemm_bias_act_kernel(%arg0: i32, %arg1: memref<8x216xbf16, #tpu.memory_space<vmem>>, %arg2: memref<216x468xbf16, #tpu.memory_space<vmem>>, %arg3: memref<8x1xf32, #tpu.memory_space<vmem>>, %arg4: memref<8x468xbf16, #tpu.memory_space<vmem>>) attributes {dimension_semantics = [#tpu.dimension_semantics<parallel>], iteration_bounds = array<i64: 1>, scalar_prefetch = 0 : i64, scratch_operands = 0 : i64, tpu.core_type = #tpu.core_type<tc>, window_params = [{pipeline_mode = #tpu.pipeline_mode<synchronous>, transform_indices = @transform_0, window_bounds = array<i64: 8, 216>}, {transform_indices = @transform_1, window_bounds = array<i64: 216, 468>}, {pipeline_mode = #tpu.pipeline_mode<synchronous>, transform_indices = @transform_2, window_bounds = array<i64: 8, 1>}, {transform_indices = @transform_3, window_bounds = array<i64: 8, 468>}]} {
    %c0 = arith.constant 0 : index
    %c0_0 = arith.constant 0 : index
    %0 = vector.load %arg1[%c0, %c0_0] : memref<8x216xbf16, #tpu.memory_space<vmem>>, vector<8x216xbf16>
    %c0_1 = arith.constant 0 : index
    %c0_2 = arith.constant 0 : index
    %1 = vector.load %arg2[%c0_1, %c0_2] : memref<216x468xbf16, #tpu.memory_space<vmem>>, vector<216x468xbf16>
    %cst = arith.constant dense<0.000000e+00> : vector<8x468xf32>
    %2 = tpu.matmul %0, %1, %cst {dimension_numbers = #tpu.dot_dimension_numbers<[1], [0], [0], [1], [0, 0, 1, 1], [], []>} : vector<8x216xbf16>, vector<216x468xbf16>, vector<8x468xf32> -> vector<8x468xf32>
    %c0_3 = arith.constant 0 : index
    %c0_4 = arith.constant 0 : index
    %3 = vector.load %arg3[%c0_3, %c0_4] : memref<8x1xf32, #tpu.memory_space<vmem>>, vector<8x1xf32>
    %4 = vector.broadcast %3 : vector<8x1xf32> to vector<8x468xf32>
    %5 = arith.addf %2, %4 : vector<8x468xf32>
    %cst_5 = arith.constant 0.000000e+00 : f32
    %6 = vector.broadcast %cst_5 : f32 to vector<8x468xf32>
    %7 = arith.cmpf oge, %5, %6 : vector<8x468xf32>
    %cst_6 = arith.constant 2.000000e-01 : f32
    %8 = vector.broadcast %cst_6 : f32 to vector<8x468xf32>
    %9 = arith.mulf %8, %5 : vector<8x468xf32>
    %10 = arith.select %7, %5, %9 : vector<8x468xi1>, vector<8x468xf32>
    %11 = arith.truncf %10 : vector<8x468xf32> to vector<8x468xbf16>
    %c0_7 = arith.constant 0 : index
    %c0_8 = arith.constant 0 : index
    %12 = vector.load %arg4[%c0_7, %c0_8] : memref<8x468xbf16, #tpu.memory_space<vmem>>, vector<8x468xbf16>
    tpu.vector_store %arg4[%c0_7, %c0_8], %11 {strides = array<i32>} : memref<8x468xbf16, #tpu.memory_space<vmem>>, vector<8x468xbf16>,
    return
  }
  func.func @transform_0(%arg0: i32) -> (i32, i32) {
    %c0_i32 = arith.constant 0 : i32
    %c0_i32_0 = arith.constant 0 : i32
    %c0_i32_1 = arith.constant 0 : i32
    return %c0_i32, %c0_i32_0 : i32, i32
  }
  func.func @transform_1(%arg0: i32) -> (i32, i32) {
    %c0_i32 = arith.constant 0 : i32
    %c0_i32_0 = arith.constant 0 : i32
    return %c0_i32, %arg0 : i32, i32
  }
  func.func @transform_2(%arg0: i32) -> (i32, i32) {
    %c0_i32 = arith.constant 0 : i32
    %c0_i32_0 = arith.constant 0 : i32
    %c0_i32_1 = arith.constant 0 : i32
    return %c0_i32, %c0_i32_0 : i32, i32
  }
  func.func @transform_3(%arg0: i32) -> (i32, i32) {
    %c0_i32 = arith.constant 0 : i32
    %c0_i32_0 = arith.constant 0 : i32
    return %c0_i32, %arg0 : i32, i32
  }
}

module attributes {stable_mosaic.version = 11 : i64} {
  func.func @_gemm_bias_act_kernel(%arg0: i32, %arg1: memref<8x216xbf16, #tpu.memory_space<vmem>>, %arg2: memref<216x260xbf16, #tpu.memory_space<vmem>>, %arg3: memref<8x1xf32, #tpu.memory_space<vmem>>, %arg4: memref<8x260xbf16, #tpu.memory_space<vmem>>) attributes {dimension_semantics = [#tpu.dimension_semantics<parallel>], iteration_bounds = array<i64: 1>, scalar_prefetch = 0 : i64, scratch_operands = 0 : i64, tpu.core_type = #tpu.core_type<tc>, window_params = [{pipeline_mode = #tpu.pipeline_mode<synchronous>, transform_indices = @transform_0, window_bounds = array<i64: 8, 216>}, {transform_indices = @transform_1, window_bounds = array<i64: 216, 260>}, {pipeline_mode = #tpu.pipeline_mode<synchronous>, transform_indices = @transform_2, window_bounds = array<i64: 8, 1>}, {transform_indices = @transform_3, window_bounds = array<i64: 8, 260>}]} {
    %c0 = arith.constant 0 : index
    %c0_0 = arith.constant 0 : index
    %0 = vector.load %arg1[%c0, %c0_0] : memref<8x216xbf16, #tpu.memory_space<vmem>>, vector<8x216xbf16>
    %c0_1 = arith.constant 0 : index
    %c0_2 = arith.constant 0 : index
    %1 = vector.load %arg2[%c0_1, %c0_2] : memref<216x260xbf16, #tpu.memory_space<vmem>>, vector<216x260xbf16>
    %cst = arith.constant dense<0.000000e+00> : vector<8x260xf32>
    %2 = tpu.matmul %0, %1, %cst {dimension_numbers = #tpu.dot_dimension_numbers<[1], [0], [0], [1], [0, 0, 1, 1], [], []>} : vector<8x216xbf16>, vector<216x260xbf16>, vector<8x260xf32> -> vector<8x260xf32>
    %c0_3 = arith.constant 0 : index
    %c0_4 = arith.constant 0 : index
    %3 = vector.load %arg3[%c0_3, %c0_4] : memref<8x1xf32, #tpu.memory_space<vmem>>, vector<8x1xf32>
    %4 = vector.broadcast %3 : vector<8x1xf32> to vector<8x260xf32>
    %5 = arith.addf %2, %4 : vector<8x260xf32>
    %cst_5 = arith.constant 0.000000e+00 : f32
    %6 = vector.broadcast %cst_5 : f32 to vector<8x260xf32>
    %7 = arith.cmpf oge, %5, %6 : vector<8x260xf32>
    %cst_6 = arith.constant 2.000000e-01 : f32
    %8 = vector.broadcast %cst_6 : f32 to vector<8x260xf32>
    %9 = arith.mulf %8, %5 : vector<8x260xf32>
    %10 = arith.select %7, %5, %9 : vector<8x260xi1>, vector<8x260xf32>
    %11 = arith.truncf %10 : vector<8x260xf32> to vector<8x260xbf16>
    %c0_7 = arith.constant 0 : index
    %c0_8 = arith.constant 0 : index
    %12 = vector.load %arg4[%c0_7, %c0_8] : memref<8x260xbf16, #tpu.memory_space<vmem>>, vector<8x260xbf16>
    tpu.vector_store %arg4[%c0_7, %c0_8], %11 {strides = array<i32>} : memref<8x260xbf16, #tpu.memory_space<vmem>>, vector<8x260xbf16>,
    return
  }
  func.func @transform_0(%arg0: i32) -> (i32, i32) {
    %c0_i32 = arith.constant 0 : i32
    %c0_i32_0 = arith.constant 0 : i32
    %c0_i32_1 = arith.constant 0 : i32
    return %c0_i32, %c0_i32_0 : i32, i32
  }
  func.func @transform_1(%arg0: i32) -> (i32, i32) {
    %c0_i32 = arith.constant 0 : i32
    %c0_i32_0 = arith.constant 0 : i32
    return %c0_i32, %arg0 : i32, i32
  }
  func.func @transform_2(%arg0: i32) -> (i32, i32) {
    %c0_i32 = arith.constant 0 : i32
    %c0_i32_0 = arith.constant 0 : i32
    %c0_i32_1 = arith.constant 0 : i32
    return %c0_i32, %c0_i32_0 : i32, i32
  }
  func.func @transform_3(%arg0: i32) -> (i32, i32) {
    %c0_i32 = arith.constant 0 : i32
    %c0_i32_0 = arith.constant 0 : i32
    return %c0_i32, %arg0 : i32, i32
  }
}

module attributes {stable_mosaic.version = 11 : i64} {
  func.func @_gemm_bias_act_kernel(%arg0: i32, %arg1: memref<8x72xbf16, #tpu.memory_space<vmem>>, %arg2: memref<72x260xbf16, #tpu.memory_space<vmem>>, %arg3: memref<8x1xf32, #tpu.memory_space<vmem>>, %arg4: memref<8x260xbf16, #tpu.memory_space<vmem>>) attributes {dimension_semantics = [#tpu.dimension_semantics<parallel>], iteration_bounds = array<i64: 1>, scalar_prefetch = 0 : i64, scratch_operands = 0 : i64, tpu.core_type = #tpu.core_type<tc>, window_params = [{pipeline_mode = #tpu.pipeline_mode<synchronous>, transform_indices = @transform_0, window_bounds = array<i64: 8, 72>}, {transform_indices = @transform_1, window_bounds = array<i64: 72, 260>}, {pipeline_mode = #tpu.pipeline_mode<synchronous>, transform_indices = @transform_2, window_bounds = array<i64: 8, 1>}, {transform_indices = @transform_3, window_bounds = array<i64: 8, 260>}]} {
    %c0 = arith.constant 0 : index
    %c0_0 = arith.constant 0 : index
    %0 = vector.load %arg1[%c0, %c0_0] : memref<8x72xbf16, #tpu.memory_space<vmem>>, vector<8x72xbf16>
    %c0_1 = arith.constant 0 : index
    %c0_2 = arith.constant 0 : index
    %1 = vector.load %arg2[%c0_1, %c0_2] : memref<72x260xbf16, #tpu.memory_space<vmem>>, vector<72x260xbf16>
    %cst = arith.constant dense<0.000000e+00> : vector<8x260xf32>
    %2 = tpu.matmul %0, %1, %cst {dimension_numbers = #tpu.dot_dimension_numbers<[1], [0], [0], [1], [0, 0, 1, 1], [], []>} : vector<8x72xbf16>, vector<72x260xbf16>, vector<8x260xf32> -> vector<8x260xf32>
    %c0_3 = arith.constant 0 : index
    %c0_4 = arith.constant 0 : index
    %3 = vector.load %arg3[%c0_3, %c0_4] : memref<8x1xf32, #tpu.memory_space<vmem>>, vector<8x1xf32>
    %4 = vector.broadcast %3 : vector<8x1xf32> to vector<8x260xf32>
    %5 = arith.addf %2, %4 : vector<8x260xf32>
    %cst_5 = arith.constant 0.000000e+00 : f32
    %6 = vector.broadcast %cst_5 : f32 to vector<8x260xf32>
    %7 = arith.cmpf oge, %5, %6 : vector<8x260xf32>
    %cst_6 = arith.constant 2.000000e-01 : f32
    %8 = vector.broadcast %cst_6 : f32 to vector<8x260xf32>
    %9 = arith.mulf %8, %5 : vector<8x260xf32>
    %10 = arith.select %7, %5, %9 : vector<8x260xi1>, vector<8x260xf32>
    %11 = arith.truncf %10 : vector<8x260xf32> to vector<8x260xbf16>
    %c0_7 = arith.constant 0 : index
    %c0_8 = arith.constant 0 : index
    %12 = vector.load %arg4[%c0_7, %c0_8] : memref<8x260xbf16, #tpu.memory_space<vmem>>, vector<8x260xbf16>
    tpu.vector_store %arg4[%c0_7, %c0_8], %11 {strides = array<i32>} : memref<8x260xbf16, #tpu.memory_space<vmem>>, vector<8x260xbf16>,
    return
  }
  func.func @transform_0(%arg0: i32) -> (i32, i32) {
    %c0_i32 = arith.constant 0 : i32
    %c0_i32_0 = arith.constant 0 : i32
    %c0_i32_1 = arith.constant 0 : i32
    return %c0_i32, %c0_i32_0 : i32, i32
  }
  func.func @transform_1(%arg0: i32) -> (i32, i32) {
    %c0_i32 = arith.constant 0 : i32
    %c0_i32_0 = arith.constant 0 : i32
    return %c0_i32, %arg0 : i32, i32
  }
  func.func @transform_2(%arg0: i32) -> (i32, i32) {
    %c0_i32 = arith.constant 0 : i32
    %c0_i32_0 = arith.constant 0 : i32
    %c0_i32_1 = arith.constant 0 : i32
    return %c0_i32, %c0_i32_0 : i32, i32
  }
  func.func @transform_3(%arg0: i32) -> (i32, i32) {
    %c0_i32 = arith.constant 0 : i32
    %c0_i32_0 = arith.constant 0 : i32
    return %c0_i32, %arg0 : i32, i32
  }
}

module attributes {stable_mosaic.version = 11 : i64} {
  func.func @_gemm_bias_act_kernel(%arg0: i32, %arg1: memref<8x72xbf16, #tpu.memory_space<vmem>>, %arg2: memref<72x260xbf16, #tpu.memory_space<vmem>>, %arg3: memref<8x1xf32, #tpu.memory_space<vmem>>, %arg4: memref<8x260xf32, #tpu.memory_space<vmem>>) attributes {dimension_semantics = [#tpu.dimension_semantics<parallel>], iteration_bounds = array<i64: 1>, scalar_prefetch = 0 : i64, scratch_operands = 0 : i64, tpu.core_type = #tpu.core_type<tc>, window_params = [{pipeline_mode = #tpu.pipeline_mode<synchronous>, transform_indices = @transform_0, window_bounds = array<i64: 8, 72>}, {transform_indices = @transform_1, window_bounds = array<i64: 72, 260>}, {pipeline_mode = #tpu.pipeline_mode<synchronous>, transform_indices = @transform_2, window_bounds = array<i64: 8, 1>}, {transform_indices = @transform_3, window_bounds = array<i64: 8, 260>}]} {
    %c0 = arith.constant 0 : index
    %c0_0 = arith.constant 0 : index
    %0 = vector.load %arg1[%c0, %c0_0] : memref<8x72xbf16, #tpu.memory_space<vmem>>, vector<8x72xbf16>
    %c0_1 = arith.constant 0 : index
    %c0_2 = arith.constant 0 : index
    %1 = vector.load %arg2[%c0_1, %c0_2] : memref<72x260xbf16, #tpu.memory_space<vmem>>, vector<72x260xbf16>
    %cst = arith.constant dense<0.000000e+00> : vector<8x260xf32>
    %2 = tpu.matmul %0, %1, %cst {dimension_numbers = #tpu.dot_dimension_numbers<[1], [0], [0], [1], [0, 0, 1, 1], [], []>} : vector<8x72xbf16>, vector<72x260xbf16>, vector<8x260xf32> -> vector<8x260xf32>
    %c0_3 = arith.constant 0 : index
    %c0_4 = arith.constant 0 : index
    %3 = vector.load %arg3[%c0_3, %c0_4] : memref<8x1xf32, #tpu.memory_space<vmem>>, vector<8x1xf32>
    %4 = vector.broadcast %3 : vector<8x1xf32> to vector<8x260xf32>
    %5 = arith.addf %2, %4 : vector<8x260xf32>
    %c0_5 = arith.constant 0 : index
    %c0_6 = arith.constant 0 : index
    %6 = vector.load %arg4[%c0_5, %c0_6] : memref<8x260xf32, #tpu.memory_space<vmem>>, vector<8x260xf32>
    tpu.vector_store %arg4[%c0_5, %c0_6], %5 {strides = array<i32>} : memref<8x260xf32, #tpu.memory_space<vmem>>, vector<8x260xf32>,
    return
  }
  func.func @transform_0(%arg0: i32) -> (i32, i32) {
    %c0_i32 = arith.constant 0 : i32
    %c0_i32_0 = arith.constant 0 : i32
    %c0_i32_1 = arith.constant 0 : i32
    return %c0_i32, %c0_i32_0 : i32, i32
  }
  func.func @transform_1(%arg0: i32) -> (i32, i32) {
    %c0_i32 = arith.constant 0 : i32
    %c0_i32_0 = arith.constant 0 : i32
    return %c0_i32, %arg0 : i32, i32
  }
  func.func @transform_2(%arg0: i32) -> (i32, i32) {
    %c0_i32 = arith.constant 0 : i32
    %c0_i32_0 = arith.constant 0 : i32
    %c0_i32_1 = arith.constant 0 : i32
    return %c0_i32, %c0_i32_0 : i32, i32
  }
  func.func @transform_3(%arg0: i32) -> (i32, i32) {
    %c0_i32 = arith.constant 0 : i32
    %c0_i32_0 = arith.constant 0 : i32
    return %c0_i32, %arg0 : i32, i32
  }
}

module attributes {stable_mosaic.version = 11 : i64} {
  func.func @_gemm_bias_act_kernel(%arg0: i32, %arg1: memref<40x32xbf16, #tpu.memory_space<vmem>>, %arg2: memref<32x60xbf16, #tpu.memory_space<vmem>>, %arg3: memref<40x1xf32, #tpu.memory_space<vmem>>, %arg4: memref<40x60xbf16, #tpu.memory_space<vmem>>) attributes {dimension_semantics = [#tpu.dimension_semantics<parallel>], iteration_bounds = array<i64: 1>, scalar_prefetch = 0 : i64, scratch_operands = 0 : i64, tpu.core_type = #tpu.core_type<tc>, window_params = [{pipeline_mode = #tpu.pipeline_mode<synchronous>, transform_indices = @transform_0, window_bounds = array<i64: 40, 32>}, {transform_indices = @transform_1, window_bounds = array<i64: 32, 60>}, {pipeline_mode = #tpu.pipeline_mode<synchronous>, transform_indices = @transform_2, window_bounds = array<i64: 40, 1>}, {transform_indices = @transform_3, window_bounds = array<i64: 40, 60>}]} {
    %c0 = arith.constant 0 : index
    %c0_0 = arith.constant 0 : index
    %0 = vector.load %arg1[%c0, %c0_0] : memref<40x32xbf16, #tpu.memory_space<vmem>>, vector<40x32xbf16>
    %c0_1 = arith.constant 0 : index
    %c0_2 = arith.constant 0 : index
    %1 = vector.load %arg2[%c0_1, %c0_2] : memref<32x60xbf16, #tpu.memory_space<vmem>>, vector<32x60xbf16>
    %cst = arith.constant dense<0.000000e+00> : vector<40x60xf32>
    %2 = tpu.matmul %0, %1, %cst {dimension_numbers = #tpu.dot_dimension_numbers<[1], [0], [0], [1], [0, 0, 1, 1], [], []>} : vector<40x32xbf16>, vector<32x60xbf16>, vector<40x60xf32> -> vector<40x60xf32>
    %c0_3 = arith.constant 0 : index
    %c0_4 = arith.constant 0 : index
    %3 = vector.load %arg3[%c0_3, %c0_4] : memref<40x1xf32, #tpu.memory_space<vmem>>, vector<40x1xf32>
    %4 = vector.broadcast %3 : vector<40x1xf32> to vector<40x60xf32>
    %5 = arith.addf %2, %4 : vector<40x60xf32>
    %6 = arith.truncf %5 : vector<40x60xf32> to vector<40x60xbf16>
    %c0_5 = arith.constant 0 : index
    %c0_6 = arith.constant 0 : index
    %7 = vector.load %arg4[%c0_5, %c0_6] : memref<40x60xbf16, #tpu.memory_space<vmem>>, vector<40x60xbf16>
    tpu.vector_store %arg4[%c0_5, %c0_6], %6 {strides = array<i32>} : memref<40x60xbf16, #tpu.memory_space<vmem>>, vector<40x60xbf16>,
    return
  }
  func.func @transform_0(%arg0: i32) -> (i32, i32) {
    %c0_i32 = arith.constant 0 : i32
    %c0_i32_0 = arith.constant 0 : i32
    %c0_i32_1 = arith.constant 0 : i32
    return %c0_i32, %c0_i32_0 : i32, i32
  }
  func.func @transform_1(%arg0: i32) -> (i32, i32) {
    %c0_i32 = arith.constant 0 : i32
    %c0_i32_0 = arith.constant 0 : i32
    return %c0_i32, %arg0 : i32, i32
  }
  func.func @transform_2(%arg0: i32) -> (i32, i32) {
    %c0_i32 = arith.constant 0 : i32
    %c0_i32_0 = arith.constant 0 : i32
    %c0_i32_1 = arith.constant 0 : i32
    return %c0_i32, %c0_i32_0 : i32, i32
  }
  func.func @transform_3(%arg0: i32) -> (i32, i32) {
    %c0_i32 = arith.constant 0 : i32
    %c0_i32_0 = arith.constant 0 : i32
    return %c0_i32, %arg0 : i32, i32
  }
}

module attributes {stable_mosaic.version = 11 : i64} {
  func.func @_gemm_bias_act_kernel(%arg0: i32, %arg1: memref<8x54xbf16, #tpu.memory_space<vmem>>, %arg2: memref<54x1020xbf16, #tpu.memory_space<vmem>>, %arg3: memref<8x1xf32, #tpu.memory_space<vmem>>, %arg4: memref<8x1020xbf16, #tpu.memory_space<vmem>>) attributes {dimension_semantics = [#tpu.dimension_semantics<parallel>], iteration_bounds = array<i64: 1>, scalar_prefetch = 0 : i64, scratch_operands = 0 : i64, tpu.core_type = #tpu.core_type<tc>, window_params = [{pipeline_mode = #tpu.pipeline_mode<synchronous>, transform_indices = @transform_0, window_bounds = array<i64: 8, 54>}, {transform_indices = @transform_1, window_bounds = array<i64: 54, 1020>}, {pipeline_mode = #tpu.pipeline_mode<synchronous>, transform_indices = @transform_2, window_bounds = array<i64: 8, 1>}, {transform_indices = @transform_3, window_bounds = array<i64: 8, 1020>}]} {
    %c0 = arith.constant 0 : index
    %c0_0 = arith.constant 0 : index
    %0 = vector.load %arg1[%c0, %c0_0] : memref<8x54xbf16, #tpu.memory_space<vmem>>, vector<8x54xbf16>
    %c0_1 = arith.constant 0 : index
    %c0_2 = arith.constant 0 : index
    %1 = vector.load %arg2[%c0_1, %c0_2] : memref<54x1020xbf16, #tpu.memory_space<vmem>>, vector<54x1020xbf16>
    %cst = arith.constant dense<0.000000e+00> : vector<8x1020xf32>
    %2 = tpu.matmul %0, %1, %cst {dimension_numbers = #tpu.dot_dimension_numbers<[1], [0], [0], [1], [0, 0, 1, 1], [], []>} : vector<8x54xbf16>, vector<54x1020xbf16>, vector<8x1020xf32> -> vector<8x1020xf32>
    %c0_3 = arith.constant 0 : index
    %c0_4 = arith.constant 0 : index
    %3 = vector.load %arg3[%c0_3, %c0_4] : memref<8x1xf32, #tpu.memory_space<vmem>>, vector<8x1xf32>
    %4 = vector.broadcast %3 : vector<8x1xf32> to vector<8x1020xf32>
    %5 = arith.addf %2, %4 : vector<8x1020xf32>
    %cst_5 = arith.constant 0.000000e+00 : f32
    %6 = vector.broadcast %cst_5 : f32 to vector<8x1020xf32>
    %7 = arith.cmpf oge, %5, %6 : vector<8x1020xf32>
    %cst_6 = arith.constant 2.000000e-01 : f32
    %8 = vector.broadcast %cst_6 : f32 to vector<8x1020xf32>
    %9 = arith.mulf %8, %5 : vector<8x1020xf32>
    %10 = arith.select %7, %5, %9 : vector<8x1020xi1>, vector<8x1020xf32>
    %11 = arith.truncf %10 : vector<8x1020xf32> to vector<8x1020xbf16>
    %c0_7 = arith.constant 0 : index
    %c0_8 = arith.constant 0 : index
    %12 = vector.load %arg4[%c0_7, %c0_8] : memref<8x1020xbf16, #tpu.memory_space<vmem>>, vector<8x1020xbf16>
    tpu.vector_store %arg4[%c0_7, %c0_8], %11 {strides = array<i32>} : memref<8x1020xbf16, #tpu.memory_space<vmem>>, vector<8x1020xbf16>,
    return
  }
  func.func @transform_0(%arg0: i32) -> (i32, i32) {
    %c0_i32 = arith.constant 0 : i32
    %c0_i32_0 = arith.constant 0 : i32
    %c0_i32_1 = arith.constant 0 : i32
    return %c0_i32, %c0_i32_0 : i32, i32
  }
  func.func @transform_1(%arg0: i32) -> (i32, i32) {
    %c0_i32 = arith.constant 0 : i32
    %c0_i32_0 = arith.constant 0 : i32
    return %c0_i32, %arg0 : i32, i32
  }
  func.func @transform_2(%arg0: i32) -> (i32, i32) {
    %c0_i32 = arith.constant 0 : i32
    %c0_i32_0 = arith.constant 0 : i32
    %c0_i32_1 = arith.constant 0 : i32
    return %c0_i32, %c0_i32_0 : i32, i32
  }
  func.func @transform_3(%arg0: i32) -> (i32, i32) {
    %c0_i32 = arith.constant 0 : i32
    %c0_i32_0 = arith.constant 0 : i32
    return %c0_i32, %arg0 : i32, i32
  }
}

module attributes {stable_mosaic.version = 11 : i64} {
  func.func @_gemm_bias_act_kernel(%arg0: i32, %arg1: memref<8x216xbf16, #tpu.memory_space<vmem>>, %arg2: memref<216x540xbf16, #tpu.memory_space<vmem>>, %arg3: memref<8x1xf32, #tpu.memory_space<vmem>>, %arg4: memref<8x540xbf16, #tpu.memory_space<vmem>>) attributes {dimension_semantics = [#tpu.dimension_semantics<parallel>], iteration_bounds = array<i64: 1>, scalar_prefetch = 0 : i64, scratch_operands = 0 : i64, tpu.core_type = #tpu.core_type<tc>, window_params = [{pipeline_mode = #tpu.pipeline_mode<synchronous>, transform_indices = @transform_0, window_bounds = array<i64: 8, 216>}, {transform_indices = @transform_1, window_bounds = array<i64: 216, 540>}, {pipeline_mode = #tpu.pipeline_mode<synchronous>, transform_indices = @transform_2, window_bounds = array<i64: 8, 1>}, {transform_indices = @transform_3, window_bounds = array<i64: 8, 540>}]} {
    %c0 = arith.constant 0 : index
    %c0_0 = arith.constant 0 : index
    %0 = vector.load %arg1[%c0, %c0_0] : memref<8x216xbf16, #tpu.memory_space<vmem>>, vector<8x216xbf16>
    %c0_1 = arith.constant 0 : index
    %c0_2 = arith.constant 0 : index
    %1 = vector.load %arg2[%c0_1, %c0_2] : memref<216x540xbf16, #tpu.memory_space<vmem>>, vector<216x540xbf16>
    %cst = arith.constant dense<0.000000e+00> : vector<8x540xf32>
    %2 = tpu.matmul %0, %1, %cst {dimension_numbers = #tpu.dot_dimension_numbers<[1], [0], [0], [1], [0, 0, 1, 1], [], []>} : vector<8x216xbf16>, vector<216x540xbf16>, vector<8x540xf32> -> vector<8x540xf32>
    %c0_3 = arith.constant 0 : index
    %c0_4 = arith.constant 0 : index
    %3 = vector.load %arg3[%c0_3, %c0_4] : memref<8x1xf32, #tpu.memory_space<vmem>>, vector<8x1xf32>
    %4 = vector.broadcast %3 : vector<8x1xf32> to vector<8x540xf32>
    %5 = arith.addf %2, %4 : vector<8x540xf32>
    %cst_5 = arith.constant 0.000000e+00 : f32
    %6 = vector.broadcast %cst_5 : f32 to vector<8x540xf32>
    %7 = arith.cmpf oge, %5, %6 : vector<8x540xf32>
    %cst_6 = arith.constant 2.000000e-01 : f32
    %8 = vector.broadcast %cst_6 : f32 to vector<8x540xf32>
    %9 = arith.mulf %8, %5 : vector<8x540xf32>
    %10 = arith.select %7, %5, %9 : vector<8x540xi1>, vector<8x540xf32>
    %11 = arith.truncf %10 : vector<8x540xf32> to vector<8x540xbf16>
    %c0_7 = arith.constant 0 : index
    %c0_8 = arith.constant 0 : index
    %12 = vector.load %arg4[%c0_7, %c0_8] : memref<8x540xbf16, #tpu.memory_space<vmem>>, vector<8x540xbf16>
    tpu.vector_store %arg4[%c0_7, %c0_8], %11 {strides = array<i32>} : memref<8x540xbf16, #tpu.memory_space<vmem>>, vector<8x540xbf16>,
    return
  }
  func.func @transform_0(%arg0: i32) -> (i32, i32) {
    %c0_i32 = arith.constant 0 : i32
    %c0_i32_0 = arith.constant 0 : i32
    %c0_i32_1 = arith.constant 0 : i32
    return %c0_i32, %c0_i32_0 : i32, i32
  }
  func.func @transform_1(%arg0: i32) -> (i32, i32) {
    %c0_i32 = arith.constant 0 : i32
    %c0_i32_0 = arith.constant 0 : i32
    return %c0_i32, %arg0 : i32, i32
  }
  func.func @transform_2(%arg0: i32) -> (i32, i32) {
    %c0_i32 = arith.constant 0 : i32
    %c0_i32_0 = arith.constant 0 : i32
    %c0_i32_1 = arith.constant 0 : i32
    return %c0_i32, %c0_i32_0 : i32, i32
  }
  func.func @transform_3(%arg0: i32) -> (i32, i32) {
    %c0_i32 = arith.constant 0 : i32
    %c0_i32_0 = arith.constant 0 : i32
    return %c0_i32, %arg0 : i32, i32
  }
}

module attributes {stable_mosaic.version = 11 : i64} {
  func.func @_gemm_bias_act_kernel(%arg0: i32, %arg1: memref<8x216xbf16, #tpu.memory_space<vmem>>, %arg2: memref<216x300xbf16, #tpu.memory_space<vmem>>, %arg3: memref<8x1xf32, #tpu.memory_space<vmem>>, %arg4: memref<8x300xbf16, #tpu.memory_space<vmem>>) attributes {dimension_semantics = [#tpu.dimension_semantics<parallel>], iteration_bounds = array<i64: 1>, scalar_prefetch = 0 : i64, scratch_operands = 0 : i64, tpu.core_type = #tpu.core_type<tc>, window_params = [{pipeline_mode = #tpu.pipeline_mode<synchronous>, transform_indices = @transform_0, window_bounds = array<i64: 8, 216>}, {transform_indices = @transform_1, window_bounds = array<i64: 216, 300>}, {pipeline_mode = #tpu.pipeline_mode<synchronous>, transform_indices = @transform_2, window_bounds = array<i64: 8, 1>}, {transform_indices = @transform_3, window_bounds = array<i64: 8, 300>}]} {
    %c0 = arith.constant 0 : index
    %c0_0 = arith.constant 0 : index
    %0 = vector.load %arg1[%c0, %c0_0] : memref<8x216xbf16, #tpu.memory_space<vmem>>, vector<8x216xbf16>
    %c0_1 = arith.constant 0 : index
    %c0_2 = arith.constant 0 : index
    %1 = vector.load %arg2[%c0_1, %c0_2] : memref<216x300xbf16, #tpu.memory_space<vmem>>, vector<216x300xbf16>
    %cst = arith.constant dense<0.000000e+00> : vector<8x300xf32>
    %2 = tpu.matmul %0, %1, %cst {dimension_numbers = #tpu.dot_dimension_numbers<[1], [0], [0], [1], [0, 0, 1, 1], [], []>} : vector<8x216xbf16>, vector<216x300xbf16>, vector<8x300xf32> -> vector<8x300xf32>
    %c0_3 = arith.constant 0 : index
    %c0_4 = arith.constant 0 : index
    %3 = vector.load %arg3[%c0_3, %c0_4] : memref<8x1xf32, #tpu.memory_space<vmem>>, vector<8x1xf32>
    %4 = vector.broadcast %3 : vector<8x1xf32> to vector<8x300xf32>
    %5 = arith.addf %2, %4 : vector<8x300xf32>
    %cst_5 = arith.constant 0.000000e+00 : f32
    %6 = vector.broadcast %cst_5 : f32 to vector<8x300xf32>
    %7 = arith.cmpf oge, %5, %6 : vector<8x300xf32>
    %cst_6 = arith.constant 2.000000e-01 : f32
    %8 = vector.broadcast %cst_6 : f32 to vector<8x300xf32>
    %9 = arith.mulf %8, %5 : vector<8x300xf32>
    %10 = arith.select %7, %5, %9 : vector<8x300xi1>, vector<8x300xf32>
    %11 = arith.truncf %10 : vector<8x300xf32> to vector<8x300xbf16>
    %c0_7 = arith.constant 0 : index
    %c0_8 = arith.constant 0 : index
    %12 = vector.load %arg4[%c0_7, %c0_8] : memref<8x300xbf16, #tpu.memory_space<vmem>>, vector<8x300xbf16>
    tpu.vector_store %arg4[%c0_7, %c0_8], %11 {strides = array<i32>} : memref<8x300xbf16, #tpu.memory_space<vmem>>, vector<8x300xbf16>,
    return
  }
  func.func @transform_0(%arg0: i32) -> (i32, i32) {
    %c0_i32 = arith.constant 0 : i32
    %c0_i32_0 = arith.constant 0 : i32
    %c0_i32_1 = arith.constant 0 : i32
    return %c0_i32, %c0_i32_0 : i32, i32
  }
  func.func @transform_1(%arg0: i32) -> (i32, i32) {
    %c0_i32 = arith.constant 0 : i32
    %c0_i32_0 = arith.constant 0 : i32
    return %c0_i32, %arg0 : i32, i32
  }
  func.func @transform_2(%arg0: i32) -> (i32, i32) {
    %c0_i32 = arith.constant 0 : i32
    %c0_i32_0 = arith.constant 0 : i32
    %c0_i32_1 = arith.constant 0 : i32
    return %c0_i32, %c0_i32_0 : i32, i32
  }
  func.func @transform_3(%arg0: i32) -> (i32, i32) {
    %c0_i32 = arith.constant 0 : i32
    %c0_i32_0 = arith.constant 0 : i32
    return %c0_i32, %arg0 : i32, i32
  }
}

module attributes {stable_mosaic.version = 11 : i64} {
  func.func @_gemm_bias_act_kernel(%arg0: i32, %arg1: memref<8x216xbf16, #tpu.memory_space<vmem>>, %arg2: memref<216x180xbf16, #tpu.memory_space<vmem>>, %arg3: memref<8x1xf32, #tpu.memory_space<vmem>>, %arg4: memref<8x180xbf16, #tpu.memory_space<vmem>>) attributes {dimension_semantics = [#tpu.dimension_semantics<parallel>], iteration_bounds = array<i64: 1>, scalar_prefetch = 0 : i64, scratch_operands = 0 : i64, tpu.core_type = #tpu.core_type<tc>, window_params = [{pipeline_mode = #tpu.pipeline_mode<synchronous>, transform_indices = @transform_0, window_bounds = array<i64: 8, 216>}, {transform_indices = @transform_1, window_bounds = array<i64: 216, 180>}, {pipeline_mode = #tpu.pipeline_mode<synchronous>, transform_indices = @transform_2, window_bounds = array<i64: 8, 1>}, {transform_indices = @transform_3, window_bounds = array<i64: 8, 180>}]} {
    %c0 = arith.constant 0 : index
    %c0_0 = arith.constant 0 : index
    %0 = vector.load %arg1[%c0, %c0_0] : memref<8x216xbf16, #tpu.memory_space<vmem>>, vector<8x216xbf16>
    %c0_1 = arith.constant 0 : index
    %c0_2 = arith.constant 0 : index
    %1 = vector.load %arg2[%c0_1, %c0_2] : memref<216x180xbf16, #tpu.memory_space<vmem>>, vector<216x180xbf16>
    %cst = arith.constant dense<0.000000e+00> : vector<8x180xf32>
    %2 = tpu.matmul %0, %1, %cst {dimension_numbers = #tpu.dot_dimension_numbers<[1], [0], [0], [1], [0, 0, 1, 1], [], []>} : vector<8x216xbf16>, vector<216x180xbf16>, vector<8x180xf32> -> vector<8x180xf32>
    %c0_3 = arith.constant 0 : index
    %c0_4 = arith.constant 0 : index
    %3 = vector.load %arg3[%c0_3, %c0_4] : memref<8x1xf32, #tpu.memory_space<vmem>>, vector<8x1xf32>
    %4 = vector.broadcast %3 : vector<8x1xf32> to vector<8x180xf32>
    %5 = arith.addf %2, %4 : vector<8x180xf32>
    %cst_5 = arith.constant 0.000000e+00 : f32
    %6 = vector.broadcast %cst_5 : f32 to vector<8x180xf32>
    %7 = arith.cmpf oge, %5, %6 : vector<8x180xf32>
    %cst_6 = arith.constant 2.000000e-01 : f32
    %8 = vector.broadcast %cst_6 : f32 to vector<8x180xf32>
    %9 = arith.mulf %8, %5 : vector<8x180xf32>
    %10 = arith.select %7, %5, %9 : vector<8x180xi1>, vector<8x180xf32>
    %11 = arith.truncf %10 : vector<8x180xf32> to vector<8x180xbf16>
    %c0_7 = arith.constant 0 : index
    %c0_8 = arith.constant 0 : index
    %12 = vector.load %arg4[%c0_7, %c0_8] : memref<8x180xbf16, #tpu.memory_space<vmem>>, vector<8x180xbf16>
    tpu.vector_store %arg4[%c0_7, %c0_8], %11 {strides = array<i32>} : memref<8x180xbf16, #tpu.memory_space<vmem>>, vector<8x180xbf16>,
    return
  }
  func.func @transform_0(%arg0: i32) -> (i32, i32) {
    %c0_i32 = arith.constant 0 : i32
    %c0_i32_0 = arith.constant 0 : i32
    %c0_i32_1 = arith.constant 0 : i32
    return %c0_i32, %c0_i32_0 : i32, i32
  }
  func.func @transform_1(%arg0: i32) -> (i32, i32) {
    %c0_i32 = arith.constant 0 : i32
    %c0_i32_0 = arith.constant 0 : i32
    return %c0_i32, %arg0 : i32, i32
  }
  func.func @transform_2(%arg0: i32) -> (i32, i32) {
    %c0_i32 = arith.constant 0 : i32
    %c0_i32_0 = arith.constant 0 : i32
    %c0_i32_1 = arith.constant 0 : i32
    return %c0_i32, %c0_i32_0 : i32, i32
  }
  func.func @transform_3(%arg0: i32) -> (i32, i32) {
    %c0_i32 = arith.constant 0 : i32
    %c0_i32_0 = arith.constant 0 : i32
    return %c0_i32, %arg0 : i32, i32
  }
}

module attributes {stable_mosaic.version = 11 : i64} {
  func.func @_gemm_bias_act_kernel(%arg0: i32, %arg1: memref<8x72xbf16, #tpu.memory_space<vmem>>, %arg2: memref<72x180xbf16, #tpu.memory_space<vmem>>, %arg3: memref<8x1xf32, #tpu.memory_space<vmem>>, %arg4: memref<8x180xbf16, #tpu.memory_space<vmem>>) attributes {dimension_semantics = [#tpu.dimension_semantics<parallel>], iteration_bounds = array<i64: 1>, scalar_prefetch = 0 : i64, scratch_operands = 0 : i64, tpu.core_type = #tpu.core_type<tc>, window_params = [{pipeline_mode = #tpu.pipeline_mode<synchronous>, transform_indices = @transform_0, window_bounds = array<i64: 8, 72>}, {transform_indices = @transform_1, window_bounds = array<i64: 72, 180>}, {pipeline_mode = #tpu.pipeline_mode<synchronous>, transform_indices = @transform_2, window_bounds = array<i64: 8, 1>}, {transform_indices = @transform_3, window_bounds = array<i64: 8, 180>}]} {
    %c0 = arith.constant 0 : index
    %c0_0 = arith.constant 0 : index
    %0 = vector.load %arg1[%c0, %c0_0] : memref<8x72xbf16, #tpu.memory_space<vmem>>, vector<8x72xbf16>
    %c0_1 = arith.constant 0 : index
    %c0_2 = arith.constant 0 : index
    %1 = vector.load %arg2[%c0_1, %c0_2] : memref<72x180xbf16, #tpu.memory_space<vmem>>, vector<72x180xbf16>
    %cst = arith.constant dense<0.000000e+00> : vector<8x180xf32>
    %2 = tpu.matmul %0, %1, %cst {dimension_numbers = #tpu.dot_dimension_numbers<[1], [0], [0], [1], [0, 0, 1, 1], [], []>} : vector<8x72xbf16>, vector<72x180xbf16>, vector<8x180xf32> -> vector<8x180xf32>
    %c0_3 = arith.constant 0 : index
    %c0_4 = arith.constant 0 : index
    %3 = vector.load %arg3[%c0_3, %c0_4] : memref<8x1xf32, #tpu.memory_space<vmem>>, vector<8x1xf32>
    %4 = vector.broadcast %3 : vector<8x1xf32> to vector<8x180xf32>
    %5 = arith.addf %2, %4 : vector<8x180xf32>
    %cst_5 = arith.constant 0.000000e+00 : f32
    %6 = vector.broadcast %cst_5 : f32 to vector<8x180xf32>
    %7 = arith.cmpf oge, %5, %6 : vector<8x180xf32>
    %cst_6 = arith.constant 2.000000e-01 : f32
    %8 = vector.broadcast %cst_6 : f32 to vector<8x180xf32>
    %9 = arith.mulf %8, %5 : vector<8x180xf32>
    %10 = arith.select %7, %5, %9 : vector<8x180xi1>, vector<8x180xf32>
    %11 = arith.truncf %10 : vector<8x180xf32> to vector<8x180xbf16>
    %c0_7 = arith.constant 0 : index
    %c0_8 = arith.constant 0 : index
    %12 = vector.load %arg4[%c0_7, %c0_8] : memref<8x180xbf16, #tpu.memory_space<vmem>>, vector<8x180xbf16>
    tpu.vector_store %arg4[%c0_7, %c0_8], %11 {strides = array<i32>} : memref<8x180xbf16, #tpu.memory_space<vmem>>, vector<8x180xbf16>,
    return
  }
  func.func @transform_0(%arg0: i32) -> (i32, i32) {
    %c0_i32 = arith.constant 0 : i32
    %c0_i32_0 = arith.constant 0 : i32
    %c0_i32_1 = arith.constant 0 : i32
    return %c0_i32, %c0_i32_0 : i32, i32
  }
  func.func @transform_1(%arg0: i32) -> (i32, i32) {
    %c0_i32 = arith.constant 0 : i32
    %c0_i32_0 = arith.constant 0 : i32
    return %c0_i32, %arg0 : i32, i32
  }
  func.func @transform_2(%arg0: i32) -> (i32, i32) {
    %c0_i32 = arith.constant 0 : i32
    %c0_i32_0 = arith.constant 0 : i32
    %c0_i32_1 = arith.constant 0 : i32
    return %c0_i32, %c0_i32_0 : i32, i32
  }
  func.func @transform_3(%arg0: i32) -> (i32, i32) {
    %c0_i32 = arith.constant 0 : i32
    %c0_i32_0 = arith.constant 0 : i32
    return %c0_i32, %arg0 : i32, i32
  }
}

module attributes {stable_mosaic.version = 11 : i64} {
  func.func @_gemm_bias_act_kernel(%arg0: i32, %arg1: memref<8x72xbf16, #tpu.memory_space<vmem>>, %arg2: memref<72x180xbf16, #tpu.memory_space<vmem>>, %arg3: memref<8x1xf32, #tpu.memory_space<vmem>>, %arg4: memref<8x180xf32, #tpu.memory_space<vmem>>) attributes {dimension_semantics = [#tpu.dimension_semantics<parallel>], iteration_bounds = array<i64: 1>, scalar_prefetch = 0 : i64, scratch_operands = 0 : i64, tpu.core_type = #tpu.core_type<tc>, window_params = [{pipeline_mode = #tpu.pipeline_mode<synchronous>, transform_indices = @transform_0, window_bounds = array<i64: 8, 72>}, {transform_indices = @transform_1, window_bounds = array<i64: 72, 180>}, {pipeline_mode = #tpu.pipeline_mode<synchronous>, transform_indices = @transform_2, window_bounds = array<i64: 8, 1>}, {transform_indices = @transform_3, window_bounds = array<i64: 8, 180>}]} {
    %c0 = arith.constant 0 : index
    %c0_0 = arith.constant 0 : index
    %0 = vector.load %arg1[%c0, %c0_0] : memref<8x72xbf16, #tpu.memory_space<vmem>>, vector<8x72xbf16>
    %c0_1 = arith.constant 0 : index
    %c0_2 = arith.constant 0 : index
    %1 = vector.load %arg2[%c0_1, %c0_2] : memref<72x180xbf16, #tpu.memory_space<vmem>>, vector<72x180xbf16>
    %cst = arith.constant dense<0.000000e+00> : vector<8x180xf32>
    %2 = tpu.matmul %0, %1, %cst {dimension_numbers = #tpu.dot_dimension_numbers<[1], [0], [0], [1], [0, 0, 1, 1], [], []>} : vector<8x72xbf16>, vector<72x180xbf16>, vector<8x180xf32> -> vector<8x180xf32>
    %c0_3 = arith.constant 0 : index
    %c0_4 = arith.constant 0 : index
    %3 = vector.load %arg3[%c0_3, %c0_4] : memref<8x1xf32, #tpu.memory_space<vmem>>, vector<8x1xf32>
    %4 = vector.broadcast %3 : vector<8x1xf32> to vector<8x180xf32>
    %5 = arith.addf %2, %4 : vector<8x180xf32>
    %c0_5 = arith.constant 0 : index
    %c0_6 = arith.constant 0 : index
    %6 = vector.load %arg4[%c0_5, %c0_6] : memref<8x180xf32, #tpu.memory_space<vmem>>, vector<8x180xf32>
    tpu.vector_store %arg4[%c0_5, %c0_6], %5 {strides = array<i32>} : memref<8x180xf32, #tpu.memory_space<vmem>>, vector<8x180xf32>,
    return
  }
  func.func @transform_0(%arg0: i32) -> (i32, i32) {
    %c0_i32 = arith.constant 0 : i32
    %c0_i32_0 = arith.constant 0 : i32
    %c0_i32_1 = arith.constant 0 : i32
    return %c0_i32, %c0_i32_0 : i32, i32
  }
  func.func @transform_1(%arg0: i32) -> (i32, i32) {
    %c0_i32 = arith.constant 0 : i32
    %c0_i32_0 = arith.constant 0 : i32
    return %c0_i32, %arg0 : i32, i32
  }
  func.func @transform_2(%arg0: i32) -> (i32, i32) {
    %c0_i32 = arith.constant 0 : i32
    %c0_i32_0 = arith.constant 0 : i32
    %c0_i32_1 = arith.constant 0 : i32
    return %c0_i32, %c0_i32_0 : i32, i32
  }
  func.func @transform_3(%arg0: i32) -> (i32, i32) {
    %c0_i32 = arith.constant 0 : i32
    %c0_i32_0 = arith.constant 0 : i32
    return %c0_i32, %arg0 : i32, i32
  }
}

module attributes {stable_mosaic.version = 11 : i64} {
  func.func @_gemm_bias_act_kernel(%arg0: i32, %arg1: memref<136x128xbf16, #tpu.memory_space<vmem>>, %arg2: memref<128x20xbf16, #tpu.memory_space<vmem>>, %arg3: memref<136x1xf32, #tpu.memory_space<vmem>>, %arg4: memref<136x20xbf16, #tpu.memory_space<vmem>>) attributes {dimension_semantics = [#tpu.dimension_semantics<parallel>], iteration_bounds = array<i64: 1>, scalar_prefetch = 0 : i64, scratch_operands = 0 : i64, tpu.core_type = #tpu.core_type<tc>, window_params = [{pipeline_mode = #tpu.pipeline_mode<synchronous>, transform_indices = @transform_0, window_bounds = array<i64: 136, 128>}, {transform_indices = @transform_1, window_bounds = array<i64: 128, 20>}, {pipeline_mode = #tpu.pipeline_mode<synchronous>, transform_indices = @transform_2, window_bounds = array<i64: 136, 1>}, {transform_indices = @transform_3, window_bounds = array<i64: 136, 20>}]} {
    %c0 = arith.constant 0 : index
    %c0_0 = arith.constant 0 : index
    %0 = vector.load %arg1[%c0, %c0_0] : memref<136x128xbf16, #tpu.memory_space<vmem>>, vector<136x128xbf16>
    %c0_1 = arith.constant 0 : index
    %c0_2 = arith.constant 0 : index
    %1 = vector.load %arg2[%c0_1, %c0_2] : memref<128x20xbf16, #tpu.memory_space<vmem>>, vector<128x20xbf16>
    %cst = arith.constant dense<0.000000e+00> : vector<136x20xf32>
    %2 = tpu.matmul %0, %1, %cst {dimension_numbers = #tpu.dot_dimension_numbers<[1], [0], [0], [1], [0, 0, 1, 1], [], []>} : vector<136x128xbf16>, vector<128x20xbf16>, vector<136x20xf32> -> vector<136x20xf32>
    %c0_3 = arith.constant 0 : index
    %c0_4 = arith.constant 0 : index
    %3 = vector.load %arg3[%c0_3, %c0_4] : memref<136x1xf32, #tpu.memory_space<vmem>>, vector<136x1xf32>
    %4 = vector.broadcast %3 : vector<136x1xf32> to vector<136x20xf32>
    %5 = arith.addf %2, %4 : vector<136x20xf32>
    %6 = arith.truncf %5 : vector<136x20xf32> to vector<136x20xbf16>
    %c0_5 = arith.constant 0 : index
    %c0_6 = arith.constant 0 : index
    %7 = vector.load %arg4[%c0_5, %c0_6] : memref<136x20xbf16, #tpu.memory_space<vmem>>, vector<136x20xbf16>
    tpu.vector_store %arg4[%c0_5, %c0_6], %6 {strides = array<i32>} : memref<136x20xbf16, #tpu.memory_space<vmem>>, vector<136x20xbf16>,
    return
  }
  func.func @transform_0(%arg0: i32) -> (i32, i32) {
    %c0_i32 = arith.constant 0 : i32
    %c0_i32_0 = arith.constant 0 : i32
    %c0_i32_1 = arith.constant 0 : i32
    return %c0_i32, %c0_i32_0 : i32, i32
  }
  func.func @transform_1(%arg0: i32) -> (i32, i32) {
    %c0_i32 = arith.constant 0 : i32
    %c0_i32_0 = arith.constant 0 : i32
    return %c0_i32, %arg0 : i32, i32
  }
  func.func @transform_2(%arg0: i32) -> (i32, i32) {
    %c0_i32 = arith.constant 0 : i32
    %c0_i32_0 = arith.constant 0 : i32
    %c0_i32_1 = arith.constant 0 : i32
    return %c0_i32, %c0_i32_0 : i32, i32
  }
  func.func @transform_3(%arg0: i32) -> (i32, i32) {
    %c0_i32 = arith.constant 0 : i32
    %c0_i32_0 = arith.constant 0 : i32
    return %c0_i32, %arg0 : i32, i32
  }
}

module attributes {stable_mosaic.version = 11 : i64} {
  func.func @_gemm_bias_act_kernel(%arg0: i32, %arg1: memref<8x54xbf16, #tpu.memory_space<vmem>>, %arg2: memref<54x1300xbf16, #tpu.memory_space<vmem>>, %arg3: memref<8x1xf32, #tpu.memory_space<vmem>>, %arg4: memref<8x1300xbf16, #tpu.memory_space<vmem>>) attributes {dimension_semantics = [#tpu.dimension_semantics<parallel>], iteration_bounds = array<i64: 1>, scalar_prefetch = 0 : i64, scratch_operands = 0 : i64, tpu.core_type = #tpu.core_type<tc>, window_params = [{pipeline_mode = #tpu.pipeline_mode<synchronous>, transform_indices = @transform_0, window_bounds = array<i64: 8, 54>}, {transform_indices = @transform_1, window_bounds = array<i64: 54, 1300>}, {pipeline_mode = #tpu.pipeline_mode<synchronous>, transform_indices = @transform_2, window_bounds = array<i64: 8, 1>}, {transform_indices = @transform_3, window_bounds = array<i64: 8, 1300>}]} {
    %c0 = arith.constant 0 : index
    %c0_0 = arith.constant 0 : index
    %0 = vector.load %arg1[%c0, %c0_0] : memref<8x54xbf16, #tpu.memory_space<vmem>>, vector<8x54xbf16>
    %c0_1 = arith.constant 0 : index
    %c0_2 = arith.constant 0 : index
    %1 = vector.load %arg2[%c0_1, %c0_2] : memref<54x1300xbf16, #tpu.memory_space<vmem>>, vector<54x1300xbf16>
    %cst = arith.constant dense<0.000000e+00> : vector<8x1300xf32>
    %2 = tpu.matmul %0, %1, %cst {dimension_numbers = #tpu.dot_dimension_numbers<[1], [0], [0], [1], [0, 0, 1, 1], [], []>} : vector<8x54xbf16>, vector<54x1300xbf16>, vector<8x1300xf32> -> vector<8x1300xf32>
    %c0_3 = arith.constant 0 : index
    %c0_4 = arith.constant 0 : index
    %3 = vector.load %arg3[%c0_3, %c0_4] : memref<8x1xf32, #tpu.memory_space<vmem>>, vector<8x1xf32>
    %4 = vector.broadcast %3 : vector<8x1xf32> to vector<8x1300xf32>
    %5 = arith.addf %2, %4 : vector<8x1300xf32>
    %cst_5 = arith.constant 0.000000e+00 : f32
    %6 = vector.broadcast %cst_5 : f32 to vector<8x1300xf32>
    %7 = arith.cmpf oge, %5, %6 : vector<8x1300xf32>
    %cst_6 = arith.constant 2.000000e-01 : f32
    %8 = vector.broadcast %cst_6 : f32 to vector<8x1300xf32>
    %9 = arith.mulf %8, %5 : vector<8x1300xf32>
    %10 = arith.select %7, %5, %9 : vector<8x1300xi1>, vector<8x1300xf32>
    %11 = arith.truncf %10 : vector<8x1300xf32> to vector<8x1300xbf16>
    %c0_7 = arith.constant 0 : index
    %c0_8 = arith.constant 0 : index
    %12 = vector.load %arg4[%c0_7, %c0_8] : memref<8x1300xbf16, #tpu.memory_space<vmem>>, vector<8x1300xbf16>
    tpu.vector_store %arg4[%c0_7, %c0_8], %11 {strides = array<i32>} : memref<8x1300xbf16, #tpu.memory_space<vmem>>, vector<8x1300xbf16>,
    return
  }
  func.func @transform_0(%arg0: i32) -> (i32, i32) {
    %c0_i32 = arith.constant 0 : i32
    %c0_i32_0 = arith.constant 0 : i32
    %c0_i32_1 = arith.constant 0 : i32
    return %c0_i32, %c0_i32_0 : i32, i32
  }
  func.func @transform_1(%arg0: i32) -> (i32, i32) {
    %c0_i32 = arith.constant 0 : i32
    %c0_i32_0 = arith.constant 0 : i32
    return %c0_i32, %arg0 : i32, i32
  }
  func.func @transform_2(%arg0: i32) -> (i32, i32) {
    %c0_i32 = arith.constant 0 : i32
    %c0_i32_0 = arith.constant 0 : i32
    %c0_i32_1 = arith.constant 0 : i32
    return %c0_i32, %c0_i32_0 : i32, i32
  }
  func.func @transform_3(%arg0: i32) -> (i32, i32) {
    %c0_i32 = arith.constant 0 : i32
    %c0_i32_0 = arith.constant 0 : i32
    return %c0_i32, %arg0 : i32, i32
  }
}

module attributes {stable_mosaic.version = 11 : i64} {
  func.func @_gemm_bias_act_kernel(%arg0: i32, %arg1: memref<8x216xbf16, #tpu.memory_space<vmem>>, %arg2: memref<216x660xbf16, #tpu.memory_space<vmem>>, %arg3: memref<8x1xf32, #tpu.memory_space<vmem>>, %arg4: memref<8x660xbf16, #tpu.memory_space<vmem>>) attributes {dimension_semantics = [#tpu.dimension_semantics<parallel>], iteration_bounds = array<i64: 1>, scalar_prefetch = 0 : i64, scratch_operands = 0 : i64, tpu.core_type = #tpu.core_type<tc>, window_params = [{pipeline_mode = #tpu.pipeline_mode<synchronous>, transform_indices = @transform_0, window_bounds = array<i64: 8, 216>}, {transform_indices = @transform_1, window_bounds = array<i64: 216, 660>}, {pipeline_mode = #tpu.pipeline_mode<synchronous>, transform_indices = @transform_2, window_bounds = array<i64: 8, 1>}, {transform_indices = @transform_3, window_bounds = array<i64: 8, 660>}]} {
    %c0 = arith.constant 0 : index
    %c0_0 = arith.constant 0 : index
    %0 = vector.load %arg1[%c0, %c0_0] : memref<8x216xbf16, #tpu.memory_space<vmem>>, vector<8x216xbf16>
    %c0_1 = arith.constant 0 : index
    %c0_2 = arith.constant 0 : index
    %1 = vector.load %arg2[%c0_1, %c0_2] : memref<216x660xbf16, #tpu.memory_space<vmem>>, vector<216x660xbf16>
    %cst = arith.constant dense<0.000000e+00> : vector<8x660xf32>
    %2 = tpu.matmul %0, %1, %cst {dimension_numbers = #tpu.dot_dimension_numbers<[1], [0], [0], [1], [0, 0, 1, 1], [], []>} : vector<8x216xbf16>, vector<216x660xbf16>, vector<8x660xf32> -> vector<8x660xf32>
    %c0_3 = arith.constant 0 : index
    %c0_4 = arith.constant 0 : index
    %3 = vector.load %arg3[%c0_3, %c0_4] : memref<8x1xf32, #tpu.memory_space<vmem>>, vector<8x1xf32>
    %4 = vector.broadcast %3 : vector<8x1xf32> to vector<8x660xf32>
    %5 = arith.addf %2, %4 : vector<8x660xf32>
    %cst_5 = arith.constant 0.000000e+00 : f32
    %6 = vector.broadcast %cst_5 : f32 to vector<8x660xf32>
    %7 = arith.cmpf oge, %5, %6 : vector<8x660xf32>
    %cst_6 = arith.constant 2.000000e-01 : f32
    %8 = vector.broadcast %cst_6 : f32 to vector<8x660xf32>
    %9 = arith.mulf %8, %5 : vector<8x660xf32>
    %10 = arith.select %7, %5, %9 : vector<8x660xi1>, vector<8x660xf32>
    %11 = arith.truncf %10 : vector<8x660xf32> to vector<8x660xbf16>
    %c0_7 = arith.constant 0 : index
    %c0_8 = arith.constant 0 : index
    %12 = vector.load %arg4[%c0_7, %c0_8] : memref<8x660xbf16, #tpu.memory_space<vmem>>, vector<8x660xbf16>
    tpu.vector_store %arg4[%c0_7, %c0_8], %11 {strides = array<i32>} : memref<8x660xbf16, #tpu.memory_space<vmem>>, vector<8x660xbf16>,
    return
  }
  func.func @transform_0(%arg0: i32) -> (i32, i32) {
    %c0_i32 = arith.constant 0 : i32
    %c0_i32_0 = arith.constant 0 : i32
    %c0_i32_1 = arith.constant 0 : i32
    return %c0_i32, %c0_i32_0 : i32, i32
  }
  func.func @transform_1(%arg0: i32) -> (i32, i32) {
    %c0_i32 = arith.constant 0 : i32
    %c0_i32_0 = arith.constant 0 : i32
    return %c0_i32, %arg0 : i32, i32
  }
  func.func @transform_2(%arg0: i32) -> (i32, i32) {
    %c0_i32 = arith.constant 0 : i32
    %c0_i32_0 = arith.constant 0 : i32
    %c0_i32_1 = arith.constant 0 : i32
    return %c0_i32, %c0_i32_0 : i32, i32
  }
  func.func @transform_3(%arg0: i32) -> (i32, i32) {
    %c0_i32 = arith.constant 0 : i32
    %c0_i32_0 = arith.constant 0 : i32
    return %c0_i32, %arg0 : i32, i32
  }
}

module attributes {stable_mosaic.version = 11 : i64} {
  func.func @_gemm_bias_act_kernel(%arg0: i32, %arg1: memref<8x216xbf16, #tpu.memory_space<vmem>>, %arg2: memref<216x340xbf16, #tpu.memory_space<vmem>>, %arg3: memref<8x1xf32, #tpu.memory_space<vmem>>, %arg4: memref<8x340xbf16, #tpu.memory_space<vmem>>) attributes {dimension_semantics = [#tpu.dimension_semantics<parallel>], iteration_bounds = array<i64: 1>, scalar_prefetch = 0 : i64, scratch_operands = 0 : i64, tpu.core_type = #tpu.core_type<tc>, window_params = [{pipeline_mode = #tpu.pipeline_mode<synchronous>, transform_indices = @transform_0, window_bounds = array<i64: 8, 216>}, {transform_indices = @transform_1, window_bounds = array<i64: 216, 340>}, {pipeline_mode = #tpu.pipeline_mode<synchronous>, transform_indices = @transform_2, window_bounds = array<i64: 8, 1>}, {transform_indices = @transform_3, window_bounds = array<i64: 8, 340>}]} {
    %c0 = arith.constant 0 : index
    %c0_0 = arith.constant 0 : index
    %0 = vector.load %arg1[%c0, %c0_0] : memref<8x216xbf16, #tpu.memory_space<vmem>>, vector<8x216xbf16>
    %c0_1 = arith.constant 0 : index
    %c0_2 = arith.constant 0 : index
    %1 = vector.load %arg2[%c0_1, %c0_2] : memref<216x340xbf16, #tpu.memory_space<vmem>>, vector<216x340xbf16>
    %cst = arith.constant dense<0.000000e+00> : vector<8x340xf32>
    %2 = tpu.matmul %0, %1, %cst {dimension_numbers = #tpu.dot_dimension_numbers<[1], [0], [0], [1], [0, 0, 1, 1], [], []>} : vector<8x216xbf16>, vector<216x340xbf16>, vector<8x340xf32> -> vector<8x340xf32>
    %c0_3 = arith.constant 0 : index
    %c0_4 = arith.constant 0 : index
    %3 = vector.load %arg3[%c0_3, %c0_4] : memref<8x1xf32, #tpu.memory_space<vmem>>, vector<8x1xf32>
    %4 = vector.broadcast %3 : vector<8x1xf32> to vector<8x340xf32>
    %5 = arith.addf %2, %4 : vector<8x340xf32>
    %cst_5 = arith.constant 0.000000e+00 : f32
    %6 = vector.broadcast %cst_5 : f32 to vector<8x340xf32>
    %7 = arith.cmpf oge, %5, %6 : vector<8x340xf32>
    %cst_6 = arith.constant 2.000000e-01 : f32
    %8 = vector.broadcast %cst_6 : f32 to vector<8x340xf32>
    %9 = arith.mulf %8, %5 : vector<8x340xf32>
    %10 = arith.select %7, %5, %9 : vector<8x340xi1>, vector<8x340xf32>
    %11 = arith.truncf %10 : vector<8x340xf32> to vector<8x340xbf16>
    %c0_7 = arith.constant 0 : index
    %c0_8 = arith.constant 0 : index
    %12 = vector.load %arg4[%c0_7, %c0_8] : memref<8x340xbf16, #tpu.memory_space<vmem>>, vector<8x340xbf16>
    tpu.vector_store %arg4[%c0_7, %c0_8], %11 {strides = array<i32>} : memref<8x340xbf16, #tpu.memory_space<vmem>>, vector<8x340xbf16>,
    return
  }
  func.func @transform_0(%arg0: i32) -> (i32, i32) {
    %c0_i32 = arith.constant 0 : i32
    %c0_i32_0 = arith.constant 0 : i32
    %c0_i32_1 = arith.constant 0 : i32
    return %c0_i32, %c0_i32_0 : i32, i32
  }
  func.func @transform_1(%arg0: i32) -> (i32, i32) {
    %c0_i32 = arith.constant 0 : i32
    %c0_i32_0 = arith.constant 0 : i32
    return %c0_i32, %arg0 : i32, i32
  }
  func.func @transform_2(%arg0: i32) -> (i32, i32) {
    %c0_i32 = arith.constant 0 : i32
    %c0_i32_0 = arith.constant 0 : i32
    %c0_i32_1 = arith.constant 0 : i32
    return %c0_i32, %c0_i32_0 : i32, i32
  }
  func.func @transform_3(%arg0: i32) -> (i32, i32) {
    %c0_i32 = arith.constant 0 : i32
    %c0_i32_0 = arith.constant 0 : i32
    return %c0_i32, %arg0 : i32, i32
  }
}

</mosaic_0001>

<llo_original>
// kernel: ms_stft_discriminator_forward.21
$region0: #{ms_stft_discriminator_forward.21}
  #allocation0 [shape = 'u32[]', space=smem, size = 0x4, offset = 0x4, fixed_abs, tag = 'smem constant byte address 0x4 - core index']
  #allocation1 [shape = 'u32[144,128]{1,0:T(1,128)}', space=vmem, size = 0x12000, scoped, tag = 'internal scratch']
  %s0 = inlined_call_operand.hbm [shape: bf16[72,64], index: 0, kind: input, shape index: {}]
  %s1 = inlined_call_operand.vmem [shape: bf16[64,52], index: 1, kind: input, shape index: {}]
  %s2 = inlined_call_operand.vmem [shape: f32[72,1], index: 2, kind: input, shape index: {}]
  %s3 = inlined_call_operand.vmem [shape: bf16[72,52], index: 3, kind: output, shape index: {}]
  %s4 = sld [smem:[#allocation0]]
  $region26: #{ms_stft_discriminator_forward.21} parent=0
    _
  %s6 = ssub.s32 1, %s4
  %s7 = scalar_select 0, %s6, %s4
  $region1: #{ms_stft_discriminator_forward.21} parent=0
    #allocation2 [shape = 'u8[18432]{0}', space=vmem, size = 0x4800, scoped, tag = 'input window, operand 0, single buffered']
    #allocation3 [shape = 's32[1]{0}', space=sflag, size = 0x4, scoped, tag = 'scoped memory for ms_stft_discriminator_forward.21']
    %8 = vsyncpa [#allocation3], 0
    // Predicated region
    $region2: #{ms_stft_discriminator_forward.21} parent=1 // pred_check
      _
    $region3: #{ms_stft_discriminator_forward.21} parent=1 // pred_check_branch
      %10 = sbr.rel (0) target = $region5
    $region4: #{ms_stft_discriminator_forward.21} parent=1 // pred_region
      %s12 = ssub.s32 576, 576
      %13 = vsyncadd [#allocation3], %s12
      %s14 = sshll.u32 [#allocation2], 4
      %s15 = int_to_ptr.vmem [resolvable:$true] %s14
      %20 = dma.hbm_to_vmem [thread:$0]  %s0, 576, %s15, [#allocation3], 64, 64, 4
    $region5: #{ms_stft_discriminator_forward.21} parent=1 // pred_fallthru
      _
    // Predicated region
    $region6: #{ms_stft_discriminator_forward.21} parent=1 // pred_check
      _
    $region7: #{ms_stft_discriminator_forward.21} parent=1 // pred_check_branch
      %22 = sbr.rel (0) target = $region9
    $region8: #{ms_stft_discriminator_forward.21} parent=1 // pred_region
      _
    $region9: #{ms_stft_discriminator_forward.21} parent=1 // pred_fallthru
      _
    // Predicated region
    $region10: #{ms_stft_discriminator_forward.21} parent=1 // pred_check
      _
    $region11: #{ms_stft_discriminator_forward.21} parent=1 // pred_check_branch
      %24 = sbr.rel (0) target = $region13
    $region12: #{ms_stft_discriminator_forward.21} parent=1 // pred_region
      _
    $region13: #{ms_stft_discriminator_forward.21} parent=1 // pred_fallthru
      _
    // Predicated region
    $region14: #{ms_stft_discriminator_forward.21} parent=1 // pred_check
      _
    $region15: #{ms_stft_discriminator_forward.21} parent=1 // pred_check_branch
      %26 = sbr.rel (0) target = $region17
    $region16: #{ms_stft_discriminator_forward.21} parent=1 // pred_region
      %27 = dma.done [#allocation3], 576
    $region17: #{ms_stft_discriminator_forward.21} parent=1 // pred_fallthru
      _
    %v29 = vld [vmem:[#allocation2] sm:$0xf]
    %v30 = vld [vmem:[#allocation2 + $0x4] sm:$0xf]
    %v31 = vld [vmem:[#allocation2 + $0x8] sm:$0xf]
    %v32 = vld [vmem:[#allocation2 + $0xc] sm:$0xf]
    %v33 = vld [vmem:[#allocation2 + $0x10] sm:$0xf]
    %v34 = vld [vmem:[#allocation2 + $0x14] sm:$0xf]
    %v35 = vld [vmem:[#allocation2 + $0x18] sm:$0xf]
    %v36 = vld [vmem:[#allocation2 + $0x1c] sm:$0xf]
    %v37 = vld [vmem:[#allocation2 + $0x20] sm:$0xf]
    %v38 = vld [vmem:[%s1] sm:$0xf]
    %v39 = vld [vmem:[%s1 + $0x4] sm:$0xf]
    %v40 = vld [vmem:[%s1 + $0x8] sm:$0xf]
    %v41 = vld [vmem:[%s1 + $0xc] sm:$0xf]
    %v42 = vld [vmem:[%s1 + $0x10] sm:$0xf]
    %v43 = vld [vmem:[%s1 + $0x14] sm:$0xf]
    %v44 = vld [vmem:[%s1 + $0x18] sm:$0xf]
    %v45 = vld [vmem:[%s1 + $0x1c] sm:$0xf]
    %v46 = vld [vmem:[%s2] sm:$0xff]
    %v47 = vld [vmem:[%s2 + $0x8] sm:$0xff]
    %v48 = vld [vmem:[%s2 + $0x10] sm:$0xff]
    %v49 = vld [vmem:[%s2 + $0x18] sm:$0xff]
    %v50 = vld [vmem:[%s2 + $0x20] sm:$0xff]
    %v51 = vld [vmem:[%s2 + $0x28] sm:$0xff]
    %v52 = vld [vmem:[%s2 + $0x30] sm:$0xff]
    %v53 = vld [vmem:[%s2 + $0x38] sm:$0xff]
    %v54 = vld [vmem:[%s2 + $0x40] sm:$0xff]
    %56 = vset.pattern.permute.xlu0 0
    %57 = vperm.xlu0 %56, %v46
    %v58 = vpop.permute.xlu0 %57
    %61 = vset.pattern.permute.xlu0 0
    %62 = vperm.xlu0 %61, %v47
    %v63 = vpop.permute.xlu0 %62
    %66 = vset.pattern.permute.xlu0 0
    %67 = vperm.xlu0 %66, %v48
    %v68 = vpop.permute.xlu0 %67
    %71 = vset.pattern.permute.xlu0 0
    %72 = vperm.xlu0 %71, %v49
    %v73 = vpop.permute.xlu0 %72
    %76 = vset.pattern.permute.xlu0 0
    %77 = vperm.xlu0 %76, %v50
    %v78 = vpop.permute.xlu0 %77
    %81 = vset.pattern.permute.xlu0 0
    %82 = vperm.xlu0 %81, %v51
    %v83 = vpop.permute.xlu0 %82
    %86 = vset.pattern.permute.xlu0 0
    %87 = vperm.xlu0 %86, %v52
    %v88 = vpop.permute.xlu0 %87
    %91 = vset.pattern.permute.xlu0 0
    %92 = vperm.xlu0 %91, %v53
    %v93 = vpop.permute.xlu0 %92
    %96 = vset.pattern.permute.xlu0 0
    %97 = vperm.xlu0 %96, %v54
    %v98 = vpop.permute.xlu0 %97
    %v109 = vunpack.c.l.b16 %v29
    %v110 = vunpack.c.l.b16 %v30
    %v111 = vunpack.c.l.b16 %v31
    %v112 = vunpack.c.l.b16 %v32
    %v113 = vunpack.c.l.b16 %v33
    %v114 = vunpack.c.l.b16 %v34
    %v115 = vunpack.c.l.b16 %v35
    %v116 = vunpack.c.l.b16 %v36
    %v117 = vunpack.c.l.b16 %v37
    %v118 = vpack.c.b16 %v110, %v109
    %v119 = vpack.c.b16 %v112, %v111
    %v120 = vpack.c.b16 %v114, %v113
    %v121 = vpack.c.b16 %v116, %v115
    %v122 = vpack.c.b16 %v117, %v117
    %v131 = vunpack.c.l.b16 %v38
    %v132 = vunpack.c.l.b16 %v39
    %v133 = vunpack.c.l.b16 %v40
    %v134 = vunpack.c.l.b16 %v41
    %v135 = vunpack.c.l.b16 %v42
    %v136 = vunpack.c.l.b16 %v43
    %v137 = vunpack.c.l.b16 %v44
    %v138 = vunpack.c.l.b16 %v45
    %v139 = vpack.c.b16 %v132, %v131
    %v140 = vpack.c.b16 %v134, %v133
    %v141 = vpack.c.b16 %v136, %v135
    %v142 = vpack.c.b16 %v138, %v137
    %vm147 = vcmask 523264
    %v149 = vsel %vm147, %v118, 0
    %v152 = vsel %vm147, %v119, 0
    %v155 = vsel %vm147, %v120, 0
    %v158 = vsel %vm147, %v121, 0
    %v161 = vsel %vm147, %v122, 0
    %163 = vmatprep.subr.bf16.mxu0 0
    %164 = vmatpush1.bf16.msra.mxu0 %v139
    %165 = vmatprep.subr.bf16.mxu0 0
    %166 = vmatpush1.bf16.msra.mxu0 %v140
    %167 = vmatprep.subr.bf16.mxu0 0
    %168 = vmatpush1.bf16.msra.mxu0 %v141
    %169 = vmatprep.subr.bf16.mxu0 0
    %170 = vmatpush1.bf16.msra.mxu0 %v142
    %171 = vmatprep.subr.bf16.mxu0 0
    %172 = vmatpush1.bf16.msra.mxu0 0
    %173 = vmatprep.subr.bf16.mxu0 0
    %174 = vmatpush1.bf16.msra.mxu0 0
    %175 = vmatprep.subr.bf16.mxu0 0
    %176 = vmatpush1.bf16.msra.mxu0 0
    %177 = vmatprep.subr.bf16.mxu0 0
    %178 = vmatpush1.bf16.msra.mxu0 0
    %179 = vmatprep.subr.bf16.mxu0 0
    %180 = vmatpush1.bf16.msra.mxu0 0
    %181 = vmatprep.subr.bf16.mxu0 0
    %182 = vmatpush1.bf16.msra.mxu0 0
    %183 = vmatprep.subr.bf16.mxu0 0
    %184 = vmatpush1.bf16.msra.mxu0 0
    %185 = vmatprep.subr.bf16.mxu0 0
    %186 = vmatpush1.bf16.msra.mxu0 0
    %187 = vmatprep.subr.bf16.mxu0 0
    %188 = vmatpush1.bf16.msra.mxu0 0
    %189 = vmatprep.subr.bf16.mxu0 0
    %190 = vmatpush1.bf16.msra.mxu0 0
    %191 = vmatprep.subr.bf16.mxu0 0
    %192 = vmatpush1.bf16.msra.mxu0 0
    %193 = vmatprep.subr.bf16.mxu0 0
    %194 = vmatpush1.bf16.msra.mxu0 0
    %195 = vmatprep.mubr.bf16.mxu0 0
    %196 = vmatmul.mubr.bf16.gmra.mrb[0].mxu0 %v149
    %v197 = vpop.f32.mrb[0].mxu0
    %v198 = vadd.f32 %v58, %v197
    %v199 = vpop.f32.mrb[0].mxu0
    %v200 = vpop.f32.mrb[0].mxu0
    %v201 = vadd.f32 %v63, %v200
    %v202 = vpop.f32.mrb[0].mxu0
    %203 = vmatprep.mubr.bf16.mxu0 0
    %204 = vmatmul.mubr.bf16.gmra.mrb[0].mxu0 %v152
    %v205 = vpop.f32.mrb[0].mxu0
    %v206 = vadd.f32 %v68, %v205
    %v207 = vpop.f32.mrb[0].mxu0
    %v208 = vpop.f32.mrb[0].mxu0
    %v209 = vadd.f32 %v73, %v208
    %v210 = vpop.f32.mrb[0].mxu0
    %211 = vmatprep.mubr.bf16.mxu0 0
    %212 = vmatmul.mubr.bf16.gmra.mrb[0].mxu0 %v155
    %v213 = vpop.f32.mrb[0].mxu0
    %v214 = vadd.f32 %v78, %v213
    %v215 = vpop.f32.mrb[0].mxu0
    %v216 = vpop.f32.mrb[0].mxu0
    %v217 = vadd.f32 %v83, %v216
    %v218 = vpop.f32.mrb[0].mxu0
    %219 = vmatprep.mubr.bf16.mxu0 0
    %220 = vmatmul.mubr.bf16.gmra.mrb[0].mxu0 %v158
    %v221 = vpop.f32.mrb[0].mxu0
    %v222 = vadd.f32 %v88, %v221
    %v223 = vpop.f32.mrb[0].mxu0
    %v224 = vpop.f32.mrb[0].mxu0
    %v225 = vadd.f32 %v93, %v224
    %v226 = vpop.f32.mrb[0].mxu0
    %227 = vmatprep.mubr.bf16.mxu0 0
    %228 = vmatmul.mubr.bf16.gmra.mrb[0].mxu0 %v161
    %v229 = vpop.f32.mrb[0].mxu0
    %v230 = vadd.f32 %v98, %v229
    %v231 = vpop.f32.mrb[0].mxu0
    %v232 = vpop.f32.mrb[0].mxu0
    %v233 = vpop.f32.mrb[0].mxu0
    %234 = vdwg.mxu0
    %v235 = vpack.c.bf16 %v201, %v198
    %v236 = vpack.c.bf16 %v209, %v206
    %v237 = vpack.c.bf16 %v217, %v214
    %v238 = vpack.c.bf16 %v225, %v222
    %v239 = vpack.c.bf16 %v230, %v230
    %v245 = vunpack.c.l.b16 %v235
    %v246 = vunpack.c.h.b16 %v235
    %v247 = vunpack.c.l.b16 %v236
    %v248 = vunpack.c.h.b16 %v236
    %v249 = vunpack.c.l.b16 %v237
    %v250 = vunpack.c.h.b16 %v237
    %v251 = vunpack.c.l.b16 %v238
    %v252 = vunpack.c.h.b16 %v238
    %v253 = vunpack.c.l.b16 %v239
    %v254 = vpack.c.b16 %v245, %v245
    %v255 = vpack.c.b16 %v246, %v246
    %v256 = vpack.c.b16 %v247, %v247
    %v257 = vpack.c.b16 %v248, %v248
    %v258 = vpack.c.b16 %v249, %v249
    %v259 = vpack.c.b16 %v250, %v250
    %v260 = vpack.c.b16 %v251, %v251
    %v261 = vpack.c.b16 %v252, %v252
    %v262 = vpack.c.b16 %v253, %v253
    %vm272 = vcmask 420864
    %273 = vst.msk [vmem:[%s3] sm:$0xf] %vm272, %v254
    %274 = vst.msk [vmem:[%s3 + $0x4] sm:$0xf] %vm272, %v255
    %275 = vst.msk [vmem:[%s3 + $0x8] sm:$0xf] %vm272, %v256
    %276 = vst.msk [vmem:[%s3 + $0xc] sm:$0xf] %vm272, %v257
    %277 = vst.msk [vmem:[%s3 + $0x10] sm:$0xf] %vm272, %v258
    %278 = vst.msk [vmem:[%s3 + $0x14] sm:$0xf] %vm272, %v259
    %279 = vst.msk [vmem:[%s3 + $0x18] sm:$0xf] %vm272, %v260
    %280 = vst.msk [vmem:[%s3 + $0x1c] sm:$0xf] %vm272, %v261
    %281 = vst.msk [vmem:[%s3 + $0x20] sm:$0xf] %vm272, %v262
    // Predicated region
    $region18: #{ms_stft_discriminator_forward.21} parent=1 // pred_check
      _
    $region19: #{ms_stft_discriminator_forward.21} parent=1 // pred_check_branch
      %283 = sbr.rel (0) target = $region21
    $region20: #{ms_stft_discriminator_forward.21} parent=1 // pred_region
      _
    $region21: #{ms_stft_discriminator_forward.21} parent=1 // pred_fallthru
      _
    // Predicated region
    $region22: #{ms_stft_discriminator_forward.21} parent=1 // pred_check
      _
    $region23: #{ms_stft_discriminator_forward.21} parent=1 // pred_check_branch
      %285 = sbr.rel (0) target = $region25
    $region24: #{ms_stft_discriminator_forward.21} parent=1 // pred_region
      _
    $region25: #{ms_stft_discriminator_forward.21} parent=1 // pred_fallthru
      _
    %286 = vsyncpa [#allocation3], 1

// kernel: ms_stft_discriminator_forward.22
$region0: #{ms_stft_discriminator_forward.22}
  #allocation0 [shape = 'u32[]', space=smem, size = 0x4, offset = 0x4, fixed_abs, tag = 'smem constant byte address 0x4 - core index']
  #allocation1 [shape = 'u32[144,128]{1,0:T(1,128)}', space=vmem, size = 0x12000, scoped, tag = 'internal scratch']
  %s0 = inlined_call_operand.vmem [shape: bf16[8,54], index: 0, kind: input, shape index: {}]
  %s1 = inlined_call_operand.vmem [shape: bf16[54,1716], index: 1, kind: input, shape index: {}]
  %s2 = inlined_call_operand.vmem [shape: f32[8,1], index: 2, kind: input, shape index: {}]
  %s3 = inlined_call_operand.vmem [shape: bf16[8,1716], index: 3, kind: output, shape index: {}]
  %s4 = sld [smem:[#allocation0]]
  $region22: #{ms_stft_discriminator_forward.22} parent=0
    _
  %s6 = ssub.s32 1, %s4
  %s7 = scalar_select 0, %s6, %s4
  // Predicated region
  $region2: #{ms_stft_discriminator_forward.22} parent=0 // pred_check
    _
  $region3: #{ms_stft_discriminator_forward.22} parent=0 // pred_check_branch
    %9 = sbr.rel (0) target = $region5
  $region4: #{ms_stft_discriminator_forward.22} parent=0 // pred_region
    _
  $region5: #{ms_stft_discriminator_forward.22} parent=0 // pred_fallthru
    _
  // Predicated region
  $region6: #{ms_stft_discriminator_forward.22} parent=0 // pred_check
    _
  $region7: #{ms_stft_discriminator_forward.22} parent=0 // pred_check_branch
    %11 = sbr.rel (0) target = $region9
  $region8: #{ms_stft_discriminator_forward.22} parent=0 // pred_region
    _
  $region9: #{ms_stft_discriminator_forward.22} parent=0 // pred_fallthru
    _
  // Predicated region
  $region10: #{ms_stft_discriminator_forward.22} parent=0 // pred_check
    _
  $region11: #{ms_stft_discriminator_forward.22} parent=0 // pred_check_branch
    %13 = sbr.rel (0) target = $region13
  $region12: #{ms_stft_discriminator_forward.22} parent=0 // pred_region
    _
  $region13: #{ms_stft_discriminator_forward.22} parent=0 // pred_fallthru
    _
  %v15 = vld [vmem:[%s0] sm:$0xf]
  %v16 = vld [vmem:[%s1] sm:$0xff]
  %v17 = vld [vmem:[%s1 + $0x8] sm:$0xff]
  %v18 = vld [vmem:[%s1 + $0x10] sm:$0xff]
  %v19 = vld [vmem:[%s1 + $0x18] sm:$0xff]
  %v20 = vld [vmem:[%s1 + $0x20] sm:$0xff]
  %v21 = vld [vmem:[%s1 + $0x28] sm:$0xff]
  %v22 = vld [vmem:[%s1 + $0x30] sm:$0xff]
  %v23 = vld [vmem:[%s1 + $0x38] sm:$0xff]
  %v24 = vld [vmem:[%s1 + $0x40] sm:$0xff]
  %v25 = vld [vmem:[%s1 + $0x48] sm:$0xff]
  %v26 = vld [vmem:[%s1 + $0x50] sm:$0xff]
  %v27 = vld [vmem:[%s1 + $0x58] sm:$0xff]
  %v28 = vld [vmem:[%s1 + $0x60] sm:$0xff]
  %v29 = vld [vmem:[%s1 + $0x68] sm:$0xff]
  %v30 = vld [vmem:[%s1 + $0x70] sm:$0xff]
  %v31 = vld [vmem:[%s1 + $0x78] sm:$0xff]
  %v32 = vld [vmem:[%s1 + $0x80] sm:$0xff]
  %v33 = vld [vmem:[%s1 + $0x88] sm:$0xff]
  %v34 = vld [vmem:[%s1 + $0x90] sm:$0xff]
  %v35 = vld [vmem:[%s1 + $0x98] sm:$0xff]
  %v36 = vld [vmem:[%s1 + $0xa0] sm:$0xff]
  %v37 = vld [vmem:[%s1 + $0xa8] sm:$0xff]
  %v38 = vld [vmem:[%s1 + $0xb0] sm:$0xff]
  %v39 = vld [vmem:[%s1 + $0xb8] sm:$0xff]
  %v40 = vld [vmem:[%s1 + $0xc0] sm:$0xff]
  %v41 = vld [vmem:[%s1 + $0xc8] sm:$0xff]
  %v42 = vld [vmem:[%s1 + $0xd0] sm:$0xff]
  %v43 = vld [vmem:[%s1 + $0xd8] sm:$0xff]
  %v44 = vld [vmem:[%s1 + $0xe0] sm:$0xff]
  %v45 = vld [vmem:[%s1 + $0xe8] sm:$0xff]
  %v46 = vld [vmem:[%s1 + $0xf0] sm:$0xff]
  %v47 = vld [vmem:[%s1 + $0xf8] sm:$0xff]
  %v48 = vld [vmem:[%s1 + $0x100] sm:$0xff]
  %v49 = vld [vmem:[%s1 + $0x108] sm:$0xff]
  %v50 = vld [vmem:[%s1 + $0x110] sm:$0xff]
  %v51 = vld [vmem:[%s1 + $0x118] sm:$0xff]
  %v52 = vld [vmem:[%s1 + $0x120] sm:$0xff]
  %v53 = vld [vmem:[%s1 + $0x128] sm:$0xff]
  %v54 = vld [vmem:[%s1 + $0x130] sm:$0xff]
  %v55 = vld [vmem:[%s1 + $0x138] sm:$0xff]
  %v56 = vld [vmem:[%s1 + $0x140] sm:$0xff]
  %v57 = vld [vmem:[%s1 + $0x148] sm:$0xff]
  %v58 = vld [vmem:[%s1 + $0x150] sm:$0x77]
  %v59 = vld [vmem:[%s1 + $0x158] sm:$0x77]
  %v60 = vld [vmem:[%s1 + $0x160] sm:$0x77]
  %v61 = vld [vmem:[%s1 + $0x168] sm:$0x77]
  %v62 = vld [vmem:[%s1 + $0x170] sm:$0x77]
  %v63 = vld [vmem:[%s1 + $0x178] sm:$0x77]
  %v64 = vld [vmem:[%s1 + $0x180] sm:$0x77]
  %v65 = vld [vmem:[%s2] sm:$0xff]
  %67 = vset.pattern.permute.xlu0 0
  %68 = vperm.xlu0 %67, %v65
  %v69 = vpop.permute.xlu0 %68
  %v120 = vunpack.c.l.b16 %v16
  %v121 = vunpack.c.h.b16 %v16
  %v122 = vunpack.c.l.b16 %v17
  %v123 = vunpack.c.h.b16 %v17
  %v124 = vunpack.c.l.b16 %v18
  %v125 = vunpack.c.h.b16 %v18
  %v126 = vunpack.c.l.b16 %v19
  %v127 = vunpack.c.h.b16 %v19
  %v128 = vunpack.c.l.b16 %v20
  %v129 = vunpack.c.h.b16 %v20
  %v130 = vunpack.c.l.b16 %v21
  %v131 = vunpack.c.h.b16 %v21
  %v132 = vunpack.c.l.b16 %v22
  %v133 = vunpack.c.h.b16 %v22
  %v134 = vunpack.c.l.b16 %v23
  %v135 = vunpack.c.h.b16 %v23
  %v136 = vunpack.c.l.b16 %v24
  %v137 = vunpack.c.h.b16 %v24
  %v138 = vunpack.c.l.b16 %v25
  %v139 = vunpack.c.h.b16 %v25
  %v140 = vunpack.c.l.b16 %v26
  %v141 = vunpack.c.h.b16 %v26
  %v142 = vunpack.c.l.b16 %v27
  %v143 = vunpack.c.h.b16 %v27
  %v144 = vunpack.c.l.b16 %v28
  %v145 = vunpack.c.h.b16 %v28
  %v146 = vunpack.c.l.b16 %v29
  %v147 = vunpack.c.h.b16 %v29
  %v148 = vunpack.c.l.b16 %v30
  %v149 = vunpack.c.h.b16 %v30
  %v150 = vunpack.c.l.b16 %v31
  %v151 = vunpack.c.h.b16 %v31
  %v152 = vunpack.c.l.b16 %v32
  %v153 = vunpack.c.h.b16 %v32
  %v154 = vunpack.c.l.b16 %v33
  %v155 = vunpack.c.h.b16 %v33
  %v156 = vunpack.c.l.b16 %v34
  %v157 = vunpack.c.h.b16 %v34
  %v158 = vunpack.c.l.b16 %v35
  %v159 = vunpack.c.h.b16 %v35
  %v160 = vunpack.c.l.b16 %v36
  %v161 = vunpack.c.h.b16 %v36
  %v162 = vunpack.c.l.b16 %v37
  %v163 = vunpack.c.h.b16 %v37
  %v164 = vunpack.c.l.b16 %v38
  %v165 = vunpack.c.h.b16 %v38
  %v166 = vunpack.c.l.b16 %v39
  %v167 = vunpack.c.h.b16 %v39
  %v168 = vunpack.c.l.b16 %v40
  %v169 = vunpack.c.h.b16 %v40
  %v170 = vunpack.c.l.b16 %v41
  %v171 = vunpack.c.h.b16 %v41
  %v172 = vunpack.c.l.b16 %v42
  %v173 = vunpack.c.h.b16 %v42
  %v174 = vunpack.c.l.b16 %v43
  %v175 = vunpack.c.h.b16 %v43
  %v176 = vunpack.c.l.b16 %v44
  %v177 = vunpack.c.h.b16 %v44
  %v178 = vunpack.c.l.b16 %v45
  %v179 = vunpack.c.h.b16 %v45
  %v180 = vunpack.c.l.b16 %v46
  %v181 = vunpack.c.h.b16 %v46
  %v182 = vunpack.c.l.b16 %v47
  %v183 = vunpack.c.h.b16 %v47
  %v184 = vunpack.c.l.b16 %v48
  %v185 = vunpack.c.h.b16 %v48
  %v186 = vunpack.c.l.b16 %v49
  %v187 = vunpack.c.h.b16 %v49
  %v188 = vunpack.c.l.b16 %v50
  %v189 = vunpack.c.h.b16 %v50
  %v190 = vunpack.c.l.b16 %v51
  %v191 = vunpack.c.h.b16 %v51
  %v192 = vunpack.c.l.b16 %v52
  %v193 = vunpack.c.h.b16 %v52
  %v194 = vunpack.c.l.b16 %v53
  %v195 = vunpack.c.h.b16 %v53
  %v196 = vunpack.c.l.b16 %v54
  %v197 = vunpack.c.h.b16 %v54
  %v198 = vunpack.c.l.b16 %v55
  %v199 = vunpack.c.h.b16 %v55
  %v200 = vunpack.c.l.b16 %v56
  %v201 = vunpack.c.h.b16 %v56
  %v202 = vunpack.c.l.b16 %v57
  %v203 = vunpack.c.h.b16 %v57
  %v204 = vunpack.c.l.b16 %v58
  %v205 = vunpack.c.h.b16 %v58
  %v206 = vunpack.c.l.b16 %v59
  %v207 = vunpack.c.h.b16 %v59
  %v208 = vunpack.c.l.b16 %v60
  %v209 = vunpack.c.h.b16 %v60
  %v210 = vunpack.c.l.b16 %v61
  %v211 = vunpack.c.h.b16 %v61
  %v212 = vunpack.c.l.b16 %v62
  %v213 = vunpack.c.h.b16 %v62
  %v214 = vunpack.c.l.b16 %v63
  %v215 = vunpack.c.h.b16 %v63
  %v216 = vunpack.c.l.b16 %v64
  %v217 = vunpack.c.h.b16 %v64
  %v218 = vpack.c.b16 %v134, %v120
  %v219 = vpack.c.b16 %v135, %v121
  %v220 = vpack.c.b16 %v136, %v122
  %v221 = vpack.c.b16 %v137, %v123
  %v222 = vpack.c.b16 %v138, %v124
  %v223 = vpack.c.b16 %v139, %v125
  %v224 = vpack.c.b16 %v140, %v126
  %v225 = vpack.c.b16 %v141, %v127
  %v226 = vpack.c.b16 %v142, %v128
  %v227 = vpack.c.b16 %v143, %v129
  %v228 = vpack.c.b16 %v144, %v130
  %v229 = vpack.c.b16 %v145, %v131
  %v230 = vpack.c.b16 %v146, %v132
  %v231 = vpack.c.b16 %v147, %v133
  %v232 = vpack.c.b16 %v162, %v148
  %v233 = vpack.c.b16 %v163, %v149
  %v234 = vpack.c.b16 %v164, %v150
  %v235 = vpack.c.b16 %v165, %v151
  %v236 = vpack.c.b16 %v166, %v152
  %v237 = vpack.c.b16 %v167, %v153
  %v238 = vpack.c.b16 %v168, %v154
  %v239 = vpack.c.b16 %v169, %v155
  %v240 = vpack.c.b16 %v170, %v156
  %v241 = vpack.c.b16 %v171, %v157
  %v242 = vpack.c.b16 %v172, %v158
  %v243 = vpack.c.b16 %v173, %v159
  %v244 = vpack.c.b16 %v174, %v160
  %v245 = vpack.c.b16 %v175, %v161
  %v246 = vpack.c.b16 %v190, %v176
  %v247 = vpack.c.b16 %v191, %v177
  %v248 = vpack.c.b16 %v192, %v178
  %v249 = vpack.c.b16 %v193, %v179
  %v250 = vpack.c.b16 %v194, %v180
  %v251 = vpack.c.b16 %v195, %v181
  %v252 = vpack.c.b16 %v196, %v182
  %v253 = vpack.c.b16 %v197, %v183
  %v254 = vpack.c.b16 %v198, %v184
  %v255 = vpack.c.b16 %v199, %v185
  %v256 = vpack.c.b16 %v200, %v186
  %v257 = vpack.c.b16 %v201, %v187
  %v258 = vpack.c.b16 %v202, %v188
  %v259 = vpack.c.b16 %v203, %v189
  %v260 = vpack.c.b16 %v204, %v204
  %v261 = vpack.c.b16 %v205, %v205
  %v262 = vpack.c.b16 %v206, %v206
  %v263 = vpack.c.b16 %v207, %v207
  %v264 = vpack.c.b16 %v208, %v208
  %v265 = vpack.c.b16 %v209, %v209
  %v266 = vpack.c.b16 %v210, %v210
  %v267 = vpack.c.b16 %v211, %v211
  %v268 = vpack.c.b16 %v212, %v212
  %v269 = vpack.c.b16 %v213, %v213
  %v270 = vpack.c.b16 %v214, %v214
  %v271 = vpack.c.b16 %v215, %v215
  %v272 = vpack.c.b16 %v216, %v216
  %v273 = vpack.c.b16 %v217, %v217
  %vm316 = vcmask 441344
  %v318 = vsel %vm316, %v15, 0
  %vm320 = vcmask 1042432
  %v322 = vsel %vm320, %v260, 0
  %v325 = vsel %vm320, %v261, 0
  %v328 = vsel %vm320, %v262, 0
  %v331 = vsel %vm320, %v263, 0
  %v334 = vsel %vm320, %v264, 0
  %v337 = vsel %vm320, %v265, 0
  %v340 = vsel %vm320, %v266, 0
  %v343 = vsel %vm320, %v267, 0
  %v346 = vsel %vm320, %v268, 0
  %v349 = vsel %vm320, %v269, 0
  %v352 = vsel %vm320, %v270, 0
  %v355 = vsel %vm320, %v271, 0
  %v358 = vsel %vm320, %v272, 0
  %v361 = vsel %vm320, %v273, 0
  %363 = vmatprep.subr.bf16.mxu0 %v219
  %364 = vmatpush1.bf16.msra.mxu0 %v218
  %365 = vmatprep.subr.bf16.mxu0 %v233
  %366 = vmatpush1.bf16.msra.mxu0 %v232
  %367 = vmatprep.subr.bf16.mxu0 %v247
  %368 = vmatpush1.bf16.msra.mxu0 %v246
  %369 = vmatprep.subr.bf16.mxu0 %v325
  %370 = vmatpush1.bf16.msra.mxu0 %v322
  %371 = vmatprep.subr.bf16.mxu0 0
  %372 = vmatpush1.bf16.msra.mxu0 0
  %373 = vmatprep.subr.bf16.mxu0 0
  %374 = vmatpush1.bf16.msra.mxu0 0
  %375 = vmatprep.subr.bf16.mxu0 0
  %376 = vmatpush1.bf16.msra.mxu0 0
  %377 = vmatprep.subr.bf16.mxu0 0
  %378 = vmatpush1.bf16.msra.mxu0 0
  %379 = vmatprep.subr.bf16.mxu0 0
  %380 = vmatpush1.bf16.msra.mxu0 0
  %381 = vmatprep.subr.bf16.mxu0 0
  %382 = vmatpush1.bf16.msra.mxu0 0
  %383 = vmatprep.subr.bf16.mxu0 0
  %384 = vmatpush1.bf16.msra.mxu0 0
  %385 = vmatprep.subr.bf16.mxu0 0
  %386 = vmatpush1.bf16.msra.mxu0 0
  %387 = vmatprep.subr.bf16.mxu0 0
  %388 = vmatpush1.bf16.msra.mxu0 0
  %389 = vmatprep.subr.bf16.mxu0 0
  %390 = vmatpush1.bf16.msra.mxu0 0
  %391 = vmatprep.subr.bf16.mxu0 0
  %392 = vmatpush1.bf16.msra.mxu0 0
  %393 = vmatprep.subr.bf16.mxu0 0
  %394 = vmatpush1.bf16.msra.mxu0 0
  %395 = vmatprep.mubr.bf16.mxu0 0
  %396 = vmatmul.mubr.bf16.gmra.mrb[0].mxu0 %v318
  %v397 = vpop.f32.mrb[0].mxu0
  %v398 = vadd.f32 %v69, %v397
  %v399 = vpop.f32.mrb[0].mxu0
  %v400 = vadd.f32 %v69, %v399
  %v401 = vpop.f32.mrb[0].mxu0
  %v402 = vpop.f32.mrb[0].mxu0
  %403 = vdwg.mxu0
  %404 = vmatprep.subr.bf16.mxu0 %v221
  %405 = vmatpush1.bf16.msra.mxu0 %v220
  %406 = vmatprep.subr.bf16.mxu0 %v235
  %407 = vmatpush1.bf16.msra.mxu0 %v234
  %408 = vmatprep.subr.bf16.mxu0 %v249
  %409 = vmatpush1.bf16.msra.mxu0 %v248
  %410 = vmatprep.subr.bf16.mxu0 %v331
  %411 = vmatpush1.bf16.msra.mxu0 %v328
  %412 = vmatprep.subr.bf16.mxu0 0
  %413 = vmatpush1.bf16.msra.mxu0 0
  %414 = vmatprep.subr.bf16.mxu0 0
  %415 = vmatpush1.bf16.msra.mxu0 0
  %416 = vmatprep.subr.bf16.mxu0 0
  %417 = vmatpush1.bf16.msra.mxu0 0
  %418 = vmatprep.subr.bf16.mxu0 0
  %419 = vmatpush1.bf16.msra.mxu0 0
  %420 = vmatprep.subr.bf16.mxu0 0
  %421 = vmatpush1.bf16.msra.mxu0 0
  %422 = vmatprep.subr.bf16.mxu0 0
  %423 = vmatpush1.bf16.msra.mxu0 0
  %424 = vmatprep.subr.bf16.mxu0 0
  %425 = vmatpush1.bf16.msra.mxu0 0
  %426 = vmatprep.subr.bf16.mxu0 0
  %427 = vmatpush1.bf16.msra.mxu0 0
  %428 = vmatprep.subr.bf16.mxu0 0
  %429 = vmatpush1.bf16.msra.mxu0 0
  %430 = vmatprep.subr.bf16.mxu0 0
  %431 = vmatpush1.bf16.msra.mxu0 0
  %432 = vmatprep.subr.bf16.mxu0 0
  %433 = vmatpush1.bf16.msra.mxu0 0
  %434 = vmatprep.subr.bf16.mxu0 0
  %435 = vmatpush1.bf16.msra.mxu0 0
  %436 = vmatprep.mubr.bf16.mxu0 0
  %437 = vmatmul.mubr.bf16.gmra.mrb[0].mxu0 %v318
  %v438 = vpop.f32.mrb[0].mxu0
  %v439 = vadd.f32 %v69, %v438
  %v440 = vpop.f32.mrb[0].mxu0
  %v441 = vadd.f32 %v69, %v440
  %v442 = vpop.f32.mrb[0].mxu0
  %v443 = vpop.f32.mrb[0].mxu0
  %444 = vdwg.mxu0
  %445 = vmatprep.subr.bf16.mxu0 %v223
  %446 = vmatpush1.bf16.msra.mxu0 %v222
  %447 = vmatprep.subr.bf16.mxu0 %v237
  %448 = vmatpush1.bf16.msra.mxu0 %v236
  %449 = vmatprep.subr.bf16.mxu0 %v251
  %450 = vmatpush1.bf16.msra.mxu0 %v250
  %451 = vmatprep.subr.bf16.mxu0 %v337
  %452 = vmatpush1.bf16.msra.mxu0 %v334
  %453 = vmatprep.subr.bf16.mxu0 0
  %454 = vmatpush1.bf16.msra.mxu0 0
  %455 = vmatprep.subr.bf16.mxu0 0
  %456 = vmatpush1.bf16.msra.mxu0 0
  %457 = vmatprep.subr.bf16.mxu0 0
  %458 = vmatpush1.bf16.msra.mxu0 0
  %459 = vmatprep.subr.bf16.mxu0 0
  %460 = vmatpush1.bf16.msra.mxu0 0
  %461 = vmatprep.subr.bf16.mxu0 0
  %462 = vmatpush1.bf16.msra.mxu0 0
  %463 = vmatprep.subr.bf16.mxu0 0
  %464 = vmatpush1.bf16.msra.mxu0 0
  %465 = vmatprep.subr.bf16.mxu0 0
  %466 = vmatpush1.bf16.msra.mxu0 0
  %467 = vmatprep.subr.bf16.mxu0 0
  %468 = vmatpush1.bf16.msra.mxu0 0
  %469 = vmatprep.subr.bf16.mxu0 0
  %470 = vmatpush1.bf16.msra.mxu0 0
  %471 = vmatprep.subr.bf16.mxu0 0
  %472 = vmatpush1.bf16.msra.mxu0 0
  %473 = vmatprep.subr.bf16.mxu0 0
  %474 = vmatpush1.bf16.msra.mxu0 0
  %475 = vmatprep.subr.bf16.mxu0 0
  %476 = vmatpush1.bf16.msra.mxu0 0
  %477 = vmatprep.mubr.bf16.mxu0 0
  %478 = vmatmul.mubr.bf16.gmra.mrb[0].mxu0 %v318
  %v479 = vpop.f32.mrb[0].mxu0
  %v480 = vadd.f32 %v69, %v479
  %v481 = vpop.f32.mrb[0].mxu0
  %v482 = vadd.f32 %v69, %v481
  %v483 = vpop.f32.mrb[0].mxu0
  %v484 = vpop.f32.mrb[0].mxu0
  %485 = vdwg.mxu0
  %486 = vmatprep.subr.bf16.mxu0 %v225
  %487 = vmatpush1.bf16.msra.mxu0 %v224
  %488 = vmatprep.subr.bf16.mxu0 %v239
  %489 = vmatpush1.bf16.msra.mxu0 %v238
  %490 = vmatprep.subr.bf16.mxu0 %v253
  %491 = vmatpush1.bf16.msra.mxu0 %v252
  %492 = vmatprep.subr.bf16.mxu0 %v343
  %493 = vmatpush1.bf16.msra.mxu0 %v340
  %494 = vmatprep.subr.bf16.mxu0 0
  %495 = vmatpush1.bf16.msra.mxu0 0
  %496 = vmatprep.subr.bf16.mxu0 0
  %497 = vmatpush1.bf16.msra.mxu0 0
  %498 = vmatprep.subr.bf16.mxu0 0
  %499 = vmatpush1.bf16.msra.mxu0 0
  %500 = vmatprep.subr.bf16.mxu0 0
  %501 = vmatpush1.bf16.msra.mxu0 0
  %502 = vmatprep.subr.bf16.mxu0 0
  %503 = vmatpush1.bf16.msra.mxu0 0
  %504 = vmatprep.subr.bf16.mxu0 0
  %505 = vmatpush1.bf16.msra.mxu0 0
  %506 = vmatprep.subr.bf16.mxu0 0
  %507 = vmatpush1.bf16.msra.mxu0 0
  %508 = vmatprep.subr.bf16.mxu0 0
  %509 = vmatpush1.bf16.msra.mxu0 0
  %510 = vmatprep.subr.bf16.mxu0 0
  %511 = vmatpush1.bf16.msra.mxu0 0
  %512 = vmatprep.subr.bf16.mxu0 0
  %513 = vmatpush1.bf16.msra.mxu0 0
  %514 = vmatprep.subr.bf16.mxu0 0
  %515 = vmatpush1.bf16.msra.mxu0 0
  %516 = vmatprep.subr.bf16.mxu0 0
  %517 = vmatpush1.bf16.msra.mxu0 0
  %518 = vmatprep.mubr.bf16.mxu0 0
  %519 = vmatmul.mubr.bf16.gmra.mrb[0].mxu0 %v318
  %v520 = vpop.f32.mrb[0].mxu0
  %v521 = vadd.f32 %v69, %v520
  %v522 = vpop.f32.mrb[0].mxu0
  %v523 = vadd.f32 %v69, %v522
  %v524 = vpop.f32.mrb[0].mxu0
  %v525 = vpop.f32.mrb[0].mxu0
  %526 = vdwg.mxu0
  %527 = vmatprep.subr.bf16.mxu0 %v227
  %528 = vmatpush1.bf16.msra.mxu0 %v226
  %529 = vmatprep.subr.bf16.mxu0 %v241
  %530 = vmatpush1.bf16.msra.mxu0 %v240
  %531 = vmatprep.subr.bf16.mxu0 %v255
  %532 = vmatpush1.bf16.msra.mxu0 %v254
  %533 = vmatprep.subr.bf16.mxu0 %v349
  %534 = vmatpush1.bf16.msra.mxu0 %v346
  %535 = vmatprep.subr.bf16.mxu0 0
  %536 = vmatpush1.bf16.msra.mxu0 0
  %537 = vmatprep.subr.bf16.mxu0 0
  %538 = vmatpush1.bf16.msra.mxu0 0
  %539 = vmatprep.subr.bf16.mxu0 0
  %540 = vmatpush1.bf16.msra.mxu0 0
  %541 = vmatprep.subr.bf16.mxu0 0
  %542 = vmatpush1.bf16.msra.mxu0 0
  %543 = vmatprep.subr.bf16.mxu0 0
  %544 = vmatpush1.bf16.msra.mxu0 0
  %545 = vmatprep.subr.bf16.mxu0 0
  %546 = vmatpush1.bf16.msra.mxu0 0
  %547 = vmatprep.subr.bf16.mxu0 0
  %548 = vmatpush1.bf16.msra.mxu0 0
  %549 = vmatprep.subr.bf16.mxu0 0
  %550 = vmatpush1.bf16.msra.mxu0 0
  %551 = vmatprep.subr.bf16.mxu0 0
  %552 = vmatpush1.bf16.msra.mxu0 0
  %553 = vmatprep.subr.bf16.mxu0 0
  %554 = vmatpush1.bf16.msra.mxu0 0
  %555 = vmatprep.subr.bf16.mxu0 0
  %556 = vmatpush1.bf16.msra.mxu0 0
  %557 = vmatprep.subr.bf16.mxu0 0
  %558 = vmatpush1.bf16.msra.mxu0 0
  %559 = vmatprep.mubr.bf16.mxu0 0
  %560 = vmatmul.mubr.bf16.gmra.mrb[0].mxu0 %v318
  %v561 = vpop.f32.mrb[0].mxu0
  %v562 = vadd.f32 %v69, %v561
  %v563 = vpop.f32.mrb[0].mxu0
  %v564 = vadd.f32 %v69, %v563
  %v565 = vpop.f32.mrb[0].mxu0
  %v566 = vpop.f32.mrb[0].mxu0
  %567 = vdwg.mxu0
  %568 = vmatprep.subr.bf16.mxu0 %v229
  %569 = vmatpush1.bf16.msra.mxu0 %v228
  %570 = vmatprep.subr.bf16.mxu0 %v243
  %571 = vmatpush1.bf16.msra.mxu0 %v242
  %572 = vmatprep.subr.bf16.mxu0 %v257
  %573 = vmatpush1.bf16.msra.mxu0 %v256
  %574 = vmatprep.subr.bf16.mxu0 %v355
  %575 = vmatpush1.bf16.msra.mxu0 %v352
  %576 = vmatprep.subr.bf16.mxu0 0
  %577 = vmatpush1.bf16.msra.mxu0 0
  %578 = vmatprep.subr.bf16.mxu0 0
  %579 = vmatpush1.bf16.msra.mxu0 0
  %580 = vmatprep.subr.bf16.mxu0 0
  %581 = vmatpush1.bf16.msra.mxu0 0
  %582 = vmatprep.subr.bf16.mxu0 0
  %583 = vmatpush1.bf16.msra.mxu0 0
  %584 = vmatprep.subr.bf16.mxu0 0
  %585 = vmatpush1.bf16.msra.mxu0 0
  %586 = vmatprep.subr.bf16.mxu0 0
  %587 = vmatpush1.bf16.msra.mxu0 0
  %588 = vmatprep.subr.bf16.mxu0 0
  %589 = vmatpush1.bf16.msra.mxu0 0
  %590 = vmatprep.subr.bf16.mxu0 0
  %591 = vmatpush1.bf16.msra.mxu0 0
  %592 = vmatprep.subr.bf16.mxu0 0
  %593 = vmatpush1.bf16.msra.mxu0 0
  %594 = vmatprep.subr.bf16.mxu0 0
  %595 = vmatpush1.bf16.msra.mxu0 0
  %596 = vmatprep.subr.bf16.mxu0 0
  %597 = vmatpush1.bf16.msra.mxu0 0
  %598 = vmatprep.subr.bf16.mxu0 0
  %599 = vmatpush1.bf16.msra.mxu0 0
  %600 = vmatprep.mubr.bf16.mxu0 0
  %601 = vmatmul.mubr.bf16.gmra.mrb[0].mxu0 %v318
  %v602 = vpop.f32.mrb[0].mxu0
  %v603 = vadd.f32 %v69, %v602
  %v604 = vpop.f32.mrb[0].mxu0
  %v605 = vadd.f32 %v69, %v604
  %v606 = vpop.f32.mrb[0].mxu0
  %v607 = vpop.f32.mrb[0].mxu0
  %608 = vdwg.mxu0
  %609 = vmatprep.subr.bf16.mxu0 %v231
  %610 = vmatpush1.bf16.msra.mxu0 %v230
  %611 = vmatprep.subr.bf16.mxu0 %v245
  %612 = vmatpush1.bf16.msra.mxu0 %v244
  %613 = vmatprep.subr.bf16.mxu0 %v259
  %614 = vmatpush1.bf16.msra.mxu0 %v258
  %615 = vmatprep.subr.bf16.mxu0 %v361
  %616 = vmatpush1.bf16.msra.mxu0 %v358
  %617 = vmatprep.subr.bf16.mxu0 0
  %618 = vmatpush1.bf16.msra.mxu0 0
  %619 = vmatprep.subr.bf16.mxu0 0
  %620 = vmatpush1.bf16.msra.mxu0 0
  %621 = vmatprep.subr.bf16.mxu0 0
  %622 = vmatpush1.bf16.msra.mxu0 0
  %623 = vmatprep.subr.bf16.mxu0 0
  %624 = vmatpush1.bf16.msra.mxu0 0
  %625 = vmatprep.subr.bf16.mxu0 0
  %626 = vmatpush1.bf16.msra.mxu0 0
  %627 = vmatprep.subr.bf16.mxu0 0
  %628 = vmatpush1.bf16.msra.mxu0 0
  %629 = vmatprep.subr.bf16.mxu0 0
  %630 = vmatpush1.bf16.msra.mxu0 0
  %631 = vmatprep.subr.bf16.mxu0 0
  %632 = vmatpush1.bf16.msra.mxu0 0
  %633 = vmatprep.subr.bf16.mxu0 0
  %634 = vmatpush1.bf16.msra.mxu0 0
  %635 = vmatprep.subr.bf16.mxu0 0
  %636 = vmatpush1.bf16.msra.mxu0 0
  %637 = vmatprep.subr.bf16.mxu0 0
  %638 = vmatpush1.bf16.msra.mxu0 0
  %639 = vmatprep.subr.bf16.mxu0 0
  %640 = vmatpush1.bf16.msra.mxu0 0
  %641 = vmatprep.mubr.bf16.mxu0 0
  %642 = vmatmul.mubr.bf16.gmra.mrb[0].mxu0 %v318
  %v643 = vpop.f32.mrb[0].mxu0
  %v644 = vadd.f32 %v69, %v643
  %v645 = vpop.f32.mrb[0].mxu0
  %v646 = vadd.f32 %v69, %v645
  %v647 = vpop.f32.mrb[0].mxu0
  %v648 = vpop.f32.mrb[0].mxu0
  %649 = vdwg.mxu0
  %vm650 = vcmp.ge.f32.partialorder %v398, 0.0
  %vm651 = vcmp.ge.f32.partialorder %v400, 0.0
  %vm652 = vcmp.ge.f32.partialorder %v439, 0.0
  %vm653 = vcmp.ge.f32.partialorder %v441, 0.0
  %vm654 = vcmp.ge.f32.partialorder %v480, 0.0
  %vm655 = vcmp.ge.f32.partialorder %v482, 0.0
  %vm656 = vcmp.ge.f32.partialorder %v521, 0.0
  %vm657 = vcmp.ge.f32.partialorder %v523, 0.0
  %vm658 = vcmp.ge.f32.partialorder %v562, 0.0
  %vm659 = vcmp.ge.f32.partialorder %v564, 0.0
  %vm660 = vcmp.ge.f32.partialorder %v603, 0.0
  %vm661 = vcmp.ge.f32.partialorder %v605, 0.0
  %vm662 = vcmp.ge.f32.partialorder %v644, 0.0
  %vm663 = vcmp.ge.f32.partialorder %v646, 0.0
  %v664 = vmul.f32 %v398, 0.2
  %v665 = vmul.f32 %v400, 0.2
  %v666 = vmul.f32 %v439, 0.2
  %v667 = vmul.f32 %v441, 0.2
  %v668 = vmul.f32 %v480, 0.2
  %v669 = vmul.f32 %v482, 0.2
  %v670 = vmul.f32 %v521, 0.2
  %v671 = vmul.f32 %v523, 0.2
  %v672 = vmul.f32 %v562, 0.2
  %v673 = vmul.f32 %v564, 0.2
  %v674 = vmul.f32 %v603, 0.2
  %v675 = vmul.f32 %v605, 0.2
  %v676 = vmul.f32 %v644, 0.2
  %v677 = vmul.f32 %v646, 0.2
  %v678 = vsel %vm650, %v398, %v664
  %v679 = vsel %vm651, %v400, %v665
  %v680 = vsel %vm652, %v439, %v666
  %v681 = vsel %vm653, %v441, %v667
  %v682 = vsel %vm654, %v480, %v668
  %v683 = vsel %vm655, %v482, %v669
  %v684 = vsel %vm656, %v521, %v670
  %v685 = vsel %vm657, %v523, %v671
  %v686 = vsel %vm658, %v562, %v672
  %v687 = vsel %vm659, %v564, %v673
  %v688 = vsel %vm660, %v603, %v674
  %v689 = vsel %vm661, %v605, %v675
  %v690 = vsel %vm662, %v644, %v676
  %v691 = vsel %vm663, %v646, %v677
  %v692 = vpack.c.bf16 %v678, %v678
  %v693 = vpack.c.bf16 %v679, %v679
  %v694 = vpack.c.bf16 %v680, %v680
  %v695 = vpack.c.bf16 %v681, %v681
  %v696 = vpack.c.bf16 %v682, %v682
  %v697 = vpack.c.bf16 %v683, %v683
  %v698 = vpack.c.bf16 %v684, %v684
  %v699 = vpack.c.bf16 %v685, %v685
  %v700 = vpack.c.bf16 %v686, %v686
  %v701 = vpack.c.bf16 %v687, %v687
  %v702 = vpack.c.bf16 %v688, %v688
  %v703 = vpack.c.bf16 %v689, %v689
  %v704 = vpack.c.bf16 %v690, %v690
  %v705 = vpack.c.bf16 %v691, %v691
  %v720 = vunpack.c.l.b16 %v692
  %v721 = vunpack.c.l.b16 %v693
  %v722 = vunpack.c.l.b16 %v694
  %v723 = vunpack.c.l.b16 %v695
  %v724 = vunpack.c.l.b16 %v696
  %v725 = vunpack.c.l.b16 %v697
  %v726 = vunpack.c.l.b16 %v698
  %v727 = vunpack.c.l.b16 %v699
  %v728 = vunpack.c.l.b16 %v700
  %v729 = vunpack.c.l.b16 %v701
  %v730 = vunpack.c.l.b16 %v702
  %v731 = vunpack.c.l.b16 %v703
  %v732 = vunpack.c.l.b16 %v704
  %v733 = vunpack.c.l.b16 %v705
  %v734 = vpack.c.b16 %v721, %v720
  %v735 = vpack.c.b16 %v723, %v722
  %v736 = vpack.c.b16 %v725, %v724
  %v737 = vpack.c.b16 %v727, %v726
  %v738 = vpack.c.b16 %v729, %v728
  %v739 = vpack.c.b16 %v731, %v730
  %v740 = vpack.c.b16 %v733, %v732
  %748 = vst [vmem:[%s3] sm:$0xff] %v734
  %749 = vst [vmem:[%s3 + $0x8] sm:$0xff] %v735
  %750 = vst [vmem:[%s3 + $0x10] sm:$0xff] %v736
  %751 = vst [vmem:[%s3 + $0x18] sm:$0xff] %v737
  %752 = vst [vmem:[%s3 + $0x20] sm:$0xff] %v738
  %753 = vst [vmem:[%s3 + $0x28] sm:$0xff] %v739
  %vm754 = vcmask 1043456
  %vm755 = vcmask 424964
  %vm756 = vmor %vm755, %vm754
  %757 = vst.msk [vmem:[%s3 + $0x30] sm:$0xff] %vm756, %v740
  // Predicated region
  $region14: #{ms_stft_discriminator_forward.22} parent=0 // pred_check
    _
  $region15: #{ms_stft_discriminator_forward.22} parent=0 // pred_check_branch
    %759 = sbr.rel (0) target = $region17
  $region16: #{ms_stft_discriminator_forward.22} parent=0 // pred_region
    _
  $region17: #{ms_stft_discriminator_forward.22} parent=0 // pred_fallthru
    _
  // Predicated region
  $region18: #{ms_stft_discriminator_forward.22} parent=0 // pred_check
    _
  $region19: #{ms_stft_discriminator_forward.22} parent=0 // pred_check_branch
    %761 = sbr.rel (0) target = $region21
  $region20: #{ms_stft_discriminator_forward.22} parent=0 // pred_region
    _
  $region21: #{ms_stft_discriminator_forward.22} parent=0 // pred_fallthru
    _

// kernel: ms_stft_discriminator_forward.23
$region0: #{ms_stft_discriminator_forward.23}
  #allocation0 [shape = 'u32[]', space=smem, size = 0x4, offset = 0x4, fixed_abs, tag = 'smem constant byte address 0x4 - core index']
  #allocation1 [shape = 'u32[144,128]{1,0:T(1,128)}', space=vmem, size = 0x12000, scoped, tag = 'internal scratch']
  %s0 = inlined_call_operand.vmem [shape: bf16[8,216], index: 0, kind: input, shape index: {}]
  %s1 = inlined_call_operand.vmem [shape: bf16[216,884], index: 1, kind: input, shape index: {}]
  %s2 = inlined_call_operand.vmem [shape: f32[8,1], index: 2, kind: input, shape index: {}]
  %s3 = inlined_call_operand.vmem [shape: bf16[8,884], index: 3, kind: output, shape index: {}]
  %s4 = sld [smem:[#allocation0]]
  $region22: #{ms_stft_discriminator_forward.23} parent=0
    _
  %s6 = ssub.s32 1, %s4
  %s7 = scalar_select 0, %s6, %s4
  // Predicated region
  $region2: #{ms_stft_discriminator_forward.23} parent=0 // pred_check
    _
  $region3: #{ms_stft_discriminator_forward.23} parent=0 // pred_check_branch
    %9 = sbr.rel (0) target = $region5
  $region4: #{ms_stft_discriminator_forward.23} parent=0 // pred_region
    _
  $region5: #{ms_stft_discriminator_forward.23} parent=0 // pred_fallthru
    _
  // Predicated region
  $region6: #{ms_stft_discriminator_forward.23} parent=0 // pred_check
    _
  $region7: #{ms_stft_discriminator_forward.23} parent=0 // pred_check_branch
    %11 = sbr.rel (0) target = $region9
  $region8: #{ms_stft_discriminator_forward.23} parent=0 // pred_region
    _
  $region9: #{ms_stft_discriminator_forward.23} parent=0 // pred_fallthru
    _
  // Predicated region
  $region10: #{ms_stft_discriminator_forward.23} parent=0 // pred_check
    _
  $region11: #{ms_stft_discriminator_forward.23} parent=0 // pred_check_branch
    %13 = sbr.rel (0) target = $region13
  $region12: #{ms_stft_discriminator_forward.23} parent=0 // pred_region
    _
  $region13: #{ms_stft_discriminator_forward.23} parent=0 // pred_fallthru
    _
  %v15 = vld [vmem:[%s0] sm:$0xff]
  %v16 = vld [vmem:[%s1] sm:$0xff]
  %v17 = vld [vmem:[%s1 + $0x8] sm:$0xff]
  %v18 = vld [vmem:[%s1 + $0x10] sm:$0xff]
  %v19 = vld [vmem:[%s1 + $0x18] sm:$0xf]
  %v20 = vld [vmem:[%s1 + $0x1c] sm:$0xff]
  %v21 = vld [vmem:[%s1 + $0x24] sm:$0xff]
  %v22 = vld [vmem:[%s1 + $0x2c] sm:$0xff]
  %v23 = vld [vmem:[%s1 + $0x34] sm:$0xf]
  %v24 = vld [vmem:[%s1 + $0x38] sm:$0xff]
  %v25 = vld [vmem:[%s1 + $0x40] sm:$0xff]
  %v26 = vld [vmem:[%s1 + $0x48] sm:$0xff]
  %v27 = vld [vmem:[%s1 + $0x50] sm:$0xf]
  %v28 = vld [vmem:[%s1 + $0x54] sm:$0xff]
  %v29 = vld [vmem:[%s1 + $0x5c] sm:$0xff]
  %v30 = vld [vmem:[%s1 + $0x64] sm:$0xff]
  %v31 = vld [vmem:[%s1 + $0x6c] sm:$0xf]
  %v32 = vld [vmem:[%s1 + $0x70] sm:$0xff]
  %v33 = vld [vmem:[%s1 + $0x78] sm:$0xff]
  %v34 = vld [vmem:[%s1 + $0x80] sm:$0xff]
  %v35 = vld [vmem:[%s1 + $0x88] sm:$0xf]
  %v36 = vld [vmem:[%s1 + $0x8c] sm:$0xff]
  %v37 = vld [vmem:[%s1 + $0x94] sm:$0xff]
  %v38 = vld [vmem:[%s1 + $0x9c] sm:$0xff]
  %v39 = vld [vmem:[%s1 + $0xa4] sm:$0xf]
  %v40 = vld [vmem:[%s1 + $0xa8] sm:$0xff]
  %v41 = vld [vmem:[%s1 + $0xb0] sm:$0xff]
  %v42 = vld [vmem:[%s1 + $0xb8] sm:$0xff]
  %v43 = vld [vmem:[%s1 + $0xc0] sm:$0xf]
  %v44 = vld [vmem:[%s1 + $0xc4] sm:$0xff]
  %v45 = vld [vmem:[%s1 + $0xcc] sm:$0xff]
  %v46 = vld [vmem:[%s1 + $0xd4] sm:$0xff]
  %v47 = vld [vmem:[%s1 + $0xdc] sm:$0xf]
  %v48 = vld [vmem:[%s1 + $0xe0] sm:$0xff]
  %v49 = vld [vmem:[%s1 + $0xe8] sm:$0xff]
  %v50 = vld [vmem:[%s1 + $0xf0] sm:$0xff]
  %v51 = vld [vmem:[%s1 + $0xf8] sm:$0xf]
  %v52 = vld [vmem:[%s1 + $0xfc] sm:$0xff]
  %v53 = vld [vmem:[%s1 + $0x104] sm:$0xff]
  %v54 = vld [vmem:[%s1 + $0x10c] sm:$0xff]
  %v55 = vld [vmem:[%s1 + $0x114] sm:$0xf]
  %v56 = vld [vmem:[%s1 + $0x118] sm:$0xff]
  %v57 = vld [vmem:[%s1 + $0x120] sm:$0xff]
  %v58 = vld [vmem:[%s1 + $0x128] sm:$0xff]
  %v59 = vld [vmem:[%s1 + $0x130] sm:$0xf]
  %v60 = vld [vmem:[%s1 + $0x134] sm:$0xff]
  %v61 = vld [vmem:[%s1 + $0x13c] sm:$0xff]
  %v62 = vld [vmem:[%s1 + $0x144] sm:$0xff]
  %v63 = vld [vmem:[%s1 + $0x14c] sm:$0xf]
  %v64 = vld [vmem:[%s1 + $0x150] sm:$0xff]
  %v65 = vld [vmem:[%s1 + $0x158] sm:$0xff]
  %v66 = vld [vmem:[%s1 + $0x160] sm:$0xff]
  %v67 = vld [vmem:[%s1 + $0x168] sm:$0xf]
  %v68 = vld [vmem:[%s1 + $0x16c] sm:$0xff]
  %v69 = vld [vmem:[%s1 + $0x174] sm:$0xff]
  %v70 = vld [vmem:[%s1 + $0x17c] sm:$0xff]
  %v71 = vld [vmem:[%s1 + $0x184] sm:$0xf]
  %v72 = vld [vmem:[%s1 + $0x188] sm:$0xff]
  %v73 = vld [vmem:[%s1 + $0x190] sm:$0xff]
  %v74 = vld [vmem:[%s1 + $0x198] sm:$0xff]
  %v75 = vld [vmem:[%s1 + $0x1a0] sm:$0xf]
  %v76 = vld [vmem:[%s1 + $0x1a4] sm:$0xff]
  %v77 = vld [vmem:[%s1 + $0x1ac] sm:$0xff]
  %v78 = vld [vmem:[%s1 + $0x1b4] sm:$0xff]
  %v79 = vld [vmem:[%s1 + $0x1bc] sm:$0xf]
  %v80 = vld [vmem:[%s1 + $0x1c0] sm:$0xff]
  %v81 = vld [vmem:[%s1 + $0x1c8] sm:$0xff]
  %v82 = vld [vmem:[%s1 + $0x1d0] sm:$0xff]
  %v83 = vld [vmem:[%s1 + $0x1d8] sm:$0xf]
  %v84 = vld [vmem:[%s1 + $0x1dc] sm:$0xff]
  %v85 = vld [vmem:[%s1 + $0x1e4] sm:$0xff]
  %v86 = vld [vmem:[%s1 + $0x1ec] sm:$0xff]
  %v87 = vld [vmem:[%s1 + $0x1f4] sm:$0xf]
  %v88 = vld [vmem:[%s1 + $0x1f8] sm:$0xff]
  %v89 = vld [vmem:[%s1 + $0x200] sm:$0xff]
  %v90 = vld [vmem:[%s1 + $0x208] sm:$0xff]
  %v91 = vld [vmem:[%s1 + $0x210] sm:$0xf]
  %v92 = vld [vmem:[%s1 + $0x214] sm:$0xff]
  %v93 = vld [vmem:[%s1 + $0x21c] sm:$0xff]
  %v94 = vld [vmem:[%s1 + $0x224] sm:$0xff]
  %v95 = vld [vmem:[%s1 + $0x22c] sm:$0xf]
  %v96 = vld [vmem:[%s1 + $0x230] sm:$0xff]
  %v97 = vld [vmem:[%s1 + $0x238] sm:$0xff]
  %v98 = vld [vmem:[%s1 + $0x240] sm:$0xff]
  %v99 = vld [vmem:[%s1 + $0x248] sm:$0xf]
  %v100 = vld [vmem:[%s1 + $0x24c] sm:$0xff]
  %v101 = vld [vmem:[%s1 + $0x254] sm:$0xff]
  %v102 = vld [vmem:[%s1 + $0x25c] sm:$0xff]
  %v103 = vld [vmem:[%s1 + $0x264] sm:$0xf]
  %v104 = vld [vmem:[%s1 + $0x268] sm:$0xff]
  %v105 = vld [vmem:[%s1 + $0x270] sm:$0xff]
  %v106 = vld [vmem:[%s1 + $0x278] sm:$0xff]
  %v107 = vld [vmem:[%s1 + $0x280] sm:$0xf]
  %v108 = vld [vmem:[%s1 + $0x284] sm:$0xff]
  %v109 = vld [vmem:[%s1 + $0x28c] sm:$0xff]
  %v110 = vld [vmem:[%s1 + $0x294] sm:$0xff]
  %v111 = vld [vmem:[%s1 + $0x29c] sm:$0xf]
  %v112 = vld [vmem:[%s1 + $0x2a0] sm:$0xff]
  %v113 = vld [vmem:[%s1 + $0x2a8] sm:$0xff]
  %v114 = vld [vmem:[%s1 + $0x2b0] sm:$0xff]
  %v115 = vld [vmem:[%s1 + $0x2b8] sm:$0xf]
  %v116 = vld [vmem:[%s1 + $0x2bc] sm:$0xff]
  %v117 = vld [vmem:[%s1 + $0x2c4] sm:$0xff]
  %v118 = vld [vmem:[%s1 + $0x2cc] sm:$0xff]
  %v119 = vld [vmem:[%s1 + $0x2d4] sm:$0xf]
  %v120 = vld [vmem:[%s1 + $0x2d8] sm:$0xff]
  %v121 = vld [vmem:[%s1 + $0x2e0] sm:$0xff]
  %v122 = vld [vmem:[%s1 + $0x2e8] sm:$0xff]
  %v123 = vld [vmem:[%s1 + $0x2f0] sm:$0xf]
  %v124 = vld [vmem:[%s2] sm:$0xff]
  %126 = vset.pattern.permute.xlu0 0
  %127 = vperm.xlu0 %126, %v124
  %v128 = vpop.permute.xlu0 %127
  %v131 = vunpack.c.l.b16 %v15
  %v132 = vunpack.c.h.b16 %v15
  %v133 = vpack.c.b16 %v131, %v131
  %v134 = vpack.c.b16 %v132, %v132
  %v244 = vunpack.c.l.b16 %v16
  %v245 = vunpack.c.h.b16 %v16
  %v246 = vunpack.c.l.b16 %v17
  %v247 = vunpack.c.h.b16 %v17
  %v248 = vunpack.c.l.b16 %v18
  %v249 = vunpack.c.h.b16 %v18
  %v250 = vunpack.c.l.b16 %v19
  %v251 = vunpack.c.l.b16 %v20
  %v252 = vunpack.c.h.b16 %v20
  %v253 = vunpack.c.l.b16 %v21
  %v254 = vunpack.c.h.b16 %v21
  %v255 = vunpack.c.l.b16 %v22
  %v256 = vunpack.c.h.b16 %v22
  %v257 = vunpack.c.l.b16 %v23
  %v258 = vunpack.c.l.b16 %v24
  %v259 = vunpack.c.h.b16 %v24
  %v260 = vunpack.c.l.b16 %v25
  %v261 = vunpack.c.h.b16 %v25
  %v262 = vunpack.c.l.b16 %v26
  %v263 = vunpack.c.h.b16 %v26
  %v264 = vunpack.c.l.b16 %v27
  %v265 = vunpack.c.l.b16 %v28
  %v266 = vunpack.c.h.b16 %v28
  %v267 = vunpack.c.l.b16 %v29
  %v268 = vunpack.c.h.b16 %v29
  %v269 = vunpack.c.l.b16 %v30
  %v270 = vunpack.c.h.b16 %v30
  %v271 = vunpack.c.l.b16 %v31
  %v272 = vunpack.c.l.b16 %v32
  %v273 = vunpack.c.h.b16 %v32
  %v274 = vunpack.c.l.b16 %v33
  %v275 = vunpack.c.h.b16 %v33
  %v276 = vunpack.c.l.b16 %v34
  %v277 = vunpack.c.h.b16 %v34
  %v278 = vunpack.c.l.b16 %v35
  %v279 = vunpack.c.l.b16 %v36
  %v280 = vunpack.c.h.b16 %v36
  %v281 = vunpack.c.l.b16 %v37
  %v282 = vunpack.c.h.b16 %v37
  %v283 = vunpack.c.l.b16 %v38
  %v284 = vunpack.c.h.b16 %v38
  %v285 = vunpack.c.l.b16 %v39
  %v286 = vunpack.c.l.b16 %v40
  %v287 = vunpack.c.h.b16 %v40
  %v288 = vunpack.c.l.b16 %v41
  %v289 = vunpack.c.h.b16 %v41
  %v290 = vunpack.c.l.b16 %v42
  %v291 = vunpack.c.h.b16 %v42
  %v292 = vunpack.c.l.b16 %v43
  %v293 = vunpack.c.l.b16 %v44
  %v294 = vunpack.c.h.b16 %v44
  %v295 = vunpack.c.l.b16 %v45
  %v296 = vunpack.c.h.b16 %v45
  %v297 = vunpack.c.l.b16 %v46
  %v298 = vunpack.c.h.b16 %v46
  %v299 = vunpack.c.l.b16 %v47
  %v300 = vunpack.c.l.b16 %v48
  %v301 = vunpack.c.h.b16 %v48
  %v302 = vunpack.c.l.b16 %v49
  %v303 = vunpack.c.h.b16 %v49
  %v304 = vunpack.c.l.b16 %v50
  %v305 = vunpack.c.h.b16 %v50
  %v306 = vunpack.c.l.b16 %v51
  %v307 = vunpack.c.l.b16 %v52
  %v308 = vunpack.c.h.b16 %v52
  %v309 = vunpack.c.l.b16 %v53
  %v310 = vunpack.c.h.b16 %v53
  %v311 = vunpack.c.l.b16 %v54
  %v312 = vunpack.c.h.b16 %v54
  %v313 = vunpack.c.l.b16 %v55
  %v314 = vunpack.c.l.b16 %v56
  %v315 = vunpack.c.h.b16 %v56
  %v316 = vunpack.c.l.b16 %v57
  %v317 = vunpack.c.h.b16 %v57
  %v318 = vunpack.c.l.b16 %v58
  %v319 = vunpack.c.h.b16 %v58
  %v320 = vunpack.c.l.b16 %v59
  %v321 = vunpack.c.l.b16 %v60
  %v322 = vunpack.c.h.b16 %v60
  %v323 = vunpack.c.l.b16 %v61
  %v324 = vunpack.c.h.b16 %v61
  %v325 = vunpack.c.l.b16 %v62
  %v326 = vunpack.c.h.b16 %v62
  %v327 = vunpack.c.l.b16 %v63
  %v328 = vunpack.c.l.b16 %v64
  %v329 = vunpack.c.h.b16 %v64
  %v330 = vunpack.c.l.b16 %v65
  %v331 = vunpack.c.h.b16 %v65
  %v332 = vunpack.c.l.b16 %v66
  %v333 = vunpack.c.h.b16 %v66
  %v334 = vunpack.c.l.b16 %v67
  %v335 = vunpack.c.l.b16 %v68
  %v336 = vunpack.c.h.b16 %v68
  %v337 = vunpack.c.l.b16 %v69
  %v338 = vunpack.c.h.b16 %v69
  %v339 = vunpack.c.l.b16 %v70
  %v340 = vunpack.c.h.b16 %v70
  %v341 = vunpack.c.l.b16 %v71
  %v342 = vunpack.c.l.b16 %v72
  %v343 = vunpack.c.h.b16 %v72
  %v344 = vunpack.c.l.b16 %v73
  %v345 = vunpack.c.h.b16 %v73
  %v346 = vunpack.c.l.b16 %v74
  %v347 = vunpack.c.h.b16 %v74
  %v348 = vunpack.c.l.b16 %v75
  %v349 = vunpack.c.l.b16 %v76
  %v350 = vunpack.c.h.b16 %v76
  %v351 = vunpack.c.l.b16 %v77
  %v352 = vunpack.c.h.b16 %v77
  %v353 = vunpack.c.l.b16 %v78
  %v354 = vunpack.c.h.b16 %v78
  %v355 = vunpack.c.l.b16 %v79
  %v356 = vunpack.c.l.b16 %v80
  %v357 = vunpack.c.h.b16 %v80
  %v358 = vunpack.c.l.b16 %v81
  %v359 = vunpack.c.h.b16 %v81
  %v360 = vunpack.c.l.b16 %v82
  %v361 = vunpack.c.h.b16 %v82
  %v362 = vunpack.c.l.b16 %v83
  %v363 = vunpack.c.l.b16 %v84
  %v364 = vunpack.c.h.b16 %v84
  %v365 = vunpack.c.l.b16 %v85
  %v366 = vunpack.c.h.b16 %v85
  %v367 = vunpack.c.l.b16 %v86
  %v368 = vunpack.c.h.b16 %v86
  %v369 = vunpack.c.l.b16 %v87
  %v370 = vunpack.c.l.b16 %v88
  %v371 = vunpack.c.h.b16 %v88
  %v372 = vunpack.c.l.b16 %v89
  %v373 = vunpack.c.h.b16 %v89
  %v374 = vunpack.c.l.b16 %v90
  %v375 = vunpack.c.h.b16 %v90
  %v376 = vunpack.c.l.b16 %v91
  %v377 = vunpack.c.l.b16 %v92
  %v378 = vunpack.c.h.b16 %v92
  %v379 = vunpack.c.l.b16 %v93
  %v380 = vunpack.c.h.b16 %v93
  %v381 = vunpack.c.l.b16 %v94
  %v382 = vunpack.c.h.b16 %v94
  %v383 = vunpack.c.l.b16 %v95
  %v384 = vunpack.c.l.b16 %v96
  %v385 = vunpack.c.h.b16 %v96
  %v386 = vunpack.c.l.b16 %v97
  %v387 = vunpack.c.h.b16 %v97
  %v388 = vunpack.c.l.b16 %v98
  %v389 = vunpack.c.h.b16 %v98
  %v390 = vunpack.c.l.b16 %v99
  %v391 = vunpack.c.l.b16 %v100
  %v392 = vunpack.c.h.b16 %v100
  %v393 = vunpack.c.l.b16 %v101
  %v394 = vunpack.c.h.b16 %v101
  %v395 = vunpack.c.l.b16 %v102
  %v396 = vunpack.c.h.b16 %v102
  %v397 = vunpack.c.l.b16 %v103
  %v398 = vunpack.c.l.b16 %v104
  %v399 = vunpack.c.h.b16 %v104
  %v400 = vunpack.c.l.b16 %v105
  %v401 = vunpack.c.h.b16 %v105
  %v402 = vunpack.c.l.b16 %v106
  %v403 = vunpack.c.h.b16 %v106
  %v404 = vunpack.c.l.b16 %v107
  %v405 = vunpack.c.l.b16 %v108
  %v406 = vunpack.c.h.b16 %v108
  %v407 = vunpack.c.l.b16 %v109
  %v408 = vunpack.c.h.b16 %v109
  %v409 = vunpack.c.l.b16 %v110
  %v410 = vunpack.c.h.b16 %v110
  %v411 = vunpack.c.l.b16 %v111
  %v412 = vunpack.c.l.b16 %v112
  %v413 = vunpack.c.h.b16 %v112
  %v414 = vunpack.c.l.b16 %v113
  %v415 = vunpack.c.h.b16 %v113
  %v416 = vunpack.c.l.b16 %v114
  %v417 = vunpack.c.h.b16 %v114
  %v418 = vunpack.c.l.b16 %v115
  %v419 = vunpack.c.l.b16 %v116
  %v420 = vunpack.c.h.b16 %v116
  %v421 = vunpack.c.l.b16 %v117
  %v422 = vunpack.c.h.b16 %v117
  %v423 = vunpack.c.l.b16 %v118
  %v424 = vunpack.c.h.b16 %v118
  %v425 = vunpack.c.l.b16 %v119
  %v426 = vunpack.c.l.b16 %v120
  %v427 = vunpack.c.h.b16 %v120
  %v428 = vunpack.c.l.b16 %v121
  %v429 = vunpack.c.h.b16 %v121
  %v430 = vunpack.c.l.b16 %v122
  %v431 = vunpack.c.h.b16 %v122
  %v432 = vunpack.c.l.b16 %v123
  %v433 = vpack.c.b16 %v251, %v244
  %v434 = vpack.c.b16 %v252, %v245
  %v435 = vpack.c.b16 %v253, %v246
  %v436 = vpack.c.b16 %v254, %v247
  %v437 = vpack.c.b16 %v255, %v248
  %v438 = vpack.c.b16 %v256, %v249
  %v439 = vpack.c.b16 %v257, %v250
  %v440 = vpack.c.b16 %v265, %v258
  %v441 = vpack.c.b16 %v266, %v259
  %v442 = vpack.c.b16 %v267, %v260
  %v443 = vpack.c.b16 %v268, %v261
  %v444 = vpack.c.b16 %v269, %v262
  %v445 = vpack.c.b16 %v270, %v263
  %v446 = vpack.c.b16 %v271, %v264
  %v447 = vpack.c.b16 %v279, %v272
  %v448 = vpack.c.b16 %v280, %v273
  %v449 = vpack.c.b16 %v281, %v274
  %v450 = vpack.c.b16 %v282, %v275
  %v451 = vpack.c.b16 %v283, %v276
  %v452 = vpack.c.b16 %v284, %v277
  %v453 = vpack.c.b16 %v285, %v278
  %v454 = vpack.c.b16 %v293, %v286
  %v455 = vpack.c.b16 %v294, %v287
  %v456 = vpack.c.b16 %v295, %v288
  %v457 = vpack.c.b16 %v296, %v289
  %v458 = vpack.c.b16 %v297, %v290
  %v459 = vpack.c.b16 %v298, %v291
  %v460 = vpack.c.b16 %v299, %v292
  %v461 = vpack.c.b16 %v307, %v300
  %v462 = vpack.c.b16 %v308, %v301
  %v463 = vpack.c.b16 %v309, %v302
  %v464 = vpack.c.b16 %v310, %v303
  %v465 = vpack.c.b16 %v311, %v304
  %v466 = vpack.c.b16 %v312, %v305
  %v467 = vpack.c.b16 %v313, %v306
  %v468 = vpack.c.b16 %v321, %v314
  %v469 = vpack.c.b16 %v322, %v315
  %v470 = vpack.c.b16 %v323, %v316
  %v471 = vpack.c.b16 %v324, %v317
  %v472 = vpack.c.b16 %v325, %v318
  %v473 = vpack.c.b16 %v326, %v319
  %v474 = vpack.c.b16 %v327, %v320
  %v475 = vpack.c.b16 %v335, %v328
  %v476 = vpack.c.b16 %v336, %v329
  %v477 = vpack.c.b16 %v337, %v330
  %v478 = vpack.c.b16 %v338, %v331
  %v479 = vpack.c.b16 %v339, %v332
  %v480 = vpack.c.b16 %v340, %v333
  %v481 = vpack.c.b16 %v341, %v334
  %v482 = vpack.c.b16 %v349, %v342
  %v483 = vpack.c.b16 %v350, %v343
  %v484 = vpack.c.b16 %v351, %v344
  %v485 = vpack.c.b16 %v352, %v345
  %v486 = vpack.c.b16 %v353, %v346
  %v487 = vpack.c.b16 %v354, %v347
  %v488 = vpack.c.b16 %v355, %v348
  %v489 = vpack.c.b16 %v363, %v356
  %v490 = vpack.c.b16 %v364, %v357
  %v491 = vpack.c.b16 %v365, %v358
  %v492 = vpack.c.b16 %v366, %v359
  %v493 = vpack.c.b16 %v367, %v360
  %v494 = vpack.c.b16 %v368, %v361
  %v495 = vpack.c.b16 %v369, %v362
  %v496 = vpack.c.b16 %v377, %v370
  %v497 = vpack.c.b16 %v378, %v371
  %v498 = vpack.c.b16 %v379, %v372
  %v499 = vpack.c.b16 %v380, %v373
  %v500 = vpack.c.b16 %v381, %v374
  %v501 = vpack.c.b16 %v382, %v375
  %v502 = vpack.c.b16 %v383, %v376
  %v503 = vpack.c.b16 %v391, %v384
  %v504 = vpack.c.b16 %v392, %v385
  %v505 = vpack.c.b16 %v393, %v386
  %v506 = vpack.c.b16 %v394, %v387
  %v507 = vpack.c.b16 %v395, %v388
  %v508 = vpack.c.b16 %v396, %v389
  %v509 = vpack.c.b16 %v397, %v390
  %v510 = vpack.c.b16 %v405, %v398
  %v511 = vpack.c.b16 %v406, %v399
  %v512 = vpack.c.b16 %v407, %v400
  %v513 = vpack.c.b16 %v408, %v401
  %v514 = vpack.c.b16 %v409, %v402
  %v515 = vpack.c.b16 %v410, %v403
  %v516 = vpack.c.b16 %v411, %v404
  %v517 = vpack.c.b16 %v419, %v412
  %v518 = vpack.c.b16 %v420, %v413
  %v519 = vpack.c.b16 %v421, %v414
  %v520 = vpack.c.b16 %v422, %v415
  %v521 = vpack.c.b16 %v423, %v416
  %v522 = vpack.c.b16 %v424, %v417
  %v523 = vpack.c.b16 %v425, %v418
  %v524 = vpack.c.b16 %v426, %v426
  %v525 = vpack.c.b16 %v427, %v427
  %v526 = vpack.c.b16 %v428, %v428
  %v527 = vpack.c.b16 %v429, %v429
  %v528 = vpack.c.b16 %v430, %v430
  %v529 = vpack.c.b16 %v431, %v431
  %v530 = vpack.c.b16 %v432, %v432
  %vm622 = vcmask 719872
  %v624 = vsel %vm622, %v134, 0
  %vm626 = vcmask 1043456
  %v628 = vsel %vm626, %v524, 0
  %v631 = vsel %vm626, %v525, 0
  %v634 = vsel %vm626, %v526, 0
  %v637 = vsel %vm626, %v527, 0
  %v640 = vsel %vm626, %v528, 0
  %v643 = vsel %vm626, %v529, 0
  %v646 = vsel %vm626, %v530, 0
  %648 = vmatprep.subr.bf16.mxu0 %v434
  %649 = vmatpush1.bf16.msra.mxu0 %v433
  %650 = vmatprep.subr.bf16.mxu0 %v441
  %651 = vmatpush1.bf16.msra.mxu0 %v440
  %652 = vmatprep.subr.bf16.mxu0 %v448
  %653 = vmatpush1.bf16.msra.mxu0 %v447
  %654 = vmatprep.subr.bf16.mxu0 %v455
  %655 = vmatpush1.bf16.msra.mxu0 %v454
  %656 = vmatprep.subr.bf16.mxu0 %v462
  %657 = vmatpush1.bf16.msra.mxu0 %v461
  %658 = vmatprep.subr.bf16.mxu0 %v469
  %659 = vmatpush1.bf16.msra.mxu0 %v468
  %660 = vmatprep.subr.bf16.mxu0 %v476
  %661 = vmatpush1.bf16.msra.mxu0 %v475
  %662 = vmatprep.subr.bf16.mxu0 %v483
  %663 = vmatpush1.bf16.msra.mxu0 %v482
  %664 = vmatprep.subr.bf16.mxu0 %v490
  %665 = vmatpush1.bf16.msra.mxu0 %v489
  %666 = vmatprep.subr.bf16.mxu0 %v497
  %667 = vmatpush1.bf16.msra.mxu0 %v496
  %668 = vmatprep.subr.bf16.mxu0 %v504
  %669 = vmatpush1.bf16.msra.mxu0 %v503
  %670 = vmatprep.subr.bf16.mxu0 %v511
  %671 = vmatpush1.bf16.msra.mxu0 %v510
  %672 = vmatprep.subr.bf16.mxu0 %v518
  %673 = vmatpush1.bf16.msra.mxu0 %v517
  %674 = vmatprep.subr.bf16.mxu0 %v631
  %675 = vmatpush1.bf16.msra.mxu0 %v628
  %676 = vmatprep.subr.bf16.mxu0 0
  %677 = vmatpush1.bf16.msra.mxu0 0
  %678 = vmatprep.subr.bf16.mxu0 0
  %679 = vmatpush1.bf16.msra.mxu0 0
  %680 = vmatprep.mubr.bf16.mxu0 %v624
  %681 = vmatmul.mubr.bf16.gmra.mrb[0].mxu0 %v133
  %v682 = vpop.f32.mrb[0].mxu0
  %v683 = vadd.f32 %v128, %v682
  %v684 = vpop.f32.mrb[0].mxu0
  %v685 = vadd.f32 %v128, %v684
  %v686 = vpop.f32.mrb[0].mxu0
  %v687 = vpop.f32.mrb[0].mxu0
  %688 = vdwg.mxu0
  %689 = vmatprep.subr.bf16.mxu0 %v436
  %690 = vmatpush1.bf16.msra.mxu0 %v435
  %691 = vmatprep.subr.bf16.mxu0 %v443
  %692 = vmatpush1.bf16.msra.mxu0 %v442
  %693 = vmatprep.subr.bf16.mxu0 %v450
  %694 = vmatpush1.bf16.msra.mxu0 %v449
  %695 = vmatprep.subr.bf16.mxu0 %v457
  %696 = vmatpush1.bf16.msra.mxu0 %v456
  %697 = vmatprep.subr.bf16.mxu0 %v464
  %698 = vmatpush1.bf16.msra.mxu0 %v463
  %699 = vmatprep.subr.bf16.mxu0 %v471
  %700 = vmatpush1.bf16.msra.mxu0 %v470
  %701 = vmatprep.subr.bf16.mxu0 %v478
  %702 = vmatpush1.bf16.msra.mxu0 %v477
  %703 = vmatprep.subr.bf16.mxu0 %v485
  %704 = vmatpush1.bf16.msra.mxu0 %v484
  %705 = vmatprep.subr.bf16.mxu0 %v492
  %706 = vmatpush1.bf16.msra.mxu0 %v491
  %707 = vmatprep.subr.bf16.mxu0 %v499
  %708 = vmatpush1.bf16.msra.mxu0 %v498
  %709 = vmatprep.subr.bf16.mxu0 %v506
  %710 = vmatpush1.bf16.msra.mxu0 %v505
  %711 = vmatprep.subr.bf16.mxu0 %v513
  %712 = vmatpush1.bf16.msra.mxu0 %v512
  %713 = vmatprep.subr.bf16.mxu0 %v520
  %714 = vmatpush1.bf16.msra.mxu0 %v519
  %715 = vmatprep.subr.bf16.mxu0 %v637
  %716 = vmatpush1.bf16.msra.mxu0 %v634
  %717 = vmatprep.subr.bf16.mxu0 0
  %718 = vmatpush1.bf16.msra.mxu0 0
  %719 = vmatprep.subr.bf16.mxu0 0
  %720 = vmatpush1.bf16.msra.mxu0 0
  %721 = vmatprep.mubr.bf16.mxu0 %v624
  %722 = vmatmul.mubr.bf16.gmra.mrb[0].mxu0 %v133
  %v723 = vpop.f32.mrb[0].mxu0
  %v724 = vadd.f32 %v128, %v723
  %v725 = vpop.f32.mrb[0].mxu0
  %v726 = vadd.f32 %v128, %v725
  %v727 = vpop.f32.mrb[0].mxu0
  %v728 = vpop.f32.mrb[0].mxu0
  %729 = vdwg.mxu0
  %730 = vmatprep.subr.bf16.mxu0 %v438
  %731 = vmatpush1.bf16.msra.mxu0 %v437
  %732 = vmatprep.subr.bf16.mxu0 %v445
  %733 = vmatpush1.bf16.msra.mxu0 %v444
  %734 = vmatprep.subr.bf16.mxu0 %v452
  %735 = vmatpush1.bf16.msra.mxu0 %v451
  %736 = vmatprep.subr.bf16.mxu0 %v459
  %737 = vmatpush1.bf16.msra.mxu0 %v458
  %738 = vmatprep.subr.bf16.mxu0 %v466
  %739 = vmatpush1.bf16.msra.mxu0 %v465
  %740 = vmatprep.subr.bf16.mxu0 %v473
  %741 = vmatpush1.bf16.msra.mxu0 %v472
  %742 = vmatprep.subr.bf16.mxu0 %v480
  %743 = vmatpush1.bf16.msra.mxu0 %v479
  %744 = vmatprep.subr.bf16.mxu0 %v487
  %745 = vmatpush1.bf16.msra.mxu0 %v486
  %746 = vmatprep.subr.bf16.mxu0 %v494
  %747 = vmatpush1.bf16.msra.mxu0 %v493
  %748 = vmatprep.subr.bf16.mxu0 %v501
  %749 = vmatpush1.bf16.msra.mxu0 %v500
  %750 = vmatprep.subr.bf16.mxu0 %v508
  %751 = vmatpush1.bf16.msra.mxu0 %v507
  %752 = vmatprep.subr.bf16.mxu0 %v515
  %753 = vmatpush1.bf16.msra.mxu0 %v514
  %754 = vmatprep.subr.bf16.mxu0 %v522
  %755 = vmatpush1.bf16.msra.mxu0 %v521
  %756 = vmatprep.subr.bf16.mxu0 %v643
  %757 = vmatpush1.bf16.msra.mxu0 %v640
  %758 = vmatprep.subr.bf16.mxu0 0
  %759 = vmatpush1.bf16.msra.mxu0 0
  %760 = vmatprep.subr.bf16.mxu0 0
  %761 = vmatpush1.bf16.msra.mxu0 0
  %762 = vmatprep.mubr.bf16.mxu0 %v624
  %763 = vmatmul.mubr.bf16.gmra.mrb[0].mxu0 %v133
  %v764 = vpop.f32.mrb[0].mxu0
  %v765 = vadd.f32 %v128, %v764
  %v766 = vpop.f32.mrb[0].mxu0
  %v767 = vadd.f32 %v128, %v766
  %v768 = vpop.f32.mrb[0].mxu0
  %v769 = vpop.f32.mrb[0].mxu0
  %770 = vdwg.mxu0
  %771 = vmatprep.subr.bf16.mxu0 0
  %772 = vmatpush1.bf16.msra.mxu0 %v439
  %773 = vmatprep.subr.bf16.mxu0 0
  %774 = vmatpush1.bf16.msra.mxu0 %v446
  %775 = vmatprep.subr.bf16.mxu0 0
  %776 = vmatpush1.bf16.msra.mxu0 %v453
  %777 = vmatprep.subr.bf16.mxu0 0
  %778 = vmatpush1.bf16.msra.mxu0 %v460
  %779 = vmatprep.subr.bf16.mxu0 0
  %780 = vmatpush1.bf16.msra.mxu0 %v467
  %781 = vmatprep.subr.bf16.mxu0 0
  %782 = vmatpush1.bf16.msra.mxu0 %v474
  %783 = vmatprep.subr.bf16.mxu0 0
  %784 = vmatpush1.bf16.msra.mxu0 %v481
  %785 = vmatprep.subr.bf16.mxu0 0
  %786 = vmatpush1.bf16.msra.mxu0 %v488
  %787 = vmatprep.subr.bf16.mxu0 0
  %788 = vmatpush1.bf16.msra.mxu0 %v495
  %789 = vmatprep.subr.bf16.mxu0 0
  %790 = vmatpush1.bf16.msra.mxu0 %v502
  %791 = vmatprep.subr.bf16.mxu0 0
  %792 = vmatpush1.bf16.msra.mxu0 %v509
  %793 = vmatprep.subr.bf16.mxu0 0
  %794 = vmatpush1.bf16.msra.mxu0 %v516
  %795 = vmatprep.subr.bf16.mxu0 0
  %796 = vmatpush1.bf16.msra.mxu0 %v523
  %797 = vmatprep.subr.bf16.mxu0 0
  %798 = vmatpush1.bf16.msra.mxu0 %v646
  %799 = vmatprep.subr.bf16.mxu0 0
  %800 = vmatpush1.bf16.msra.mxu0 0
  %801 = vmatprep.subr.bf16.mxu0 0
  %802 = vmatpush1.bf16.msra.mxu0 0
  %803 = vmatprep.mubr.bf16.mxu0 %v624
  %804 = vmatmul.mubr.bf16.gmra.mrb[0].mxu0 %v133
  %v805 = vpop.f32.mrb[0].mxu0
  %v806 = vadd.f32 %v128, %v805
  %v807 = vpop.f32.mrb[0].mxu0
  %v808 = vpop.f32.mrb[0].mxu0
  %v809 = vpop.f32.mrb[0].mxu0
  %810 = vdwg.mxu0
  %vm811 = vcmp.ge.f32.partialorder %v683, 0.0
  %vm812 = vcmp.ge.f32.partialorder %v685, 0.0
  %vm813 = vcmp.ge.f32.partialorder %v724, 0.0
  %vm814 = vcmp.ge.f32.partialorder %v726, 0.0
  %vm815 = vcmp.ge.f32.partialorder %v765, 0.0
  %vm816 = vcmp.ge.f32.partialorder %v767, 0.0
  %vm817 = vcmp.ge.f32.partialorder %v806, 0.0
  %v818 = vmul.f32 %v683, 0.2
  %v819 = vmul.f32 %v685, 0.2
  %v820 = vmul.f32 %v724, 0.2
  %v821 = vmul.f32 %v726, 0.2
  %v822 = vmul.f32 %v765, 0.2
  %v823 = vmul.f32 %v767, 0.2
  %v824 = vmul.f32 %v806, 0.2
  %v825 = vsel %vm811, %v683, %v818
  %v826 = vsel %vm812, %v685, %v819
  %v827 = vsel %vm813, %v724, %v820
  %v828 = vsel %vm814, %v726, %v821
  %v829 = vsel %vm815, %v765, %v822
  %v830 = vsel %vm816, %v767, %v823
  %v831 = vsel %vm817, %v806, %v824
  %v832 = vpack.c.bf16 %v825, %v825
  %v833 = vpack.c.bf16 %v826, %v826
  %v834 = vpack.c.bf16 %v827, %v827
  %v835 = vpack.c.bf16 %v828, %v828
  %v836 = vpack.c.bf16 %v829, %v829
  %v837 = vpack.c.bf16 %v830, %v830
  %v838 = vpack.c.bf16 %v831, %v831
  %v846 = vunpack.c.l.b16 %v832
  %v847 = vunpack.c.l.b16 %v833
  %v848 = vunpack.c.l.b16 %v834
  %v849 = vunpack.c.l.b16 %v835
  %v850 = vunpack.c.l.b16 %v836
  %v851 = vunpack.c.l.b16 %v837
  %v852 = vunpack.c.l.b16 %v838
  %v853 = vpack.c.b16 %v847, %v846
  %v854 = vpack.c.b16 %v849, %v848
  %v855 = vpack.c.b16 %v851, %v850
  %v856 = vpack.c.b16 %v852, %v852
  %861 = vst [vmem:[%s3] sm:$0xff] %v853
  %862 = vst [vmem:[%s3 + $0x8] sm:$0xff] %v854
  %863 = vst [vmem:[%s3 + $0x10] sm:$0xff] %v855
  %vm864 = vcmask 945152
  %865 = vst.msk [vmem:[%s3 + $0x18] sm:$0xf] %vm864, %v856
  // Predicated region
  $region14: #{ms_stft_discriminator_forward.23} parent=0 // pred_check
    _
  $region15: #{ms_stft_discriminator_forward.23} parent=0 // pred_check_branch
    %867 = sbr.rel (0) target = $region17
  $region16: #{ms_stft_discriminator_forward.23} parent=0 // pred_region
    _
  $region17: #{ms_stft_discriminator_forward.23} parent=0 // pred_fallthru
    _
  // Predicated region
  $region18: #{ms_stft_discriminator_forward.23} parent=0 // pred_check
    _
  $region19: #{ms_stft_discriminator_forward.23} parent=0 // pred_check_branch
    %869 = sbr.rel (0) target = $region21
  $region20: #{ms_stft_discriminator_forward.23} parent=0 // pred_region
    _
  $region21: #{ms_stft_discriminator_forward.23} parent=0 // pred_fallthru
    _

// kernel: ms_stft_discriminator_forward.24
$region0: #{ms_stft_discriminator_forward.24}
  #allocation0 [shape = 'u32[]', space=smem, size = 0x4, offset = 0x4, fixed_abs, tag = 'smem constant byte address 0x4 - core index']
  #allocation1 [shape = 'u32[144,128]{1,0:T(1,128)}', space=vmem, size = 0x12000, scoped, tag = 'internal scratch']
  %s0 = inlined_call_operand.vmem [shape: bf16[8,216], index: 0, kind: input, shape index: {}]
  %s1 = inlined_call_operand.vmem [shape: bf16[216,468], index: 1, kind: input, shape index: {}]
  %s2 = inlined_call_operand.vmem [shape: f32[8,1], index: 2, kind: input, shape index: {}]
  %s3 = inlined_call_operand.vmem [shape: bf16[8,468], index: 3, kind: output, shape index: {}]
  %s4 = sld [smem:[#allocation0]]
  $region22: #{ms_stft_discriminator_forward.24} parent=0
    _
  %s6 = ssub.s32 1, %s4
  %s7 = scalar_select 0, %s6, %s4
  // Predicated region
  $region2: #{ms_stft_discriminator_forward.24} parent=0 // pred_check
    _
  $region3: #{ms_stft_discriminator_forward.24} parent=0 // pred_check_branch
    %9 = sbr.rel (0) target = $region5
  $region4: #{ms_stft_discriminator_forward.24} parent=0 // pred_region
    _
  $region5: #{ms_stft_discriminator_forward.24} parent=0 // pred_fallthru
    _
  // Predicated region
  $region6: #{ms_stft_discriminator_forward.24} parent=0 // pred_check
    _
  $region7: #{ms_stft_discriminator_forward.24} parent=0 // pred_check_branch
    %11 = sbr.rel (0) target = $region9
  $region8: #{ms_stft_discriminator_forward.24} parent=0 // pred_region
    _
  $region9: #{ms_stft_discriminator_forward.24} parent=0 // pred_fallthru
    _
  // Predicated region
  $region10: #{ms_stft_discriminator_forward.24} parent=0 // pred_check
    _
  $region11: #{ms_stft_discriminator_forward.24} parent=0 // pred_check_branch
    %13 = sbr.rel (0) target = $region13
  $region12: #{ms_stft_discriminator_forward.24} parent=0 // pred_region
    _
  $region13: #{ms_stft_discriminator_forward.24} parent=0 // pred_fallthru
    _
  %v15 = vld [vmem:[%s0] sm:$0xff]
  %v16 = vld [vmem:[%s1] sm:$0xff]
  %v17 = vld [vmem:[%s1 + $0x8] sm:$0xff]
  %v18 = vld [vmem:[%s1 + $0x10] sm:$0xff]
  %v19 = vld [vmem:[%s1 + $0x18] sm:$0xff]
  %v20 = vld [vmem:[%s1 + $0x20] sm:$0xff]
  %v21 = vld [vmem:[%s1 + $0x28] sm:$0xff]
  %v22 = vld [vmem:[%s1 + $0x30] sm:$0xff]
  %v23 = vld [vmem:[%s1 + $0x38] sm:$0xff]
  %v24 = vld [vmem:[%s1 + $0x40] sm:$0xff]
  %v25 = vld [vmem:[%s1 + $0x48] sm:$0xff]
  %v26 = vld [vmem:[%s1 + $0x50] sm:$0xff]
  %v27 = vld [vmem:[%s1 + $0x58] sm:$0xff]
  %v28 = vld [vmem:[%s1 + $0x60] sm:$0xff]
  %v29 = vld [vmem:[%s1 + $0x68] sm:$0xff]
  %v30 = vld [vmem:[%s1 + $0x70] sm:$0xff]
  %v31 = vld [vmem:[%s1 + $0x78] sm:$0xff]
  %v32 = vld [vmem:[%s1 + $0x80] sm:$0xff]
  %v33 = vld [vmem:[%s1 + $0x88] sm:$0xff]
  %v34 = vld [vmem:[%s1 + $0x90] sm:$0xff]
  %v35 = vld [vmem:[%s1 + $0x98] sm:$0xff]
  %v36 = vld [vmem:[%s1 + $0xa0] sm:$0xff]
  %v37 = vld [vmem:[%s1 + $0xa8] sm:$0xff]
  %v38 = vld [vmem:[%s1 + $0xb0] sm:$0xff]
  %v39 = vld [vmem:[%s1 + $0xb8] sm:$0xff]
  %v40 = vld [vmem:[%s1 + $0xc0] sm:$0xff]
  %v41 = vld [vmem:[%s1 + $0xc8] sm:$0xff]
  %v42 = vld [vmem:[%s1 + $0xd0] sm:$0xff]
  %v43 = vld [vmem:[%s1 + $0xd8] sm:$0xff]
  %v44 = vld [vmem:[%s1 + $0xe0] sm:$0xff]
  %v45 = vld [vmem:[%s1 + $0xe8] sm:$0xff]
  %v46 = vld [vmem:[%s1 + $0xf0] sm:$0xff]
  %v47 = vld [vmem:[%s1 + $0xf8] sm:$0xff]
  %v48 = vld [vmem:[%s1 + $0x100] sm:$0xff]
  %v49 = vld [vmem:[%s1 + $0x108] sm:$0xff]
  %v50 = vld [vmem:[%s1 + $0x110] sm:$0xff]
  %v51 = vld [vmem:[%s1 + $0x118] sm:$0xff]
  %v52 = vld [vmem:[%s1 + $0x120] sm:$0xff]
  %v53 = vld [vmem:[%s1 + $0x128] sm:$0xff]
  %v54 = vld [vmem:[%s1 + $0x130] sm:$0xff]
  %v55 = vld [vmem:[%s1 + $0x138] sm:$0xff]
  %v56 = vld [vmem:[%s1 + $0x140] sm:$0xff]
  %v57 = vld [vmem:[%s1 + $0x148] sm:$0xff]
  %v58 = vld [vmem:[%s1 + $0x150] sm:$0xff]
  %v59 = vld [vmem:[%s1 + $0x158] sm:$0xff]
  %v60 = vld [vmem:[%s1 + $0x160] sm:$0xff]
  %v61 = vld [vmem:[%s1 + $0x168] sm:$0xff]
  %v62 = vld [vmem:[%s1 + $0x170] sm:$0xff]
  %v63 = vld [vmem:[%s1 + $0x178] sm:$0xff]
  %v64 = vld [vmem:[%s1 + $0x180] sm:$0xff]
  %v65 = vld [vmem:[%s1 + $0x188] sm:$0xff]
  %v66 = vld [vmem:[%s1 + $0x190] sm:$0xff]
  %v67 = vld [vmem:[%s1 + $0x198] sm:$0xff]
  %v68 = vld [vmem:[%s1 + $0x1a0] sm:$0xff]
  %v69 = vld [vmem:[%s1 + $0x1a8] sm:$0xff]
  %v70 = vld [vmem:[%s2] sm:$0xff]
  %72 = vset.pattern.permute.xlu0 0
  %73 = vperm.xlu0 %72, %v70
  %v74 = vpop.permute.xlu0 %73
  %v77 = vunpack.c.l.b16 %v15
  %v78 = vunpack.c.h.b16 %v15
  %v79 = vpack.c.b16 %v77, %v77
  %v80 = vpack.c.b16 %v78, %v78
  %v136 = vunpack.c.l.b16 %v16
  %v137 = vunpack.c.h.b16 %v16
  %v138 = vunpack.c.l.b16 %v17
  %v139 = vunpack.c.h.b16 %v17
  %v140 = vunpack.c.l.b16 %v18
  %v141 = vunpack.c.h.b16 %v18
  %v142 = vunpack.c.l.b16 %v19
  %v143 = vunpack.c.h.b16 %v19
  %v144 = vunpack.c.l.b16 %v20
  %v145 = vunpack.c.h.b16 %v20
  %v146 = vunpack.c.l.b16 %v21
  %v147 = vunpack.c.h.b16 %v21
  %v148 = vunpack.c.l.b16 %v22
  %v149 = vunpack.c.h.b16 %v22
  %v150 = vunpack.c.l.b16 %v23
  %v151 = vunpack.c.h.b16 %v23
  %v152 = vunpack.c.l.b16 %v24
  %v153 = vunpack.c.h.b16 %v24
  %v154 = vunpack.c.l.b16 %v25
  %v155 = vunpack.c.h.b16 %v25
  %v156 = vunpack.c.l.b16 %v26
  %v157 = vunpack.c.h.b16 %v26
  %v158 = vunpack.c.l.b16 %v27
  %v159 = vunpack.c.h.b16 %v27
  %v160 = vunpack.c.l.b16 %v28
  %v161 = vunpack.c.h.b16 %v28
  %v162 = vunpack.c.l.b16 %v29
  %v163 = vunpack.c.h.b16 %v29
  %v164 = vunpack.c.l.b16 %v30
  %v165 = vunpack.c.h.b16 %v30
  %v166 = vunpack.c.l.b16 %v31
  %v167 = vunpack.c.h.b16 %v31
  %v168 = vunpack.c.l.b16 %v32
  %v169 = vunpack.c.h.b16 %v32
  %v170 = vunpack.c.l.b16 %v33
  %v171 = vunpack.c.h.b16 %v33
  %v172 = vunpack.c.l.b16 %v34
  %v173 = vunpack.c.h.b16 %v34
  %v174 = vunpack.c.l.b16 %v35
  %v175 = vunpack.c.h.b16 %v35
  %v176 = vunpack.c.l.b16 %v36
  %v177 = vunpack.c.h.b16 %v36
  %v178 = vunpack.c.l.b16 %v37
  %v179 = vunpack.c.h.b16 %v37
  %v180 = vunpack.c.l.b16 %v38
  %v181 = vunpack.c.h.b16 %v38
  %v182 = vunpack.c.l.b16 %v39
  %v183 = vunpack.c.h.b16 %v39
  %v184 = vunpack.c.l.b16 %v40
  %v185 = vunpack.c.h.b16 %v40
  %v186 = vunpack.c.l.b16 %v41
  %v187 = vunpack.c.h.b16 %v41
  %v188 = vunpack.c.l.b16 %v42
  %v189 = vunpack.c.h.b16 %v42
  %v190 = vunpack.c.l.b16 %v43
  %v191 = vunpack.c.h.b16 %v43
  %v192 = vunpack.c.l.b16 %v44
  %v193 = vunpack.c.h.b16 %v44
  %v194 = vunpack.c.l.b16 %v45
  %v195 = vunpack.c.h.b16 %v45
  %v196 = vunpack.c.l.b16 %v46
  %v197 = vunpack.c.h.b16 %v46
  %v198 = vunpack.c.l.b16 %v47
  %v199 = vunpack.c.h.b16 %v47
  %v200 = vunpack.c.l.b16 %v48
  %v201 = vunpack.c.h.b16 %v48
  %v202 = vunpack.c.l.b16 %v49
  %v203 = vunpack.c.h.b16 %v49
  %v204 = vunpack.c.l.b16 %v50
  %v205 = vunpack.c.h.b16 %v50
  %v206 = vunpack.c.l.b16 %v51
  %v207 = vunpack.c.h.b16 %v51
  %v208 = vunpack.c.l.b16 %v52
  %v209 = vunpack.c.h.b16 %v52
  %v210 = vunpack.c.l.b16 %v53
  %v211 = vunpack.c.h.b16 %v53
  %v212 = vunpack.c.l.b16 %v54
  %v213 = vunpack.c.h.b16 %v54
  %v214 = vunpack.c.l.b16 %v55
  %v215 = vunpack.c.h.b16 %v55
  %v216 = vunpack.c.l.b16 %v56
  %v217 = vunpack.c.h.b16 %v56
  %v218 = vunpack.c.l.b16 %v57
  %v219 = vunpack.c.h.b16 %v57
  %v220 = vunpack.c.l.b16 %v58
  %v221 = vunpack.c.h.b16 %v58
  %v222 = vunpack.c.l.b16 %v59
  %v223 = vunpack.c.h.b16 %v59
  %v224 = vunpack.c.l.b16 %v60
  %v225 = vunpack.c.h.b16 %v60
  %v226 = vunpack.c.l.b16 %v61
  %v227 = vunpack.c.h.b16 %v61
  %v228 = vunpack.c.l.b16 %v62
  %v229 = vunpack.c.h.b16 %v62
  %v230 = vunpack.c.l.b16 %v63
  %v231 = vunpack.c.h.b16 %v63
  %v232 = vunpack.c.l.b16 %v64
  %v233 = vunpack.c.h.b16 %v64
  %v234 = vunpack.c.l.b16 %v65
  %v235 = vunpack.c.h.b16 %v65
  %v236 = vunpack.c.l.b16 %v66
  %v237 = vunpack.c.h.b16 %v66
  %v238 = vunpack.c.l.b16 %v67
  %v239 = vunpack.c.h.b16 %v67
  %v240 = vunpack.c.l.b16 %v68
  %v241 = vunpack.c.h.b16 %v68
  %v242 = vunpack.c.l.b16 %v69
  %v243 = vunpack.c.h.b16 %v69
  %v244 = vpack.c.b16 %v140, %v136
  %v245 = vpack.c.b16 %v141, %v137
  %v246 = vpack.c.b16 %v142, %v138
  %v247 = vpack.c.b16 %v143, %v139
  %v248 = vpack.c.b16 %v148, %v144
  %v249 = vpack.c.b16 %v149, %v145
  %v250 = vpack.c.b16 %v150, %v146
  %v251 = vpack.c.b16 %v151, %v147
  %v252 = vpack.c.b16 %v156, %v152
  %v253 = vpack.c.b16 %v157, %v153
  %v254 = vpack.c.b16 %v158, %v154
  %v255 = vpack.c.b16 %v159, %v155
  %v256 = vpack.c.b16 %v164, %v160
  %v257 = vpack.c.b16 %v165, %v161
  %v258 = vpack.c.b16 %v166, %v162
  %v259 = vpack.c.b16 %v167, %v163
  %v260 = vpack.c.b16 %v172, %v168
  %v261 = vpack.c.b16 %v173, %v169
  %v262 = vpack.c.b16 %v174, %v170
  %v263 = vpack.c.b16 %v175, %v171
  %v264 = vpack.c.b16 %v180, %v176
  %v265 = vpack.c.b16 %v181, %v177
  %v266 = vpack.c.b16 %v182, %v178
  %v267 = vpack.c.b16 %v183, %v179
  %v268 = vpack.c.b16 %v188, %v184
  %v269 = vpack.c.b16 %v189, %v185
  %v270 = vpack.c.b16 %v190, %v186
  %v271 = vpack.c.b16 %v191, %v187
  %v272 = vpack.c.b16 %v196, %v192
  %v273 = vpack.c.b16 %v197, %v193
  %v274 = vpack.c.b16 %v198, %v194
  %v275 = vpack.c.b16 %v199, %v195
  %v276 = vpack.c.b16 %v204, %v200
  %v277 = vpack.c.b16 %v205, %v201
  %v278 = vpack.c.b16 %v206, %v202
  %v279 = vpack.c.b16 %v207, %v203
  %v280 = vpack.c.b16 %v212, %v208
  %v281 = vpack.c.b16 %v213, %v209
  %v282 = vpack.c.b16 %v214, %v210
  %v283 = vpack.c.b16 %v215, %v211
  %v284 = vpack.c.b16 %v220, %v216
  %v285 = vpack.c.b16 %v221, %v217
  %v286 = vpack.c.b16 %v222, %v218
  %v287 = vpack.c.b16 %v223, %v219
  %v288 = vpack.c.b16 %v228, %v224
  %v289 = vpack.c.b16 %v229, %v225
  %v290 = vpack.c.b16 %v230, %v226
  %v291 = vpack.c.b16 %v231, %v227
  %v292 = vpack.c.b16 %v236, %v232
  %v293 = vpack.c.b16 %v237, %v233
  %v294 = vpack.c.b16 %v238, %v234
  %v295 = vpack.c.b16 %v239, %v235
  %v296 = vpack.c.b16 %v240, %v240
  %v297 = vpack.c.b16 %v241, %v241
  %v298 = vpack.c.b16 %v242, %v242
  %v299 = vpack.c.b16 %v243, %v243
  %vm352 = vcmask 719872
  %v354 = vsel %vm352, %v80, 0
  %vm356 = vcmask 1043456
  %v358 = vsel %vm356, %v296, 0
  %v361 = vsel %vm356, %v297, 0
  %v364 = vsel %vm356, %v298, 0
  %v367 = vsel %vm356, %v299, 0
  %369 = vmatprep.subr.bf16.mxu0 %v245
  %370 = vmatpush1.bf16.msra.mxu0 %v244
  %371 = vmatprep.subr.bf16.mxu0 %v249
  %372 = vmatpush1.bf16.msra.mxu0 %v248
  %373 = vmatprep.subr.bf16.mxu0 %v253
  %374 = vmatpush1.bf16.msra.mxu0 %v252
  %375 = vmatprep.subr.bf16.mxu0 %v257
  %376 = vmatpush1.bf16.msra.mxu0 %v256
  %377 = vmatprep.subr.bf16.mxu0 %v261
  %378 = vmatpush1.bf16.msra.mxu0 %v260
  %379 = vmatprep.subr.bf16.mxu0 %v265
  %380 = vmatpush1.bf16.msra.mxu0 %v264
  %381 = vmatprep.subr.bf16.mxu0 %v269
  %382 = vmatpush1.bf16.msra.mxu0 %v268
  %383 = vmatprep.subr.bf16.mxu0 %v273
  %384 = vmatpush1.bf16.msra.mxu0 %v272
  %385 = vmatprep.subr.bf16.mxu0 %v277
  %386 = vmatpush1.bf16.msra.mxu0 %v276
  %387 = vmatprep.subr.bf16.mxu0 %v281
  %388 = vmatpush1.bf16.msra.mxu0 %v280
  %389 = vmatprep.subr.bf16.mxu0 %v285
  %390 = vmatpush1.bf16.msra.mxu0 %v284
  %391 = vmatprep.subr.bf16.mxu0 %v289
  %392 = vmatpush1.bf16.msra.mxu0 %v288
  %393 = vmatprep.subr.bf16.mxu0 %v293
  %394 = vmatpush1.bf16.msra.mxu0 %v292
  %395 = vmatprep.subr.bf16.mxu0 %v361
  %396 = vmatpush1.bf16.msra.mxu0 %v358
  %397 = vmatprep.subr.bf16.mxu0 0
  %398 = vmatpush1.bf16.msra.mxu0 0
  %399 = vmatprep.subr.bf16.mxu0 0
  %400 = vmatpush1.bf16.msra.mxu0 0
  %401 = vmatprep.mubr.bf16.mxu0 %v354
  %402 = vmatmul.mubr.bf16.gmra.mrb[0].mxu0 %v79
  %v403 = vpop.f32.mrb[0].mxu0
  %v404 = vadd.f32 %v74, %v403
  %v405 = vpop.f32.mrb[0].mxu0
  %v406 = vadd.f32 %v74, %v405
  %v407 = vpop.f32.mrb[0].mxu0
  %v408 = vpop.f32.mrb[0].mxu0
  %409 = vdwg.mxu0
  %410 = vmatprep.subr.bf16.mxu0 %v247
  %411 = vmatpush1.bf16.msra.mxu0 %v246
  %412 = vmatprep.subr.bf16.mxu0 %v251
  %413 = vmatpush1.bf16.msra.mxu0 %v250
  %414 = vmatprep.subr.bf16.mxu0 %v255
  %415 = vmatpush1.bf16.msra.mxu0 %v254
  %416 = vmatprep.subr.bf16.mxu0 %v259
  %417 = vmatpush1.bf16.msra.mxu0 %v258
  %418 = vmatprep.subr.bf16.mxu0 %v263
  %419 = vmatpush1.bf16.msra.mxu0 %v262
  %420 = vmatprep.subr.bf16.mxu0 %v267
  %421 = vmatpush1.bf16.msra.mxu0 %v266
  %422 = vmatprep.subr.bf16.mxu0 %v271
  %423 = vmatpush1.bf16.msra.mxu0 %v270
  %424 = vmatprep.subr.bf16.mxu0 %v275
  %425 = vmatpush1.bf16.msra.mxu0 %v274
  %426 = vmatprep.subr.bf16.mxu0 %v279
  %427 = vmatpush1.bf16.msra.mxu0 %v278
  %428 = vmatprep.subr.bf16.mxu0 %v283
  %429 = vmatpush1.bf16.msra.mxu0 %v282
  %430 = vmatprep.subr.bf16.mxu0 %v287
  %431 = vmatpush1.bf16.msra.mxu0 %v286
  %432 = vmatprep.subr.bf16.mxu0 %v291
  %433 = vmatpush1.bf16.msra.mxu0 %v290
  %434 = vmatprep.subr.bf16.mxu0 %v295
  %435 = vmatpush1.bf16.msra.mxu0 %v294
  %436 = vmatprep.subr.bf16.mxu0 %v367
  %437 = vmatpush1.bf16.msra.mxu0 %v364
  %438 = vmatprep.subr.bf16.mxu0 0
  %439 = vmatpush1.bf16.msra.mxu0 0
  %440 = vmatprep.subr.bf16.mxu0 0
  %441 = vmatpush1.bf16.msra.mxu0 0
  %442 = vmatprep.mubr.bf16.mxu0 %v354
  %443 = vmatmul.mubr.bf16.gmra.mrb[0].mxu0 %v79
  %v444 = vpop.f32.mrb[0].mxu0
  %v445 = vadd.f32 %v74, %v444
  %v446 = vpop.f32.mrb[0].mxu0
  %v447 = vadd.f32 %v74, %v446
  %v448 = vpop.f32.mrb[0].mxu0
  %v449 = vpop.f32.mrb[0].mxu0
  %450 = vdwg.mxu0
  %vm451 = vcmp.ge.f32.partialorder %v404, 0.0
  %vm452 = vcmp.ge.f32.partialorder %v406, 0.0
  %vm453 = vcmp.ge.f32.partialorder %v445, 0.0
  %vm454 = vcmp.ge.f32.partialorder %v447, 0.0
  %v455 = vmul.f32 %v404, 0.2
  %v456 = vmul.f32 %v406, 0.2
  %v457 = vmul.f32 %v445, 0.2
  %v458 = vmul.f32 %v447, 0.2
  %v459 = vsel %vm451, %v404, %v455
  %v460 = vsel %vm452, %v406, %v456
  %v461 = vsel %vm453, %v445, %v457
  %v462 = vsel %vm454, %v447, %v458
  %v463 = vpack.c.bf16 %v459, %v459
  %v464 = vpack.c.bf16 %v460, %v460
  %v465 = vpack.c.bf16 %v461, %v461
  %v466 = vpack.c.bf16 %v462, %v462
  %v471 = vunpack.c.l.b16 %v463
  %v472 = vunpack.c.l.b16 %v464
  %v473 = vunpack.c.l.b16 %v465
  %v474 = vunpack.c.l.b16 %v466
  %v475 = vpack.c.b16 %v472, %v471
  %v476 = vpack.c.b16 %v474, %v473
  %479 = vst [vmem:[%s3] sm:$0xff] %v475
  %vm480 = vcmask 687108
  %vm481 = vmor %vm480, %vm356
  %482 = vst.msk [vmem:[%s3 + $0x8] sm:$0xff] %vm481, %v476
  // Predicated region
  $region14: #{ms_stft_discriminator_forward.24} parent=0 // pred_check
    _
  $region15: #{ms_stft_discriminator_forward.24} parent=0 // pred_check_branch
    %484 = sbr.rel (0) target = $region17
  $region16: #{ms_stft_discriminator_forward.24} parent=0 // pred_region
    _
  $region17: #{ms_stft_discriminator_forward.24} parent=0 // pred_fallthru
    _
  // Predicated region
  $region18: #{ms_stft_discriminator_forward.24} parent=0 // pred_check
    _
  $region19: #{ms_stft_discriminator_forward.24} parent=0 // pred_check_branch
    %486 = sbr.rel (0) target = $region21
  $region20: #{ms_stft_discriminator_forward.24} parent=0 // pred_region
    _
  $region21: #{ms_stft_discriminator_forward.24} parent=0 // pred_fallthru
    _

// kernel: ms_stft_discriminator_forward.25
$region0: #{ms_stft_discriminator_forward.25}
  #allocation0 [shape = 'u32[]', space=smem, size = 0x4, offset = 0x4, fixed_abs, tag = 'smem constant byte address 0x4 - core index']
  #allocation1 [shape = 'u32[144,128]{1,0:T(1,128)}', space=vmem, size = 0x12000, scoped, tag = 'internal scratch']
  %s0 = inlined_call_operand.vmem [shape: bf16[8,216], index: 0, kind: input, shape index: {}]
  %s1 = inlined_call_operand.vmem [shape: bf16[216,260], index: 1, kind: input, shape index: {}]
  %s2 = inlined_call_operand.vmem [shape: f32[8,1], index: 2, kind: input, shape index: {}]
  %s3 = inlined_call_operand.vmem [shape: bf16[8,260], index: 3, kind: output, shape index: {}]
  %s4 = sld [smem:[#allocation0]]
  $region22: #{ms_stft_discriminator_forward.25} parent=0
    _
  %s6 = ssub.s32 1, %s4
  %s7 = scalar_select 0, %s6, %s4
  // Predicated region
  $region2: #{ms_stft_discriminator_forward.25} parent=0 // pred_check
    _
  $region3: #{ms_stft_discriminator_forward.25} parent=0 // pred_check_branch
    %9 = sbr.rel (0) target = $region5
  $region4: #{ms_stft_discriminator_forward.25} parent=0 // pred_region
    _
  $region5: #{ms_stft_discriminator_forward.25} parent=0 // pred_fallthru
    _
  // Predicated region
  $region6: #{ms_stft_discriminator_forward.25} parent=0 // pred_check
    _
  $region7: #{ms_stft_discriminator_forward.25} parent=0 // pred_check_branch
    %11 = sbr.rel (0) target = $region9
  $region8: #{ms_stft_discriminator_forward.25} parent=0 // pred_region
    _
  $region9: #{ms_stft_discriminator_forward.25} parent=0 // pred_fallthru
    _
  // Predicated region
  $region10: #{ms_stft_discriminator_forward.25} parent=0 // pred_check
    _
  $region11: #{ms_stft_discriminator_forward.25} parent=0 // pred_check_branch
    %13 = sbr.rel (0) target = $region13
  $region12: #{ms_stft_discriminator_forward.25} parent=0 // pred_region
    _
  $region13: #{ms_stft_discriminator_forward.25} parent=0 // pred_fallthru
    _
  %v15 = vld [vmem:[%s0] sm:$0xff]
  %v16 = vld [vmem:[%s1] sm:$0xff]
  %v17 = vld [vmem:[%s1 + $0x8] sm:$0xf]
  %v18 = vld [vmem:[%s1 + $0xc] sm:$0xff]
  %v19 = vld [vmem:[%s1 + $0x14] sm:$0xf]
  %v20 = vld [vmem:[%s1 + $0x18] sm:$0xff]
  %v21 = vld [vmem:[%s1 + $0x20] sm:$0xf]
  %v22 = vld [vmem:[%s1 + $0x24] sm:$0xff]
  %v23 = vld [vmem:[%s1 + $0x2c] sm:$0xf]
  %v24 = vld [vmem:[%s1 + $0x30] sm:$0xff]
  %v25 = vld [vmem:[%s1 + $0x38] sm:$0xf]
  %v26 = vld [vmem:[%s1 + $0x3c] sm:$0xff]
  %v27 = vld [vmem:[%s1 + $0x44] sm:$0xf]
  %v28 = vld [vmem:[%s1 + $0x48] sm:$0xff]
  %v29 = vld [vmem:[%s1 + $0x50] sm:$0xf]
  %v30 = vld [vmem:[%s1 + $0x54] sm:$0xff]
  %v31 = vld [vmem:[%s1 + $0x5c] sm:$0xf]
  %v32 = vld [vmem:[%s1 + $0x60] sm:$0xff]
  %v33 = vld [vmem:[%s1 + $0x68] sm:$0xf]
  %v34 = vld [vmem:[%s1 + $0x6c] sm:$0xff]
  %v35 = vld [vmem:[%s1 + $0x74] sm:$0xf]
  %v36 = vld [vmem:[%s1 + $0x78] sm:$0xff]
  %v37 = vld [vmem:[%s1 + $0x80] sm:$0xf]
  %v38 = vld [vmem:[%s1 + $0x84] sm:$0xff]
  %v39 = vld [vmem:[%s1 + $0x8c] sm:$0xf]
  %v40 = vld [vmem:[%s1 + $0x90] sm:$0xff]
  %v41 = vld [vmem:[%s1 + $0x98] sm:$0xf]
  %v42 = vld [vmem:[%s1 + $0x9c] sm:$0xff]
  %v43 = vld [vmem:[%s1 + $0xa4] sm:$0xf]
  %v44 = vld [vmem:[%s1 + $0xa8] sm:$0xff]
  %v45 = vld [vmem:[%s1 + $0xb0] sm:$0xf]
  %v46 = vld [vmem:[%s1 + $0xb4] sm:$0xff]
  %v47 = vld [vmem:[%s1 + $0xbc] sm:$0xf]
  %v48 = vld [vmem:[%s1 + $0xc0] sm:$0xff]
  %v49 = vld [vmem:[%s1 + $0xc8] sm:$0xf]
  %v50 = vld [vmem:[%s1 + $0xcc] sm:$0xff]
  %v51 = vld [vmem:[%s1 + $0xd4] sm:$0xf]
  %v52 = vld [vmem:[%s1 + $0xd8] sm:$0xff]
  %v53 = vld [vmem:[%s1 + $0xe0] sm:$0xf]
  %v54 = vld [vmem:[%s1 + $0xe4] sm:$0xff]
  %v55 = vld [vmem:[%s1 + $0xec] sm:$0xf]
  %v56 = vld [vmem:[%s1 + $0xf0] sm:$0xff]
  %v57 = vld [vmem:[%s1 + $0xf8] sm:$0xf]
  %v58 = vld [vmem:[%s1 + $0xfc] sm:$0xff]
  %v59 = vld [vmem:[%s1 + $0x104] sm:$0xf]
  %v60 = vld [vmem:[%s1 + $0x108] sm:$0xff]
  %v61 = vld [vmem:[%s1 + $0x110] sm:$0xf]
  %v62 = vld [vmem:[%s1 + $0x114] sm:$0xff]
  %v63 = vld [vmem:[%s1 + $0x11c] sm:$0xf]
  %v64 = vld [vmem:[%s1 + $0x120] sm:$0xff]
  %v65 = vld [vmem:[%s1 + $0x128] sm:$0xf]
  %v66 = vld [vmem:[%s1 + $0x12c] sm:$0xff]
  %v67 = vld [vmem:[%s1 + $0x134] sm:$0xf]
  %v68 = vld [vmem:[%s1 + $0x138] sm:$0xff]
  %v69 = vld [vmem:[%s1 + $0x140] sm:$0xf]
  %v70 = vld [vmem:[%s2] sm:$0xff]
  %72 = vset.pattern.permute.xlu0 0
  %73 = vperm.xlu0 %72, %v70
  %v74 = vpop.permute.xlu0 %73
  %v77 = vunpack.c.l.b16 %v15
  %v78 = vunpack.c.h.b16 %v15
  %v79 = vpack.c.b16 %v77, %v77
  %v80 = vpack.c.b16 %v78, %v78
  %v136 = vunpack.c.l.b16 %v16
  %v137 = vunpack.c.h.b16 %v16
  %v138 = vunpack.c.l.b16 %v17
  %v139 = vunpack.c.l.b16 %v18
  %v140 = vunpack.c.h.b16 %v18
  %v141 = vunpack.c.l.b16 %v19
  %v142 = vunpack.c.l.b16 %v20
  %v143 = vunpack.c.h.b16 %v20
  %v144 = vunpack.c.l.b16 %v21
  %v145 = vunpack.c.l.b16 %v22
  %v146 = vunpack.c.h.b16 %v22
  %v147 = vunpack.c.l.b16 %v23
  %v148 = vunpack.c.l.b16 %v24
  %v149 = vunpack.c.h.b16 %v24
  %v150 = vunpack.c.l.b16 %v25
  %v151 = vunpack.c.l.b16 %v26
  %v152 = vunpack.c.h.b16 %v26
  %v153 = vunpack.c.l.b16 %v27
  %v154 = vunpack.c.l.b16 %v28
  %v155 = vunpack.c.h.b16 %v28
  %v156 = vunpack.c.l.b16 %v29
  %v157 = vunpack.c.l.b16 %v30
  %v158 = vunpack.c.h.b16 %v30
  %v159 = vunpack.c.l.b16 %v31
  %v160 = vunpack.c.l.b16 %v32
  %v161 = vunpack.c.h.b16 %v32
  %v162 = vunpack.c.l.b16 %v33
  %v163 = vunpack.c.l.b16 %v34
  %v164 = vunpack.c.h.b16 %v34
  %v165 = vunpack.c.l.b16 %v35
  %v166 = vunpack.c.l.b16 %v36
  %v167 = vunpack.c.h.b16 %v36
  %v168 = vunpack.c.l.b16 %v37
  %v169 = vunpack.c.l.b16 %v38
  %v170 = vunpack.c.h.b16 %v38
  %v171 = vunpack.c.l.b16 %v39
  %v172 = vunpack.c.l.b16 %v40
  %v173 = vunpack.c.h.b16 %v40
  %v174 = vunpack.c.l.b16 %v41
  %v175 = vunpack.c.l.b16 %v42
  %v176 = vunpack.c.h.b16 %v42
  %v177 = vunpack.c.l.b16 %v43
  %v178 = vunpack.c.l.b16 %v44
  %v179 = vunpack.c.h.b16 %v44
  %v180 = vunpack.c.l.b16 %v45
  %v181 = vunpack.c.l.b16 %v46
  %v182 = vunpack.c.h.b16 %v46
  %v183 = vunpack.c.l.b16 %v47
  %v184 = vunpack.c.l.b16 %v48
  %v185 = vunpack.c.h.b16 %v48
  %v186 = vunpack.c.l.b16 %v49
  %v187 = vunpack.c.l.b16 %v50
  %v188 = vunpack.c.h.b16 %v50
  %v189 = vunpack.c.l.b16 %v51
  %v190 = vunpack.c.l.b16 %v52
  %v191 = vunpack.c.h.b16 %v52
  %v192 = vunpack.c.l.b16 %v53
  %v193 = vunpack.c.l.b16 %v54
  %v194 = vunpack.c.h.b16 %v54
  %v195 = vunpack.c.l.b16 %v55
  %v196 = vunpack.c.l.b16 %v56
  %v197 = vunpack.c.h.b16 %v56
  %v198 = vunpack.c.l.b16 %v57
  %v199 = vunpack.c.l.b16 %v58
  %v200 = vunpack.c.h.b16 %v58
  %v201 = vunpack.c.l.b16 %v59
  %v202 = vunpack.c.l.b16 %v60
  %v203 = vunpack.c.h.b16 %v60
  %v204 = vunpack.c.l.b16 %v61
  %v205 = vunpack.c.l.b16 %v62
  %v206 = vunpack.c.h.b16 %v62
  %v207 = vunpack.c.l.b16 %v63
  %v208 = vunpack.c.l.b16 %v64
  %v209 = vunpack.c.h.b16 %v64
  %v210 = vunpack.c.l.b16 %v65
  %v211 = vunpack.c.l.b16 %v66
  %v212 = vunpack.c.h.b16 %v66
  %v213 = vunpack.c.l.b16 %v67
  %v214 = vunpack.c.l.b16 %v68
  %v215 = vunpack.c.h.b16 %v68
  %v216 = vunpack.c.l.b16 %v69
  %v217 = vpack.c.b16 %v139, %v136
  %v218 = vpack.c.b16 %v140, %v137
  %v219 = vpack.c.b16 %v141, %v138
  %v220 = vpack.c.b16 %v145, %v142
  %v221 = vpack.c.b16 %v146, %v143
  %v222 = vpack.c.b16 %v147, %v144
  %v223 = vpack.c.b16 %v151, %v148
  %v224 = vpack.c.b16 %v152, %v149
  %v225 = vpack.c.b16 %v153, %v150
  %v226 = vpack.c.b16 %v157, %v154
  %v227 = vpack.c.b16 %v158, %v155
  %v228 = vpack.c.b16 %v159, %v156
  %v229 = vpack.c.b16 %v163, %v160
  %v230 = vpack.c.b16 %v164, %v161
  %v231 = vpack.c.b16 %v165, %v162
  %v232 = vpack.c.b16 %v169, %v166
  %v233 = vpack.c.b16 %v170, %v167
  %v234 = vpack.c.b16 %v171, %v168
  %v235 = vpack.c.b16 %v175, %v172
  %v236 = vpack.c.b16 %v176, %v173
  %v237 = vpack.c.b16 %v177, %v174
  %v238 = vpack.c.b16 %v181, %v178
  %v239 = vpack.c.b16 %v182, %v179
  %v240 = vpack.c.b16 %v183, %v180
  %v241 = vpack.c.b16 %v187, %v184
  %v242 = vpack.c.b16 %v188, %v185
  %v243 = vpack.c.b16 %v189, %v186
  %v244 = vpack.c.b16 %v193, %v190
  %v245 = vpack.c.b16 %v194, %v191
  %v246 = vpack.c.b16 %v195, %v192
  %v247 = vpack.c.b16 %v199, %v196
  %v248 = vpack.c.b16 %v200, %v197
  %v249 = vpack.c.b16 %v201, %v198
  %v250 = vpack.c.b16 %v205, %v202
  %v251 = vpack.c.b16 %v206, %v203
  %v252 = vpack.c.b16 %v207, %v204
  %v253 = vpack.c.b16 %v211, %v208
  %v254 = vpack.c.b16 %v212, %v209
  %v255 = vpack.c.b16 %v213, %v210
  %v256 = vpack.c.b16 %v214, %v214
  %v257 = vpack.c.b16 %v215, %v215
  %v258 = vpack.c.b16 %v216, %v216
  %vm298 = vcmask 719872
  %v300 = vsel %vm298, %v80, 0
  %vm302 = vcmask 1043456
  %v304 = vsel %vm302, %v256, 0
  %v307 = vsel %vm302, %v257, 0
  %v310 = vsel %vm302, %v258, 0
  %312 = vmatprep.subr.bf16.mxu0 %v218
  %313 = vmatpush1.bf16.msra.mxu0 %v217
  %314 = vmatprep.subr.bf16.mxu0 %v221
  %315 = vmatpush1.bf16.msra.mxu0 %v220
  %316 = vmatprep.subr.bf16.mxu0 %v224
  %317 = vmatpush1.bf16.msra.mxu0 %v223
  %318 = vmatprep.subr.bf16.mxu0 %v227
  %319 = vmatpush1.bf16.msra.mxu0 %v226
  %320 = vmatprep.subr.bf16.mxu0 %v230
  %321 = vmatpush1.bf16.msra.mxu0 %v229
  %322 = vmatprep.subr.bf16.mxu0 %v233
  %323 = vmatpush1.bf16.msra.mxu0 %v232
  %324 = vmatprep.subr.bf16.mxu0 %v236
  %325 = vmatpush1.bf16.msra.mxu0 %v235
  %326 = vmatprep.subr.bf16.mxu0 %v239
  %327 = vmatpush1.bf16.msra.mxu0 %v238
  %328 = vmatprep.subr.bf16.mxu0 %v242
  %329 = vmatpush1.bf16.msra.mxu0 %v241
  %330 = vmatprep.subr.bf16.mxu0 %v245
  %331 = vmatpush1.bf16.msra.mxu0 %v244
  %332 = vmatprep.subr.bf16.mxu0 %v248
  %333 = vmatpush1.bf16.msra.mxu0 %v247
  %334 = vmatprep.subr.bf16.mxu0 %v251
  %335 = vmatpush1.bf16.msra.mxu0 %v250
  %336 = vmatprep.subr.bf16.mxu0 %v254
  %337 = vmatpush1.bf16.msra.mxu0 %v253
  %338 = vmatprep.subr.bf16.mxu0 %v307
  %339 = vmatpush1.bf16.msra.mxu0 %v304
  %340 = vmatprep.subr.bf16.mxu0 0
  %341 = vmatpush1.bf16.msra.mxu0 0
  %342 = vmatprep.subr.bf16.mxu0 0
  %343 = vmatpush1.bf16.msra.mxu0 0
  %344 = vmatprep.mubr.bf16.mxu0 %v300
  %345 = vmatmul.mubr.bf16.gmra.mrb[0].mxu0 %v79
  %v346 = vpop.f32.mrb[0].mxu0
  %v347 = vadd.f32 %v74, %v346
  %v348 = vpop.f32.mrb[0].mxu0
  %v349 = vadd.f32 %v74, %v348
  %v350 = vpop.f32.mrb[0].mxu0
  %v351 = vpop.f32.mrb[0].mxu0
  %352 = vdwg.mxu0
  %353 = vmatprep.subr.bf16.mxu0 0
  %354 = vmatpush1.bf16.msra.mxu0 %v219
  %355 = vmatprep.subr.bf16.mxu0 0
  %356 = vmatpush1.bf16.msra.mxu0 %v222
  %357 = vmatprep.subr.bf16.mxu0 0
  %358 = vmatpush1.bf16.msra.mxu0 %v225
  %359 = vmatprep.subr.bf16.mxu0 0
  %360 = vmatpush1.bf16.msra.mxu0 %v228
  %361 = vmatprep.subr.bf16.mxu0 0
  %362 = vmatpush1.bf16.msra.mxu0 %v231
  %363 = vmatprep.subr.bf16.mxu0 0
  %364 = vmatpush1.bf16.msra.mxu0 %v234
  %365 = vmatprep.subr.bf16.mxu0 0
  %366 = vmatpush1.bf16.msra.mxu0 %v237
  %367 = vmatprep.subr.bf16.mxu0 0
  %368 = vmatpush1.bf16.msra.mxu0 %v240
  %369 = vmatprep.subr.bf16.mxu0 0
  %370 = vmatpush1.bf16.msra.mxu0 %v243
  %371 = vmatprep.subr.bf16.mxu0 0
  %372 = vmatpush1.bf16.msra.mxu0 %v246
  %373 = vmatprep.subr.bf16.mxu0 0
  %374 = vmatpush1.bf16.msra.mxu0 %v249
  %375 = vmatprep.subr.bf16.mxu0 0
  %376 = vmatpush1.bf16.msra.mxu0 %v252
  %377 = vmatprep.subr.bf16.mxu0 0
  %378 = vmatpush1.bf16.msra.mxu0 %v255
  %379 = vmatprep.subr.bf16.mxu0 0
  %380 = vmatpush1.bf16.msra.mxu0 %v310
  %381 = vmatprep.subr.bf16.mxu0 0
  %382 = vmatpush1.bf16.msra.mxu0 0
  %383 = vmatprep.subr.bf16.mxu0 0
  %384 = vmatpush1.bf16.msra.mxu0 0
  %385 = vmatprep.mubr.bf16.mxu0 %v300
  %386 = vmatmul.mubr.bf16.gmra.mrb[0].mxu0 %v79
  %v387 = vpop.f32.mrb[0].mxu0
  %v388 = vadd.f32 %v74, %v387
  %v389 = vpop.f32.mrb[0].mxu0
  %v390 = vpop.f32.mrb[0].mxu0
  %v391 = vpop.f32.mrb[0].mxu0
  %392 = vdwg.mxu0
  %vm393 = vcmp.ge.f32.partialorder %v347, 0.0
  %vm394 = vcmp.ge.f32.partialorder %v349, 0.0
  %vm395 = vcmp.ge.f32.partialorder %v388, 0.0
  %v396 = vmul.f32 %v347, 0.2
  %v397 = vmul.f32 %v349, 0.2
  %v398 = vmul.f32 %v388, 0.2
  %v399 = vsel %vm393, %v347, %v396
  %v400 = vsel %vm394, %v349, %v397
  %v401 = vsel %vm395, %v388, %v398
  %v402 = vpack.c.bf16 %v399, %v399
  %v403 = vpack.c.bf16 %v400, %v400
  %v404 = vpack.c.bf16 %v401, %v401
  %v408 = vunpack.c.l.b16 %v402
  %v409 = vunpack.c.l.b16 %v403
  %v410 = vunpack.c.l.b16 %v404
  %v411 = vpack.c.b16 %v409, %v408
  %v412 = vpack.c.b16 %v410, %v410
  %415 = vst [vmem:[%s3] sm:$0xff] %v411
  %vm416 = vcmask 27648
  %417 = vst.msk [vmem:[%s3 + $0x8] sm:$0xf] %vm416, %v412
  // Predicated region
  $region14: #{ms_stft_discriminator_forward.25} parent=0 // pred_check
    _
  $region15: #{ms_stft_discriminator_forward.25} parent=0 // pred_check_branch
    %419 = sbr.rel (0) target = $region17
  $region16: #{ms_stft_discriminator_forward.25} parent=0 // pred_region
    _
  $region17: #{ms_stft_discriminator_forward.25} parent=0 // pred_fallthru
    _
  // Predicated region
  $region18: #{ms_stft_discriminator_forward.25} parent=0 // pred_check
    _
  $region19: #{ms_stft_discriminator_forward.25} parent=0 // pred_check_branch
    %421 = sbr.rel (0) target = $region21
  $region20: #{ms_stft_discriminator_forward.25} parent=0 // pred_region
    _
  $region21: #{ms_stft_discriminator_forward.25} parent=0 // pred_fallthru
    _

// kernel: ms_stft_discriminator_forward.26
$region0: #{ms_stft_discriminator_forward.26}
  #allocation0 [shape = 'u32[]', space=smem, size = 0x4, offset = 0x4, fixed_abs, tag = 'smem constant byte address 0x4 - core index']
  #allocation1 [shape = 'u32[144,128]{1,0:T(1,128)}', space=vmem, size = 0x12000, scoped, tag = 'internal scratch']
  %s0 = inlined_call_operand.vmem [shape: bf16[8,72], index: 0, kind: input, shape index: {}]
  %s1 = inlined_call_operand.vmem [shape: bf16[72,260], index: 1, kind: input, shape index: {}]
  %s2 = inlined_call_operand.vmem [shape: f32[8,1], index: 2, kind: input, shape index: {}]
  %s3 = inlined_call_operand.vmem [shape: bf16[8,260], index: 3, kind: output, shape index: {}]
  %s4 = sld [smem:[#allocation0]]
  $region22: #{ms_stft_discriminator_forward.26} parent=0
    _
  %s6 = ssub.s32 1, %s4
  %s7 = scalar_select 0, %s6, %s4
  // Predicated region
  $region2: #{ms_stft_discriminator_forward.26} parent=0 // pred_check
    _
  $region3: #{ms_stft_discriminator_forward.26} parent=0 // pred_check_branch
    %9 = sbr.rel (0) target = $region5
  $region4: #{ms_stft_discriminator_forward.26} parent=0 // pred_region
    _
  $region5: #{ms_stft_discriminator_forward.26} parent=0 // pred_fallthru
    _
  // Predicated region
  $region6: #{ms_stft_discriminator_forward.26} parent=0 // pred_check
    _
  $region7: #{ms_stft_discriminator_forward.26} parent=0 // pred_check_branch
    %11 = sbr.rel (0) target = $region9
  $region8: #{ms_stft_discriminator_forward.26} parent=0 // pred_region
    _
  $region9: #{ms_stft_discriminator_forward.26} parent=0 // pred_fallthru
    _
  // Predicated region
  $region10: #{ms_stft_discriminator_forward.26} parent=0 // pred_check
    _
  $region11: #{ms_stft_discriminator_forward.26} parent=0 // pred_check_branch
    %13 = sbr.rel (0) target = $region13
  $region12: #{ms_stft_discriminator_forward.26} parent=0 // pred_region
    _
  $region13: #{ms_stft_discriminator_forward.26} parent=0 // pred_fallthru
    _
  %v15 = vld [vmem:[%s0] sm:$0xf]
  %v16 = vld [vmem:[%s1] sm:$0xff]
  %v17 = vld [vmem:[%s1 + $0x8] sm:$0xf]
  %v18 = vld [vmem:[%s1 + $0xc] sm:$0xff]
  %v19 = vld [vmem:[%s1 + $0x14] sm:$0xf]
  %v20 = vld [vmem:[%s1 + $0x18] sm:$0xff]
  %v21 = vld [vmem:[%s1 + $0x20] sm:$0xf]
  %v22 = vld [vmem:[%s1 + $0x24] sm:$0xff]
  %v23 = vld [vmem:[%s1 + $0x2c] sm:$0xf]
  %v24 = vld [vmem:[%s1 + $0x30] sm:$0xff]
  %v25 = vld [vmem:[%s1 + $0x38] sm:$0xf]
  %v26 = vld [vmem:[%s1 + $0x3c] sm:$0xff]
  %v27 = vld [vmem:[%s1 + $0x44] sm:$0xf]
  %v28 = vld [vmem:[%s1 + $0x48] sm:$0xff]
  %v29 = vld [vmem:[%s1 + $0x50] sm:$0xf]
  %v30 = vld [vmem:[%s1 + $0x54] sm:$0xff]
  %v31 = vld [vmem:[%s1 + $0x5c] sm:$0xf]
  %v32 = vld [vmem:[%s1 + $0x60] sm:$0xff]
  %v33 = vld [vmem:[%s1 + $0x68] sm:$0xf]
  %v34 = vld [vmem:[%s2] sm:$0xff]
  %36 = vset.pattern.permute.xlu0 0
  %37 = vperm.xlu0 %36, %v34
  %v38 = vpop.permute.xlu0 %37
  %v58 = vunpack.c.l.b16 %v16
  %v59 = vunpack.c.h.b16 %v16
  %v60 = vunpack.c.l.b16 %v17
  %v61 = vunpack.c.l.b16 %v18
  %v62 = vunpack.c.h.b16 %v18
  %v63 = vunpack.c.l.b16 %v19
  %v64 = vunpack.c.l.b16 %v20
  %v65 = vunpack.c.h.b16 %v20
  %v66 = vunpack.c.l.b16 %v21
  %v67 = vunpack.c.l.b16 %v22
  %v68 = vunpack.c.h.b16 %v22
  %v69 = vunpack.c.l.b16 %v23
  %v70 = vunpack.c.l.b16 %v24
  %v71 = vunpack.c.h.b16 %v24
  %v72 = vunpack.c.l.b16 %v25
  %v73 = vunpack.c.l.b16 %v26
  %v74 = vunpack.c.h.b16 %v26
  %v75 = vunpack.c.l.b16 %v27
  %v76 = vunpack.c.l.b16 %v28
  %v77 = vunpack.c.h.b16 %v28
  %v78 = vunpack.c.l.b16 %v29
  %v79 = vunpack.c.l.b16 %v30
  %v80 = vunpack.c.h.b16 %v30
  %v81 = vunpack.c.l.b16 %v31
  %v82 = vunpack.c.l.b16 %v32
  %v83 = vunpack.c.h.b16 %v32
  %v84 = vunpack.c.l.b16 %v33
  %v85 = vpack.c.b16 %v61, %v58
  %v86 = vpack.c.b16 %v62, %v59
  %v87 = vpack.c.b16 %v63, %v60
  %v88 = vpack.c.b16 %v67, %v64
  %v89 = vpack.c.b16 %v68, %v65
  %v90 = vpack.c.b16 %v69, %v66
  %v91 = vpack.c.b16 %v73, %v70
  %v92 = vpack.c.b16 %v74, %v71
  %v93 = vpack.c.b16 %v75, %v72
  %v94 = vpack.c.b16 %v79, %v76
  %v95 = vpack.c.b16 %v80, %v77
  %v96 = vpack.c.b16 %v81, %v78
  %v97 = vpack.c.b16 %v82, %v82
  %v98 = vpack.c.b16 %v83, %v83
  %v99 = vpack.c.b16 %v84, %v84
  %vm112 = vcmask 588800
  %v114 = vsel %vm112, %v15, 0
  %vm116 = vcmask 1043456
  %v118 = vsel %vm116, %v97, 0
  %v121 = vsel %vm116, %v98, 0
  %v124 = vsel %vm116, %v99, 0
  %126 = vmatprep.subr.bf16.mxu0 %v86
  %127 = vmatpush1.bf16.msra.mxu0 %v85
  %128 = vmatprep.subr.bf16.mxu0 %v89
  %129 = vmatpush1.bf16.msra.mxu0 %v88
  %130 = vmatprep.subr.bf16.mxu0 %v92
  %131 = vmatpush1.bf16.msra.mxu0 %v91
  %132 = vmatprep.subr.bf16.mxu0 %v95
  %133 = vmatpush1.bf16.msra.mxu0 %v94
  %134 = vmatprep.subr.bf16.mxu0 %v121
  %135 = vmatpush1.bf16.msra.mxu0 %v118
  %136 = vmatprep.subr.bf16.mxu0 0
  %137 = vmatpush1.bf16.msra.mxu0 0
  %138 = vmatprep.subr.bf16.mxu0 0
  %139 = vmatpush1.bf16.msra.mxu0 0
  %140 = vmatprep.subr.bf16.mxu0 0
  %141 = vmatpush1.bf16.msra.mxu0 0
  %142 = vmatprep.subr.bf16.mxu0 0
  %143 = vmatpush1.bf16.msra.mxu0 0
  %144 = vmatprep.subr.bf16.mxu0 0
  %145 = vmatpush1.bf16.msra.mxu0 0
  %146 = vmatprep.subr.bf16.mxu0 0
  %147 = vmatpush1.bf16.msra.mxu0 0
  %148 = vmatprep.subr.bf16.mxu0 0
  %149 = vmatpush1.bf16.msra.mxu0 0
  %150 = vmatprep.subr.bf16.mxu0 0
  %151 = vmatpush1.bf16.msra.mxu0 0
  %152 = vmatprep.subr.bf16.mxu0 0
  %153 = vmatpush1.bf16.msra.mxu0 0
  %154 = vmatprep.subr.bf16.mxu0 0
  %155 = vmatpush1.bf16.msra.mxu0 0
  %156 = vmatprep.subr.bf16.mxu0 0
  %157 = vmatpush1.bf16.msra.mxu0 0
  %158 = vmatprep.mubr.bf16.mxu0 0
  %159 = vmatmul.mubr.bf16.gmra.mrb[0].mxu0 %v114
  %v160 = vpop.f32.mrb[0].mxu0
  %v161 = vadd.f32 %v38, %v160
  %v162 = vpop.f32.mrb[0].mxu0
  %v163 = vadd.f32 %v38, %v162
  %v164 = vpop.f32.mrb[0].mxu0
  %v165 = vpop.f32.mrb[0].mxu0
  %166 = vdwg.mxu0
  %167 = vmatprep.subr.bf16.mxu0 0
  %168 = vmatpush1.bf16.msra.mxu0 %v87
  %169 = vmatprep.subr.bf16.mxu0 0
  %170 = vmatpush1.bf16.msra.mxu0 %v90
  %171 = vmatprep.subr.bf16.mxu0 0
  %172 = vmatpush1.bf16.msra.mxu0 %v93
  %173 = vmatprep.subr.bf16.mxu0 0
  %174 = vmatpush1.bf16.msra.mxu0 %v96
  %175 = vmatprep.subr.bf16.mxu0 0
  %176 = vmatpush1.bf16.msra.mxu0 %v124
  %177 = vmatprep.subr.bf16.mxu0 0
  %178 = vmatpush1.bf16.msra.mxu0 0
  %179 = vmatprep.subr.bf16.mxu0 0
  %180 = vmatpush1.bf16.msra.mxu0 0
  %181 = vmatprep.subr.bf16.mxu0 0
  %182 = vmatpush1.bf16.msra.mxu0 0
  %183 = vmatprep.subr.bf16.mxu0 0
  %184 = vmatpush1.bf16.msra.mxu0 0
  %185 = vmatprep.subr.bf16.mxu0 0
  %186 = vmatpush1.bf16.msra.mxu0 0
  %187 = vmatprep.subr.bf16.mxu0 0
  %188 = vmatpush1.bf16.msra.mxu0 0
  %189 = vmatprep.subr.bf16.mxu0 0
  %190 = vmatpush1.bf16.msra.mxu0 0
  %191 = vmatprep.subr.bf16.mxu0 0
  %192 = vmatpush1.bf16.msra.mxu0 0
  %193 = vmatprep.subr.bf16.mxu0 0
  %194 = vmatpush1.bf16.msra.mxu0 0
  %195 = vmatprep.subr.bf16.mxu0 0
  %196 = vmatpush1.bf16.msra.mxu0 0
  %197 = vmatprep.subr.bf16.mxu0 0
  %198 = vmatpush1.bf16.msra.mxu0 0
  %199 = vmatprep.mubr.bf16.mxu0 0
  %200 = vmatmul.mubr.bf16.gmra.mrb[0].mxu0 %v114
  %v201 = vpop.f32.mrb[0].mxu0
  %v202 = vadd.f32 %v38, %v201
  %v203 = vpop.f32.mrb[0].mxu0
  %v204 = vpop.f32.mrb[0].mxu0
  %v205 = vpop.f32.mrb[0].mxu0
  %206 = vdwg.mxu0
  %vm207 = vcmp.ge.f32.partialorder %v161, 0.0
  %vm208 = vcmp.ge.f32.partialorder %v163, 0.0
  %vm209 = vcmp.ge.f32.partialorder %v202, 0.0
  %v210 = vmul.f32 %v161, 0.2
  %v211 = vmul.f32 %v163, 0.2
  %v212 = vmul.f32 %v202, 0.2
  %v213 = vsel %vm207, %v161, %v210
  %v214 = vsel %vm208, %v163, %v211
  %v215 = vsel %vm209, %v202, %v212
  %v216 = vpack.c.bf16 %v213, %v213
  %v217 = vpack.c.bf16 %v214, %v214
  %v218 = vpack.c.bf16 %v215, %v215
  %v222 = vunpack.c.l.b16 %v216
  %v223 = vunpack.c.l.b16 %v217
  %v224 = vunpack.c.l.b16 %v218
  %v225 = vpack.c.b16 %v223, %v222
  %v226 = vpack.c.b16 %v224, %v224
  %229 = vst [vmem:[%s3] sm:$0xff] %v225
  %vm230 = vcmask 27648
  %231 = vst.msk [vmem:[%s3 + $0x8] sm:$0xf] %vm230, %v226
  // Predicated region
  $region14: #{ms_stft_discriminator_forward.26} parent=0 // pred_check
    _
  $region15: #{ms_stft_discriminator_forward.26} parent=0 // pred_check_branch
    %233 = sbr.rel (0) target = $region17
  $region16: #{ms_stft_discriminator_forward.26} parent=0 // pred_region
    _
  $region17: #{ms_stft_discriminator_forward.26} parent=0 // pred_fallthru
    _
  // Predicated region
  $region18: #{ms_stft_discriminator_forward.26} parent=0 // pred_check
    _
  $region19: #{ms_stft_discriminator_forward.26} parent=0 // pred_check_branch
    %235 = sbr.rel (0) target = $region21
  $region20: #{ms_stft_discriminator_forward.26} parent=0 // pred_region
    _
  $region21: #{ms_stft_discriminator_forward.26} parent=0 // pred_fallthru
    _

// kernel: ms_stft_discriminator_forward.27
$region0: #{ms_stft_discriminator_forward.27}
  #allocation0 [shape = 'u32[]', space=smem, size = 0x4, offset = 0x4, fixed_abs, tag = 'smem constant byte address 0x4 - core index']
  #allocation1 [shape = 'u32[144,128]{1,0:T(1,128)}', space=vmem, size = 0x12000, scoped, tag = 'internal scratch']
  %s0 = inlined_call_operand.vmem [shape: bf16[8,72], index: 0, kind: input, shape index: {}]
  %s1 = inlined_call_operand.vmem [shape: bf16[72,260], index: 1, kind: input, shape index: {}]
  %s2 = inlined_call_operand.vmem [shape: f32[8,1], index: 2, kind: input, shape index: {}]
  %s3 = inlined_call_operand.vmem [shape: f32[8,260], index: 3, kind: output, shape index: {}]
  %s4 = sld [smem:[#allocation0]]
  $region22: #{ms_stft_discriminator_forward.27} parent=0
    _
  %s6 = ssub.s32 1, %s4
  %s7 = scalar_select 0, %s6, %s4
  // Predicated region
  $region2: #{ms_stft_discriminator_forward.27} parent=0 // pred_check
    _
  $region3: #{ms_stft_discriminator_forward.27} parent=0 // pred_check_branch
    %9 = sbr.rel (0) target = $region5
  $region4: #{ms_stft_discriminator_forward.27} parent=0 // pred_region
    _
  $region5: #{ms_stft_discriminator_forward.27} parent=0 // pred_fallthru
    _
  // Predicated region
  $region6: #{ms_stft_discriminator_forward.27} parent=0 // pred_check
    _
  $region7: #{ms_stft_discriminator_forward.27} parent=0 // pred_check_branch
    %11 = sbr.rel (0) target = $region9
  $region8: #{ms_stft_discriminator_forward.27} parent=0 // pred_region
    _
  $region9: #{ms_stft_discriminator_forward.27} parent=0 // pred_fallthru
    _
  // Predicated region
  $region10: #{ms_stft_discriminator_forward.27} parent=0 // pred_check
    _
  $region11: #{ms_stft_discriminator_forward.27} parent=0 // pred_check_branch
    %13 = sbr.rel (0) target = $region13
  $region12: #{ms_stft_discriminator_forward.27} parent=0 // pred_region
    _
  $region13: #{ms_stft_discriminator_forward.27} parent=0 // pred_fallthru
    _
  %v15 = vld [vmem:[%s0] sm:$0xf]
  %v16 = vld [vmem:[%s1] sm:$0xff]
  %v17 = vld [vmem:[%s1 + $0x8] sm:$0xf]
  %v18 = vld [vmem:[%s1 + $0xc] sm:$0xff]
  %v19 = vld [vmem:[%s1 + $0x14] sm:$0xf]
  %v20 = vld [vmem:[%s1 + $0x18] sm:$0xff]
  %v21 = vld [vmem:[%s1 + $0x20] sm:$0xf]
  %v22 = vld [vmem:[%s1 + $0x24] sm:$0xff]
  %v23 = vld [vmem:[%s1 + $0x2c] sm:$0xf]
  %v24 = vld [vmem:[%s1 + $0x30] sm:$0xff]
  %v25 = vld [vmem:[%s1 + $0x38] sm:$0xf]
  %v26 = vld [vmem:[%s1 + $0x3c] sm:$0xff]
  %v27 = vld [vmem:[%s1 + $0x44] sm:$0xf]
  %v28 = vld [vmem:[%s1 + $0x48] sm:$0xff]
  %v29 = vld [vmem:[%s1 + $0x50] sm:$0xf]
  %v30 = vld [vmem:[%s1 + $0x54] sm:$0xff]
  %v31 = vld [vmem:[%s1 + $0x5c] sm:$0xf]
  %v32 = vld [vmem:[%s1 + $0x60] sm:$0xff]
  %v33 = vld [vmem:[%s1 + $0x68] sm:$0xf]
  %v34 = vld [vmem:[%s2] sm:$0xff]
  %36 = vset.pattern.permute.xlu0 0
  %37 = vperm.xlu0 %36, %v34
  %v38 = vpop.permute.xlu0 %37
  %v58 = vunpack.c.l.b16 %v16
  %v59 = vunpack.c.h.b16 %v16
  %v60 = vunpack.c.l.b16 %v17
  %v61 = vunpack.c.l.b16 %v18
  %v62 = vunpack.c.h.b16 %v18
  %v63 = vunpack.c.l.b16 %v19
  %v64 = vunpack.c.l.b16 %v20
  %v65 = vunpack.c.h.b16 %v20
  %v66 = vunpack.c.l.b16 %v21
  %v67 = vunpack.c.l.b16 %v22
  %v68 = vunpack.c.h.b16 %v22
  %v69 = vunpack.c.l.b16 %v23
  %v70 = vunpack.c.l.b16 %v24
  %v71 = vunpack.c.h.b16 %v24
  %v72 = vunpack.c.l.b16 %v25
  %v73 = vunpack.c.l.b16 %v26
  %v74 = vunpack.c.h.b16 %v26
  %v75 = vunpack.c.l.b16 %v27
  %v76 = vunpack.c.l.b16 %v28
  %v77 = vunpack.c.h.b16 %v28
  %v78 = vunpack.c.l.b16 %v29
  %v79 = vunpack.c.l.b16 %v30
  %v80 = vunpack.c.h.b16 %v30
  %v81 = vunpack.c.l.b16 %v31
  %v82 = vunpack.c.l.b16 %v32
  %v83 = vunpack.c.h.b16 %v32
  %v84 = vunpack.c.l.b16 %v33
  %v85 = vpack.c.b16 %v61, %v58
  %v86 = vpack.c.b16 %v62, %v59
  %v87 = vpack.c.b16 %v63, %v60
  %v88 = vpack.c.b16 %v67, %v64
  %v89 = vpack.c.b16 %v68, %v65
  %v90 = vpack.c.b16 %v69, %v66
  %v91 = vpack.c.b16 %v73, %v70
  %v92 = vpack.c.b16 %v74, %v71
  %v93 = vpack.c.b16 %v75, %v72
  %v94 = vpack.c.b16 %v79, %v76
  %v95 = vpack.c.b16 %v80, %v77
  %v96 = vpack.c.b16 %v81, %v78
  %v97 = vpack.c.b16 %v82, %v82
  %v98 = vpack.c.b16 %v83, %v83
  %v99 = vpack.c.b16 %v84, %v84
  %vm112 = vcmask 588800
  %v114 = vsel %vm112, %v15, 0
  %vm116 = vcmask 1043456
  %v118 = vsel %vm116, %v97, 0
  %v121 = vsel %vm116, %v98, 0
  %v124 = vsel %vm116, %v99, 0
  %126 = vmatprep.subr.bf16.mxu0 %v86
  %127 = vmatpush1.bf16.msra.mxu0 %v85
  %128 = vmatprep.subr.bf16.mxu0 %v89
  %129 = vmatpush1.bf16.msra.mxu0 %v88
  %130 = vmatprep.subr.bf16.mxu0 %v92
  %131 = vmatpush1.bf16.msra.mxu0 %v91
  %132 = vmatprep.subr.bf16.mxu0 %v95
  %133 = vmatpush1.bf16.msra.mxu0 %v94
  %134 = vmatprep.subr.bf16.mxu0 %v121
  %135 = vmatpush1.bf16.msra.mxu0 %v118
  %136 = vmatprep.subr.bf16.mxu0 0
  %137 = vmatpush1.bf16.msra.mxu0 0
  %138 = vmatprep.subr.bf16.mxu0 0
  %139 = vmatpush1.bf16.msra.mxu0 0
  %140 = vmatprep.subr.bf16.mxu0 0
  %141 = vmatpush1.bf16.msra.mxu0 0
  %142 = vmatprep.subr.bf16.mxu0 0
  %143 = vmatpush1.bf16.msra.mxu0 0
  %144 = vmatprep.subr.bf16.mxu0 0
  %145 = vmatpush1.bf16.msra.mxu0 0
  %146 = vmatprep.subr.bf16.mxu0 0
  %147 = vmatpush1.bf16.msra.mxu0 0
  %148 = vmatprep.subr.bf16.mxu0 0
  %149 = vmatpush1.bf16.msra.mxu0 0
  %150 = vmatprep.subr.bf16.mxu0 0
  %151 = vmatpush1.bf16.msra.mxu0 0
  %152 = vmatprep.subr.bf16.mxu0 0
  %153 = vmatpush1.bf16.msra.mxu0 0
  %154 = vmatprep.subr.bf16.mxu0 0
  %155 = vmatpush1.bf16.msra.mxu0 0
  %156 = vmatprep.subr.bf16.mxu0 0
  %157 = vmatpush1.bf16.msra.mxu0 0
  %158 = vmatprep.mubr.bf16.mxu0 0
  %159 = vmatmul.mubr.bf16.gmra.mrb[0].mxu0 %v114
  %v160 = vpop.f32.mrb[0].mxu0
  %v161 = vadd.f32 %v38, %v160
  %v162 = vpop.f32.mrb[0].mxu0
  %v163 = vadd.f32 %v38, %v162
  %v164 = vpop.f32.mrb[0].mxu0
  %v165 = vpop.f32.mrb[0].mxu0
  %166 = vdwg.mxu0
  %167 = vmatprep.subr.bf16.mxu0 0
  %168 = vmatpush1.bf16.msra.mxu0 %v87
  %169 = vmatprep.subr.bf16.mxu0 0
  %170 = vmatpush1.bf16.msra.mxu0 %v90
  %171 = vmatprep.subr.bf16.mxu0 0
  %172 = vmatpush1.bf16.msra.mxu0 %v93
  %173 = vmatprep.subr.bf16.mxu0 0
  %174 = vmatpush1.bf16.msra.mxu0 %v96
  %175 = vmatprep.subr.bf16.mxu0 0
  %176 = vmatpush1.bf16.msra.mxu0 %v124
  %177 = vmatprep.subr.bf16.mxu0 0
  %178 = vmatpush1.bf16.msra.mxu0 0
  %179 = vmatprep.subr.bf16.mxu0 0
  %180 = vmatpush1.bf16.msra.mxu0 0
  %181 = vmatprep.subr.bf16.mxu0 0
  %182 = vmatpush1.bf16.msra.mxu0 0
  %183 = vmatprep.subr.bf16.mxu0 0
  %184 = vmatpush1.bf16.msra.mxu0 0
  %185 = vmatprep.subr.bf16.mxu0 0
  %186 = vmatpush1.bf16.msra.mxu0 0
  %187 = vmatprep.subr.bf16.mxu0 0
  %188 = vmatpush1.bf16.msra.mxu0 0
  %189 = vmatprep.subr.bf16.mxu0 0
  %190 = vmatpush1.bf16.msra.mxu0 0
  %191 = vmatprep.subr.bf16.mxu0 0
  %192 = vmatpush1.bf16.msra.mxu0 0
  %193 = vmatprep.subr.bf16.mxu0 0
  %194 = vmatpush1.bf16.msra.mxu0 0
  %195 = vmatprep.subr.bf16.mxu0 0
  %196 = vmatpush1.bf16.msra.mxu0 0
  %197 = vmatprep.subr.bf16.mxu0 0
  %198 = vmatpush1.bf16.msra.mxu0 0
  %199 = vmatprep.mubr.bf16.mxu0 0
  %200 = vmatmul.mubr.bf16.gmra.mrb[0].mxu0 %v114
  %v201 = vpop.f32.mrb[0].mxu0
  %v202 = vadd.f32 %v38, %v201
  %v203 = vpop.f32.mrb[0].mxu0
  %v204 = vpop.f32.mrb[0].mxu0
  %v205 = vpop.f32.mrb[0].mxu0
  %206 = vdwg.mxu0
  %207 = vst [vmem:[%s3] sm:$0xff] %v161
  %208 = vst [vmem:[%s3 + $0x8] sm:$0xff] %v163
  %vm209 = vcmask 31744
  %210 = vst.msk [vmem:[%s3 + $0x10] sm:$0xff] %vm209, %v202
  // Predicated region
  $region14: #{ms_stft_discriminator_forward.27} parent=0 // pred_check
    _
  $region15: #{ms_stft_discriminator_forward.27} parent=0 // pred_check_branch
    %212 = sbr.rel (0) target = $region17
  $region16: #{ms_stft_discriminator_forward.27} parent=0 // pred_region
    _
  $region17: #{ms_stft_discriminator_forward.27} parent=0 // pred_fallthru
    _
  // Predicated region
  $region18: #{ms_stft_discriminator_forward.27} parent=0 // pred_check
    _
  $region19: #{ms_stft_discriminator_forward.27} parent=0 // pred_check_branch
    %214 = sbr.rel (0) target = $region21
  $region20: #{ms_stft_discriminator_forward.27} parent=0 // pred_region
    _
  $region21: #{ms_stft_discriminator_forward.27} parent=0 // pred_fallthru
    _

// kernel: ms_stft_discriminator_forward.35
$region0: #{ms_stft_discriminator_forward.35}
  #allocation0 [shape = 'u32[]', space=smem, size = 0x4, offset = 0x4, fixed_abs, tag = 'smem constant byte address 0x4 - core index']
  #allocation1 [shape = 'u32[144,128]{1,0:T(1,128)}', space=vmem, size = 0x12000, scoped, tag = 'internal scratch']
  %s0 = inlined_call_operand.vmem [shape: bf16[40,32], index: 0, kind: input, shape index: {}]
  %s1 = inlined_call_operand.vmem [shape: bf16[32,60], index: 1, kind: input, shape index: {}]
  %s2 = inlined_call_operand.vmem [shape: f32[40,1], index: 2, kind: input, shape index: {}]
  %s3 = inlined_call_operand.vmem [shape: bf16[40,60], index: 3, kind: output, shape index: {}]
  %s4 = sld [smem:[#allocation0]]
  $region22: #{ms_stft_discriminator_forward.35} parent=0
    _
  %s6 = ssub.s32 1, %s4
  %s7 = scalar_select 0, %s6, %s4
  // Predicated region
  $region2: #{ms_stft_discriminator_forward.35} parent=0 // pred_check
    _
  $region3: #{ms_stft_discriminator_forward.35} parent=0 // pred_check_branch
    %9 = sbr.rel (0) target = $region5
  $region4: #{ms_stft_discriminator_forward.35} parent=0 // pred_region
    _
  $region5: #{ms_stft_discriminator_forward.35} parent=0 // pred_fallthru
    _
  // Predicated region
  $region6: #{ms_stft_discriminator_forward.35} parent=0 // pred_check
    _
  $region7: #{ms_stft_discriminator_forward.35} parent=0 // pred_check_branch
    %11 = sbr.rel (0) target = $region9
  $region8: #{ms_stft_discriminator_forward.35} parent=0 // pred_region
    _
  $region9: #{ms_stft_discriminator_forward.35} parent=0 // pred_fallthru
    _
  // Predicated region
  $region10: #{ms_stft_discriminator_forward.35} parent=0 // pred_check
    _
  $region11: #{ms_stft_discriminator_forward.35} parent=0 // pred_check_branch
    %13 = sbr.rel (0) target = $region13
  $region12: #{ms_stft_discriminator_forward.35} parent=0 // pred_region
    _
  $region13: #{ms_stft_discriminator_forward.35} parent=0 // pred_fallthru
    _
  %v15 = vld [vmem:[%s0] sm:$0xf]
  %v16 = vld [vmem:[%s0 + $0x4] sm:$0xf]
  %v17 = vld [vmem:[%s0 + $0x8] sm:$0xf]
  %v18 = vld [vmem:[%s0 + $0xc] sm:$0xf]
  %v19 = vld [vmem:[%s0 + $0x10] sm:$0xf]
  %v20 = vld [vmem:[%s1] sm:$0xf]
  %v21 = vld [vmem:[%s1 + $0x4] sm:$0xf]
  %v22 = vld [vmem:[%s1 + $0x8] sm:$0xf]
  %v23 = vld [vmem:[%s1 + $0xc] sm:$0xf]
  %v24 = vld [vmem:[%s2] sm:$0xff]
  %v25 = vld [vmem:[%s2 + $0x8] sm:$0xff]
  %v26 = vld [vmem:[%s2 + $0x10] sm:$0xff]
  %v27 = vld [vmem:[%s2 + $0x18] sm:$0xff]
  %v28 = vld [vmem:[%s2 + $0x20] sm:$0xff]
  %30 = vset.pattern.permute.xlu0 0
  %31 = vperm.xlu0 %30, %v24
  %v32 = vpop.permute.xlu0 %31
  %35 = vset.pattern.permute.xlu0 0
  %36 = vperm.xlu0 %35, %v25
  %v37 = vpop.permute.xlu0 %36
  %40 = vset.pattern.permute.xlu0 0
  %41 = vperm.xlu0 %40, %v26
  %v42 = vpop.permute.xlu0 %41
  %45 = vset.pattern.permute.xlu0 0
  %46 = vperm.xlu0 %45, %v27
  %v47 = vpop.permute.xlu0 %46
  %50 = vset.pattern.permute.xlu0 0
  %51 = vperm.xlu0 %50, %v28
  %v52 = vpop.permute.xlu0 %51
  %v59 = vunpack.c.l.b16 %v15
  %v60 = vunpack.c.l.b16 %v16
  %v61 = vunpack.c.l.b16 %v17
  %v62 = vunpack.c.l.b16 %v18
  %v63 = vunpack.c.l.b16 %v19
  %v64 = vpack.c.b16 %v60, %v59
  %v65 = vpack.c.b16 %v62, %v61
  %v66 = vpack.c.b16 %v63, %v63
  %v71 = vunpack.c.l.b16 %v20
  %v72 = vunpack.c.l.b16 %v21
  %v73 = vunpack.c.l.b16 %v22
  %v74 = vunpack.c.l.b16 %v23
  %v75 = vpack.c.b16 %v72, %v71
  %v76 = vpack.c.b16 %v74, %v73
  %vm79 = vcmask 261120
  %v81 = vsel %vm79, %v64, 0
  %v84 = vsel %vm79, %v65, 0
  %v87 = vsel %vm79, %v66, 0
  %89 = vmatprep.subr.bf16.mxu0 0
  %90 = vmatpush1.bf16.msra.mxu0 %v75
  %91 = vmatprep.subr.bf16.mxu0 0
  %92 = vmatpush1.bf16.msra.mxu0 %v76
  %93 = vmatprep.subr.bf16.mxu0 0
  %94 = vmatpush1.bf16.msra.mxu0 0
  %95 = vmatprep.subr.bf16.mxu0 0
  %96 = vmatpush1.bf16.msra.mxu0 0
  %97 = vmatprep.subr.bf16.mxu0 0
  %98 = vmatpush1.bf16.msra.mxu0 0
  %99 = vmatprep.subr.bf16.mxu0 0
  %100 = vmatpush1.bf16.msra.mxu0 0
  %101 = vmatprep.subr.bf16.mxu0 0
  %102 = vmatpush1.bf16.msra.mxu0 0
  %103 = vmatprep.subr.bf16.mxu0 0
  %104 = vmatpush1.bf16.msra.mxu0 0
  %105 = vmatprep.subr.bf16.mxu0 0
  %106 = vmatpush1.bf16.msra.mxu0 0
  %107 = vmatprep.subr.bf16.mxu0 0
  %108 = vmatpush1.bf16.msra.mxu0 0
  %109 = vmatprep.subr.bf16.mxu0 0
  %110 = vmatpush1.bf16.msra.mxu0 0
  %111 = vmatprep.subr.bf16.mxu0 0
  %112 = vmatpush1.bf16.msra.mxu0 0
  %113 = vmatprep.subr.bf16.mxu0 0
  %114 = vmatpush1.bf16.msra.mxu0 0
  %115 = vmatprep.subr.bf16.mxu0 0
  %116 = vmatpush1.bf16.msra.mxu0 0
  %117 = vmatprep.subr.bf16.mxu0 0
  %118 = vmatpush1.bf16.msra.mxu0 0
  %119 = vmatprep.subr.bf16.mxu0 0
  %120 = vmatpush1.bf16.msra.mxu0 0
  %121 = vmatprep.mubr.bf16.mxu0 0
  %122 = vmatmul.mubr.bf16.gmra.mrb[0].mxu0 %v81
  %v123 = vpop.f32.mrb[0].mxu0
  %v124 = vadd.f32 %v32, %v123
  %v125 = vpop.f32.mrb[0].mxu0
  %v126 = vpop.f32.mrb[0].mxu0
  %v127 = vadd.f32 %v37, %v126
  %v128 = vpop.f32.mrb[0].mxu0
  %129 = vmatprep.mubr.bf16.mxu0 0
  %130 = vmatmul.mubr.bf16.gmra.mrb[0].mxu0 %v84
  %v131 = vpop.f32.mrb[0].mxu0
  %v132 = vadd.f32 %v42, %v131
  %v133 = vpop.f32.mrb[0].mxu0
  %v134 = vpop.f32.mrb[0].mxu0
  %v135 = vadd.f32 %v47, %v134
  %v136 = vpop.f32.mrb[0].mxu0
  %137 = vmatprep.mubr.bf16.mxu0 0
  %138 = vmatmul.mubr.bf16.gmra.mrb[0].mxu0 %v87
  %v139 = vpop.f32.mrb[0].mxu0
  %v140 = vadd.f32 %v52, %v139
  %v141 = vpop.f32.mrb[0].mxu0
  %v142 = vpop.f32.mrb[0].mxu0
  %v143 = vpop.f32.mrb[0].mxu0
  %144 = vdwg.mxu0
  %v145 = vpack.c.bf16 %v127, %v124
  %v146 = vpack.c.bf16 %v135, %v132
  %v147 = vpack.c.bf16 %v140, %v140
  %v151 = vunpack.c.l.b16 %v145
  %v152 = vunpack.c.h.b16 %v145
  %v153 = vunpack.c.l.b16 %v146
  %v154 = vunpack.c.h.b16 %v146
  %v155 = vunpack.c.l.b16 %v147
  %v156 = vpack.c.b16 %v151, %v151
  %v157 = vpack.c.b16 %v152, %v152
  %v158 = vpack.c.b16 %v153, %v153
  %v159 = vpack.c.b16 %v154, %v154
  %v160 = vpack.c.b16 %v155, %v155
  %vm166 = vcmask 486400
  %167 = vst.msk [vmem:[%s3] sm:$0xf] %vm166, %v156
  %168 = vst.msk [vmem:[%s3 + $0x4] sm:$0xf] %vm166, %v157
  %169 = vst.msk [vmem:[%s3 + $0x8] sm:$0xf] %vm166, %v158
  %170 = vst.msk [vmem:[%s3 + $0xc] sm:$0xf] %vm166, %v159
  %171 = vst.msk [vmem:[%s3 + $0x10] sm:$0xf] %vm166, %v160
  // Predicated region
  $region14: #{ms_stft_discriminator_forward.35} parent=0 // pred_check
    _
  $region15: #{ms_stft_discriminator_forward.35} parent=0 // pred_check_branch
    %173 = sbr.rel (0) target = $region17
  $region16: #{ms_stft_discriminator_forward.35} parent=0 // pred_region
    _
  $region17: #{ms_stft_discriminator_forward.35} parent=0 // pred_fallthru
    _
  // Predicated region
  $region18: #{ms_stft_discriminator_forward.35} parent=0 // pred_check
    _
  $region19: #{ms_stft_discriminator_forward.35} parent=0 // pred_check_branch
    %175 = sbr.rel (0) target = $region21
  $region20: #{ms_stft_discriminator_forward.35} parent=0 // pred_region
    _
  $region21: #{ms_stft_discriminator_forward.35} parent=0 // pred_fallthru
    _

// kernel: ms_stft_discriminator_forward.36
$region0: #{ms_stft_discriminator_forward.36}
  #allocation0 [shape = 'u32[]', space=smem, size = 0x4, offset = 0x4, fixed_abs, tag = 'smem constant byte address 0x4 - core index']
  #allocation1 [shape = 'u32[144,128]{1,0:T(1,128)}', space=vmem, size = 0x12000, scoped, tag = 'internal scratch']
  %s0 = inlined_call_operand.vmem [shape: bf16[8,54], index: 0, kind: input, shape index: {}]
  %s1 = inlined_call_operand.vmem [shape: bf16[54,1020], index: 1, kind: input, shape index: {}]
  %s2 = inlined_call_operand.vmem [shape: f32[8,1], index: 2, kind: input, shape index: {}]
  %s3 = inlined_call_operand.vmem [shape: bf16[8,1020], index: 3, kind: output, shape index: {}]
  %s4 = sld [smem:[#allocation0]]
  $region22: #{ms_stft_discriminator_forward.36} parent=0
    _
  %s6 = ssub.s32 1, %s4
  %s7 = scalar_select 0, %s6, %s4
  // Predicated region
  $region2: #{ms_stft_discriminator_forward.36} parent=0 // pred_check
    _
  $region3: #{ms_stft_discriminator_forward.36} parent=0 // pred_check_branch
    %9 = sbr.rel (0) target = $region5
  $region4: #{ms_stft_discriminator_forward.36} parent=0 // pred_region
    _
  $region5: #{ms_stft_discriminator_forward.36} parent=0 // pred_fallthru
    _
  // Predicated region
  $region6: #{ms_stft_discriminator_forward.36} parent=0 // pred_check
    _
  $region7: #{ms_stft_discriminator_forward.36} parent=0 // pred_check_branch
    %11 = sbr.rel (0) target = $region9
  $region8: #{ms_stft_discriminator_forward.36} parent=0 // pred_region
    _
  $region9: #{ms_stft_discriminator_forward.36} parent=0 // pred_fallthru
    _
  // Predicated region
  $region10: #{ms_stft_discriminator_forward.36} parent=0 // pred_check
    _
  $region11: #{ms_stft_discriminator_forward.36} parent=0 // pred_check_branch
    %13 = sbr.rel (0) target = $region13
  $region12: #{ms_stft_discriminator_forward.36} parent=0 // pred_region
    _
  $region13: #{ms_stft_discriminator_forward.36} parent=0 // pred_fallthru
    _
  %v15 = vld [vmem:[%s0] sm:$0xf]
  %v16 = vld [vmem:[%s1] sm:$0xff]
  %v17 = vld [vmem:[%s1 + $0x8] sm:$0xff]
  %v18 = vld [vmem:[%s1 + $0x10] sm:$0xff]
  %v19 = vld [vmem:[%s1 + $0x18] sm:$0xff]
  %v20 = vld [vmem:[%s1 + $0x20] sm:$0xff]
  %v21 = vld [vmem:[%s1 + $0x28] sm:$0xff]
  %v22 = vld [vmem:[%s1 + $0x30] sm:$0xff]
  %v23 = vld [vmem:[%s1 + $0x38] sm:$0xff]
  %v24 = vld [vmem:[%s1 + $0x40] sm:$0xff]
  %v25 = vld [vmem:[%s1 + $0x48] sm:$0xff]
  %v26 = vld [vmem:[%s1 + $0x50] sm:$0xff]
  %v27 = vld [vmem:[%s1 + $0x58] sm:$0xff]
  %v28 = vld [vmem:[%s1 + $0x60] sm:$0xff]
  %v29 = vld [vmem:[%s1 + $0x68] sm:$0xff]
  %v30 = vld [vmem:[%s1 + $0x70] sm:$0xff]
  %v31 = vld [vmem:[%s1 + $0x78] sm:$0xff]
  %v32 = vld [vmem:[%s1 + $0x80] sm:$0xff]
  %v33 = vld [vmem:[%s1 + $0x88] sm:$0xff]
  %v34 = vld [vmem:[%s1 + $0x90] sm:$0xff]
  %v35 = vld [vmem:[%s1 + $0x98] sm:$0xff]
  %v36 = vld [vmem:[%s1 + $0xa0] sm:$0xff]
  %v37 = vld [vmem:[%s1 + $0xa8] sm:$0xff]
  %v38 = vld [vmem:[%s1 + $0xb0] sm:$0xff]
  %v39 = vld [vmem:[%s1 + $0xb8] sm:$0xff]
  %v40 = vld [vmem:[%s1 + $0xc0] sm:$0x77]
  %v41 = vld [vmem:[%s1 + $0xc8] sm:$0x77]
  %v42 = vld [vmem:[%s1 + $0xd0] sm:$0x77]
  %v43 = vld [vmem:[%s1 + $0xd8] sm:$0x77]
  %v44 = vld [vmem:[%s2] sm:$0xff]
  %46 = vset.pattern.permute.xlu0 0
  %47 = vperm.xlu0 %46, %v44
  %v48 = vpop.permute.xlu0 %47
  %v78 = vunpack.c.l.b16 %v16
  %v79 = vunpack.c.h.b16 %v16
  %v80 = vunpack.c.l.b16 %v17
  %v81 = vunpack.c.h.b16 %v17
  %v82 = vunpack.c.l.b16 %v18
  %v83 = vunpack.c.h.b16 %v18
  %v84 = vunpack.c.l.b16 %v19
  %v85 = vunpack.c.h.b16 %v19
  %v86 = vunpack.c.l.b16 %v20
  %v87 = vunpack.c.h.b16 %v20
  %v88 = vunpack.c.l.b16 %v21
  %v89 = vunpack.c.h.b16 %v21
  %v90 = vunpack.c.l.b16 %v22
  %v91 = vunpack.c.h.b16 %v22
  %v92 = vunpack.c.l.b16 %v23
  %v93 = vunpack.c.h.b16 %v23
  %v94 = vunpack.c.l.b16 %v24
  %v95 = vunpack.c.h.b16 %v24
  %v96 = vunpack.c.l.b16 %v25
  %v97 = vunpack.c.h.b16 %v25
  %v98 = vunpack.c.l.b16 %v26
  %v99 = vunpack.c.h.b16 %v26
  %v100 = vunpack.c.l.b16 %v27
  %v101 = vunpack.c.h.b16 %v27
  %v102 = vunpack.c.l.b16 %v28
  %v103 = vunpack.c.h.b16 %v28
  %v104 = vunpack.c.l.b16 %v29
  %v105 = vunpack.c.h.b16 %v29
  %v106 = vunpack.c.l.b16 %v30
  %v107 = vunpack.c.h.b16 %v30
  %v108 = vunpack.c.l.b16 %v31
  %v109 = vunpack.c.h.b16 %v31
  %v110 = vunpack.c.l.b16 %v32
  %v111 = vunpack.c.h.b16 %v32
  %v112 = vunpack.c.l.b16 %v33
  %v113 = vunpack.c.h.b16 %v33
  %v114 = vunpack.c.l.b16 %v34
  %v115 = vunpack.c.h.b16 %v34
  %v116 = vunpack.c.l.b16 %v35
  %v117 = vunpack.c.h.b16 %v35
  %v118 = vunpack.c.l.b16 %v36
  %v119 = vunpack.c.h.b16 %v36
  %v120 = vunpack.c.l.b16 %v37
  %v121 = vunpack.c.h.b16 %v37
  %v122 = vunpack.c.l.b16 %v38
  %v123 = vunpack.c.h.b16 %v38
  %v124 = vunpack.c.l.b16 %v39
  %v125 = vunpack.c.h.b16 %v39
  %v126 = vunpack.c.l.b16 %v40
  %v127 = vunpack.c.h.b16 %v40
  %v128 = vunpack.c.l.b16 %v41
  %v129 = vunpack.c.h.b16 %v41
  %v130 = vunpack.c.l.b16 %v42
  %v131 = vunpack.c.h.b16 %v42
  %v132 = vunpack.c.l.b16 %v43
  %v133 = vunpack.c.h.b16 %v43
  %v134 = vpack.c.b16 %v86, %v78
  %v135 = vpack.c.b16 %v87, %v79
  %v136 = vpack.c.b16 %v88, %v80
  %v137 = vpack.c.b16 %v89, %v81
  %v138 = vpack.c.b16 %v90, %v82
  %v139 = vpack.c.b16 %v91, %v83
  %v140 = vpack.c.b16 %v92, %v84
  %v141 = vpack.c.b16 %v93, %v85
  %v142 = vpack.c.b16 %v102, %v94
  %v143 = vpack.c.b16 %v103, %v95
  %v144 = vpack.c.b16 %v104, %v96
  %v145 = vpack.c.b16 %v105, %v97
  %v146 = vpack.c.b16 %v106, %v98
  %v147 = vpack.c.b16 %v107, %v99
  %v148 = vpack.c.b16 %v108, %v100
  %v149 = vpack.c.b16 %v109, %v101
  %v150 = vpack.c.b16 %v118, %v110
  %v151 = vpack.c.b16 %v119, %v111
  %v152 = vpack.c.b16 %v120, %v112
  %v153 = vpack.c.b16 %v121, %v113
  %v154 = vpack.c.b16 %v122, %v114
  %v155 = vpack.c.b16 %v123, %v115
  %v156 = vpack.c.b16 %v124, %v116
  %v157 = vpack.c.b16 %v125, %v117
  %v158 = vpack.c.b16 %v126, %v126
  %v159 = vpack.c.b16 %v127, %v127
  %v160 = vpack.c.b16 %v128, %v128
  %v161 = vpack.c.b16 %v129, %v129
  %v162 = vpack.c.b16 %v130, %v130
  %v163 = vpack.c.b16 %v131, %v131
  %v164 = vpack.c.b16 %v132, %v132
  %v165 = vpack.c.b16 %v133, %v133
  %vm190 = vcmask 441344
  %v192 = vsel %vm190, %v15, 0
  %vm194 = vcmask 1042432
  %v196 = vsel %vm194, %v158, 0
  %v199 = vsel %vm194, %v159, 0
  %v202 = vsel %vm194, %v160, 0
  %v205 = vsel %vm194, %v161, 0
  %v208 = vsel %vm194, %v162, 0
  %v211 = vsel %vm194, %v163, 0
  %v214 = vsel %vm194, %v164, 0
  %v217 = vsel %vm194, %v165, 0
  %219 = vmatprep.subr.bf16.mxu0 %v135
  %220 = vmatpush1.bf16.msra.mxu0 %v134
  %221 = vmatprep.subr.bf16.mxu0 %v143
  %222 = vmatpush1.bf16.msra.mxu0 %v142
  %223 = vmatprep.subr.bf16.mxu0 %v151
  %224 = vmatpush1.bf16.msra.mxu0 %v150
  %225 = vmatprep.subr.bf16.mxu0 %v199
  %226 = vmatpush1.bf16.msra.mxu0 %v196
  %227 = vmatprep.subr.bf16.mxu0 0
  %228 = vmatpush1.bf16.msra.mxu0 0
  %229 = vmatprep.subr.bf16.mxu0 0
  %230 = vmatpush1.bf16.msra.mxu0 0
  %231 = vmatprep.subr.bf16.mxu0 0
  %232 = vmatpush1.bf16.msra.mxu0 0
  %233 = vmatprep.subr.bf16.mxu0 0
  %234 = vmatpush1.bf16.msra.mxu0 0
  %235 = vmatprep.subr.bf16.mxu0 0
  %236 = vmatpush1.bf16.msra.mxu0 0
  %237 = vmatprep.subr.bf16.mxu0 0
  %238 = vmatpush1.bf16.msra.mxu0 0
  %239 = vmatprep.subr.bf16.mxu0 0
  %240 = vmatpush1.bf16.msra.mxu0 0
  %241 = vmatprep.subr.bf16.mxu0 0
  %242 = vmatpush1.bf16.msra.mxu0 0
  %243 = vmatprep.subr.bf16.mxu0 0
  %244 = vmatpush1.bf16.msra.mxu0 0
  %245 = vmatprep.subr.bf16.mxu0 0
  %246 = vmatpush1.bf16.msra.mxu0 0
  %247 = vmatprep.subr.bf16.mxu0 0
  %248 = vmatpush1.bf16.msra.mxu0 0
  %249 = vmatprep.subr.bf16.mxu0 0
  %250 = vmatpush1.bf16.msra.mxu0 0
  %251 = vmatprep.mubr.bf16.mxu0 0
  %252 = vmatmul.mubr.bf16.gmra.mrb[0].mxu0 %v192
  %v253 = vpop.f32.mrb[0].mxu0
  %v254 = vadd.f32 %v48, %v253
  %v255 = vpop.f32.mrb[0].mxu0
  %v256 = vadd.f32 %v48, %v255
  %v257 = vpop.f32.mrb[0].mxu0
  %v258 = vpop.f32.mrb[0].mxu0
  %259 = vdwg.mxu0
  %260 = vmatprep.subr.bf16.mxu0 %v137
  %261 = vmatpush1.bf16.msra.mxu0 %v136
  %262 = vmatprep.subr.bf16.mxu0 %v145
  %263 = vmatpush1.bf16.msra.mxu0 %v144
  %264 = vmatprep.subr.bf16.mxu0 %v153
  %265 = vmatpush1.bf16.msra.mxu0 %v152
  %266 = vmatprep.subr.bf16.mxu0 %v205
  %267 = vmatpush1.bf16.msra.mxu0 %v202
  %268 = vmatprep.subr.bf16.mxu0 0
  %269 = vmatpush1.bf16.msra.mxu0 0
  %270 = vmatprep.subr.bf16.mxu0 0
  %271 = vmatpush1.bf16.msra.mxu0 0
  %272 = vmatprep.subr.bf16.mxu0 0
  %273 = vmatpush1.bf16.msra.mxu0 0
  %274 = vmatprep.subr.bf16.mxu0 0
  %275 = vmatpush1.bf16.msra.mxu0 0
  %276 = vmatprep.subr.bf16.mxu0 0
  %277 = vmatpush1.bf16.msra.mxu0 0
  %278 = vmatprep.subr.bf16.mxu0 0
  %279 = vmatpush1.bf16.msra.mxu0 0
  %280 = vmatprep.subr.bf16.mxu0 0
  %281 = vmatpush1.bf16.msra.mxu0 0
  %282 = vmatprep.subr.bf16.mxu0 0
  %283 = vmatpush1.bf16.msra.mxu0 0
  %284 = vmatprep.subr.bf16.mxu0 0
  %285 = vmatpush1.bf16.msra.mxu0 0
  %286 = vmatprep.subr.bf16.mxu0 0
  %287 = vmatpush1.bf16.msra.mxu0 0
  %288 = vmatprep.subr.bf16.mxu0 0
  %289 = vmatpush1.bf16.msra.mxu0 0
  %290 = vmatprep.subr.bf16.mxu0 0
  %291 = vmatpush1.bf16.msra.mxu0 0
  %292 = vmatprep.mubr.bf16.mxu0 0
  %293 = vmatmul.mubr.bf16.gmra.mrb[0].mxu0 %v192
  %v294 = vpop.f32.mrb[0].mxu0
  %v295 = vadd.f32 %v48, %v294
  %v296 = vpop.f32.mrb[0].mxu0
  %v297 = vadd.f32 %v48, %v296
  %v298 = vpop.f32.mrb[0].mxu0
  %v299 = vpop.f32.mrb[0].mxu0
  %300 = vdwg.mxu0
  %301 = vmatprep.subr.bf16.mxu0 %v139
  %302 = vmatpush1.bf16.msra.mxu0 %v138
  %303 = vmatprep.subr.bf16.mxu0 %v147
  %304 = vmatpush1.bf16.msra.mxu0 %v146
  %305 = vmatprep.subr.bf16.mxu0 %v155
  %306 = vmatpush1.bf16.msra.mxu0 %v154
  %307 = vmatprep.subr.bf16.mxu0 %v211
  %308 = vmatpush1.bf16.msra.mxu0 %v208
  %309 = vmatprep.subr.bf16.mxu0 0
  %310 = vmatpush1.bf16.msra.mxu0 0
  %311 = vmatprep.subr.bf16.mxu0 0
  %312 = vmatpush1.bf16.msra.mxu0 0
  %313 = vmatprep.subr.bf16.mxu0 0
  %314 = vmatpush1.bf16.msra.mxu0 0
  %315 = vmatprep.subr.bf16.mxu0 0
  %316 = vmatpush1.bf16.msra.mxu0 0
  %317 = vmatprep.subr.bf16.mxu0 0
  %318 = vmatpush1.bf16.msra.mxu0 0
  %319 = vmatprep.subr.bf16.mxu0 0
  %320 = vmatpush1.bf16.msra.mxu0 0
  %321 = vmatprep.subr.bf16.mxu0 0
  %322 = vmatpush1.bf16.msra.mxu0 0
  %323 = vmatprep.subr.bf16.mxu0 0
  %324 = vmatpush1.bf16.msra.mxu0 0
  %325 = vmatprep.subr.bf16.mxu0 0
  %326 = vmatpush1.bf16.msra.mxu0 0
  %327 = vmatprep.subr.bf16.mxu0 0
  %328 = vmatpush1.bf16.msra.mxu0 0
  %329 = vmatprep.subr.bf16.mxu0 0
  %330 = vmatpush1.bf16.msra.mxu0 0
  %331 = vmatprep.subr.bf16.mxu0 0
  %332 = vmatpush1.bf16.msra.mxu0 0
  %333 = vmatprep.mubr.bf16.mxu0 0
  %334 = vmatmul.mubr.bf16.gmra.mrb[0].mxu0 %v192
  %v335 = vpop.f32.mrb[0].mxu0
  %v336 = vadd.f32 %v48, %v335
  %v337 = vpop.f32.mrb[0].mxu0
  %v338 = vadd.f32 %v48, %v337
  %v339 = vpop.f32.mrb[0].mxu0
  %v340 = vpop.f32.mrb[0].mxu0
  %341 = vdwg.mxu0
  %342 = vmatprep.subr.bf16.mxu0 %v141
  %343 = vmatpush1.bf16.msra.mxu0 %v140
  %344 = vmatprep.subr.bf16.mxu0 %v149
  %345 = vmatpush1.bf16.msra.mxu0 %v148
  %346 = vmatprep.subr.bf16.mxu0 %v157
  %347 = vmatpush1.bf16.msra.mxu0 %v156
  %348 = vmatprep.subr.bf16.mxu0 %v217
  %349 = vmatpush1.bf16.msra.mxu0 %v214
  %350 = vmatprep.subr.bf16.mxu0 0
  %351 = vmatpush1.bf16.msra.mxu0 0
  %352 = vmatprep.subr.bf16.mxu0 0
  %353 = vmatpush1.bf16.msra.mxu0 0
  %354 = vmatprep.subr.bf16.mxu0 0
  %355 = vmatpush1.bf16.msra.mxu0 0
  %356 = vmatprep.subr.bf16.mxu0 0
  %357 = vmatpush1.bf16.msra.mxu0 0
  %358 = vmatprep.subr.bf16.mxu0 0
  %359 = vmatpush1.bf16.msra.mxu0 0
  %360 = vmatprep.subr.bf16.mxu0 0
  %361 = vmatpush1.bf16.msra.mxu0 0
  %362 = vmatprep.subr.bf16.mxu0 0
  %363 = vmatpush1.bf16.msra.mxu0 0
  %364 = vmatprep.subr.bf16.mxu0 0
  %365 = vmatpush1.bf16.msra.mxu0 0
  %366 = vmatprep.subr.bf16.mxu0 0
  %367 = vmatpush1.bf16.msra.mxu0 0
  %368 = vmatprep.subr.bf16.mxu0 0
  %369 = vmatpush1.bf16.msra.mxu0 0
  %370 = vmatprep.subr.bf16.mxu0 0
  %371 = vmatpush1.bf16.msra.mxu0 0
  %372 = vmatprep.subr.bf16.mxu0 0
  %373 = vmatpush1.bf16.msra.mxu0 0
  %374 = vmatprep.mubr.bf16.mxu0 0
  %375 = vmatmul.mubr.bf16.gmra.mrb[0].mxu0 %v192
  %v376 = vpop.f32.mrb[0].mxu0
  %v377 = vadd.f32 %v48, %v376
  %v378 = vpop.f32.mrb[0].mxu0
  %v379 = vadd.f32 %v48, %v378
  %v380 = vpop.f32.mrb[0].mxu0
  %v381 = vpop.f32.mrb[0].mxu0
  %382 = vdwg.mxu0
  %vm383 = vcmp.ge.f32.partialorder %v254, 0.0
  %vm384 = vcmp.ge.f32.partialorder %v256, 0.0
  %vm385 = vcmp.ge.f32.partialorder %v295, 0.0
  %vm386 = vcmp.ge.f32.partialorder %v297, 0.0
  %vm387 = vcmp.ge.f32.partialorder %v336, 0.0
  %vm388 = vcmp.ge.f32.partialorder %v338, 0.0
  %vm389 = vcmp.ge.f32.partialorder %v377, 0.0
  %vm390 = vcmp.ge.f32.partialorder %v379, 0.0
  %v391 = vmul.f32 %v254, 0.2
  %v392 = vmul.f32 %v256, 0.2
  %v393 = vmul.f32 %v295, 0.2
  %v394 = vmul.f32 %v297, 0.2
  %v395 = vmul.f32 %v336, 0.2
  %v396 = vmul.f32 %v338, 0.2
  %v397 = vmul.f32 %v377, 0.2
  %v398 = vmul.f32 %v379, 0.2
  %v399 = vsel %vm383, %v254, %v391
  %v400 = vsel %vm384, %v256, %v392
  %v401 = vsel %vm385, %v295, %v393
  %v402 = vsel %vm386, %v297, %v394
  %v403 = vsel %vm387, %v336, %v395
  %v404 = vsel %vm388, %v338, %v396
  %v405 = vsel %vm389, %v377, %v397
  %v406 = vsel %vm390, %v379, %v398
  %v407 = vpack.c.bf16 %v399, %v399
  %v408 = vpack.c.bf16 %v400, %v400
  %v409 = vpack.c.bf16 %v401, %v401
  %v410 = vpack.c.bf16 %v402, %v402
  %v411 = vpack.c.bf16 %v403, %v403
  %v412 = vpack.c.bf16 %v404, %v404
  %v413 = vpack.c.bf16 %v405, %v405
  %v414 = vpack.c.bf16 %v406, %v406
  %v423 = vunpack.c.l.b16 %v407
  %v424 = vunpack.c.l.b16 %v408
  %v425 = vunpack.c.l.b16 %v409
  %v426 = vunpack.c.l.b16 %v410
  %v427 = vunpack.c.l.b16 %v411
  %v428 = vunpack.c.l.b16 %v412
  %v429 = vunpack.c.l.b16 %v413
  %v430 = vunpack.c.l.b16 %v414
  %v431 = vpack.c.b16 %v424, %v423
  %v432 = vpack.c.b16 %v426, %v425
  %v433 = vpack.c.b16 %v428, %v427
  %v434 = vpack.c.b16 %v430, %v429
  %439 = vst [vmem:[%s3] sm:$0xff] %v431
  %440 = vst [vmem:[%s3 + $0x8] sm:$0xff] %v432
  %441 = vst [vmem:[%s3 + $0x10] sm:$0xff] %v433
  %vm442 = vcmask 1043456
  %vm443 = vcmask 1014788
  %vm444 = vmor %vm443, %vm442
  %445 = vst.msk [vmem:[%s3 + $0x18] sm:$0xff] %vm444, %v434
  // Predicated region
  $region14: #{ms_stft_discriminator_forward.36} parent=0 // pred_check
    _
  $region15: #{ms_stft_discriminator_forward.36} parent=0 // pred_check_branch
    %447 = sbr.rel (0) target = $region17
  $region16: #{ms_stft_discriminator_forward.36} parent=0 // pred_region
    _
  $region17: #{ms_stft_discriminator_forward.36} parent=0 // pred_fallthru
    _
  // Predicated region
  $region18: #{ms_stft_discriminator_forward.36} parent=0 // pred_check
    _
  $region19: #{ms_stft_discriminator_forward.36} parent=0 // pred_check_branch
    %449 = sbr.rel (0) target = $region21
  $region20: #{ms_stft_discriminator_forward.36} parent=0 // pred_region
    _
  $region21: #{ms_stft_discriminator_forward.36} parent=0 // pred_fallthru
    _

// kernel: ms_stft_discriminator_forward.37
$region0: #{ms_stft_discriminator_forward.37}
  #allocation0 [shape = 'u32[]', space=smem, size = 0x4, offset = 0x4, fixed_abs, tag = 'smem constant byte address 0x4 - core index']
  #allocation1 [shape = 'u32[144,128]{1,0:T(1,128)}', space=vmem, size = 0x12000, scoped, tag = 'internal scratch']
  %s0 = inlined_call_operand.vmem [shape: bf16[8,216], index: 0, kind: input, shape index: {}]
  %s1 = inlined_call_operand.vmem [shape: bf16[216,540], index: 1, kind: input, shape index: {}]
  %s2 = inlined_call_operand.vmem [shape: f32[8,1], index: 2, kind: input, shape index: {}]
  %s3 = inlined_call_operand.vmem [shape: bf16[8,540], index: 3, kind: output, shape index: {}]
  %s4 = sld [smem:[#allocation0]]
  $region22: #{ms_stft_discriminator_forward.37} parent=0
    _
  %s6 = ssub.s32 1, %s4
  %s7 = scalar_select 0, %s6, %s4
  // Predicated region
  $region2: #{ms_stft_discriminator_forward.37} parent=0 // pred_check
    _
  $region3: #{ms_stft_discriminator_forward.37} parent=0 // pred_check_branch
    %9 = sbr.rel (0) target = $region5
  $region4: #{ms_stft_discriminator_forward.37} parent=0 // pred_region
    _
  $region5: #{ms_stft_discriminator_forward.37} parent=0 // pred_fallthru
    _
  // Predicated region
  $region6: #{ms_stft_discriminator_forward.37} parent=0 // pred_check
    _
  $region7: #{ms_stft_discriminator_forward.37} parent=0 // pred_check_branch
    %11 = sbr.rel (0) target = $region9
  $region8: #{ms_stft_discriminator_forward.37} parent=0 // pred_region
    _
  $region9: #{ms_stft_discriminator_forward.37} parent=0 // pred_fallthru
    _
  // Predicated region
  $region10: #{ms_stft_discriminator_forward.37} parent=0 // pred_check
    _
  $region11: #{ms_stft_discriminator_forward.37} parent=0 // pred_check_branch
    %13 = sbr.rel (0) target = $region13
  $region12: #{ms_stft_discriminator_forward.37} parent=0 // pred_region
    _
  $region13: #{ms_stft_discriminator_forward.37} parent=0 // pred_fallthru
    _
  %v15 = vld [vmem:[%s0] sm:$0xff]
  %v16 = vld [vmem:[%s1] sm:$0xff]
  %v17 = vld [vmem:[%s1 + $0x8] sm:$0xff]
  %v18 = vld [vmem:[%s1 + $0x10] sm:$0xf]
  %v19 = vld [vmem:[%s1 + $0x14] sm:$0xff]
  %v20 = vld [vmem:[%s1 + $0x1c] sm:$0xff]
  %v21 = vld [vmem:[%s1 + $0x24] sm:$0xf]
  %v22 = vld [vmem:[%s1 + $0x28] sm:$0xff]
  %v23 = vld [vmem:[%s1 + $0x30] sm:$0xff]
  %v24 = vld [vmem:[%s1 + $0x38] sm:$0xf]
  %v25 = vld [vmem:[%s1 + $0x3c] sm:$0xff]
  %v26 = vld [vmem:[%s1 + $0x44] sm:$0xff]
  %v27 = vld [vmem:[%s1 + $0x4c] sm:$0xf]
  %v28 = vld [vmem:[%s1 + $0x50] sm:$0xff]
  %v29 = vld [vmem:[%s1 + $0x58] sm:$0xff]
  %v30 = vld [vmem:[%s1 + $0x60] sm:$0xf]
  %v31 = vld [vmem:[%s1 + $0x64] sm:$0xff]
  %v32 = vld [vmem:[%s1 + $0x6c] sm:$0xff]
  %v33 = vld [vmem:[%s1 + $0x74] sm:$0xf]
  %v34 = vld [vmem:[%s1 + $0x78] sm:$0xff]
  %v35 = vld [vmem:[%s1 + $0x80] sm:$0xff]
  %v36 = vld [vmem:[%s1 + $0x88] sm:$0xf]
  %v37 = vld [vmem:[%s1 + $0x8c] sm:$0xff]
  %v38 = vld [vmem:[%s1 + $0x94] sm:$0xff]
  %v39 = vld [vmem:[%s1 + $0x9c] sm:$0xf]
  %v40 = vld [vmem:[%s1 + $0xa0] sm:$0xff]
  %v41 = vld [vmem:[%s1 + $0xa8] sm:$0xff]
  %v42 = vld [vmem:[%s1 + $0xb0] sm:$0xf]
  %v43 = vld [vmem:[%s1 + $0xb4] sm:$0xff]
  %v44 = vld [vmem:[%s1 + $0xbc] sm:$0xff]
  %v45 = vld [vmem:[%s1 + $0xc4] sm:$0xf]
  %v46 = vld [vmem:[%s1 + $0xc8] sm:$0xff]
  %v47 = vld [vmem:[%s1 + $0xd0] sm:$0xff]
  %v48 = vld [vmem:[%s1 + $0xd8] sm:$0xf]
  %v49 = vld [vmem:[%s1 + $0xdc] sm:$0xff]
  %v50 = vld [vmem:[%s1 + $0xe4] sm:$0xff]
  %v51 = vld [vmem:[%s1 + $0xec] sm:$0xf]
  %v52 = vld [vmem:[%s1 + $0xf0] sm:$0xff]
  %v53 = vld [vmem:[%s1 + $0xf8] sm:$0xff]
  %v54 = vld [vmem:[%s1 + $0x100] sm:$0xf]
  %v55 = vld [vmem:[%s1 + $0x104] sm:$0xff]
  %v56 = vld [vmem:[%s1 + $0x10c] sm:$0xff]
  %v57 = vld [vmem:[%s1 + $0x114] sm:$0xf]
  %v58 = vld [vmem:[%s1 + $0x118] sm:$0xff]
  %v59 = vld [vmem:[%s1 + $0x120] sm:$0xff]
  %v60 = vld [vmem:[%s1 + $0x128] sm:$0xf]
  %v61 = vld [vmem:[%s1 + $0x12c] sm:$0xff]
  %v62 = vld [vmem:[%s1 + $0x134] sm:$0xff]
  %v63 = vld [vmem:[%s1 + $0x13c] sm:$0xf]
  %v64 = vld [vmem:[%s1 + $0x140] sm:$0xff]
  %v65 = vld [vmem:[%s1 + $0x148] sm:$0xff]
  %v66 = vld [vmem:[%s1 + $0x150] sm:$0xf]
  %v67 = vld [vmem:[%s1 + $0x154] sm:$0xff]
  %v68 = vld [vmem:[%s1 + $0x15c] sm:$0xff]
  %v69 = vld [vmem:[%s1 + $0x164] sm:$0xf]
  %v70 = vld [vmem:[%s1 + $0x168] sm:$0xff]
  %v71 = vld [vmem:[%s1 + $0x170] sm:$0xff]
  %v72 = vld [vmem:[%s1 + $0x178] sm:$0xf]
  %v73 = vld [vmem:[%s1 + $0x17c] sm:$0xff]
  %v74 = vld [vmem:[%s1 + $0x184] sm:$0xff]
  %v75 = vld [vmem:[%s1 + $0x18c] sm:$0xf]
  %v76 = vld [vmem:[%s1 + $0x190] sm:$0xff]
  %v77 = vld [vmem:[%s1 + $0x198] sm:$0xff]
  %v78 = vld [vmem:[%s1 + $0x1a0] sm:$0xf]
  %v79 = vld [vmem:[%s1 + $0x1a4] sm:$0xff]
  %v80 = vld [vmem:[%s1 + $0x1ac] sm:$0xff]
  %v81 = vld [vmem:[%s1 + $0x1b4] sm:$0xf]
  %v82 = vld [vmem:[%s1 + $0x1b8] sm:$0xff]
  %v83 = vld [vmem:[%s1 + $0x1c0] sm:$0xff]
  %v84 = vld [vmem:[%s1 + $0x1c8] sm:$0xf]
  %v85 = vld [vmem:[%s1 + $0x1cc] sm:$0xff]
  %v86 = vld [vmem:[%s1 + $0x1d4] sm:$0xff]
  %v87 = vld [vmem:[%s1 + $0x1dc] sm:$0xf]
  %v88 = vld [vmem:[%s1 + $0x1e0] sm:$0xff]
  %v89 = vld [vmem:[%s1 + $0x1e8] sm:$0xff]
  %v90 = vld [vmem:[%s1 + $0x1f0] sm:$0xf]
  %v91 = vld [vmem:[%s1 + $0x1f4] sm:$0xff]
  %v92 = vld [vmem:[%s1 + $0x1fc] sm:$0xff]
  %v93 = vld [vmem:[%s1 + $0x204] sm:$0xf]
  %v94 = vld [vmem:[%s1 + $0x208] sm:$0xff]
  %v95 = vld [vmem:[%s1 + $0x210] sm:$0xff]
  %v96 = vld [vmem:[%s1 + $0x218] sm:$0xf]
  %v97 = vld [vmem:[%s2] sm:$0xff]
  %99 = vset.pattern.permute.xlu0 0
  %100 = vperm.xlu0 %99, %v97
  %v101 = vpop.permute.xlu0 %100
  %v104 = vunpack.c.l.b16 %v15
  %v105 = vunpack.c.h.b16 %v15
  %v106 = vpack.c.b16 %v104, %v104
  %v107 = vpack.c.b16 %v105, %v105
  %v190 = vunpack.c.l.b16 %v16
  %v191 = vunpack.c.h.b16 %v16
  %v192 = vunpack.c.l.b16 %v17
  %v193 = vunpack.c.h.b16 %v17
  %v194 = vunpack.c.l.b16 %v18
  %v195 = vunpack.c.l.b16 %v19
  %v196 = vunpack.c.h.b16 %v19
  %v197 = vunpack.c.l.b16 %v20
  %v198 = vunpack.c.h.b16 %v20
  %v199 = vunpack.c.l.b16 %v21
  %v200 = vunpack.c.l.b16 %v22
  %v201 = vunpack.c.h.b16 %v22
  %v202 = vunpack.c.l.b16 %v23
  %v203 = vunpack.c.h.b16 %v23
  %v204 = vunpack.c.l.b16 %v24
  %v205 = vunpack.c.l.b16 %v25
  %v206 = vunpack.c.h.b16 %v25
  %v207 = vunpack.c.l.b16 %v26
  %v208 = vunpack.c.h.b16 %v26
  %v209 = vunpack.c.l.b16 %v27
  %v210 = vunpack.c.l.b16 %v28
  %v211 = vunpack.c.h.b16 %v28
  %v212 = vunpack.c.l.b16 %v29
  %v213 = vunpack.c.h.b16 %v29
  %v214 = vunpack.c.l.b16 %v30
  %v215 = vunpack.c.l.b16 %v31
  %v216 = vunpack.c.h.b16 %v31
  %v217 = vunpack.c.l.b16 %v32
  %v218 = vunpack.c.h.b16 %v32
  %v219 = vunpack.c.l.b16 %v33
  %v220 = vunpack.c.l.b16 %v34
  %v221 = vunpack.c.h.b16 %v34
  %v222 = vunpack.c.l.b16 %v35
  %v223 = vunpack.c.h.b16 %v35
  %v224 = vunpack.c.l.b16 %v36
  %v225 = vunpack.c.l.b16 %v37
  %v226 = vunpack.c.h.b16 %v37
  %v227 = vunpack.c.l.b16 %v38
  %v228 = vunpack.c.h.b16 %v38
  %v229 = vunpack.c.l.b16 %v39
  %v230 = vunpack.c.l.b16 %v40
  %v231 = vunpack.c.h.b16 %v40
  %v232 = vunpack.c.l.b16 %v41
  %v233 = vunpack.c.h.b16 %v41
  %v234 = vunpack.c.l.b16 %v42
  %v235 = vunpack.c.l.b16 %v43
  %v236 = vunpack.c.h.b16 %v43
  %v237 = vunpack.c.l.b16 %v44
  %v238 = vunpack.c.h.b16 %v44
  %v239 = vunpack.c.l.b16 %v45
  %v240 = vunpack.c.l.b16 %v46
  %v241 = vunpack.c.h.b16 %v46
  %v242 = vunpack.c.l.b16 %v47
  %v243 = vunpack.c.h.b16 %v47
  %v244 = vunpack.c.l.b16 %v48
  %v245 = vunpack.c.l.b16 %v49
  %v246 = vunpack.c.h.b16 %v49
  %v247 = vunpack.c.l.b16 %v50
  %v248 = vunpack.c.h.b16 %v50
  %v249 = vunpack.c.l.b16 %v51
  %v250 = vunpack.c.l.b16 %v52
  %v251 = vunpack.c.h.b16 %v52
  %v252 = vunpack.c.l.b16 %v53
  %v253 = vunpack.c.h.b16 %v53
  %v254 = vunpack.c.l.b16 %v54
  %v255 = vunpack.c.l.b16 %v55
  %v256 = vunpack.c.h.b16 %v55
  %v257 = vunpack.c.l.b16 %v56
  %v258 = vunpack.c.h.b16 %v56
  %v259 = vunpack.c.l.b16 %v57
  %v260 = vunpack.c.l.b16 %v58
  %v261 = vunpack.c.h.b16 %v58
  %v262 = vunpack.c.l.b16 %v59
  %v263 = vunpack.c.h.b16 %v59
  %v264 = vunpack.c.l.b16 %v60
  %v265 = vunpack.c.l.b16 %v61
  %v266 = vunpack.c.h.b16 %v61
  %v267 = vunpack.c.l.b16 %v62
  %v268 = vunpack.c.h.b16 %v62
  %v269 = vunpack.c.l.b16 %v63
  %v270 = vunpack.c.l.b16 %v64
  %v271 = vunpack.c.h.b16 %v64
  %v272 = vunpack.c.l.b16 %v65
  %v273 = vunpack.c.h.b16 %v65
  %v274 = vunpack.c.l.b16 %v66
  %v275 = vunpack.c.l.b16 %v67
  %v276 = vunpack.c.h.b16 %v67
  %v277 = vunpack.c.l.b16 %v68
  %v278 = vunpack.c.h.b16 %v68
  %v279 = vunpack.c.l.b16 %v69
  %v280 = vunpack.c.l.b16 %v70
  %v281 = vunpack.c.h.b16 %v70
  %v282 = vunpack.c.l.b16 %v71
  %v283 = vunpack.c.h.b16 %v71
  %v284 = vunpack.c.l.b16 %v72
  %v285 = vunpack.c.l.b16 %v73
  %v286 = vunpack.c.h.b16 %v73
  %v287 = vunpack.c.l.b16 %v74
  %v288 = vunpack.c.h.b16 %v74
  %v289 = vunpack.c.l.b16 %v75
  %v290 = vunpack.c.l.b16 %v76
  %v291 = vunpack.c.h.b16 %v76
  %v292 = vunpack.c.l.b16 %v77
  %v293 = vunpack.c.h.b16 %v77
  %v294 = vunpack.c.l.b16 %v78
  %v295 = vunpack.c.l.b16 %v79
  %v296 = vunpack.c.h.b16 %v79
  %v297 = vunpack.c.l.b16 %v80
  %v298 = vunpack.c.h.b16 %v80
  %v299 = vunpack.c.l.b16 %v81
  %v300 = vunpack.c.l.b16 %v82
  %v301 = vunpack.c.h.b16 %v82
  %v302 = vunpack.c.l.b16 %v83
  %v303 = vunpack.c.h.b16 %v83
  %v304 = vunpack.c.l.b16 %v84
  %v305 = vunpack.c.l.b16 %v85
  %v306 = vunpack.c.h.b16 %v85
  %v307 = vunpack.c.l.b16 %v86
  %v308 = vunpack.c.h.b16 %v86
  %v309 = vunpack.c.l.b16 %v87
  %v310 = vunpack.c.l.b16 %v88
  %v311 = vunpack.c.h.b16 %v88
  %v312 = vunpack.c.l.b16 %v89
  %v313 = vunpack.c.h.b16 %v89
  %v314 = vunpack.c.l.b16 %v90
  %v315 = vunpack.c.l.b16 %v91
  %v316 = vunpack.c.h.b16 %v91
  %v317 = vunpack.c.l.b16 %v92
  %v318 = vunpack.c.h.b16 %v92
  %v319 = vunpack.c.l.b16 %v93
  %v320 = vunpack.c.l.b16 %v94
  %v321 = vunpack.c.h.b16 %v94
  %v322 = vunpack.c.l.b16 %v95
  %v323 = vunpack.c.h.b16 %v95
  %v324 = vunpack.c.l.b16 %v96
  %v325 = vpack.c.b16 %v195, %v190
  %v326 = vpack.c.b16 %v196, %v191
  %v327 = vpack.c.b16 %v197, %v192
  %v328 = vpack.c.b16 %v198, %v193
  %v329 = vpack.c.b16 %v199, %v194
  %v330 = vpack.c.b16 %v205, %v200
  %v331 = vpack.c.b16 %v206, %v201
  %v332 = vpack.c.b16 %v207, %v202
  %v333 = vpack.c.b16 %v208, %v203
  %v334 = vpack.c.b16 %v209, %v204
  %v335 = vpack.c.b16 %v215, %v210
  %v336 = vpack.c.b16 %v216, %v211
  %v337 = vpack.c.b16 %v217, %v212
  %v338 = vpack.c.b16 %v218, %v213
  %v339 = vpack.c.b16 %v219, %v214
  %v340 = vpack.c.b16 %v225, %v220
  %v341 = vpack.c.b16 %v226, %v221
  %v342 = vpack.c.b16 %v227, %v222
  %v343 = vpack.c.b16 %v228, %v223
  %v344 = vpack.c.b16 %v229, %v224
  %v345 = vpack.c.b16 %v235, %v230
  %v346 = vpack.c.b16 %v236, %v231
  %v347 = vpack.c.b16 %v237, %v232
  %v348 = vpack.c.b16 %v238, %v233
  %v349 = vpack.c.b16 %v239, %v234
  %v350 = vpack.c.b16 %v245, %v240
  %v351 = vpack.c.b16 %v246, %v241
  %v352 = vpack.c.b16 %v247, %v242
  %v353 = vpack.c.b16 %v248, %v243
  %v354 = vpack.c.b16 %v249, %v244
  %v355 = vpack.c.b16 %v255, %v250
  %v356 = vpack.c.b16 %v256, %v251
  %v357 = vpack.c.b16 %v257, %v252
  %v358 = vpack.c.b16 %v258, %v253
  %v359 = vpack.c.b16 %v259, %v254
  %v360 = vpack.c.b16 %v265, %v260
  %v361 = vpack.c.b16 %v266, %v261
  %v362 = vpack.c.b16 %v267, %v262
  %v363 = vpack.c.b16 %v268, %v263
  %v364 = vpack.c.b16 %v269, %v264
  %v365 = vpack.c.b16 %v275, %v270
  %v366 = vpack.c.b16 %v276, %v271
  %v367 = vpack.c.b16 %v277, %v272
  %v368 = vpack.c.b16 %v278, %v273
  %v369 = vpack.c.b16 %v279, %v274
  %v370 = vpack.c.b16 %v285, %v280
  %v371 = vpack.c.b16 %v286, %v281
  %v372 = vpack.c.b16 %v287, %v282
  %v373 = vpack.c.b16 %v288, %v283
  %v374 = vpack.c.b16 %v289, %v284
  %v375 = vpack.c.b16 %v295, %v290
  %v376 = vpack.c.b16 %v296, %v291
  %v377 = vpack.c.b16 %v297, %v292
  %v378 = vpack.c.b16 %v298, %v293
  %v379 = vpack.c.b16 %v299, %v294
  %v380 = vpack.c.b16 %v305, %v300
  %v381 = vpack.c.b16 %v306, %v301
  %v382 = vpack.c.b16 %v307, %v302
  %v383 = vpack.c.b16 %v308, %v303
  %v384 = vpack.c.b16 %v309, %v304
  %v385 = vpack.c.b16 %v315, %v310
  %v386 = vpack.c.b16 %v316, %v311
  %v387 = vpack.c.b16 %v317, %v312
  %v388 = vpack.c.b16 %v318, %v313
  %v389 = vpack.c.b16 %v319, %v314
  %v390 = vpack.c.b16 %v320, %v320
  %v391 = vpack.c.b16 %v321, %v321
  %v392 = vpack.c.b16 %v322, %v322
  %v393 = vpack.c.b16 %v323, %v323
  %v394 = vpack.c.b16 %v324, %v324
  %vm460 = vcmask 719872
  %v462 = vsel %vm460, %v107, 0
  %vm464 = vcmask 1043456
  %v466 = vsel %vm464, %v390, 0
  %v469 = vsel %vm464, %v391, 0
  %v472 = vsel %vm464, %v392, 0
  %v475 = vsel %vm464, %v393, 0
  %v478 = vsel %vm464, %v394, 0
  %480 = vmatprep.subr.bf16.mxu0 %v326
  %481 = vmatpush1.bf16.msra.mxu0 %v325
  %482 = vmatprep.subr.bf16.mxu0 %v331
  %483 = vmatpush1.bf16.msra.mxu0 %v330
  %484 = vmatprep.subr.bf16.mxu0 %v336
  %485 = vmatpush1.bf16.msra.mxu0 %v335
  %486 = vmatprep.subr.bf16.mxu0 %v341
  %487 = vmatpush1.bf16.msra.mxu0 %v340
  %488 = vmatprep.subr.bf16.mxu0 %v346
  %489 = vmatpush1.bf16.msra.mxu0 %v345
  %490 = vmatprep.subr.bf16.mxu0 %v351
  %491 = vmatpush1.bf16.msra.mxu0 %v350
  %492 = vmatprep.subr.bf16.mxu0 %v356
  %493 = vmatpush1.bf16.msra.mxu0 %v355
  %494 = vmatprep.subr.bf16.mxu0 %v361
  %495 = vmatpush1.bf16.msra.mxu0 %v360
  %496 = vmatprep.subr.bf16.mxu0 %v366
  %497 = vmatpush1.bf16.msra.mxu0 %v365
  %498 = vmatprep.subr.bf16.mxu0 %v371
  %499 = vmatpush1.bf16.msra.mxu0 %v370
  %500 = vmatprep.subr.bf16.mxu0 %v376
  %501 = vmatpush1.bf16.msra.mxu0 %v375
  %502 = vmatprep.subr.bf16.mxu0 %v381
  %503 = vmatpush1.bf16.msra.mxu0 %v380
  %504 = vmatprep.subr.bf16.mxu0 %v386
  %505 = vmatpush1.bf16.msra.mxu0 %v385
  %506 = vmatprep.subr.bf16.mxu0 %v469
  %507 = vmatpush1.bf16.msra.mxu0 %v466
  %508 = vmatprep.subr.bf16.mxu0 0
  %509 = vmatpush1.bf16.msra.mxu0 0
  %510 = vmatprep.subr.bf16.mxu0 0
  %511 = vmatpush1.bf16.msra.mxu0 0
  %512 = vmatprep.mubr.bf16.mxu0 %v462
  %513 = vmatmul.mubr.bf16.gmra.mrb[0].mxu0 %v106
  %v514 = vpop.f32.mrb[0].mxu0
  %v515 = vadd.f32 %v101, %v514
  %v516 = vpop.f32.mrb[0].mxu0
  %v517 = vadd.f32 %v101, %v516
  %v518 = vpop.f32.mrb[0].mxu0
  %v519 = vpop.f32.mrb[0].mxu0
  %520 = vdwg.mxu0
  %521 = vmatprep.subr.bf16.mxu0 %v328
  %522 = vmatpush1.bf16.msra.mxu0 %v327
  %523 = vmatprep.subr.bf16.mxu0 %v333
  %524 = vmatpush1.bf16.msra.mxu0 %v332
  %525 = vmatprep.subr.bf16.mxu0 %v338
  %526 = vmatpush1.bf16.msra.mxu0 %v337
  %527 = vmatprep.subr.bf16.mxu0 %v343
  %528 = vmatpush1.bf16.msra.mxu0 %v342
  %529 = vmatprep.subr.bf16.mxu0 %v348
  %530 = vmatpush1.bf16.msra.mxu0 %v347
  %531 = vmatprep.subr.bf16.mxu0 %v353
  %532 = vmatpush1.bf16.msra.mxu0 %v352
  %533 = vmatprep.subr.bf16.mxu0 %v358
  %534 = vmatpush1.bf16.msra.mxu0 %v357
  %535 = vmatprep.subr.bf16.mxu0 %v363
  %536 = vmatpush1.bf16.msra.mxu0 %v362
  %537 = vmatprep.subr.bf16.mxu0 %v368
  %538 = vmatpush1.bf16.msra.mxu0 %v367
  %539 = vmatprep.subr.bf16.mxu0 %v373
  %540 = vmatpush1.bf16.msra.mxu0 %v372
  %541 = vmatprep.subr.bf16.mxu0 %v378
  %542 = vmatpush1.bf16.msra.mxu0 %v377
  %543 = vmatprep.subr.bf16.mxu0 %v383
  %544 = vmatpush1.bf16.msra.mxu0 %v382
  %545 = vmatprep.subr.bf16.mxu0 %v388
  %546 = vmatpush1.bf16.msra.mxu0 %v387
  %547 = vmatprep.subr.bf16.mxu0 %v475
  %548 = vmatpush1.bf16.msra.mxu0 %v472
  %549 = vmatprep.subr.bf16.mxu0 0
  %550 = vmatpush1.bf16.msra.mxu0 0
  %551 = vmatprep.subr.bf16.mxu0 0
  %552 = vmatpush1.bf16.msra.mxu0 0
  %553 = vmatprep.mubr.bf16.mxu0 %v462
  %554 = vmatmul.mubr.bf16.gmra.mrb[0].mxu0 %v106
  %v555 = vpop.f32.mrb[0].mxu0
  %v556 = vadd.f32 %v101, %v555
  %v557 = vpop.f32.mrb[0].mxu0
  %v558 = vadd.f32 %v101, %v557
  %v559 = vpop.f32.mrb[0].mxu0
  %v560 = vpop.f32.mrb[0].mxu0
  %561 = vdwg.mxu0
  %562 = vmatprep.subr.bf16.mxu0 0
  %563 = vmatpush1.bf16.msra.mxu0 %v329
  %564 = vmatprep.subr.bf16.mxu0 0
  %565 = vmatpush1.bf16.msra.mxu0 %v334
  %566 = vmatprep.subr.bf16.mxu0 0
  %567 = vmatpush1.bf16.msra.mxu0 %v339
  %568 = vmatprep.subr.bf16.mxu0 0
  %569 = vmatpush1.bf16.msra.mxu0 %v344
  %570 = vmatprep.subr.bf16.mxu0 0
  %571 = vmatpush1.bf16.msra.mxu0 %v349
  %572 = vmatprep.subr.bf16.mxu0 0
  %573 = vmatpush1.bf16.msra.mxu0 %v354
  %574 = vmatprep.subr.bf16.mxu0 0
  %575 = vmatpush1.bf16.msra.mxu0 %v359
  %576 = vmatprep.subr.bf16.mxu0 0
  %577 = vmatpush1.bf16.msra.mxu0 %v364
  %578 = vmatprep.subr.bf16.mxu0 0
  %579 = vmatpush1.bf16.msra.mxu0 %v369
  %580 = vmatprep.subr.bf16.mxu0 0
  %581 = vmatpush1.bf16.msra.mxu0 %v374
  %582 = vmatprep.subr.bf16.mxu0 0
  %583 = vmatpush1.bf16.msra.mxu0 %v379
  %584 = vmatprep.subr.bf16.mxu0 0
  %585 = vmatpush1.bf16.msra.mxu0 %v384
  %586 = vmatprep.subr.bf16.mxu0 0
  %587 = vmatpush1.bf16.msra.mxu0 %v389
  %588 = vmatprep.subr.bf16.mxu0 0
  %589 = vmatpush1.bf16.msra.mxu0 %v478
  %590 = vmatprep.subr.bf16.mxu0 0
  %591 = vmatpush1.bf16.msra.mxu0 0
  %592 = vmatprep.subr.bf16.mxu0 0
  %593 = vmatpush1.bf16.msra.mxu0 0
  %594 = vmatprep.mubr.bf16.mxu0 %v462
  %595 = vmatmul.mubr.bf16.gmra.mrb[0].mxu0 %v106
  %v596 = vpop.f32.mrb[0].mxu0
  %v597 = vadd.f32 %v101, %v596
  %v598 = vpop.f32.mrb[0].mxu0
  %v599 = vpop.f32.mrb[0].mxu0
  %v600 = vpop.f32.mrb[0].mxu0
  %601 = vdwg.mxu0
  %vm602 = vcmp.ge.f32.partialorder %v515, 0.0
  %vm603 = vcmp.ge.f32.partialorder %v517, 0.0
  %vm604 = vcmp.ge.f32.partialorder %v556, 0.0
  %vm605 = vcmp.ge.f32.partialorder %v558, 0.0
  %vm606 = vcmp.ge.f32.partialorder %v597, 0.0
  %v607 = vmul.f32 %v515, 0.2
  %v608 = vmul.f32 %v517, 0.2
  %v609 = vmul.f32 %v556, 0.2
  %v610 = vmul.f32 %v558, 0.2
  %v611 = vmul.f32 %v597, 0.2
  %v612 = vsel %vm602, %v515, %v607
  %v613 = vsel %vm603, %v517, %v608
  %v614 = vsel %vm604, %v556, %v609
  %v615 = vsel %vm605, %v558, %v610
  %v616 = vsel %vm606, %v597, %v611
  %v617 = vpack.c.bf16 %v612, %v612
  %v618 = vpack.c.bf16 %v613, %v613
  %v619 = vpack.c.bf16 %v614, %v614
  %v620 = vpack.c.bf16 %v615, %v615
  %v621 = vpack.c.bf16 %v616, %v616
  %v627 = vunpack.c.l.b16 %v617
  %v628 = vunpack.c.l.b16 %v618
  %v629 = vunpack.c.l.b16 %v619
  %v630 = vunpack.c.l.b16 %v620
  %v631 = vunpack.c.l.b16 %v621
  %v632 = vpack.c.b16 %v628, %v627
  %v633 = vpack.c.b16 %v630, %v629
  %v634 = vpack.c.b16 %v631, %v631
  %638 = vst [vmem:[%s3] sm:$0xff] %v632
  %639 = vst [vmem:[%s3 + $0x8] sm:$0xff] %v633
  %vm640 = vcmask 224256
  %641 = vst.msk [vmem:[%s3 + $0x10] sm:$0xf] %vm640, %v634
  // Predicated region
  $region14: #{ms_stft_discriminator_forward.37} parent=0 // pred_check
    _
  $region15: #{ms_stft_discriminator_forward.37} parent=0 // pred_check_branch
    %643 = sbr.rel (0) target = $region17
  $region16: #{ms_stft_discriminator_forward.37} parent=0 // pred_region
    _
  $region17: #{ms_stft_discriminator_forward.37} parent=0 // pred_fallthru
    _
  // Predicated region
  $region18: #{ms_stft_discriminator_forward.37} parent=0 // pred_check
    _
  $region19: #{ms_stft_discriminator_forward.37} parent=0 // pred_check_branch
    %645 = sbr.rel (0) target = $region21
  $region20: #{ms_stft_discriminator_forward.37} parent=0 // pred_region
    _
  $region21: #{ms_stft_discriminator_forward.37} parent=0 // pred_fallthru
    _

// kernel: ms_stft_discriminator_forward.38
$region0: #{ms_stft_discriminator_forward.38}
  #allocation0 [shape = 'u32[]', space=smem, size = 0x4, offset = 0x4, fixed_abs, tag = 'smem constant byte address 0x4 - core index']
  #allocation1 [shape = 'u32[144,128]{1,0:T(1,128)}', space=vmem, size = 0x12000, scoped, tag = 'internal scratch']
  %s0 = inlined_call_operand.vmem [shape: bf16[8,216], index: 0, kind: input, shape index: {}]
  %s1 = inlined_call_operand.vmem [shape: bf16[216,300], index: 1, kind: input, shape index: {}]
  %s2 = inlined_call_operand.vmem [shape: f32[8,1], index: 2, kind: input, shape index: {}]
  %s3 = inlined_call_operand.vmem [shape: bf16[8,300], index: 3, kind: output, shape index: {}]
  %s4 = sld [smem:[#allocation0]]
  $region22: #{ms_stft_discriminator_forward.38} parent=0
    _
  %s6 = ssub.s32 1, %s4
  %s7 = scalar_select 0, %s6, %s4
  // Predicated region
  $region2: #{ms_stft_discriminator_forward.38} parent=0 // pred_check
    _
  $region3: #{ms_stft_discriminator_forward.38} parent=0 // pred_check_branch
    %9 = sbr.rel (0) target = $region5
  $region4: #{ms_stft_discriminator_forward.38} parent=0 // pred_region
    _
  $region5: #{ms_stft_discriminator_forward.38} parent=0 // pred_fallthru
    _
  // Predicated region
  $region6: #{ms_stft_discriminator_forward.38} parent=0 // pred_check
    _
  $region7: #{ms_stft_discriminator_forward.38} parent=0 // pred_check_branch
    %11 = sbr.rel (0) target = $region9
  $region8: #{ms_stft_discriminator_forward.38} parent=0 // pred_region
    _
  $region9: #{ms_stft_discriminator_forward.38} parent=0 // pred_fallthru
    _
  // Predicated region
  $region10: #{ms_stft_discriminator_forward.38} parent=0 // pred_check
    _
  $region11: #{ms_stft_discriminator_forward.38} parent=0 // pred_check_branch
    %13 = sbr.rel (0) target = $region13
  $region12: #{ms_stft_discriminator_forward.38} parent=0 // pred_region
    _
  $region13: #{ms_stft_discriminator_forward.38} parent=0 // pred_fallthru
    _
  %v15 = vld [vmem:[%s0] sm:$0xff]
  %v16 = vld [vmem:[%s1] sm:$0xff]
  %v17 = vld [vmem:[%s1 + $0x8] sm:$0xf]
  %v18 = vld [vmem:[%s1 + $0xc] sm:$0xff]
  %v19 = vld [vmem:[%s1 + $0x14] sm:$0xf]
  %v20 = vld [vmem:[%s1 + $0x18] sm:$0xff]
  %v21 = vld [vmem:[%s1 + $0x20] sm:$0xf]
  %v22 = vld [vmem:[%s1 + $0x24] sm:$0xff]
  %v23 = vld [vmem:[%s1 + $0x2c] sm:$0xf]
  %v24 = vld [vmem:[%s1 + $0x30] sm:$0xff]
  %v25 = vld [vmem:[%s1 + $0x38] sm:$0xf]
  %v26 = vld [vmem:[%s1 + $0x3c] sm:$0xff]
  %v27 = vld [vmem:[%s1 + $0x44] sm:$0xf]
  %v28 = vld [vmem:[%s1 + $0x48] sm:$0xff]
  %v29 = vld [vmem:[%s1 + $0x50] sm:$0xf]
  %v30 = vld [vmem:[%s1 + $0x54] sm:$0xff]
  %v31 = vld [vmem:[%s1 + $0x5c] sm:$0xf]
  %v32 = vld [vmem:[%s1 + $0x60] sm:$0xff]
  %v33 = vld [vmem:[%s1 + $0x68] sm:$0xf]
  %v34 = vld [vmem:[%s1 + $0x6c] sm:$0xff]
  %v35 = vld [vmem:[%s1 + $0x74] sm:$0xf]
  %v36 = vld [vmem:[%s1 + $0x78] sm:$0xff]
  %v37 = vld [vmem:[%s1 + $0x80] sm:$0xf]
  %v38 = vld [vmem:[%s1 + $0x84] sm:$0xff]
  %v39 = vld [vmem:[%s1 + $0x8c] sm:$0xf]
  %v40 = vld [vmem:[%s1 + $0x90] sm:$0xff]
  %v41 = vld [vmem:[%s1 + $0x98] sm:$0xf]
  %v42 = vld [vmem:[%s1 + $0x9c] sm:$0xff]
  %v43 = vld [vmem:[%s1 + $0xa4] sm:$0xf]
  %v44 = vld [vmem:[%s1 + $0xa8] sm:$0xff]
  %v45 = vld [vmem:[%s1 + $0xb0] sm:$0xf]
  %v46 = vld [vmem:[%s1 + $0xb4] sm:$0xff]
  %v47 = vld [vmem:[%s1 + $0xbc] sm:$0xf]
  %v48 = vld [vmem:[%s1 + $0xc0] sm:$0xff]
  %v49 = vld [vmem:[%s1 + $0xc8] sm:$0xf]
  %v50 = vld [vmem:[%s1 + $0xcc] sm:$0xff]
  %v51 = vld [vmem:[%s1 + $0xd4] sm:$0xf]
  %v52 = vld [vmem:[%s1 + $0xd8] sm:$0xff]
  %v53 = vld [vmem:[%s1 + $0xe0] sm:$0xf]
  %v54 = vld [vmem:[%s1 + $0xe4] sm:$0xff]
  %v55 = vld [vmem:[%s1 + $0xec] sm:$0xf]
  %v56 = vld [vmem:[%s1 + $0xf0] sm:$0xff]
  %v57 = vld [vmem:[%s1 + $0xf8] sm:$0xf]
  %v58 = vld [vmem:[%s1 + $0xfc] sm:$0xff]
  %v59 = vld [vmem:[%s1 + $0x104] sm:$0xf]
  %v60 = vld [vmem:[%s1 + $0x108] sm:$0xff]
  %v61 = vld [vmem:[%s1 + $0x110] sm:$0xf]
  %v62 = vld [vmem:[%s1 + $0x114] sm:$0xff]
  %v63 = vld [vmem:[%s1 + $0x11c] sm:$0xf]
  %v64 = vld [vmem:[%s1 + $0x120] sm:$0xff]
  %v65 = vld [vmem:[%s1 + $0x128] sm:$0xf]
  %v66 = vld [vmem:[%s1 + $0x12c] sm:$0xff]
  %v67 = vld [vmem:[%s1 + $0x134] sm:$0xf]
  %v68 = vld [vmem:[%s1 + $0x138] sm:$0xff]
  %v69 = vld [vmem:[%s1 + $0x140] sm:$0xf]
  %v70 = vld [vmem:[%s2] sm:$0xff]
  %72 = vset.pattern.permute.xlu0 0
  %73 = vperm.xlu0 %72, %v70
  %v74 = vpop.permute.xlu0 %73
  %v77 = vunpack.c.l.b16 %v15
  %v78 = vunpack.c.h.b16 %v15
  %v79 = vpack.c.b16 %v77, %v77
  %v80 = vpack.c.b16 %v78, %v78
  %v136 = vunpack.c.l.b16 %v16
  %v137 = vunpack.c.h.b16 %v16
  %v138 = vunpack.c.l.b16 %v17
  %v139 = vunpack.c.l.b16 %v18
  %v140 = vunpack.c.h.b16 %v18
  %v141 = vunpack.c.l.b16 %v19
  %v142 = vunpack.c.l.b16 %v20
  %v143 = vunpack.c.h.b16 %v20
  %v144 = vunpack.c.l.b16 %v21
  %v145 = vunpack.c.l.b16 %v22
  %v146 = vunpack.c.h.b16 %v22
  %v147 = vunpack.c.l.b16 %v23
  %v148 = vunpack.c.l.b16 %v24
  %v149 = vunpack.c.h.b16 %v24
  %v150 = vunpack.c.l.b16 %v25
  %v151 = vunpack.c.l.b16 %v26
  %v152 = vunpack.c.h.b16 %v26
  %v153 = vunpack.c.l.b16 %v27
  %v154 = vunpack.c.l.b16 %v28
  %v155 = vunpack.c.h.b16 %v28
  %v156 = vunpack.c.l.b16 %v29
  %v157 = vunpack.c.l.b16 %v30
  %v158 = vunpack.c.h.b16 %v30
  %v159 = vunpack.c.l.b16 %v31
  %v160 = vunpack.c.l.b16 %v32
  %v161 = vunpack.c.h.b16 %v32
  %v162 = vunpack.c.l.b16 %v33
  %v163 = vunpack.c.l.b16 %v34
  %v164 = vunpack.c.h.b16 %v34
  %v165 = vunpack.c.l.b16 %v35
  %v166 = vunpack.c.l.b16 %v36
  %v167 = vunpack.c.h.b16 %v36
  %v168 = vunpack.c.l.b16 %v37
  %v169 = vunpack.c.l.b16 %v38
  %v170 = vunpack.c.h.b16 %v38
  %v171 = vunpack.c.l.b16 %v39
  %v172 = vunpack.c.l.b16 %v40
  %v173 = vunpack.c.h.b16 %v40
  %v174 = vunpack.c.l.b16 %v41
  %v175 = vunpack.c.l.b16 %v42
  %v176 = vunpack.c.h.b16 %v42
  %v177 = vunpack.c.l.b16 %v43
  %v178 = vunpack.c.l.b16 %v44
  %v179 = vunpack.c.h.b16 %v44
  %v180 = vunpack.c.l.b16 %v45
  %v181 = vunpack.c.l.b16 %v46
  %v182 = vunpack.c.h.b16 %v46
  %v183 = vunpack.c.l.b16 %v47
  %v184 = vunpack.c.l.b16 %v48
  %v185 = vunpack.c.h.b16 %v48
  %v186 = vunpack.c.l.b16 %v49
  %v187 = vunpack.c.l.b16 %v50
  %v188 = vunpack.c.h.b16 %v50
  %v189 = vunpack.c.l.b16 %v51
  %v190 = vunpack.c.l.b16 %v52
  %v191 = vunpack.c.h.b16 %v52
  %v192 = vunpack.c.l.b16 %v53
  %v193 = vunpack.c.l.b16 %v54
  %v194 = vunpack.c.h.b16 %v54
  %v195 = vunpack.c.l.b16 %v55
  %v196 = vunpack.c.l.b16 %v56
  %v197 = vunpack.c.h.b16 %v56
  %v198 = vunpack.c.l.b16 %v57
  %v199 = vunpack.c.l.b16 %v58
  %v200 = vunpack.c.h.b16 %v58
  %v201 = vunpack.c.l.b16 %v59
  %v202 = vunpack.c.l.b16 %v60
  %v203 = vunpack.c.h.b16 %v60
  %v204 = vunpack.c.l.b16 %v61
  %v205 = vunpack.c.l.b16 %v62
  %v206 = vunpack.c.h.b16 %v62
  %v207 = vunpack.c.l.b16 %v63
  %v208 = vunpack.c.l.b16 %v64
  %v209 = vunpack.c.h.b16 %v64
  %v210 = vunpack.c.l.b16 %v65
  %v211 = vunpack.c.l.b16 %v66
  %v212 = vunpack.c.h.b16 %v66
  %v213 = vunpack.c.l.b16 %v67
  %v214 = vunpack.c.l.b16 %v68
  %v215 = vunpack.c.h.b16 %v68
  %v216 = vunpack.c.l.b16 %v69
  %v217 = vpack.c.b16 %v139, %v136
  %v218 = vpack.c.b16 %v140, %v137
  %v219 = vpack.c.b16 %v141, %v138
  %v220 = vpack.c.b16 %v145, %v142
  %v221 = vpack.c.b16 %v146, %v143
  %v222 = vpack.c.b16 %v147, %v144
  %v223 = vpack.c.b16 %v151, %v148
  %v224 = vpack.c.b16 %v152, %v149
  %v225 = vpack.c.b16 %v153, %v150
  %v226 = vpack.c.b16 %v157, %v154
  %v227 = vpack.c.b16 %v158, %v155
  %v228 = vpack.c.b16 %v159, %v156
  %v229 = vpack.c.b16 %v163, %v160
  %v230 = vpack.c.b16 %v164, %v161
  %v231 = vpack.c.b16 %v165, %v162
  %v232 = vpack.c.b16 %v169, %v166
  %v233 = vpack.c.b16 %v170, %v167
  %v234 = vpack.c.b16 %v171, %v168
  %v235 = vpack.c.b16 %v175, %v172
  %v236 = vpack.c.b16 %v176, %v173
  %v237 = vpack.c.b16 %v177, %v174
  %v238 = vpack.c.b16 %v181, %v178
  %v239 = vpack.c.b16 %v182, %v179
  %v240 = vpack.c.b16 %v183, %v180
  %v241 = vpack.c.b16 %v187, %v184
  %v242 = vpack.c.b16 %v188, %v185
  %v243 = vpack.c.b16 %v189, %v186
  %v244 = vpack.c.b16 %v193, %v190
  %v245 = vpack.c.b16 %v194, %v191
  %v246 = vpack.c.b16 %v195, %v192
  %v247 = vpack.c.b16 %v199, %v196
  %v248 = vpack.c.b16 %v200, %v197
  %v249 = vpack.c.b16 %v201, %v198
  %v250 = vpack.c.b16 %v205, %v202
  %v251 = vpack.c.b16 %v206, %v203
  %v252 = vpack.c.b16 %v207, %v204
  %v253 = vpack.c.b16 %v211, %v208
  %v254 = vpack.c.b16 %v212, %v209
  %v255 = vpack.c.b16 %v213, %v210
  %v256 = vpack.c.b16 %v214, %v214
  %v257 = vpack.c.b16 %v215, %v215
  %v258 = vpack.c.b16 %v216, %v216
  %vm298 = vcmask 719872
  %v300 = vsel %vm298, %v80, 0
  %vm302 = vcmask 1043456
  %v304 = vsel %vm302, %v256, 0
  %v307 = vsel %vm302, %v257, 0
  %v310 = vsel %vm302, %v258, 0
  %312 = vmatprep.subr.bf16.mxu0 %v218
  %313 = vmatpush1.bf16.msra.mxu0 %v217
  %314 = vmatprep.subr.bf16.mxu0 %v221
  %315 = vmatpush1.bf16.msra.mxu0 %v220
  %316 = vmatprep.subr.bf16.mxu0 %v224
  %317 = vmatpush1.bf16.msra.mxu0 %v223
  %318 = vmatprep.subr.bf16.mxu0 %v227
  %319 = vmatpush1.bf16.msra.mxu0 %v226
  %320 = vmatprep.subr.bf16.mxu0 %v230
  %321 = vmatpush1.bf16.msra.mxu0 %v229
  %322 = vmatprep.subr.bf16.mxu0 %v233
  %323 = vmatpush1.bf16.msra.mxu0 %v232
  %324 = vmatprep.subr.bf16.mxu0 %v236
  %325 = vmatpush1.bf16.msra.mxu0 %v235
  %326 = vmatprep.subr.bf16.mxu0 %v239
  %327 = vmatpush1.bf16.msra.mxu0 %v238
  %328 = vmatprep.subr.bf16.mxu0 %v242
  %329 = vmatpush1.bf16.msra.mxu0 %v241
  %330 = vmatprep.subr.bf16.mxu0 %v245
  %331 = vmatpush1.bf16.msra.mxu0 %v244
  %332 = vmatprep.subr.bf16.mxu0 %v248
  %333 = vmatpush1.bf16.msra.mxu0 %v247
  %334 = vmatprep.subr.bf16.mxu0 %v251
  %335 = vmatpush1.bf16.msra.mxu0 %v250
  %336 = vmatprep.subr.bf16.mxu0 %v254
  %337 = vmatpush1.bf16.msra.mxu0 %v253
  %338 = vmatprep.subr.bf16.mxu0 %v307
  %339 = vmatpush1.bf16.msra.mxu0 %v304
  %340 = vmatprep.subr.bf16.mxu0 0
  %341 = vmatpush1.bf16.msra.mxu0 0
  %342 = vmatprep.subr.bf16.mxu0 0
  %343 = vmatpush1.bf16.msra.mxu0 0
  %344 = vmatprep.mubr.bf16.mxu0 %v300
  %345 = vmatmul.mubr.bf16.gmra.mrb[0].mxu0 %v79
  %v346 = vpop.f32.mrb[0].mxu0
  %v347 = vadd.f32 %v74, %v346
  %v348 = vpop.f32.mrb[0].mxu0
  %v349 = vadd.f32 %v74, %v348
  %v350 = vpop.f32.mrb[0].mxu0
  %v351 = vpop.f32.mrb[0].mxu0
  %352 = vdwg.mxu0
  %353 = vmatprep.subr.bf16.mxu0 0
  %354 = vmatpush1.bf16.msra.mxu0 %v219
  %355 = vmatprep.subr.bf16.mxu0 0
  %356 = vmatpush1.bf16.msra.mxu0 %v222
  %357 = vmatprep.subr.bf16.mxu0 0
  %358 = vmatpush1.bf16.msra.mxu0 %v225
  %359 = vmatprep.subr.bf16.mxu0 0
  %360 = vmatpush1.bf16.msra.mxu0 %v228
  %361 = vmatprep.subr.bf16.mxu0 0
  %362 = vmatpush1.bf16.msra.mxu0 %v231
  %363 = vmatprep.subr.bf16.mxu0 0
  %364 = vmatpush1.bf16.msra.mxu0 %v234
  %365 = vmatprep.subr.bf16.mxu0 0
  %366 = vmatpush1.bf16.msra.mxu0 %v237
  %367 = vmatprep.subr.bf16.mxu0 0
  %368 = vmatpush1.bf16.msra.mxu0 %v240
  %369 = vmatprep.subr.bf16.mxu0 0
  %370 = vmatpush1.bf16.msra.mxu0 %v243
  %371 = vmatprep.subr.bf16.mxu0 0
  %372 = vmatpush1.bf16.msra.mxu0 %v246
  %373 = vmatprep.subr.bf16.mxu0 0
  %374 = vmatpush1.bf16.msra.mxu0 %v249
  %375 = vmatprep.subr.bf16.mxu0 0
  %376 = vmatpush1.bf16.msra.mxu0 %v252
  %377 = vmatprep.subr.bf16.mxu0 0
  %378 = vmatpush1.bf16.msra.mxu0 %v255
  %379 = vmatprep.subr.bf16.mxu0 0
  %380 = vmatpush1.bf16.msra.mxu0 %v310
  %381 = vmatprep.subr.bf16.mxu0 0
  %382 = vmatpush1.bf16.msra.mxu0 0
  %383 = vmatprep.subr.bf16.mxu0 0
  %384 = vmatpush1.bf16.msra.mxu0 0
  %385 = vmatprep.mubr.bf16.mxu0 %v300
  %386 = vmatmul.mubr.bf16.gmra.mrb[0].mxu0 %v79
  %v387 = vpop.f32.mrb[0].mxu0
  %v388 = vadd.f32 %v74, %v387
  %v389 = vpop.f32.mrb[0].mxu0
  %v390 = vpop.f32.mrb[0].mxu0
  %v391 = vpop.f32.mrb[0].mxu0
  %392 = vdwg.mxu0
  %vm393 = vcmp.ge.f32.partialorder %v347, 0.0
  %vm394 = vcmp.ge.f32.partialorder %v349, 0.0
  %vm395 = vcmp.ge.f32.partialorder %v388, 0.0
  %v396 = vmul.f32 %v347, 0.2
  %v397 = vmul.f32 %v349, 0.2
  %v398 = vmul.f32 %v388, 0.2
  %v399 = vsel %vm393, %v347, %v396
  %v400 = vsel %vm394, %v349, %v397
  %v401 = vsel %vm395, %v388, %v398
  %v402 = vpack.c.bf16 %v399, %v399
  %v403 = vpack.c.bf16 %v400, %v400
  %v404 = vpack.c.bf16 %v401, %v401
  %v408 = vunpack.c.l.b16 %v402
  %v409 = vunpack.c.l.b16 %v403
  %v410 = vunpack.c.l.b16 %v404
  %v411 = vpack.c.b16 %v409, %v408
  %v412 = vpack.c.b16 %v410, %v410
  %415 = vst [vmem:[%s3] sm:$0xff] %v411
  %vm416 = vcmask 355328
  %417 = vst.msk [vmem:[%s3 + $0x8] sm:$0xf] %vm416, %v412
  // Predicated region
  $region14: #{ms_stft_discriminator_forward.38} parent=0 // pred_check
    _
  $region15: #{ms_stft_discriminator_forward.38} parent=0 // pred_check_branch
    %419 = sbr.rel (0) target = $region17
  $region16: #{ms_stft_discriminator_forward.38} parent=0 // pred_region
    _
  $region17: #{ms_stft_discriminator_forward.38} parent=0 // pred_fallthru
    _
  // Predicated region
  $region18: #{ms_stft_discriminator_forward.38} parent=0 // pred_check
    _
  $region19: #{ms_stft_discriminator_forward.38} parent=0 // pred_check_branch
    %421 = sbr.rel (0) target = $region21
  $region20: #{ms_stft_discriminator_forward.38} parent=0 // pred_region
    _
  $region21: #{ms_stft_discriminator_forward.38} parent=0 // pred_fallthru
    _

// kernel: ms_stft_discriminator_forward.39
$region0: #{ms_stft_discriminator_forward.39}
  #allocation0 [shape = 'u32[]', space=smem, size = 0x4, offset = 0x4, fixed_abs, tag = 'smem constant byte address 0x4 - core index']
  #allocation1 [shape = 'u32[144,128]{1,0:T(1,128)}', space=vmem, size = 0x12000, scoped, tag = 'internal scratch']
  %s0 = inlined_call_operand.vmem [shape: bf16[8,216], index: 0, kind: input, shape index: {}]
  %s1 = inlined_call_operand.vmem [shape: bf16[216,180], index: 1, kind: input, shape index: {}]
  %s2 = inlined_call_operand.vmem [shape: f32[8,1], index: 2, kind: input, shape index: {}]
  %s3 = inlined_call_operand.vmem [shape: bf16[8,180], index: 3, kind: output, shape index: {}]
  %s4 = sld [smem:[#allocation0]]
  $region22: #{ms_stft_discriminator_forward.39} parent=0
    _
  %s6 = ssub.s32 1, %s4
  %s7 = scalar_select 0, %s6, %s4
  // Predicated region
  $region2: #{ms_stft_discriminator_forward.39} parent=0 // pred_check
    _
  $region3: #{ms_stft_discriminator_forward.39} parent=0 // pred_check_branch
    %9 = sbr.rel (0) target = $region5
  $region4: #{ms_stft_discriminator_forward.39} parent=0 // pred_region
    _
  $region5: #{ms_stft_discriminator_forward.39} parent=0 // pred_fallthru
    _
  // Predicated region
  $region6: #{ms_stft_discriminator_forward.39} parent=0 // pred_check
    _
  $region7: #{ms_stft_discriminator_forward.39} parent=0 // pred_check_branch
    %11 = sbr.rel (0) target = $region9
  $region8: #{ms_stft_discriminator_forward.39} parent=0 // pred_region
    _
  $region9: #{ms_stft_discriminator_forward.39} parent=0 // pred_fallthru
    _
  // Predicated region
  $region10: #{ms_stft_discriminator_forward.39} parent=0 // pred_check
    _
  $region11: #{ms_stft_discriminator_forward.39} parent=0 // pred_check_branch
    %13 = sbr.rel (0) target = $region13
  $region12: #{ms_stft_discriminator_forward.39} parent=0 // pred_region
    _
  $region13: #{ms_stft_discriminator_forward.39} parent=0 // pred_fallthru
    _
  %v15 = vld [vmem:[%s0] sm:$0xff]
  %v16 = vld [vmem:[%s1] sm:$0xff]
  %v17 = vld [vmem:[%s1 + $0x8] sm:$0xff]
  %v18 = vld [vmem:[%s1 + $0x10] sm:$0xff]
  %v19 = vld [vmem:[%s1 + $0x18] sm:$0xff]
  %v20 = vld [vmem:[%s1 + $0x20] sm:$0xff]
  %v21 = vld [vmem:[%s1 + $0x28] sm:$0xff]
  %v22 = vld [vmem:[%s1 + $0x30] sm:$0xff]
  %v23 = vld [vmem:[%s1 + $0x38] sm:$0xff]
  %v24 = vld [vmem:[%s1 + $0x40] sm:$0xff]
  %v25 = vld [vmem:[%s1 + $0x48] sm:$0xff]
  %v26 = vld [vmem:[%s1 + $0x50] sm:$0xff]
  %v27 = vld [vmem:[%s1 + $0x58] sm:$0xff]
  %v28 = vld [vmem:[%s1 + $0x60] sm:$0xff]
  %v29 = vld [vmem:[%s1 + $0x68] sm:$0xff]
  %v30 = vld [vmem:[%s1 + $0x70] sm:$0xff]
  %v31 = vld [vmem:[%s1 + $0x78] sm:$0xff]
  %v32 = vld [vmem:[%s1 + $0x80] sm:$0xff]
  %v33 = vld [vmem:[%s1 + $0x88] sm:$0xff]
  %v34 = vld [vmem:[%s1 + $0x90] sm:$0xff]
  %v35 = vld [vmem:[%s1 + $0x98] sm:$0xff]
  %v36 = vld [vmem:[%s1 + $0xa0] sm:$0xff]
  %v37 = vld [vmem:[%s1 + $0xa8] sm:$0xff]
  %v38 = vld [vmem:[%s1 + $0xb0] sm:$0xff]
  %v39 = vld [vmem:[%s1 + $0xb8] sm:$0xff]
  %v40 = vld [vmem:[%s1 + $0xc0] sm:$0xff]
  %v41 = vld [vmem:[%s1 + $0xc8] sm:$0xff]
  %v42 = vld [vmem:[%s1 + $0xd0] sm:$0xff]
  %v43 = vld [vmem:[%s2] sm:$0xff]
  %45 = vset.pattern.permute.xlu0 0
  %46 = vperm.xlu0 %45, %v43
  %v47 = vpop.permute.xlu0 %46
  %v50 = vunpack.c.l.b16 %v15
  %v51 = vunpack.c.h.b16 %v15
  %v52 = vpack.c.b16 %v50, %v50
  %v53 = vpack.c.b16 %v51, %v51
  %v82 = vunpack.c.l.b16 %v16
  %v83 = vunpack.c.h.b16 %v16
  %v84 = vunpack.c.l.b16 %v17
  %v85 = vunpack.c.h.b16 %v17
  %v86 = vunpack.c.l.b16 %v18
  %v87 = vunpack.c.h.b16 %v18
  %v88 = vunpack.c.l.b16 %v19
  %v89 = vunpack.c.h.b16 %v19
  %v90 = vunpack.c.l.b16 %v20
  %v91 = vunpack.c.h.b16 %v20
  %v92 = vunpack.c.l.b16 %v21
  %v93 = vunpack.c.h.b16 %v21
  %v94 = vunpack.c.l.b16 %v22
  %v95 = vunpack.c.h.b16 %v22
  %v96 = vunpack.c.l.b16 %v23
  %v97 = vunpack.c.h.b16 %v23
  %v98 = vunpack.c.l.b16 %v24
  %v99 = vunpack.c.h.b16 %v24
  %v100 = vunpack.c.l.b16 %v25
  %v101 = vunpack.c.h.b16 %v25
  %v102 = vunpack.c.l.b16 %v26
  %v103 = vunpack.c.h.b16 %v26
  %v104 = vunpack.c.l.b16 %v27
  %v105 = vunpack.c.h.b16 %v27
  %v106 = vunpack.c.l.b16 %v28
  %v107 = vunpack.c.h.b16 %v28
  %v108 = vunpack.c.l.b16 %v29
  %v109 = vunpack.c.h.b16 %v29
  %v110 = vunpack.c.l.b16 %v30
  %v111 = vunpack.c.h.b16 %v30
  %v112 = vunpack.c.l.b16 %v31
  %v113 = vunpack.c.h.b16 %v31
  %v114 = vunpack.c.l.b16 %v32
  %v115 = vunpack.c.h.b16 %v32
  %v116 = vunpack.c.l.b16 %v33
  %v117 = vunpack.c.h.b16 %v33
  %v118 = vunpack.c.l.b16 %v34
  %v119 = vunpack.c.h.b16 %v34
  %v120 = vunpack.c.l.b16 %v35
  %v121 = vunpack.c.h.b16 %v35
  %v122 = vunpack.c.l.b16 %v36
  %v123 = vunpack.c.h.b16 %v36
  %v124 = vunpack.c.l.b16 %v37
  %v125 = vunpack.c.h.b16 %v37
  %v126 = vunpack.c.l.b16 %v38
  %v127 = vunpack.c.h.b16 %v38
  %v128 = vunpack.c.l.b16 %v39
  %v129 = vunpack.c.h.b16 %v39
  %v130 = vunpack.c.l.b16 %v40
  %v131 = vunpack.c.h.b16 %v40
  %v132 = vunpack.c.l.b16 %v41
  %v133 = vunpack.c.h.b16 %v41
  %v134 = vunpack.c.l.b16 %v42
  %v135 = vunpack.c.h.b16 %v42
  %v136 = vpack.c.b16 %v84, %v82
  %v137 = vpack.c.b16 %v85, %v83
  %v138 = vpack.c.b16 %v88, %v86
  %v139 = vpack.c.b16 %v89, %v87
  %v140 = vpack.c.b16 %v92, %v90
  %v141 = vpack.c.b16 %v93, %v91
  %v142 = vpack.c.b16 %v96, %v94
  %v143 = vpack.c.b16 %v97, %v95
  %v144 = vpack.c.b16 %v100, %v98
  %v145 = vpack.c.b16 %v101, %v99
  %v146 = vpack.c.b16 %v104, %v102
  %v147 = vpack.c.b16 %v105, %v103
  %v148 = vpack.c.b16 %v108, %v106
  %v149 = vpack.c.b16 %v109, %v107
  %v150 = vpack.c.b16 %v112, %v110
  %v151 = vpack.c.b16 %v113, %v111
  %v152 = vpack.c.b16 %v116, %v114
  %v153 = vpack.c.b16 %v117, %v115
  %v154 = vpack.c.b16 %v120, %v118
  %v155 = vpack.c.b16 %v121, %v119
  %v156 = vpack.c.b16 %v124, %v122
  %v157 = vpack.c.b16 %v125, %v123
  %v158 = vpack.c.b16 %v128, %v126
  %v159 = vpack.c.b16 %v129, %v127
  %v160 = vpack.c.b16 %v132, %v130
  %v161 = vpack.c.b16 %v133, %v131
  %v162 = vpack.c.b16 %v134, %v134
  %v163 = vpack.c.b16 %v135, %v135
  %vm190 = vcmask 719872
  %v192 = vsel %vm190, %v53, 0
  %vm194 = vcmask 1043456
  %v196 = vsel %vm194, %v162, 0
  %v199 = vsel %vm194, %v163, 0
  %201 = vmatprep.subr.bf16.mxu0 %v137
  %202 = vmatpush1.bf16.msra.mxu0 %v136
  %203 = vmatprep.subr.bf16.mxu0 %v139
  %204 = vmatpush1.bf16.msra.mxu0 %v138
  %205 = vmatprep.subr.bf16.mxu0 %v141
  %206 = vmatpush1.bf16.msra.mxu0 %v140
  %207 = vmatprep.subr.bf16.mxu0 %v143
  %208 = vmatpush1.bf16.msra.mxu0 %v142
  %209 = vmatprep.subr.bf16.mxu0 %v145
  %210 = vmatpush1.bf16.msra.mxu0 %v144
  %211 = vmatprep.subr.bf16.mxu0 %v147
  %212 = vmatpush1.bf16.msra.mxu0 %v146
  %213 = vmatprep.subr.bf16.mxu0 %v149
  %214 = vmatpush1.bf16.msra.mxu0 %v148
  %215 = vmatprep.subr.bf16.mxu0 %v151
  %216 = vmatpush1.bf16.msra.mxu0 %v150
  %217 = vmatprep.subr.bf16.mxu0 %v153
  %218 = vmatpush1.bf16.msra.mxu0 %v152
  %219 = vmatprep.subr.bf16.mxu0 %v155
  %220 = vmatpush1.bf16.msra.mxu0 %v154
  %221 = vmatprep.subr.bf16.mxu0 %v157
  %222 = vmatpush1.bf16.msra.mxu0 %v156
  %223 = vmatprep.subr.bf16.mxu0 %v159
  %224 = vmatpush1.bf16.msra.mxu0 %v158
  %225 = vmatprep.subr.bf16.mxu0 %v161
  %226 = vmatpush1.bf16.msra.mxu0 %v160
  %227 = vmatprep.subr.bf16.mxu0 %v199
  %228 = vmatpush1.bf16.msra.mxu0 %v196
  %229 = vmatprep.subr.bf16.mxu0 0
  %230 = vmatpush1.bf16.msra.mxu0 0
  %231 = vmatprep.subr.bf16.mxu0 0
  %232 = vmatpush1.bf16.msra.mxu0 0
  %233 = vmatprep.mubr.bf16.mxu0 %v192
  %234 = vmatmul.mubr.bf16.gmra.mrb[0].mxu0 %v52
  %v235 = vpop.f32.mrb[0].mxu0
  %v236 = vadd.f32 %v47, %v235
  %v237 = vpop.f32.mrb[0].mxu0
  %v238 = vadd.f32 %v47, %v237
  %v239 = vpop.f32.mrb[0].mxu0
  %v240 = vpop.f32.mrb[0].mxu0
  %241 = vdwg.mxu0
  %vm242 = vcmp.ge.f32.partialorder %v236, 0.0
  %vm243 = vcmp.ge.f32.partialorder %v238, 0.0
  %v244 = vmul.f32 %v236, 0.2
  %v245 = vmul.f32 %v238, 0.2
  %v246 = vsel %vm242, %v236, %v244
  %v247 = vsel %vm243, %v238, %v245
  %v248 = vpack.c.bf16 %v246, %v246
  %v249 = vpack.c.bf16 %v247, %v247
  %v252 = vunpack.c.l.b16 %v248
  %v253 = vunpack.c.l.b16 %v249
  %v254 = vpack.c.b16 %v253, %v252
  %vm256 = vcmask 424964
  %vm257 = vmor %vm256, %vm194
  %258 = vst.msk [vmem:[%s3] sm:$0xff] %vm257, %v254
  // Predicated region
  $region14: #{ms_stft_discriminator_forward.39} parent=0 // pred_check
    _
  $region15: #{ms_stft_discriminator_forward.39} parent=0 // pred_check_branch
    %260 = sbr.rel (0) target = $region17
  $region16: #{ms_stft_discriminator_forward.39} parent=0 // pred_region
    _
  $region17: #{ms_stft_discriminator_forward.39} parent=0 // pred_fallthru
    _
  // Predicated region
  $region18: #{ms_stft_discriminator_forward.39} parent=0 // pred_check
    _
  $region19: #{ms_stft_discriminator_forward.39} parent=0 // pred_check_branch
    %262 = sbr.rel (0) target = $region21
  $region20: #{ms_stft_discriminator_forward.39} parent=0 // pred_region
    _
  $region21: #{ms_stft_discriminator_forward.39} parent=0 // pred_fallthru
    _

// kernel: ms_stft_discriminator_forward.40
$region0: #{ms_stft_discriminator_forward.40}
  #allocation0 [shape = 'u32[]', space=smem, size = 0x4, offset = 0x4, fixed_abs, tag = 'smem constant byte address 0x4 - core index']
  #allocation1 [shape = 'u32[144,128]{1,0:T(1,128)}', space=vmem, size = 0x12000, scoped, tag = 'internal scratch']
  %s0 = inlined_call_operand.vmem [shape: bf16[8,72], index: 0, kind: input, shape index: {}]
  %s1 = inlined_call_operand.vmem [shape: bf16[72,180], index: 1, kind: input, shape index: {}]
  %s2 = inlined_call_operand.vmem [shape: f32[8,1], index: 2, kind: input, shape index: {}]
  %s3 = inlined_call_operand.vmem [shape: bf16[8,180], index: 3, kind: output, shape index: {}]
  %s4 = sld [smem:[#allocation0]]
  $region22: #{ms_stft_discriminator_forward.40} parent=0
    _
  %s6 = ssub.s32 1, %s4
  %s7 = scalar_select 0, %s6, %s4
  // Predicated region
  $region2: #{ms_stft_discriminator_forward.40} parent=0 // pred_check
    _
  $region3: #{ms_stft_discriminator_forward.40} parent=0 // pred_check_branch
    %9 = sbr.rel (0) target = $region5
  $region4: #{ms_stft_discriminator_forward.40} parent=0 // pred_region
    _
  $region5: #{ms_stft_discriminator_forward.40} parent=0 // pred_fallthru
    _
  // Predicated region
  $region6: #{ms_stft_discriminator_forward.40} parent=0 // pred_check
    _
  $region7: #{ms_stft_discriminator_forward.40} parent=0 // pred_check_branch
    %11 = sbr.rel (0) target = $region9
  $region8: #{ms_stft_discriminator_forward.40} parent=0 // pred_region
    _
  $region9: #{ms_stft_discriminator_forward.40} parent=0 // pred_fallthru
    _
  // Predicated region
  $region10: #{ms_stft_discriminator_forward.40} parent=0 // pred_check
    _
  $region11: #{ms_stft_discriminator_forward.40} parent=0 // pred_check_branch
    %13 = sbr.rel (0) target = $region13
  $region12: #{ms_stft_discriminator_forward.40} parent=0 // pred_region
    _
  $region13: #{ms_stft_discriminator_forward.40} parent=0 // pred_fallthru
    _
  %v15 = vld [vmem:[%s0] sm:$0xf]
  %v16 = vld [vmem:[%s1] sm:$0xff]
  %v17 = vld [vmem:[%s1 + $0x8] sm:$0xff]
  %v18 = vld [vmem:[%s1 + $0x10] sm:$0xff]
  %v19 = vld [vmem:[%s1 + $0x18] sm:$0xff]
  %v20 = vld [vmem:[%s1 + $0x20] sm:$0xff]
  %v21 = vld [vmem:[%s1 + $0x28] sm:$0xff]
  %v22 = vld [vmem:[%s1 + $0x30] sm:$0xff]
  %v23 = vld [vmem:[%s1 + $0x38] sm:$0xff]
  %v24 = vld [vmem:[%s1 + $0x40] sm:$0xff]
  %v25 = vld [vmem:[%s2] sm:$0xff]
  %27 = vset.pattern.permute.xlu0 0
  %28 = vperm.xlu0 %27, %v25
  %v29 = vpop.permute.xlu0 %28
  %v40 = vunpack.c.l.b16 %v16
  %v41 = vunpack.c.h.b16 %v16
  %v42 = vunpack.c.l.b16 %v17
  %v43 = vunpack.c.h.b16 %v17
  %v44 = vunpack.c.l.b16 %v18
  %v45 = vunpack.c.h.b16 %v18
  %v46 = vunpack.c.l.b16 %v19
  %v47 = vunpack.c.h.b16 %v19
  %v48 = vunpack.c.l.b16 %v20
  %v49 = vunpack.c.h.b16 %v20
  %v50 = vunpack.c.l.b16 %v21
  %v51 = vunpack.c.h.b16 %v21
  %v52 = vunpack.c.l.b16 %v22
  %v53 = vunpack.c.h.b16 %v22
  %v54 = vunpack.c.l.b16 %v23
  %v55 = vunpack.c.h.b16 %v23
  %v56 = vunpack.c.l.b16 %v24
  %v57 = vunpack.c.h.b16 %v24
  %v58 = vpack.c.b16 %v42, %v40
  %v59 = vpack.c.b16 %v43, %v41
  %v60 = vpack.c.b16 %v46, %v44
  %v61 = vpack.c.b16 %v47, %v45
  %v62 = vpack.c.b16 %v50, %v48
  %v63 = vpack.c.b16 %v51, %v49
  %v64 = vpack.c.b16 %v54, %v52
  %v65 = vpack.c.b16 %v55, %v53
  %v66 = vpack.c.b16 %v56, %v56
  %v67 = vpack.c.b16 %v57, %v57
  %vm76 = vcmask 588800
  %v78 = vsel %vm76, %v15, 0
  %vm80 = vcmask 1043456
  %v82 = vsel %vm80, %v66, 0
  %v85 = vsel %vm80, %v67, 0
  %87 = vmatprep.subr.bf16.mxu0 %v59
  %88 = vmatpush1.bf16.msra.mxu0 %v58
  %89 = vmatprep.subr.bf16.mxu0 %v61
  %90 = vmatpush1.bf16.msra.mxu0 %v60
  %91 = vmatprep.subr.bf16.mxu0 %v63
  %92 = vmatpush1.bf16.msra.mxu0 %v62
  %93 = vmatprep.subr.bf16.mxu0 %v65
  %94 = vmatpush1.bf16.msra.mxu0 %v64
  %95 = vmatprep.subr.bf16.mxu0 %v85
  %96 = vmatpush1.bf16.msra.mxu0 %v82
  %97 = vmatprep.subr.bf16.mxu0 0
  %98 = vmatpush1.bf16.msra.mxu0 0
  %99 = vmatprep.subr.bf16.mxu0 0
  %100 = vmatpush1.bf16.msra.mxu0 0
  %101 = vmatprep.subr.bf16.mxu0 0
  %102 = vmatpush1.bf16.msra.mxu0 0
  %103 = vmatprep.subr.bf16.mxu0 0
  %104 = vmatpush1.bf16.msra.mxu0 0
  %105 = vmatprep.subr.bf16.mxu0 0
  %106 = vmatpush1.bf16.msra.mxu0 0
  %107 = vmatprep.subr.bf16.mxu0 0
  %108 = vmatpush1.bf16.msra.mxu0 0
  %109 = vmatprep.subr.bf16.mxu0 0
  %110 = vmatpush1.bf16.msra.mxu0 0
  %111 = vmatprep.subr.bf16.mxu0 0
  %112 = vmatpush1.bf16.msra.mxu0 0
  %113 = vmatprep.subr.bf16.mxu0 0
  %114 = vmatpush1.bf16.msra.mxu0 0
  %115 = vmatprep.subr.bf16.mxu0 0
  %116 = vmatpush1.bf16.msra.mxu0 0
  %117 = vmatprep.subr.bf16.mxu0 0
  %118 = vmatpush1.bf16.msra.mxu0 0
  %119 = vmatprep.mubr.bf16.mxu0 0
  %120 = vmatmul.mubr.bf16.gmra.mrb[0].mxu0 %v78
  %v121 = vpop.f32.mrb[0].mxu0
  %v122 = vadd.f32 %v29, %v121
  %v123 = vpop.f32.mrb[0].mxu0
  %v124 = vadd.f32 %v29, %v123
  %v125 = vpop.f32.mrb[0].mxu0
  %v126 = vpop.f32.mrb[0].mxu0
  %127 = vdwg.mxu0
  %vm128 = vcmp.ge.f32.partialorder %v122, 0.0
  %vm129 = vcmp.ge.f32.partialorder %v124, 0.0
  %v130 = vmul.f32 %v122, 0.2
  %v131 = vmul.f32 %v124, 0.2
  %v132 = vsel %vm128, %v122, %v130
  %v133 = vsel %vm129, %v124, %v131
  %v134 = vpack.c.bf16 %v132, %v132
  %v135 = vpack.c.bf16 %v133, %v133
  %v138 = vunpack.c.l.b16 %v134
  %v139 = vunpack.c.l.b16 %v135
  %v140 = vpack.c.b16 %v139, %v138
  %vm142 = vcmask 424964
  %vm143 = vmor %vm142, %vm80
  %144 = vst.msk [vmem:[%s3] sm:$0xff] %vm143, %v140
  // Predicated region
  $region14: #{ms_stft_discriminator_forward.40} parent=0 // pred_check
    _
  $region15: #{ms_stft_discriminator_forward.40} parent=0 // pred_check_branch
    %146 = sbr.rel (0) target = $region17
  $region16: #{ms_stft_discriminator_forward.40} parent=0 // pred_region
    _
  $region17: #{ms_stft_discriminator_forward.40} parent=0 // pred_fallthru
    _
  // Predicated region
  $region18: #{ms_stft_discriminator_forward.40} parent=0 // pred_check
    _
  $region19: #{ms_stft_discriminator_forward.40} parent=0 // pred_check_branch
    %148 = sbr.rel (0) target = $region21
  $region20: #{ms_stft_discriminator_forward.40} parent=0 // pred_region
    _
  $region21: #{ms_stft_discriminator_forward.40} parent=0 // pred_fallthru
    _

// kernel: ms_stft_discriminator_forward.41
$region0: #{ms_stft_discriminator_forward.41}
  #allocation0 [shape = 'u32[]', space=smem, size = 0x4, offset = 0x4, fixed_abs, tag = 'smem constant byte address 0x4 - core index']
  #allocation1 [shape = 'u32[144,128]{1,0:T(1,128)}', space=vmem, size = 0x12000, scoped, tag = 'internal scratch']
  %s0 = inlined_call_operand.vmem [shape: bf16[8,72], index: 0, kind: input, shape index: {}]
  %s1 = inlined_call_operand.vmem [shape: bf16[72,180], index: 1, kind: input, shape index: {}]
  %s2 = inlined_call_operand.vmem [shape: f32[8,1], index: 2, kind: input, shape index: {}]
  %s3 = inlined_call_operand.vmem [shape: f32[8,180], index: 3, kind: output, shape index: {}]
  %s4 = sld [smem:[#allocation0]]
  $region22: #{ms_stft_discriminator_forward.41} parent=0
    _
  %s6 = ssub.s32 1, %s4
  %s7 = scalar_select 0, %s6, %s4
  // Predicated region
  $region2: #{ms_stft_discriminator_forward.41} parent=0 // pred_check
    _
  $region3: #{ms_stft_discriminator_forward.41} parent=0 // pred_check_branch
    %9 = sbr.rel (0) target = $region5
  $region4: #{ms_stft_discriminator_forward.41} parent=0 // pred_region
    _
  $region5: #{ms_stft_discriminator_forward.41} parent=0 // pred_fallthru
    _
  // Predicated region
  $region6: #{ms_stft_discriminator_forward.41} parent=0 // pred_check
    _
  $region7: #{ms_stft_discriminator_forward.41} parent=0 // pred_check_branch
    %11 = sbr.rel (0) target = $region9
  $region8: #{ms_stft_discriminator_forward.41} parent=0 // pred_region
    _
  $region9: #{ms_stft_discriminator_forward.41} parent=0 // pred_fallthru
    _
  // Predicated region
  $region10: #{ms_stft_discriminator_forward.41} parent=0 // pred_check
    _
  $region11: #{ms_stft_discriminator_forward.41} parent=0 // pred_check_branch
    %13 = sbr.rel (0) target = $region13
  $region12: #{ms_stft_discriminator_forward.41} parent=0 // pred_region
    _
  $region13: #{ms_stft_discriminator_forward.41} parent=0 // pred_fallthru
    _
  %v15 = vld [vmem:[%s0] sm:$0xf]
  %v16 = vld [vmem:[%s1] sm:$0xff]
  %v17 = vld [vmem:[%s1 + $0x8] sm:$0xff]
  %v18 = vld [vmem:[%s1 + $0x10] sm:$0xff]
  %v19 = vld [vmem:[%s1 + $0x18] sm:$0xff]
  %v20 = vld [vmem:[%s1 + $0x20] sm:$0xff]
  %v21 = vld [vmem:[%s1 + $0x28] sm:$0xff]
  %v22 = vld [vmem:[%s1 + $0x30] sm:$0xff]
  %v23 = vld [vmem:[%s1 + $0x38] sm:$0xff]
  %v24 = vld [vmem:[%s1 + $0x40] sm:$0xff]
  %v25 = vld [vmem:[%s2] sm:$0xff]
  %27 = vset.pattern.permute.xlu0 0
  %28 = vperm.xlu0 %27, %v25
  %v29 = vpop.permute.xlu0 %28
  %v40 = vunpack.c.l.b16 %v16
  %v41 = vunpack.c.h.b16 %v16
  %v42 = vunpack.c.l.b16 %v17
  %v43 = vunpack.c.h.b16 %v17
  %v44 = vunpack.c.l.b16 %v18
  %v45 = vunpack.c.h.b16 %v18
  %v46 = vunpack.c.l.b16 %v19
  %v47 = vunpack.c.h.b16 %v19
  %v48 = vunpack.c.l.b16 %v20
  %v49 = vunpack.c.h.b16 %v20
  %v50 = vunpack.c.l.b16 %v21
  %v51 = vunpack.c.h.b16 %v21
  %v52 = vunpack.c.l.b16 %v22
  %v53 = vunpack.c.h.b16 %v22
  %v54 = vunpack.c.l.b16 %v23
  %v55 = vunpack.c.h.b16 %v23
  %v56 = vunpack.c.l.b16 %v24
  %v57 = vunpack.c.h.b16 %v24
  %v58 = vpack.c.b16 %v42, %v40
  %v59 = vpack.c.b16 %v43, %v41
  %v60 = vpack.c.b16 %v46, %v44
  %v61 = vpack.c.b16 %v47, %v45
  %v62 = vpack.c.b16 %v50, %v48
  %v63 = vpack.c.b16 %v51, %v49
  %v64 = vpack.c.b16 %v54, %v52
  %v65 = vpack.c.b16 %v55, %v53
  %v66 = vpack.c.b16 %v56, %v56
  %v67 = vpack.c.b16 %v57, %v57
  %vm76 = vcmask 588800
  %v78 = vsel %vm76, %v15, 0
  %vm80 = vcmask 1043456
  %v82 = vsel %vm80, %v66, 0
  %v85 = vsel %vm80, %v67, 0
  %87 = vmatprep.subr.bf16.mxu0 %v59
  %88 = vmatpush1.bf16.msra.mxu0 %v58
  %89 = vmatprep.subr.bf16.mxu0 %v61
  %90 = vmatpush1.bf16.msra.mxu0 %v60
  %91 = vmatprep.subr.bf16.mxu0 %v63
  %92 = vmatpush1.bf16.msra.mxu0 %v62
  %93 = vmatprep.subr.bf16.mxu0 %v65
  %94 = vmatpush1.bf16.msra.mxu0 %v64
  %95 = vmatprep.subr.bf16.mxu0 %v85
  %96 = vmatpush1.bf16.msra.mxu0 %v82
  %97 = vmatprep.subr.bf16.mxu0 0
  %98 = vmatpush1.bf16.msra.mxu0 0
  %99 = vmatprep.subr.bf16.mxu0 0
  %100 = vmatpush1.bf16.msra.mxu0 0
  %101 = vmatprep.subr.bf16.mxu0 0
  %102 = vmatpush1.bf16.msra.mxu0 0
  %103 = vmatprep.subr.bf16.mxu0 0
  %104 = vmatpush1.bf16.msra.mxu0 0
  %105 = vmatprep.subr.bf16.mxu0 0
  %106 = vmatpush1.bf16.msra.mxu0 0
  %107 = vmatprep.subr.bf16.mxu0 0
  %108 = vmatpush1.bf16.msra.mxu0 0
  %109 = vmatprep.subr.bf16.mxu0 0
  %110 = vmatpush1.bf16.msra.mxu0 0
  %111 = vmatprep.subr.bf16.mxu0 0
  %112 = vmatpush1.bf16.msra.mxu0 0
  %113 = vmatprep.subr.bf16.mxu0 0
  %114 = vmatpush1.bf16.msra.mxu0 0
  %115 = vmatprep.subr.bf16.mxu0 0
  %116 = vmatpush1.bf16.msra.mxu0 0
  %117 = vmatprep.subr.bf16.mxu0 0
  %118 = vmatpush1.bf16.msra.mxu0 0
  %119 = vmatprep.mubr.bf16.mxu0 0
  %120 = vmatmul.mubr.bf16.gmra.mrb[0].mxu0 %v78
  %v121 = vpop.f32.mrb[0].mxu0
  %v122 = vadd.f32 %v29, %v121
  %v123 = vpop.f32.mrb[0].mxu0
  %v124 = vadd.f32 %v29, %v123
  %v125 = vpop.f32.mrb[0].mxu0
  %v126 = vpop.f32.mrb[0].mxu0
  %127 = vdwg.mxu0
  %128 = vst [vmem:[%s3] sm:$0xff] %v122
  %vm129 = vcmask 424960
  %130 = vst.msk [vmem:[%s3 + $0x8] sm:$0xff] %vm129, %v124
  // Predicated region
  $region14: #{ms_stft_discriminator_forward.41} parent=0 // pred_check
    _
  $region15: #{ms_stft_discriminator_forward.41} parent=0 // pred_check_branch
    %132 = sbr.rel (0) target = $region17
  $region16: #{ms_stft_discriminator_forward.41} parent=0 // pred_region
    _
  $region17: #{ms_stft_discriminator_forward.41} parent=0 // pred_fallthru
    _
  // Predicated region
  $region18: #{ms_stft_discriminator_forward.41} parent=0 // pred_check
    _
  $region19: #{ms_stft_discriminator_forward.41} parent=0 // pred_check_branch
    %134 = sbr.rel (0) target = $region21
  $region20: #{ms_stft_discriminator_forward.41} parent=0 // pred_region
    _
  $region21: #{ms_stft_discriminator_forward.41} parent=0 // pred_fallthru
    _

// kernel: ms_stft_discriminator_forward.28
$region0: #{ms_stft_discriminator_forward.28}
  #allocation0 [shape = 'u32[]', space=smem, size = 0x4, offset = 0x4, fixed_abs, tag = 'smem constant byte address 0x4 - core index']
  #allocation1 [shape = 'u32[144,128]{1,0:T(1,128)}', space=vmem, size = 0x12000, scoped, tag = 'internal scratch']
  %s0 = inlined_call_operand.vmem [shape: bf16[136,128], index: 0, kind: input, shape index: {}]
  %s1 = inlined_call_operand.vmem [shape: bf16[128,20], index: 1, kind: input, shape index: {}]
  %s2 = inlined_call_operand.vmem [shape: f32[136,1], index: 2, kind: input, shape index: {}]
  %s3 = inlined_call_operand.vmem [shape: bf16[136,20], index: 3, kind: output, shape index: {}]
  %s4 = sld [smem:[#allocation0]]
  $region22: #{ms_stft_discriminator_forward.28} parent=0
    _
  %s6 = ssub.s32 1, %s4
  %s7 = scalar_select 0, %s6, %s4
  // Predicated region
  $region2: #{ms_stft_discriminator_forward.28} parent=0 // pred_check
    _
  $region3: #{ms_stft_discriminator_forward.28} parent=0 // pred_check_branch
    %9 = sbr.rel (0) target = $region5
  $region4: #{ms_stft_discriminator_forward.28} parent=0 // pred_region
    _
  $region5: #{ms_stft_discriminator_forward.28} parent=0 // pred_fallthru
    _
  // Predicated region
  $region6: #{ms_stft_discriminator_forward.28} parent=0 // pred_check
    _
  $region7: #{ms_stft_discriminator_forward.28} parent=0 // pred_check_branch
    %11 = sbr.rel (0) target = $region9
  $region8: #{ms_stft_discriminator_forward.28} parent=0 // pred_region
    _
  $region9: #{ms_stft_discriminator_forward.28} parent=0 // pred_fallthru
    _
  // Predicated region
  $region10: #{ms_stft_discriminator_forward.28} parent=0 // pred_check
    _
  $region11: #{ms_stft_discriminator_forward.28} parent=0 // pred_check_branch
    %13 = sbr.rel (0) target = $region13
  $region12: #{ms_stft_discriminator_forward.28} parent=0 // pred_region
    _
  $region13: #{ms_stft_discriminator_forward.28} parent=0 // pred_fallthru
    _
  %v15 = vld [vmem:[%s0] sm:$0xf]
  %v16 = vld [vmem:[%s0 + $0x4] sm:$0xf]
  %v17 = vld [vmem:[%s0 + $0x8] sm:$0xf]
  %v18 = vld [vmem:[%s0 + $0xc] sm:$0xf]
  %v19 = vld [vmem:[%s0 + $0x10] sm:$0xf]
  %v20 = vld [vmem:[%s0 + $0x14] sm:$0xf]
  %v21 = vld [vmem:[%s0 + $0x18] sm:$0xf]
  %v22 = vld [vmem:[%s0 + $0x1c] sm:$0xf]
  %v23 = vld [vmem:[%s0 + $0x20] sm:$0xf]
  %v24 = vld [vmem:[%s0 + $0x24] sm:$0xf]
  %v25 = vld [vmem:[%s0 + $0x28] sm:$0xf]
  %v26 = vld [vmem:[%s0 + $0x2c] sm:$0xf]
  %v27 = vld [vmem:[%s0 + $0x30] sm:$0xf]
  %v28 = vld [vmem:[%s0 + $0x34] sm:$0xf]
  %v29 = vld [vmem:[%s0 + $0x38] sm:$0xf]
  %v30 = vld [vmem:[%s0 + $0x3c] sm:$0xf]
  %v31 = vld [vmem:[%s0 + $0x40] sm:$0xf]
  %v32 = vld [vmem:[%s1] sm:$0xf]
  %v33 = vld [vmem:[%s1 + $0x4] sm:$0xf]
  %v34 = vld [vmem:[%s1 + $0x8] sm:$0xf]
  %v35 = vld [vmem:[%s1 + $0xc] sm:$0xf]
  %v36 = vld [vmem:[%s1 + $0x10] sm:$0xf]
  %v37 = vld [vmem:[%s1 + $0x14] sm:$0xf]
  %v38 = vld [vmem:[%s1 + $0x18] sm:$0xf]
  %v39 = vld [vmem:[%s1 + $0x1c] sm:$0xf]
  %v40 = vld [vmem:[%s1 + $0x20] sm:$0xf]
  %v41 = vld [vmem:[%s1 + $0x24] sm:$0xf]
  %v42 = vld [vmem:[%s1 + $0x28] sm:$0xf]
  %v43 = vld [vmem:[%s1 + $0x2c] sm:$0xf]
  %v44 = vld [vmem:[%s1 + $0x30] sm:$0xf]
  %v45 = vld [vmem:[%s1 + $0x34] sm:$0xf]
  %v46 = vld [vmem:[%s1 + $0x38] sm:$0xf]
  %v47 = vld [vmem:[%s1 + $0x3c] sm:$0xf]
  %v48 = vld [vmem:[%s2] sm:$0xff]
  %v49 = vld [vmem:[%s2 + $0x8] sm:$0xff]
  %v50 = vld [vmem:[%s2 + $0x10] sm:$0xff]
  %v51 = vld [vmem:[%s2 + $0x18] sm:$0xff]
  %v52 = vld [vmem:[%s2 + $0x20] sm:$0xff]
  %v53 = vld [vmem:[%s2 + $0x28] sm:$0xff]
  %v54 = vld [vmem:[%s2 + $0x30] sm:$0xff]
  %v55 = vld [vmem:[%s2 + $0x38] sm:$0xff]
  %v56 = vld [vmem:[%s2 + $0x40] sm:$0xff]
  %v57 = vld [vmem:[%s2 + $0x48] sm:$0xff]
  %v58 = vld [vmem:[%s2 + $0x50] sm:$0xff]
  %v59 = vld [vmem:[%s2 + $0x58] sm:$0xff]
  %v60 = vld [vmem:[%s2 + $0x60] sm:$0xff]
  %v61 = vld [vmem:[%s2 + $0x68] sm:$0xff]
  %v62 = vld [vmem:[%s2 + $0x70] sm:$0xff]
  %v63 = vld [vmem:[%s2 + $0x78] sm:$0xff]
  %v64 = vld [vmem:[%s2 + $0x80] sm:$0xff]
  %66 = vset.pattern.permute.xlu0 0
  %67 = vperm.xlu0 %66, %v48
  %v68 = vpop.permute.xlu0 %67
  %71 = vset.pattern.permute.xlu0 0
  %72 = vperm.xlu0 %71, %v49
  %v73 = vpop.permute.xlu0 %72
  %76 = vset.pattern.permute.xlu0 0
  %77 = vperm.xlu0 %76, %v50
  %v78 = vpop.permute.xlu0 %77
  %81 = vset.pattern.permute.xlu0 0
  %82 = vperm.xlu0 %81, %v51
  %v83 = vpop.permute.xlu0 %82
  %86 = vset.pattern.permute.xlu0 0
  %87 = vperm.xlu0 %86, %v52
  %v88 = vpop.permute.xlu0 %87
  %91 = vset.pattern.permute.xlu0 0
  %92 = vperm.xlu0 %91, %v53
  %v93 = vpop.permute.xlu0 %92
  %96 = vset.pattern.permute.xlu0 0
  %97 = vperm.xlu0 %96, %v54
  %v98 = vpop.permute.xlu0 %97
  %101 = vset.pattern.permute.xlu0 0
  %102 = vperm.xlu0 %101, %v55
  %v103 = vpop.permute.xlu0 %102
  %106 = vset.pattern.permute.xlu0 0
  %107 = vperm.xlu0 %106, %v56
  %v108 = vpop.permute.xlu0 %107
  %111 = vset.pattern.permute.xlu0 0
  %112 = vperm.xlu0 %111, %v57
  %v113 = vpop.permute.xlu0 %112
  %116 = vset.pattern.permute.xlu0 0
  %117 = vperm.xlu0 %116, %v58
  %v118 = vpop.permute.xlu0 %117
  %121 = vset.pattern.permute.xlu0 0
  %122 = vperm.xlu0 %121, %v59
  %v123 = vpop.permute.xlu0 %122
  %126 = vset.pattern.permute.xlu0 0
  %127 = vperm.xlu0 %126, %v60
  %v128 = vpop.permute.xlu0 %127
  %131 = vset.pattern.permute.xlu0 0
  %132 = vperm.xlu0 %131, %v61
  %v133 = vpop.permute.xlu0 %132
  %136 = vset.pattern.permute.xlu0 0
  %137 = vperm.xlu0 %136, %v62
  %v138 = vpop.permute.xlu0 %137
  %141 = vset.pattern.permute.xlu0 0
  %142 = vperm.xlu0 %141, %v63
  %v143 = vpop.permute.xlu0 %142
  %146 = vset.pattern.permute.xlu0 0
  %147 = vperm.xlu0 %146, %v64
  %v148 = vpop.permute.xlu0 %147
  %v167 = vunpack.c.l.b16 %v15
  %v168 = vunpack.c.l.b16 %v16
  %v169 = vunpack.c.l.b16 %v17
  %v170 = vunpack.c.l.b16 %v18
  %v171 = vunpack.c.l.b16 %v19
  %v172 = vunpack.c.l.b16 %v20
  %v173 = vunpack.c.l.b16 %v21
  %v174 = vunpack.c.l.b16 %v22
  %v175 = vunpack.c.l.b16 %v23
  %v176 = vunpack.c.l.b16 %v24
  %v177 = vunpack.c.l.b16 %v25
  %v178 = vunpack.c.l.b16 %v26
  %v179 = vunpack.c.l.b16 %v27
  %v180 = vunpack.c.l.b16 %v28
  %v181 = vunpack.c.l.b16 %v29
  %v182 = vunpack.c.l.b16 %v30
  %v183 = vunpack.c.l.b16 %v31
  %v184 = vpack.c.b16 %v168, %v167
  %v185 = vpack.c.b16 %v170, %v169
  %v186 = vpack.c.b16 %v172, %v171
  %v187 = vpack.c.b16 %v174, %v173
  %v188 = vpack.c.b16 %v176, %v175
  %v189 = vpack.c.b16 %v178, %v177
  %v190 = vpack.c.b16 %v180, %v179
  %v191 = vpack.c.b16 %v182, %v181
  %v192 = vpack.c.b16 %v183, %v183
  %v218 = vunpack.c.l.b16 %v32
  %v219 = vunpack.c.l.b16 %v33
  %v220 = vunpack.c.l.b16 %v34
  %v221 = vunpack.c.l.b16 %v35
  %v222 = vunpack.c.l.b16 %v36
  %v223 = vunpack.c.l.b16 %v37
  %v224 = vunpack.c.l.b16 %v38
  %v225 = vunpack.c.l.b16 %v39
  %v226 = vunpack.c.l.b16 %v40
  %v227 = vunpack.c.l.b16 %v41
  %v228 = vunpack.c.l.b16 %v42
  %v229 = vunpack.c.l.b16 %v43
  %v230 = vunpack.c.l.b16 %v44
  %v231 = vunpack.c.l.b16 %v45
  %v232 = vunpack.c.l.b16 %v46
  %v233 = vunpack.c.l.b16 %v47
  %v234 = vpack.c.b16 %v219, %v218
  %v235 = vpack.c.b16 %v221, %v220
  %v236 = vpack.c.b16 %v223, %v222
  %v237 = vpack.c.b16 %v225, %v224
  %v238 = vpack.c.b16 %v227, %v226
  %v239 = vpack.c.b16 %v229, %v228
  %v240 = vpack.c.b16 %v231, %v230
  %v241 = vpack.c.b16 %v233, %v232
  %250 = vmatprep.subr.bf16.mxu0 0
  %251 = vmatpush1.bf16.msra.mxu0 %v234
  %252 = vmatprep.subr.bf16.mxu0 0
  %253 = vmatpush1.bf16.msra.mxu0 %v235
  %254 = vmatprep.subr.bf16.mxu0 0
  %255 = vmatpush1.bf16.msra.mxu0 %v236
  %256 = vmatprep.subr.bf16.mxu0 0
  %257 = vmatpush1.bf16.msra.mxu0 %v237
  %258 = vmatprep.subr.bf16.mxu0 0
  %259 = vmatpush1.bf16.msra.mxu0 %v238
  %260 = vmatprep.subr.bf16.mxu0 0
  %261 = vmatpush1.bf16.msra.mxu0 %v239
  %262 = vmatprep.subr.bf16.mxu0 0
  %263 = vmatpush1.bf16.msra.mxu0 %v240
  %264 = vmatprep.subr.bf16.mxu0 0
  %265 = vmatpush1.bf16.msra.mxu0 %v241
  %266 = vmatprep.subr.bf16.mxu0 0
  %267 = vmatpush1.bf16.msra.mxu0 0
  %268 = vmatprep.subr.bf16.mxu0 0
  %269 = vmatpush1.bf16.msra.mxu0 0
  %270 = vmatprep.subr.bf16.mxu0 0
  %271 = vmatpush1.bf16.msra.mxu0 0
  %272 = vmatprep.subr.bf16.mxu0 0
  %273 = vmatpush1.bf16.msra.mxu0 0
  %274 = vmatprep.subr.bf16.mxu0 0
  %275 = vmatpush1.bf16.msra.mxu0 0
  %276 = vmatprep.subr.bf16.mxu0 0
  %277 = vmatpush1.bf16.msra.mxu0 0
  %278 = vmatprep.subr.bf16.mxu0 0
  %279 = vmatpush1.bf16.msra.mxu0 0
  %280 = vmatprep.subr.bf16.mxu0 0
  %281 = vmatpush1.bf16.msra.mxu0 0
  %282 = vmatprep.mubr.bf16.mxu0 0
  %283 = vmatmul.mubr.bf16.gmra.mrb[0].mxu0 %v184
  %v284 = vpop.f32.mrb[0].mxu0
  %v285 = vadd.f32 %v68, %v284
  %v286 = vpop.f32.mrb[0].mxu0
  %v287 = vpop.f32.mrb[0].mxu0
  %v288 = vadd.f32 %v73, %v287
  %v289 = vpop.f32.mrb[0].mxu0
  %290 = vmatprep.mubr.bf16.mxu0 0
  %291 = vmatmul.mubr.bf16.gmra.mrb[0].mxu0 %v185
  %v292 = vpop.f32.mrb[0].mxu0
  %v293 = vadd.f32 %v78, %v292
  %v294 = vpop.f32.mrb[0].mxu0
  %v295 = vpop.f32.mrb[0].mxu0
  %v296 = vadd.f32 %v83, %v295
  %v297 = vpop.f32.mrb[0].mxu0
  %298 = vmatprep.mubr.bf16.mxu0 0
  %299 = vmatmul.mubr.bf16.gmra.mrb[0].mxu0 %v186
  %v300 = vpop.f32.mrb[0].mxu0
  %v301 = vadd.f32 %v88, %v300
  %v302 = vpop.f32.mrb[0].mxu0
  %v303 = vpop.f32.mrb[0].mxu0
  %v304 = vadd.f32 %v93, %v303
  %v305 = vpop.f32.mrb[0].mxu0
  %306 = vmatprep.mubr.bf16.mxu0 0
  %307 = vmatmul.mubr.bf16.gmra.mrb[0].mxu0 %v187
  %v308 = vpop.f32.mrb[0].mxu0
  %v309 = vadd.f32 %v98, %v308
  %v310 = vpop.f32.mrb[0].mxu0
  %v311 = vpop.f32.mrb[0].mxu0
  %v312 = vadd.f32 %v103, %v311
  %v313 = vpop.f32.mrb[0].mxu0
  %314 = vmatprep.mubr.bf16.mxu0 0
  %315 = vmatmul.mubr.bf16.gmra.mrb[0].mxu0 %v188
  %v316 = vpop.f32.mrb[0].mxu0
  %v317 = vadd.f32 %v108, %v316
  %v318 = vpop.f32.mrb[0].mxu0
  %v319 = vpop.f32.mrb[0].mxu0
  %v320 = vadd.f32 %v113, %v319
  %v321 = vpop.f32.mrb[0].mxu0
  %322 = vmatprep.mubr.bf16.mxu0 0
  %323 = vmatmul.mubr.bf16.gmra.mrb[0].mxu0 %v189
  %v324 = vpop.f32.mrb[0].mxu0
  %v325 = vadd.f32 %v118, %v324
  %v326 = vpop.f32.mrb[0].mxu0
  %v327 = vpop.f32.mrb[0].mxu0
  %v328 = vadd.f32 %v123, %v327
  %v329 = vpop.f32.mrb[0].mxu0
  %330 = vmatprep.mubr.bf16.mxu0 0
  %331 = vmatmul.mubr.bf16.gmra.mrb[0].mxu0 %v190
  %v332 = vpop.f32.mrb[0].mxu0
  %v333 = vadd.f32 %v128, %v332
  %v334 = vpop.f32.mrb[0].mxu0
  %v335 = vpop.f32.mrb[0].mxu0
  %v336 = vadd.f32 %v133, %v335
  %v337 = vpop.f32.mrb[0].mxu0
  %338 = vmatprep.mubr.bf16.mxu0 0
  %339 = vmatmul.mubr.bf16.gmra.mrb[0].mxu0 %v191
  %v340 = vpop.f32.mrb[0].mxu0
  %v341 = vadd.f32 %v138, %v340
  %v342 = vpop.f32.mrb[0].mxu0
  %v343 = vpop.f32.mrb[0].mxu0
  %v344 = vadd.f32 %v143, %v343
  %v345 = vpop.f32.mrb[0].mxu0
  %346 = vmatprep.mubr.bf16.mxu0 0
  %347 = vmatmul.mubr.bf16.gmra.mrb[0].mxu0 %v192
  %v348 = vpop.f32.mrb[0].mxu0
  %v349 = vadd.f32 %v148, %v348
  %v350 = vpop.f32.mrb[0].mxu0
  %v351 = vpop.f32.mrb[0].mxu0
  %v352 = vpop.f32.mrb[0].mxu0
  %353 = vdwg.mxu0
  %v354 = vpack.c.bf16 %v288, %v285
  %v355 = vpack.c.bf16 %v296, %v293
  %v356 = vpack.c.bf16 %v304, %v301
  %v357 = vpack.c.bf16 %v312, %v309
  %v358 = vpack.c.bf16 %v320, %v317
  %v359 = vpack.c.bf16 %v328, %v325
  %v360 = vpack.c.bf16 %v336, %v333
  %v361 = vpack.c.bf16 %v344, %v341
  %v362 = vpack.c.bf16 %v349, %v349
  %v372 = vunpack.c.l.b16 %v354
  %v373 = vunpack.c.h.b16 %v354
  %v374 = vunpack.c.l.b16 %v355
  %v375 = vunpack.c.h.b16 %v355
  %v376 = vunpack.c.l.b16 %v356
  %v377 = vunpack.c.h.b16 %v356
  %v378 = vunpack.c.l.b16 %v357
  %v379 = vunpack.c.h.b16 %v357
  %v380 = vunpack.c.l.b16 %v358
  %v381 = vunpack.c.h.b16 %v358
  %v382 = vunpack.c.l.b16 %v359
  %v383 = vunpack.c.h.b16 %v359
  %v384 = vunpack.c.l.b16 %v360
  %v385 = vunpack.c.h.b16 %v360
  %v386 = vunpack.c.l.b16 %v361
  %v387 = vunpack.c.h.b16 %v361
  %v388 = vunpack.c.l.b16 %v362
  %v389 = vpack.c.b16 %v372, %v372
  %v390 = vpack.c.b16 %v373, %v373
  %v391 = vpack.c.b16 %v374, %v374
  %v392 = vpack.c.b16 %v375, %v375
  %v393 = vpack.c.b16 %v376, %v376
  %v394 = vpack.c.b16 %v377, %v377
  %v395 = vpack.c.b16 %v378, %v378
  %v396 = vpack.c.b16 %v379, %v379
  %v397 = vpack.c.b16 %v380, %v380
  %v398 = vpack.c.b16 %v381, %v381
  %v399 = vpack.c.b16 %v382, %v382
  %v400 = vpack.c.b16 %v383, %v383
  %v401 = vpack.c.b16 %v384, %v384
  %v402 = vpack.c.b16 %v385, %v385
  %v403 = vpack.c.b16 %v386, %v386
  %v404 = vpack.c.b16 %v387, %v387
  %v405 = vpack.c.b16 %v388, %v388
  %vm423 = vcmask 158720
  %424 = vst.msk [vmem:[%s3] sm:$0xf] %vm423, %v389
  %425 = vst.msk [vmem:[%s3 + $0x4] sm:$0xf] %vm423, %v390
  %426 = vst.msk [vmem:[%s3 + $0x8] sm:$0xf] %vm423, %v391
  %427 = vst.msk [vmem:[%s3 + $0xc] sm:$0xf] %vm423, %v392
  %428 = vst.msk [vmem:[%s3 + $0x10] sm:$0xf] %vm423, %v393
  %429 = vst.msk [vmem:[%s3 + $0x14] sm:$0xf] %vm423, %v394
  %430 = vst.msk [vmem:[%s3 + $0x18] sm:$0xf] %vm423, %v395
  %431 = vst.msk [vmem:[%s3 + $0x1c] sm:$0xf] %vm423, %v396
  %432 = vst.msk [vmem:[%s3 + $0x20] sm:$0xf] %vm423, %v397
  %433 = vst.msk [vmem:[%s3 + $0x24] sm:$0xf] %vm423, %v398
  %434 = vst.msk [vmem:[%s3 + $0x28] sm:$0xf] %vm423, %v399
  %435 = vst.msk [vmem:[%s3 + $0x2c] sm:$0xf] %vm423, %v400
  %436 = vst.msk [vmem:[%s3 + $0x30] sm:$0xf] %vm423, %v401
  %437 = vst.msk [vmem:[%s3 + $0x34] sm:$0xf] %vm423, %v402
  %438 = vst.msk [vmem:[%s3 + $0x38] sm:$0xf] %vm423, %v403
  %439 = vst.msk [vmem:[%s3 + $0x3c] sm:$0xf] %vm423, %v404
  %440 = vst.msk [vmem:[%s3 + $0x40] sm:$0xf] %vm423, %v405
  // Predicated region
  $region14: #{ms_stft_discriminator_forward.28} parent=0 // pred_check
    _
  $region15: #{ms_stft_discriminator_forward.28} parent=0 // pred_check_branch
    %442 = sbr.rel (0) target = $region17
  $region16: #{ms_stft_discriminator_forward.28} parent=0 // pred_region
    _
  $region17: #{ms_stft_discriminator_forward.28} parent=0 // pred_fallthru
    _
  // Predicated region
  $region18: #{ms_stft_discriminator_forward.28} parent=0 // pred_check
    _
  $region19: #{ms_stft_discriminator_forward.28} parent=0 // pred_check_branch
    %444 = sbr.rel (0) target = $region21
  $region20: #{ms_stft_discriminator_forward.28} parent=0 // pred_region
    _
  $region21: #{ms_stft_discriminator_forward.28} parent=0 // pred_fallthru
    _

// kernel: ms_stft_discriminator_forward.29
$region0: #{ms_stft_discriminator_forward.29}
  #allocation0 [shape = 'u32[]', space=smem, size = 0x4, offset = 0x4, fixed_abs, tag = 'smem constant byte address 0x4 - core index']
  #allocation1 [shape = 'u32[144,128]{1,0:T(1,128)}', space=vmem, size = 0x12000, scoped, tag = 'internal scratch']
  %s0 = inlined_call_operand.vmem [shape: bf16[8,54], index: 0, kind: input, shape index: {}]
  %s1 = inlined_call_operand.vmem [shape: bf16[54,1300], index: 1, kind: input, shape index: {}]
  %s2 = inlined_call_operand.vmem [shape: f32[8,1], index: 2, kind: input, shape index: {}]
  %s3 = inlined_call_operand.vmem [shape: bf16[8,1300], index: 3, kind: output, shape index: {}]
  %s4 = sld [smem:[#allocation0]]
  $region22: #{ms_stft_discriminator_forward.29} parent=0
    _
  %s6 = ssub.s32 1, %s4
  %s7 = scalar_select 0, %s6, %s4
  // Predicated region
  $region2: #{ms_stft_discriminator_forward.29} parent=0 // pred_check
    _
  $region3: #{ms_stft_discriminator_forward.29} parent=0 // pred_check_branch
    %9 = sbr.rel (0) target = $region5
  $region4: #{ms_stft_discriminator_forward.29} parent=0 // pred_region
    _
  $region5: #{ms_stft_discriminator_forward.29} parent=0 // pred_fallthru
    _
  // Predicated region
  $region6: #{ms_stft_discriminator_forward.29} parent=0 // pred_check
    _
  $region7: #{ms_stft_discriminator_forward.29} parent=0 // pred_check_branch
    %11 = sbr.rel (0) target = $region9
  $region8: #{ms_stft_discriminator_forward.29} parent=0 // pred_region
    _
  $region9: #{ms_stft_discriminator_forward.29} parent=0 // pred_fallthru
    _
  // Predicated region
  $region10: #{ms_stft_discriminator_forward.29} parent=0 // pred_check
    _
  $region11: #{ms_stft_discriminator_forward.29} parent=0 // pred_check_branch
    %13 = sbr.rel (0) target = $region13
  $region12: #{ms_stft_discriminator_forward.29} parent=0 // pred_region
    _
  $region13: #{ms_stft_discriminator_forward.29} parent=0 // pred_fallthru
    _
  %v15 = vld [vmem:[%s0] sm:$0xf]
  %v16 = vld [vmem:[%s1] sm:$0xff]
  %v17 = vld [vmem:[%s1 + $0x8] sm:$0xff]
  %v18 = vld [vmem:[%s1 + $0x10] sm:$0xff]
  %v19 = vld [vmem:[%s1 + $0x18] sm:$0xff]
  %v20 = vld [vmem:[%s1 + $0x20] sm:$0xff]
  %v21 = vld [vmem:[%s1 + $0x28] sm:$0xf]
  %v22 = vld [vmem:[%s1 + $0x2c] sm:$0xff]
  %v23 = vld [vmem:[%s1 + $0x34] sm:$0xff]
  %v24 = vld [vmem:[%s1 + $0x3c] sm:$0xff]
  %v25 = vld [vmem:[%s1 + $0x44] sm:$0xff]
  %v26 = vld [vmem:[%s1 + $0x4c] sm:$0xff]
  %v27 = vld [vmem:[%s1 + $0x54] sm:$0xf]
  %v28 = vld [vmem:[%s1 + $0x58] sm:$0xff]
  %v29 = vld [vmem:[%s1 + $0x60] sm:$0xff]
  %v30 = vld [vmem:[%s1 + $0x68] sm:$0xff]
  %v31 = vld [vmem:[%s1 + $0x70] sm:$0xff]
  %v32 = vld [vmem:[%s1 + $0x78] sm:$0xff]
  %v33 = vld [vmem:[%s1 + $0x80] sm:$0xf]
  %v34 = vld [vmem:[%s1 + $0x84] sm:$0xff]
  %v35 = vld [vmem:[%s1 + $0x8c] sm:$0xff]
  %v36 = vld [vmem:[%s1 + $0x94] sm:$0xff]
  %v37 = vld [vmem:[%s1 + $0x9c] sm:$0xff]
  %v38 = vld [vmem:[%s1 + $0xa4] sm:$0xff]
  %v39 = vld [vmem:[%s1 + $0xac] sm:$0xf]
  %v40 = vld [vmem:[%s1 + $0xb0] sm:$0xff]
  %v41 = vld [vmem:[%s1 + $0xb8] sm:$0xff]
  %v42 = vld [vmem:[%s1 + $0xc0] sm:$0xff]
  %v43 = vld [vmem:[%s1 + $0xc8] sm:$0xff]
  %v44 = vld [vmem:[%s1 + $0xd0] sm:$0xff]
  %v45 = vld [vmem:[%s1 + $0xd8] sm:$0xf]
  %v46 = vld [vmem:[%s1 + $0xdc] sm:$0xff]
  %v47 = vld [vmem:[%s1 + $0xe4] sm:$0xff]
  %v48 = vld [vmem:[%s1 + $0xec] sm:$0xff]
  %v49 = vld [vmem:[%s1 + $0xf4] sm:$0xff]
  %v50 = vld [vmem:[%s1 + $0xfc] sm:$0xff]
  %v51 = vld [vmem:[%s1 + $0x104] sm:$0xf]
  %v52 = vld [vmem:[%s1 + $0x108] sm:$0x77]
  %v53 = vld [vmem:[%s1 + $0x110] sm:$0x77]
  %v54 = vld [vmem:[%s1 + $0x118] sm:$0x77]
  %v55 = vld [vmem:[%s1 + $0x120] sm:$0x77]
  %v56 = vld [vmem:[%s1 + $0x128] sm:$0x77]
  %v57 = vld [vmem:[%s1 + $0x130] sm:$0x7]
  %v58 = vld [vmem:[%s2] sm:$0xff]
  %60 = vset.pattern.permute.xlu0 0
  %61 = vperm.xlu0 %60, %v58
  %v62 = vpop.permute.xlu0 %61
  %v106 = vunpack.c.l.b16 %v16
  %v107 = vunpack.c.h.b16 %v16
  %v108 = vunpack.c.l.b16 %v17
  %v109 = vunpack.c.h.b16 %v17
  %v110 = vunpack.c.l.b16 %v18
  %v111 = vunpack.c.h.b16 %v18
  %v112 = vunpack.c.l.b16 %v19
  %v113 = vunpack.c.h.b16 %v19
  %v114 = vunpack.c.l.b16 %v20
  %v115 = vunpack.c.h.b16 %v20
  %v116 = vunpack.c.l.b16 %v21
  %v117 = vunpack.c.l.b16 %v22
  %v118 = vunpack.c.h.b16 %v22
  %v119 = vunpack.c.l.b16 %v23
  %v120 = vunpack.c.h.b16 %v23
  %v121 = vunpack.c.l.b16 %v24
  %v122 = vunpack.c.h.b16 %v24
  %v123 = vunpack.c.l.b16 %v25
  %v124 = vunpack.c.h.b16 %v25
  %v125 = vunpack.c.l.b16 %v26
  %v126 = vunpack.c.h.b16 %v26
  %v127 = vunpack.c.l.b16 %v27
  %v128 = vunpack.c.l.b16 %v28
  %v129 = vunpack.c.h.b16 %v28
  %v130 = vunpack.c.l.b16 %v29
  %v131 = vunpack.c.h.b16 %v29
  %v132 = vunpack.c.l.b16 %v30
  %v133 = vunpack.c.h.b16 %v30
  %v134 = vunpack.c.l.b16 %v31
  %v135 = vunpack.c.h.b16 %v31
  %v136 = vunpack.c.l.b16 %v32
  %v137 = vunpack.c.h.b16 %v32
  %v138 = vunpack.c.l.b16 %v33
  %v139 = vunpack.c.l.b16 %v34
  %v140 = vunpack.c.h.b16 %v34
  %v141 = vunpack.c.l.b16 %v35
  %v142 = vunpack.c.h.b16 %v35
  %v143 = vunpack.c.l.b16 %v36
  %v144 = vunpack.c.h.b16 %v36
  %v145 = vunpack.c.l.b16 %v37
  %v146 = vunpack.c.h.b16 %v37
  %v147 = vunpack.c.l.b16 %v38
  %v148 = vunpack.c.h.b16 %v38
  %v149 = vunpack.c.l.b16 %v39
  %v150 = vunpack.c.l.b16 %v40
  %v151 = vunpack.c.h.b16 %v40
  %v152 = vunpack.c.l.b16 %v41
  %v153 = vunpack.c.h.b16 %v41
  %v154 = vunpack.c.l.b16 %v42
  %v155 = vunpack.c.h.b16 %v42
  %v156 = vunpack.c.l.b16 %v43
  %v157 = vunpack.c.h.b16 %v43
  %v158 = vunpack.c.l.b16 %v44
  %v159 = vunpack.c.h.b16 %v44
  %v160 = vunpack.c.l.b16 %v45
  %v161 = vunpack.c.l.b16 %v46
  %v162 = vunpack.c.h.b16 %v46
  %v163 = vunpack.c.l.b16 %v47
  %v164 = vunpack.c.h.b16 %v47
  %v165 = vunpack.c.l.b16 %v48
  %v166 = vunpack.c.h.b16 %v48
  %v167 = vunpack.c.l.b16 %v49
  %v168 = vunpack.c.h.b16 %v49
  %v169 = vunpack.c.l.b16 %v50
  %v170 = vunpack.c.h.b16 %v50
  %v171 = vunpack.c.l.b16 %v51
  %v172 = vunpack.c.l.b16 %v52
  %v173 = vunpack.c.h.b16 %v52
  %v174 = vunpack.c.l.b16 %v53
  %v175 = vunpack.c.h.b16 %v53
  %v176 = vunpack.c.l.b16 %v54
  %v177 = vunpack.c.h.b16 %v54
  %v178 = vunpack.c.l.b16 %v55
  %v179 = vunpack.c.h.b16 %v55
  %v180 = vunpack.c.l.b16 %v56
  %v181 = vunpack.c.h.b16 %v56
  %v182 = vunpack.c.l.b16 %v57
  %v183 = vpack.c.b16 %v117, %v106
  %v184 = vpack.c.b16 %v118, %v107
  %v185 = vpack.c.b16 %v119, %v108
  %v186 = vpack.c.b16 %v120, %v109
  %v187 = vpack.c.b16 %v121, %v110
  %v188 = vpack.c.b16 %v122, %v111
  %v189 = vpack.c.b16 %v123, %v112
  %v190 = vpack.c.b16 %v124, %v113
  %v191 = vpack.c.b16 %v125, %v114
  %v192 = vpack.c.b16 %v126, %v115
  %v193 = vpack.c.b16 %v127, %v116
  %v194 = vpack.c.b16 %v139, %v128
  %v195 = vpack.c.b16 %v140, %v129
  %v196 = vpack.c.b16 %v141, %v130
  %v197 = vpack.c.b16 %v142, %v131
  %v198 = vpack.c.b16 %v143, %v132
  %v199 = vpack.c.b16 %v144, %v133
  %v200 = vpack.c.b16 %v145, %v134
  %v201 = vpack.c.b16 %v146, %v135
  %v202 = vpack.c.b16 %v147, %v136
  %v203 = vpack.c.b16 %v148, %v137
  %v204 = vpack.c.b16 %v149, %v138
  %v205 = vpack.c.b16 %v161, %v150
  %v206 = vpack.c.b16 %v162, %v151
  %v207 = vpack.c.b16 %v163, %v152
  %v208 = vpack.c.b16 %v164, %v153
  %v209 = vpack.c.b16 %v165, %v154
  %v210 = vpack.c.b16 %v166, %v155
  %v211 = vpack.c.b16 %v167, %v156
  %v212 = vpack.c.b16 %v168, %v157
  %v213 = vpack.c.b16 %v169, %v158
  %v214 = vpack.c.b16 %v170, %v159
  %v215 = vpack.c.b16 %v171, %v160
  %v216 = vpack.c.b16 %v172, %v172
  %v217 = vpack.c.b16 %v173, %v173
  %v218 = vpack.c.b16 %v174, %v174
  %v219 = vpack.c.b16 %v175, %v175
  %v220 = vpack.c.b16 %v176, %v176
  %v221 = vpack.c.b16 %v177, %v177
  %v222 = vpack.c.b16 %v178, %v178
  %v223 = vpack.c.b16 %v179, %v179
  %v224 = vpack.c.b16 %v180, %v180
  %v225 = vpack.c.b16 %v181, %v181
  %v226 = vpack.c.b16 %v182, %v182
  %vm260 = vcmask 441344
  %v262 = vsel %vm260, %v15, 0
  %vm264 = vcmask 1042432
  %v266 = vsel %vm264, %v216, 0
  %v269 = vsel %vm264, %v217, 0
  %v272 = vsel %vm264, %v218, 0
  %v275 = vsel %vm264, %v219, 0
  %v278 = vsel %vm264, %v220, 0
  %v281 = vsel %vm264, %v221, 0
  %v284 = vsel %vm264, %v222, 0
  %v287 = vsel %vm264, %v223, 0
  %v290 = vsel %vm264, %v224, 0
  %v293 = vsel %vm264, %v225, 0
  %v296 = vsel %vm264, %v226, 0
  %298 = vmatprep.subr.bf16.mxu0 %v184
  %299 = vmatpush1.bf16.msra.mxu0 %v183
  %300 = vmatprep.subr.bf16.mxu0 %v195
  %301 = vmatpush1.bf16.msra.mxu0 %v194
  %302 = vmatprep.subr.bf16.mxu0 %v206
  %303 = vmatpush1.bf16.msra.mxu0 %v205
  %304 = vmatprep.subr.bf16.mxu0 %v269
  %305 = vmatpush1.bf16.msra.mxu0 %v266
  %306 = vmatprep.subr.bf16.mxu0 0
  %307 = vmatpush1.bf16.msra.mxu0 0
  %308 = vmatprep.subr.bf16.mxu0 0
  %309 = vmatpush1.bf16.msra.mxu0 0
  %310 = vmatprep.subr.bf16.mxu0 0
  %311 = vmatpush1.bf16.msra.mxu0 0
  %312 = vmatprep.subr.bf16.mxu0 0
  %313 = vmatpush1.bf16.msra.mxu0 0
  %314 = vmatprep.subr.bf16.mxu0 0
  %315 = vmatpush1.bf16.msra.mxu0 0
  %316 = vmatprep.subr.bf16.mxu0 0
  %317 = vmatpush1.bf16.msra.mxu0 0
  %318 = vmatprep.subr.bf16.mxu0 0
  %319 = vmatpush1.bf16.msra.mxu0 0
  %320 = vmatprep.subr.bf16.mxu0 0
  %321 = vmatpush1.bf16.msra.mxu0 0
  %322 = vmatprep.subr.bf16.mxu0 0
  %323 = vmatpush1.bf16.msra.mxu0 0
  %324 = vmatprep.subr.bf16.mxu0 0
  %325 = vmatpush1.bf16.msra.mxu0 0
  %326 = vmatprep.subr.bf16.mxu0 0
  %327 = vmatpush1.bf16.msra.mxu0 0
  %328 = vmatprep.subr.bf16.mxu0 0
  %329 = vmatpush1.bf16.msra.mxu0 0
  %330 = vmatprep.mubr.bf16.mxu0 0
  %331 = vmatmul.mubr.bf16.gmra.mrb[0].mxu0 %v262
  %v332 = vpop.f32.mrb[0].mxu0
  %v333 = vadd.f32 %v62, %v332
  %v334 = vpop.f32.mrb[0].mxu0
  %v335 = vadd.f32 %v62, %v334
  %v336 = vpop.f32.mrb[0].mxu0
  %v337 = vpop.f32.mrb[0].mxu0
  %338 = vdwg.mxu0
  %339 = vmatprep.subr.bf16.mxu0 %v186
  %340 = vmatpush1.bf16.msra.mxu0 %v185
  %341 = vmatprep.subr.bf16.mxu0 %v197
  %342 = vmatpush1.bf16.msra.mxu0 %v196
  %343 = vmatprep.subr.bf16.mxu0 %v208
  %344 = vmatpush1.bf16.msra.mxu0 %v207
  %345 = vmatprep.subr.bf16.mxu0 %v275
  %346 = vmatpush1.bf16.msra.mxu0 %v272
  %347 = vmatprep.subr.bf16.mxu0 0
  %348 = vmatpush1.bf16.msra.mxu0 0
  %349 = vmatprep.subr.bf16.mxu0 0
  %350 = vmatpush1.bf16.msra.mxu0 0
  %351 = vmatprep.subr.bf16.mxu0 0
  %352 = vmatpush1.bf16.msra.mxu0 0
  %353 = vmatprep.subr.bf16.mxu0 0
  %354 = vmatpush1.bf16.msra.mxu0 0
  %355 = vmatprep.subr.bf16.mxu0 0
  %356 = vmatpush1.bf16.msra.mxu0 0
  %357 = vmatprep.subr.bf16.mxu0 0
  %358 = vmatpush1.bf16.msra.mxu0 0
  %359 = vmatprep.subr.bf16.mxu0 0
  %360 = vmatpush1.bf16.msra.mxu0 0
  %361 = vmatprep.subr.bf16.mxu0 0
  %362 = vmatpush1.bf16.msra.mxu0 0
  %363 = vmatprep.subr.bf16.mxu0 0
  %364 = vmatpush1.bf16.msra.mxu0 0
  %365 = vmatprep.subr.bf16.mxu0 0
  %366 = vmatpush1.bf16.msra.mxu0 0
  %367 = vmatprep.subr.bf16.mxu0 0
  %368 = vmatpush1.bf16.msra.mxu0 0
  %369 = vmatprep.subr.bf16.mxu0 0
  %370 = vmatpush1.bf16.msra.mxu0 0
  %371 = vmatprep.mubr.bf16.mxu0 0
  %372 = vmatmul.mubr.bf16.gmra.mrb[0].mxu0 %v262
  %v373 = vpop.f32.mrb[0].mxu0
  %v374 = vadd.f32 %v62, %v373
  %v375 = vpop.f32.mrb[0].mxu0
  %v376 = vadd.f32 %v62, %v375
  %v377 = vpop.f32.mrb[0].mxu0
  %v378 = vpop.f32.mrb[0].mxu0
  %379 = vdwg.mxu0
  %380 = vmatprep.subr.bf16.mxu0 %v188
  %381 = vmatpush1.bf16.msra.mxu0 %v187
  %382 = vmatprep.subr.bf16.mxu0 %v199
  %383 = vmatpush1.bf16.msra.mxu0 %v198
  %384 = vmatprep.subr.bf16.mxu0 %v210
  %385 = vmatpush1.bf16.msra.mxu0 %v209
  %386 = vmatprep.subr.bf16.mxu0 %v281
  %387 = vmatpush1.bf16.msra.mxu0 %v278
  %388 = vmatprep.subr.bf16.mxu0 0
  %389 = vmatpush1.bf16.msra.mxu0 0
  %390 = vmatprep.subr.bf16.mxu0 0
  %391 = vmatpush1.bf16.msra.mxu0 0
  %392 = vmatprep.subr.bf16.mxu0 0
  %393 = vmatpush1.bf16.msra.mxu0 0
  %394 = vmatprep.subr.bf16.mxu0 0
  %395 = vmatpush1.bf16.msra.mxu0 0
  %396 = vmatprep.subr.bf16.mxu0 0
  %397 = vmatpush1.bf16.msra.mxu0 0
  %398 = vmatprep.subr.bf16.mxu0 0
  %399 = vmatpush1.bf16.msra.mxu0 0
  %400 = vmatprep.subr.bf16.mxu0 0
  %401 = vmatpush1.bf16.msra.mxu0 0
  %402 = vmatprep.subr.bf16.mxu0 0
  %403 = vmatpush1.bf16.msra.mxu0 0
  %404 = vmatprep.subr.bf16.mxu0 0
  %405 = vmatpush1.bf16.msra.mxu0 0
  %406 = vmatprep.subr.bf16.mxu0 0
  %407 = vmatpush1.bf16.msra.mxu0 0
  %408 = vmatprep.subr.bf16.mxu0 0
  %409 = vmatpush1.bf16.msra.mxu0 0
  %410 = vmatprep.subr.bf16.mxu0 0
  %411 = vmatpush1.bf16.msra.mxu0 0
  %412 = vmatprep.mubr.bf16.mxu0 0
  %413 = vmatmul.mubr.bf16.gmra.mrb[0].mxu0 %v262
  %v414 = vpop.f32.mrb[0].mxu0
  %v415 = vadd.f32 %v62, %v414
  %v416 = vpop.f32.mrb[0].mxu0
  %v417 = vadd.f32 %v62, %v416
  %v418 = vpop.f32.mrb[0].mxu0
  %v419 = vpop.f32.mrb[0].mxu0
  %420 = vdwg.mxu0
  %421 = vmatprep.subr.bf16.mxu0 %v190
  %422 = vmatpush1.bf16.msra.mxu0 %v189
  %423 = vmatprep.subr.bf16.mxu0 %v201
  %424 = vmatpush1.bf16.msra.mxu0 %v200
  %425 = vmatprep.subr.bf16.mxu0 %v212
  %426 = vmatpush1.bf16.msra.mxu0 %v211
  %427 = vmatprep.subr.bf16.mxu0 %v287
  %428 = vmatpush1.bf16.msra.mxu0 %v284
  %429 = vmatprep.subr.bf16.mxu0 0
  %430 = vmatpush1.bf16.msra.mxu0 0
  %431 = vmatprep.subr.bf16.mxu0 0
  %432 = vmatpush1.bf16.msra.mxu0 0
  %433 = vmatprep.subr.bf16.mxu0 0
  %434 = vmatpush1.bf16.msra.mxu0 0
  %435 = vmatprep.subr.bf16.mxu0 0
  %436 = vmatpush1.bf16.msra.mxu0 0
  %437 = vmatprep.subr.bf16.mxu0 0
  %438 = vmatpush1.bf16.msra.mxu0 0
  %439 = vmatprep.subr.bf16.mxu0 0
  %440 = vmatpush1.bf16.msra.mxu0 0
  %441 = vmatprep.subr.bf16.mxu0 0
  %442 = vmatpush1.bf16.msra.mxu0 0
  %443 = vmatprep.subr.bf16.mxu0 0
  %444 = vmatpush1.bf16.msra.mxu0 0
  %445 = vmatprep.subr.bf16.mxu0 0
  %446 = vmatpush1.bf16.msra.mxu0 0
  %447 = vmatprep.subr.bf16.mxu0 0
  %448 = vmatpush1.bf16.msra.mxu0 0
  %449 = vmatprep.subr.bf16.mxu0 0
  %450 = vmatpush1.bf16.msra.mxu0 0
  %451 = vmatprep.subr.bf16.mxu0 0
  %452 = vmatpush1.bf16.msra.mxu0 0
  %453 = vmatprep.mubr.bf16.mxu0 0
  %454 = vmatmul.mubr.bf16.gmra.mrb[0].mxu0 %v262
  %v455 = vpop.f32.mrb[0].mxu0
  %v456 = vadd.f32 %v62, %v455
  %v457 = vpop.f32.mrb[0].mxu0
  %v458 = vadd.f32 %v62, %v457
  %v459 = vpop.f32.mrb[0].mxu0
  %v460 = vpop.f32.mrb[0].mxu0
  %461 = vdwg.mxu0
  %462 = vmatprep.subr.bf16.mxu0 %v192
  %463 = vmatpush1.bf16.msra.mxu0 %v191
  %464 = vmatprep.subr.bf16.mxu0 %v203
  %465 = vmatpush1.bf16.msra.mxu0 %v202
  %466 = vmatprep.subr.bf16.mxu0 %v214
  %467 = vmatpush1.bf16.msra.mxu0 %v213
  %468 = vmatprep.subr.bf16.mxu0 %v293
  %469 = vmatpush1.bf16.msra.mxu0 %v290
  %470 = vmatprep.subr.bf16.mxu0 0
  %471 = vmatpush1.bf16.msra.mxu0 0
  %472 = vmatprep.subr.bf16.mxu0 0
  %473 = vmatpush1.bf16.msra.mxu0 0
  %474 = vmatprep.subr.bf16.mxu0 0
  %475 = vmatpush1.bf16.msra.mxu0 0
  %476 = vmatprep.subr.bf16.mxu0 0
  %477 = vmatpush1.bf16.msra.mxu0 0
  %478 = vmatprep.subr.bf16.mxu0 0
  %479 = vmatpush1.bf16.msra.mxu0 0
  %480 = vmatprep.subr.bf16.mxu0 0
  %481 = vmatpush1.bf16.msra.mxu0 0
  %482 = vmatprep.subr.bf16.mxu0 0
  %483 = vmatpush1.bf16.msra.mxu0 0
  %484 = vmatprep.subr.bf16.mxu0 0
  %485 = vmatpush1.bf16.msra.mxu0 0
  %486 = vmatprep.subr.bf16.mxu0 0
  %487 = vmatpush1.bf16.msra.mxu0 0
  %488 = vmatprep.subr.bf16.mxu0 0
  %489 = vmatpush1.bf16.msra.mxu0 0
  %490 = vmatprep.subr.bf16.mxu0 0
  %491 = vmatpush1.bf16.msra.mxu0 0
  %492 = vmatprep.subr.bf16.mxu0 0
  %493 = vmatpush1.bf16.msra.mxu0 0
  %494 = vmatprep.mubr.bf16.mxu0 0
  %495 = vmatmul.mubr.bf16.gmra.mrb[0].mxu0 %v262
  %v496 = vpop.f32.mrb[0].mxu0
  %v497 = vadd.f32 %v62, %v496
  %v498 = vpop.f32.mrb[0].mxu0
  %v499 = vadd.f32 %v62, %v498
  %v500 = vpop.f32.mrb[0].mxu0
  %v501 = vpop.f32.mrb[0].mxu0
  %502 = vdwg.mxu0
  %503 = vmatprep.subr.bf16.mxu0 0
  %504 = vmatpush1.bf16.msra.mxu0 %v193
  %505 = vmatprep.subr.bf16.mxu0 0
  %506 = vmatpush1.bf16.msra.mxu0 %v204
  %507 = vmatprep.subr.bf16.mxu0 0
  %508 = vmatpush1.bf16.msra.mxu0 %v215
  %509 = vmatprep.subr.bf16.mxu0 0
  %510 = vmatpush1.bf16.msra.mxu0 %v296
  %511 = vmatprep.subr.bf16.mxu0 0
  %512 = vmatpush1.bf16.msra.mxu0 0
  %513 = vmatprep.subr.bf16.mxu0 0
  %514 = vmatpush1.bf16.msra.mxu0 0
  %515 = vmatprep.subr.bf16.mxu0 0
  %516 = vmatpush1.bf16.msra.mxu0 0
  %517 = vmatprep.subr.bf16.mxu0 0
  %518 = vmatpush1.bf16.msra.mxu0 0
  %519 = vmatprep.subr.bf16.mxu0 0
  %520 = vmatpush1.bf16.msra.mxu0 0
  %521 = vmatprep.subr.bf16.mxu0 0
  %522 = vmatpush1.bf16.msra.mxu0 0
  %523 = vmatprep.subr.bf16.mxu0 0
  %524 = vmatpush1.bf16.msra.mxu0 0
  %525 = vmatprep.subr.bf16.mxu0 0
  %526 = vmatpush1.bf16.msra.mxu0 0
  %527 = vmatprep.subr.bf16.mxu0 0
  %528 = vmatpush1.bf16.msra.mxu0 0
  %529 = vmatprep.subr.bf16.mxu0 0
  %530 = vmatpush1.bf16.msra.mxu0 0
  %531 = vmatprep.subr.bf16.mxu0 0
  %532 = vmatpush1.bf16.msra.mxu0 0
  %533 = vmatprep.subr.bf16.mxu0 0
  %534 = vmatpush1.bf16.msra.mxu0 0
  %535 = vmatprep.mubr.bf16.mxu0 0
  %536 = vmatmul.mubr.bf16.gmra.mrb[0].mxu0 %v262
  %v537 = vpop.f32.mrb[0].mxu0
  %v538 = vadd.f32 %v62, %v537
  %v539 = vpop.f32.mrb[0].mxu0
  %v540 = vpop.f32.mrb[0].mxu0
  %v541 = vpop.f32.mrb[0].mxu0
  %542 = vdwg.mxu0
  %vm543 = vcmp.ge.f32.partialorder %v333, 0.0
  %vm544 = vcmp.ge.f32.partialorder %v335, 0.0
  %vm545 = vcmp.ge.f32.partialorder %v374, 0.0
  %vm546 = vcmp.ge.f32.partialorder %v376, 0.0
  %vm547 = vcmp.ge.f32.partialorder %v415, 0.0
  %vm548 = vcmp.ge.f32.partialorder %v417, 0.0
  %vm549 = vcmp.ge.f32.partialorder %v456, 0.0
  %vm550 = vcmp.ge.f32.partialorder %v458, 0.0
  %vm551 = vcmp.ge.f32.partialorder %v497, 0.0
  %vm552 = vcmp.ge.f32.partialorder %v499, 0.0
  %vm553 = vcmp.ge.f32.partialorder %v538, 0.0
  %v554 = vmul.f32 %v333, 0.2
  %v555 = vmul.f32 %v335, 0.2
  %v556 = vmul.f32 %v374, 0.2
  %v557 = vmul.f32 %v376, 0.2
  %v558 = vmul.f32 %v415, 0.2
  %v559 = vmul.f32 %v417, 0.2
  %v560 = vmul.f32 %v456, 0.2
  %v561 = vmul.f32 %v458, 0.2
  %v562 = vmul.f32 %v497, 0.2
  %v563 = vmul.f32 %v499, 0.2
  %v564 = vmul.f32 %v538, 0.2
  %v565 = vsel %vm543, %v333, %v554
  %v566 = vsel %vm544, %v335, %v555
  %v567 = vsel %vm545, %v374, %v556
  %v568 = vsel %vm546, %v376, %v557
  %v569 = vsel %vm547, %v415, %v558
  %v570 = vsel %vm548, %v417, %v559
  %v571 = vsel %vm549, %v456, %v560
  %v572 = vsel %vm550, %v458, %v561
  %v573 = vsel %vm551, %v497, %v562
  %v574 = vsel %vm552, %v499, %v563
  %v575 = vsel %vm553, %v538, %v564
  %v576 = vpack.c.bf16 %v565, %v565
  %v577 = vpack.c.bf16 %v566, %v566
  %v578 = vpack.c.bf16 %v567, %v567
  %v579 = vpack.c.bf16 %v568, %v568
  %v580 = vpack.c.bf16 %v569, %v569
  %v581 = vpack.c.bf16 %v570, %v570
  %v582 = vpack.c.bf16 %v571, %v571
  %v583 = vpack.c.bf16 %v572, %v572
  %v584 = vpack.c.bf16 %v573, %v573
  %v585 = vpack.c.bf16 %v574, %v574
  %v586 = vpack.c.bf16 %v575, %v575
  %v598 = vunpack.c.l.b16 %v576
  %v599 = vunpack.c.l.b16 %v577
  %v600 = vunpack.c.l.b16 %v578
  %v601 = vunpack.c.l.b16 %v579
  %v602 = vunpack.c.l.b16 %v580
  %v603 = vunpack.c.l.b16 %v581
  %v604 = vunpack.c.l.b16 %v582
  %v605 = vunpack.c.l.b16 %v583
  %v606 = vunpack.c.l.b16 %v584
  %v607 = vunpack.c.l.b16 %v585
  %v608 = vunpack.c.l.b16 %v586
  %v609 = vpack.c.b16 %v599, %v598
  %v610 = vpack.c.b16 %v601, %v600
  %v611 = vpack.c.b16 %v603, %v602
  %v612 = vpack.c.b16 %v605, %v604
  %v613 = vpack.c.b16 %v607, %v606
  %v614 = vpack.c.b16 %v608, %v608
  %621 = vst [vmem:[%s3] sm:$0xff] %v609
  %622 = vst [vmem:[%s3 + $0x8] sm:$0xff] %v610
  %623 = vst [vmem:[%s3 + $0x10] sm:$0xff] %v611
  %624 = vst [vmem:[%s3 + $0x18] sm:$0xff] %v612
  %625 = vst [vmem:[%s3 + $0x20] sm:$0xff] %v613
  %vm626 = vcmask 158720
  %627 = vst.msk [vmem:[%s3 + $0x28] sm:$0xf] %vm626, %v614
  // Predicated region
  $region14: #{ms_stft_discriminator_forward.29} parent=0 // pred_check
    _
  $region15: #{ms_stft_discriminator_forward.29} parent=0 // pred_check_branch
    %629 = sbr.rel (0) target = $region17
  $region16: #{ms_stft_discriminator_forward.29} parent=0 // pred_region
    _
  $region17: #{ms_stft_discriminator_forward.29} parent=0 // pred_fallthru
    _
  // Predicated region
  $region18: #{ms_stft_discriminator_forward.29} parent=0 // pred_check
    _
  $region19: #{ms_stft_discriminator_forward.29} parent=0 // pred_check_branch
    %631 = sbr.rel (0) target = $region21
  $region20: #{ms_stft_discriminator_forward.29} parent=0 // pred_region
    _
  $region21: #{ms_stft_discriminator_forward.29} parent=0 // pred_fallthru
    _

// kernel: ms_stft_discriminator_forward.30
$region0: #{ms_stft_discriminator_forward.30}
  #allocation0 [shape = 'u32[]', space=smem, size = 0x4, offset = 0x4, fixed_abs, tag = 'smem constant byte address 0x4 - core index']
  #allocation1 [shape = 'u32[144,128]{1,0:T(1,128)}', space=vmem, size = 0x12000, scoped, tag = 'internal scratch']
  %s0 = inlined_call_operand.vmem [shape: bf16[8,216], index: 0, kind: input, shape index: {}]
  %s1 = inlined_call_operand.vmem [shape: bf16[216,660], index: 1, kind: input, shape index: {}]
  %s2 = inlined_call_operand.vmem [shape: f32[8,1], index: 2, kind: input, shape index: {}]
  %s3 = inlined_call_operand.vmem [shape: bf16[8,660], index: 3, kind: output, shape index: {}]
  %s4 = sld [smem:[#allocation0]]
  $region22: #{ms_stft_discriminator_forward.30} parent=0
    _
  %s6 = ssub.s32 1, %s4
  %s7 = scalar_select 0, %s6, %s4
  // Predicated region
  $region2: #{ms_stft_discriminator_forward.30} parent=0 // pred_check
    _
  $region3: #{ms_stft_discriminator_forward.30} parent=0 // pred_check_branch
    %9 = sbr.rel (0) target = $region5
  $region4: #{ms_stft_discriminator_forward.30} parent=0 // pred_region
    _
  $region5: #{ms_stft_discriminator_forward.30} parent=0 // pred_fallthru
    _
  // Predicated region
  $region6: #{ms_stft_discriminator_forward.30} parent=0 // pred_check
    _
  $region7: #{ms_stft_discriminator_forward.30} parent=0 // pred_check_branch
    %11 = sbr.rel (0) target = $region9
  $region8: #{ms_stft_discriminator_forward.30} parent=0 // pred_region
    _
  $region9: #{ms_stft_discriminator_forward.30} parent=0 // pred_fallthru
    _
  // Predicated region
  $region10: #{ms_stft_discriminator_forward.30} parent=0 // pred_check
    _
  $region11: #{ms_stft_discriminator_forward.30} parent=0 // pred_check_branch
    %13 = sbr.rel (0) target = $region13
  $region12: #{ms_stft_discriminator_forward.30} parent=0 // pred_region
    _
  $region13: #{ms_stft_discriminator_forward.30} parent=0 // pred_fallthru
    _
  %v15 = vld [vmem:[%s0] sm:$0xff]
  %v16 = vld [vmem:[%s1] sm:$0xff]
  %v17 = vld [vmem:[%s1 + $0x8] sm:$0xff]
  %v18 = vld [vmem:[%s1 + $0x10] sm:$0xff]
  %v19 = vld [vmem:[%s1 + $0x18] sm:$0xff]
  %v20 = vld [vmem:[%s1 + $0x20] sm:$0xff]
  %v21 = vld [vmem:[%s1 + $0x28] sm:$0xff]
  %v22 = vld [vmem:[%s1 + $0x30] sm:$0xff]
  %v23 = vld [vmem:[%s1 + $0x38] sm:$0xff]
  %v24 = vld [vmem:[%s1 + $0x40] sm:$0xff]
  %v25 = vld [vmem:[%s1 + $0x48] sm:$0xff]
  %v26 = vld [vmem:[%s1 + $0x50] sm:$0xff]
  %v27 = vld [vmem:[%s1 + $0x58] sm:$0xff]
  %v28 = vld [vmem:[%s1 + $0x60] sm:$0xff]
  %v29 = vld [vmem:[%s1 + $0x68] sm:$0xff]
  %v30 = vld [vmem:[%s1 + $0x70] sm:$0xff]
  %v31 = vld [vmem:[%s1 + $0x78] sm:$0xff]
  %v32 = vld [vmem:[%s1 + $0x80] sm:$0xff]
  %v33 = vld [vmem:[%s1 + $0x88] sm:$0xff]
  %v34 = vld [vmem:[%s1 + $0x90] sm:$0xff]
  %v35 = vld [vmem:[%s1 + $0x98] sm:$0xff]
  %v36 = vld [vmem:[%s1 + $0xa0] sm:$0xff]
  %v37 = vld [vmem:[%s1 + $0xa8] sm:$0xff]
  %v38 = vld [vmem:[%s1 + $0xb0] sm:$0xff]
  %v39 = vld [vmem:[%s1 + $0xb8] sm:$0xff]
  %v40 = vld [vmem:[%s1 + $0xc0] sm:$0xff]
  %v41 = vld [vmem:[%s1 + $0xc8] sm:$0xff]
  %v42 = vld [vmem:[%s1 + $0xd0] sm:$0xff]
  %v43 = vld [vmem:[%s1 + $0xd8] sm:$0xff]
  %v44 = vld [vmem:[%s1 + $0xe0] sm:$0xff]
  %v45 = vld [vmem:[%s1 + $0xe8] sm:$0xff]
  %v46 = vld [vmem:[%s1 + $0xf0] sm:$0xff]
  %v47 = vld [vmem:[%s1 + $0xf8] sm:$0xff]
  %v48 = vld [vmem:[%s1 + $0x100] sm:$0xff]
  %v49 = vld [vmem:[%s1 + $0x108] sm:$0xff]
  %v50 = vld [vmem:[%s1 + $0x110] sm:$0xff]
  %v51 = vld [vmem:[%s1 + $0x118] sm:$0xff]
  %v52 = vld [vmem:[%s1 + $0x120] sm:$0xff]
  %v53 = vld [vmem:[%s1 + $0x128] sm:$0xff]
  %v54 = vld [vmem:[%s1 + $0x130] sm:$0xff]
  %v55 = vld [vmem:[%s1 + $0x138] sm:$0xff]
  %v56 = vld [vmem:[%s1 + $0x140] sm:$0xff]
  %v57 = vld [vmem:[%s1 + $0x148] sm:$0xff]
  %v58 = vld [vmem:[%s1 + $0x150] sm:$0xff]
  %v59 = vld [vmem:[%s1 + $0x158] sm:$0xff]
  %v60 = vld [vmem:[%s1 + $0x160] sm:$0xff]
  %v61 = vld [vmem:[%s1 + $0x168] sm:$0xff]
  %v62 = vld [vmem:[%s1 + $0x170] sm:$0xff]
  %v63 = vld [vmem:[%s1 + $0x178] sm:$0xff]
  %v64 = vld [vmem:[%s1 + $0x180] sm:$0xff]
  %v65 = vld [vmem:[%s1 + $0x188] sm:$0xff]
  %v66 = vld [vmem:[%s1 + $0x190] sm:$0xff]
  %v67 = vld [vmem:[%s1 + $0x198] sm:$0xff]
  %v68 = vld [vmem:[%s1 + $0x1a0] sm:$0xff]
  %v69 = vld [vmem:[%s1 + $0x1a8] sm:$0xff]
  %v70 = vld [vmem:[%s1 + $0x1b0] sm:$0xff]
  %v71 = vld [vmem:[%s1 + $0x1b8] sm:$0xff]
  %v72 = vld [vmem:[%s1 + $0x1c0] sm:$0xff]
  %v73 = vld [vmem:[%s1 + $0x1c8] sm:$0xff]
  %v74 = vld [vmem:[%s1 + $0x1d0] sm:$0xff]
  %v75 = vld [vmem:[%s1 + $0x1d8] sm:$0xff]
  %v76 = vld [vmem:[%s1 + $0x1e0] sm:$0xff]
  %v77 = vld [vmem:[%s1 + $0x1e8] sm:$0xff]
  %v78 = vld [vmem:[%s1 + $0x1f0] sm:$0xff]
  %v79 = vld [vmem:[%s1 + $0x1f8] sm:$0xff]
  %v80 = vld [vmem:[%s1 + $0x200] sm:$0xff]
  %v81 = vld [vmem:[%s1 + $0x208] sm:$0xff]
  %v82 = vld [vmem:[%s1 + $0x210] sm:$0xff]
  %v83 = vld [vmem:[%s1 + $0x218] sm:$0xff]
  %v84 = vld [vmem:[%s1 + $0x220] sm:$0xff]
  %v85 = vld [vmem:[%s1 + $0x228] sm:$0xff]
  %v86 = vld [vmem:[%s1 + $0x230] sm:$0xff]
  %v87 = vld [vmem:[%s1 + $0x238] sm:$0xff]
  %v88 = vld [vmem:[%s1 + $0x240] sm:$0xff]
  %v89 = vld [vmem:[%s1 + $0x248] sm:$0xff]
  %v90 = vld [vmem:[%s1 + $0x250] sm:$0xff]
  %v91 = vld [vmem:[%s1 + $0x258] sm:$0xff]
  %v92 = vld [vmem:[%s1 + $0x260] sm:$0xff]
  %v93 = vld [vmem:[%s1 + $0x268] sm:$0xff]
  %v94 = vld [vmem:[%s1 + $0x270] sm:$0xff]
  %v95 = vld [vmem:[%s1 + $0x278] sm:$0xff]
  %v96 = vld [vmem:[%s1 + $0x280] sm:$0xff]
  %v97 = vld [vmem:[%s2] sm:$0xff]
  %99 = vset.pattern.permute.xlu0 0
  %100 = vperm.xlu0 %99, %v97
  %v101 = vpop.permute.xlu0 %100
  %v104 = vunpack.c.l.b16 %v15
  %v105 = vunpack.c.h.b16 %v15
  %v106 = vpack.c.b16 %v104, %v104
  %v107 = vpack.c.b16 %v105, %v105
  %v190 = vunpack.c.l.b16 %v16
  %v191 = vunpack.c.h.b16 %v16
  %v192 = vunpack.c.l.b16 %v17
  %v193 = vunpack.c.h.b16 %v17
  %v194 = vunpack.c.l.b16 %v18
  %v195 = vunpack.c.h.b16 %v18
  %v196 = vunpack.c.l.b16 %v19
  %v197 = vunpack.c.h.b16 %v19
  %v198 = vunpack.c.l.b16 %v20
  %v199 = vunpack.c.h.b16 %v20
  %v200 = vunpack.c.l.b16 %v21
  %v201 = vunpack.c.h.b16 %v21
  %v202 = vunpack.c.l.b16 %v22
  %v203 = vunpack.c.h.b16 %v22
  %v204 = vunpack.c.l.b16 %v23
  %v205 = vunpack.c.h.b16 %v23
  %v206 = vunpack.c.l.b16 %v24
  %v207 = vunpack.c.h.b16 %v24
  %v208 = vunpack.c.l.b16 %v25
  %v209 = vunpack.c.h.b16 %v25
  %v210 = vunpack.c.l.b16 %v26
  %v211 = vunpack.c.h.b16 %v26
  %v212 = vunpack.c.l.b16 %v27
  %v213 = vunpack.c.h.b16 %v27
  %v214 = vunpack.c.l.b16 %v28
  %v215 = vunpack.c.h.b16 %v28
  %v216 = vunpack.c.l.b16 %v29
  %v217 = vunpack.c.h.b16 %v29
  %v218 = vunpack.c.l.b16 %v30
  %v219 = vunpack.c.h.b16 %v30
  %v220 = vunpack.c.l.b16 %v31
  %v221 = vunpack.c.h.b16 %v31
  %v222 = vunpack.c.l.b16 %v32
  %v223 = vunpack.c.h.b16 %v32
  %v224 = vunpack.c.l.b16 %v33
  %v225 = vunpack.c.h.b16 %v33
  %v226 = vunpack.c.l.b16 %v34
  %v227 = vunpack.c.h.b16 %v34
  %v228 = vunpack.c.l.b16 %v35
  %v229 = vunpack.c.h.b16 %v35
  %v230 = vunpack.c.l.b16 %v36
  %v231 = vunpack.c.h.b16 %v36
  %v232 = vunpack.c.l.b16 %v37
  %v233 = vunpack.c.h.b16 %v37
  %v234 = vunpack.c.l.b16 %v38
  %v235 = vunpack.c.h.b16 %v38
  %v236 = vunpack.c.l.b16 %v39
  %v237 = vunpack.c.h.b16 %v39
  %v238 = vunpack.c.l.b16 %v40
  %v239 = vunpack.c.h.b16 %v40
  %v240 = vunpack.c.l.b16 %v41
  %v241 = vunpack.c.h.b16 %v41
  %v242 = vunpack.c.l.b16 %v42
  %v243 = vunpack.c.h.b16 %v42
  %v244 = vunpack.c.l.b16 %v43
  %v245 = vunpack.c.h.b16 %v43
  %v246 = vunpack.c.l.b16 %v44
  %v247 = vunpack.c.h.b16 %v44
  %v248 = vunpack.c.l.b16 %v45
  %v249 = vunpack.c.h.b16 %v45
  %v250 = vunpack.c.l.b16 %v46
  %v251 = vunpack.c.h.b16 %v46
  %v252 = vunpack.c.l.b16 %v47
  %v253 = vunpack.c.h.b16 %v47
  %v254 = vunpack.c.l.b16 %v48
  %v255 = vunpack.c.h.b16 %v48
  %v256 = vunpack.c.l.b16 %v49
  %v257 = vunpack.c.h.b16 %v49
  %v258 = vunpack.c.l.b16 %v50
  %v259 = vunpack.c.h.b16 %v50
  %v260 = vunpack.c.l.b16 %v51
  %v261 = vunpack.c.h.b16 %v51
  %v262 = vunpack.c.l.b16 %v52
  %v263 = vunpack.c.h.b16 %v52
  %v264 = vunpack.c.l.b16 %v53
  %v265 = vunpack.c.h.b16 %v53
  %v266 = vunpack.c.l.b16 %v54
  %v267 = vunpack.c.h.b16 %v54
  %v268 = vunpack.c.l.b16 %v55
  %v269 = vunpack.c.h.b16 %v55
  %v270 = vunpack.c.l.b16 %v56
  %v271 = vunpack.c.h.b16 %v56
  %v272 = vunpack.c.l.b16 %v57
  %v273 = vunpack.c.h.b16 %v57
  %v274 = vunpack.c.l.b16 %v58
  %v275 = vunpack.c.h.b16 %v58
  %v276 = vunpack.c.l.b16 %v59
  %v277 = vunpack.c.h.b16 %v59
  %v278 = vunpack.c.l.b16 %v60
  %v279 = vunpack.c.h.b16 %v60
  %v280 = vunpack.c.l.b16 %v61
  %v281 = vunpack.c.h.b16 %v61
  %v282 = vunpack.c.l.b16 %v62
  %v283 = vunpack.c.h.b16 %v62
  %v284 = vunpack.c.l.b16 %v63
  %v285 = vunpack.c.h.b16 %v63
  %v286 = vunpack.c.l.b16 %v64
  %v287 = vunpack.c.h.b16 %v64
  %v288 = vunpack.c.l.b16 %v65
  %v289 = vunpack.c.h.b16 %v65
  %v290 = vunpack.c.l.b16 %v66
  %v291 = vunpack.c.h.b16 %v66
  %v292 = vunpack.c.l.b16 %v67
  %v293 = vunpack.c.h.b16 %v67
  %v294 = vunpack.c.l.b16 %v68
  %v295 = vunpack.c.h.b16 %v68
  %v296 = vunpack.c.l.b16 %v69
  %v297 = vunpack.c.h.b16 %v69
  %v298 = vunpack.c.l.b16 %v70
  %v299 = vunpack.c.h.b16 %v70
  %v300 = vunpack.c.l.b16 %v71
  %v301 = vunpack.c.h.b16 %v71
  %v302 = vunpack.c.l.b16 %v72
  %v303 = vunpack.c.h.b16 %v72
  %v304 = vunpack.c.l.b16 %v73
  %v305 = vunpack.c.h.b16 %v73
  %v306 = vunpack.c.l.b16 %v74
  %v307 = vunpack.c.h.b16 %v74
  %v308 = vunpack.c.l.b16 %v75
  %v309 = vunpack.c.h.b16 %v75
  %v310 = vunpack.c.l.b16 %v76
  %v311 = vunpack.c.h.b16 %v76
  %v312 = vunpack.c.l.b16 %v77
  %v313 = vunpack.c.h.b16 %v77
  %v314 = vunpack.c.l.b16 %v78
  %v315 = vunpack.c.h.b16 %v78
  %v316 = vunpack.c.l.b16 %v79
  %v317 = vunpack.c.h.b16 %v79
  %v318 = vunpack.c.l.b16 %v80
  %v319 = vunpack.c.h.b16 %v80
  %v320 = vunpack.c.l.b16 %v81
  %v321 = vunpack.c.h.b16 %v81
  %v322 = vunpack.c.l.b16 %v82
  %v323 = vunpack.c.h.b16 %v82
  %v324 = vunpack.c.l.b16 %v83
  %v325 = vunpack.c.h.b16 %v83
  %v326 = vunpack.c.l.b16 %v84
  %v327 = vunpack.c.h.b16 %v84
  %v328 = vunpack.c.l.b16 %v85
  %v329 = vunpack.c.h.b16 %v85
  %v330 = vunpack.c.l.b16 %v86
  %v331 = vunpack.c.h.b16 %v86
  %v332 = vunpack.c.l.b16 %v87
  %v333 = vunpack.c.h.b16 %v87
  %v334 = vunpack.c.l.b16 %v88
  %v335 = vunpack.c.h.b16 %v88
  %v336 = vunpack.c.l.b16 %v89
  %v337 = vunpack.c.h.b16 %v89
  %v338 = vunpack.c.l.b16 %v90
  %v339 = vunpack.c.h.b16 %v90
  %v340 = vunpack.c.l.b16 %v91
  %v341 = vunpack.c.h.b16 %v91
  %v342 = vunpack.c.l.b16 %v92
  %v343 = vunpack.c.h.b16 %v92
  %v344 = vunpack.c.l.b16 %v93
  %v345 = vunpack.c.h.b16 %v93
  %v346 = vunpack.c.l.b16 %v94
  %v347 = vunpack.c.h.b16 %v94
  %v348 = vunpack.c.l.b16 %v95
  %v349 = vunpack.c.h.b16 %v95
  %v350 = vunpack.c.l.b16 %v96
  %v351 = vunpack.c.h.b16 %v96
  %v352 = vpack.c.b16 %v196, %v190
  %v353 = vpack.c.b16 %v197, %v191
  %v354 = vpack.c.b16 %v198, %v192
  %v355 = vpack.c.b16 %v199, %v193
  %v356 = vpack.c.b16 %v200, %v194
  %v357 = vpack.c.b16 %v201, %v195
  %v358 = vpack.c.b16 %v208, %v202
  %v359 = vpack.c.b16 %v209, %v203
  %v360 = vpack.c.b16 %v210, %v204
  %v361 = vpack.c.b16 %v211, %v205
  %v362 = vpack.c.b16 %v212, %v206
  %v363 = vpack.c.b16 %v213, %v207
  %v364 = vpack.c.b16 %v220, %v214
  %v365 = vpack.c.b16 %v221, %v215
  %v366 = vpack.c.b16 %v222, %v216
  %v367 = vpack.c.b16 %v223, %v217
  %v368 = vpack.c.b16 %v224, %v218
  %v369 = vpack.c.b16 %v225, %v219
  %v370 = vpack.c.b16 %v232, %v226
  %v371 = vpack.c.b16 %v233, %v227
  %v372 = vpack.c.b16 %v234, %v228
  %v373 = vpack.c.b16 %v235, %v229
  %v374 = vpack.c.b16 %v236, %v230
  %v375 = vpack.c.b16 %v237, %v231
  %v376 = vpack.c.b16 %v244, %v238
  %v377 = vpack.c.b16 %v245, %v239
  %v378 = vpack.c.b16 %v246, %v240
  %v379 = vpack.c.b16 %v247, %v241
  %v380 = vpack.c.b16 %v248, %v242
  %v381 = vpack.c.b16 %v249, %v243
  %v382 = vpack.c.b16 %v256, %v250
  %v383 = vpack.c.b16 %v257, %v251
  %v384 = vpack.c.b16 %v258, %v252
  %v385 = vpack.c.b16 %v259, %v253
  %v386 = vpack.c.b16 %v260, %v254
  %v387 = vpack.c.b16 %v261, %v255
  %v388 = vpack.c.b16 %v268, %v262
  %v389 = vpack.c.b16 %v269, %v263
  %v390 = vpack.c.b16 %v270, %v264
  %v391 = vpack.c.b16 %v271, %v265
  %v392 = vpack.c.b16 %v272, %v266
  %v393 = vpack.c.b16 %v273, %v267
  %v394 = vpack.c.b16 %v280, %v274
  %v395 = vpack.c.b16 %v281, %v275
  %v396 = vpack.c.b16 %v282, %v276
  %v397 = vpack.c.b16 %v283, %v277
  %v398 = vpack.c.b16 %v284, %v278
  %v399 = vpack.c.b16 %v285, %v279
  %v400 = vpack.c.b16 %v292, %v286
  %v401 = vpack.c.b16 %v293, %v287
  %v402 = vpack.c.b16 %v294, %v288
  %v403 = vpack.c.b16 %v295, %v289
  %v404 = vpack.c.b16 %v296, %v290
  %v405 = vpack.c.b16 %v297, %v291
  %v406 = vpack.c.b16 %v304, %v298
  %v407 = vpack.c.b16 %v305, %v299
  %v408 = vpack.c.b16 %v306, %v300
  %v409 = vpack.c.b16 %v307, %v301
  %v410 = vpack.c.b16 %v308, %v302
  %v411 = vpack.c.b16 %v309, %v303
  %v412 = vpack.c.b16 %v316, %v310
  %v413 = vpack.c.b16 %v317, %v311
  %v414 = vpack.c.b16 %v318, %v312
  %v415 = vpack.c.b16 %v319, %v313
  %v416 = vpack.c.b16 %v320, %v314
  %v417 = vpack.c.b16 %v321, %v315
  %v418 = vpack.c.b16 %v328, %v322
  %v419 = vpack.c.b16 %v329, %v323
  %v420 = vpack.c.b16 %v330, %v324
  %v421 = vpack.c.b16 %v331, %v325
  %v422 = vpack.c.b16 %v332, %v326
  %v423 = vpack.c.b16 %v333, %v327
  %v424 = vpack.c.b16 %v340, %v334
  %v425 = vpack.c.b16 %v341, %v335
  %v426 = vpack.c.b16 %v342, %v336
  %v427 = vpack.c.b16 %v343, %v337
  %v428 = vpack.c.b16 %v344, %v338
  %v429 = vpack.c.b16 %v345, %v339
  %v430 = vpack.c.b16 %v346, %v346
  %v431 = vpack.c.b16 %v347, %v347
  %v432 = vpack.c.b16 %v348, %v348
  %v433 = vpack.c.b16 %v349, %v349
  %v434 = vpack.c.b16 %v350, %v350
  %v435 = vpack.c.b16 %v351, %v351
  %vm514 = vcmask 719872
  %v516 = vsel %vm514, %v107, 0
  %vm518 = vcmask 1043456
  %v520 = vsel %vm518, %v430, 0
  %v523 = vsel %vm518, %v431, 0
  %v526 = vsel %vm518, %v432, 0
  %v529 = vsel %vm518, %v433, 0
  %v532 = vsel %vm518, %v434, 0
  %v535 = vsel %vm518, %v435, 0
  %537 = vmatprep.subr.bf16.mxu0 %v353
  %538 = vmatpush1.bf16.msra.mxu0 %v352
  %539 = vmatprep.subr.bf16.mxu0 %v359
  %540 = vmatpush1.bf16.msra.mxu0 %v358
  %541 = vmatprep.subr.bf16.mxu0 %v365
  %542 = vmatpush1.bf16.msra.mxu0 %v364
  %543 = vmatprep.subr.bf16.mxu0 %v371
  %544 = vmatpush1.bf16.msra.mxu0 %v370
  %545 = vmatprep.subr.bf16.mxu0 %v377
  %546 = vmatpush1.bf16.msra.mxu0 %v376
  %547 = vmatprep.subr.bf16.mxu0 %v383
  %548 = vmatpush1.bf16.msra.mxu0 %v382
  %549 = vmatprep.subr.bf16.mxu0 %v389
  %550 = vmatpush1.bf16.msra.mxu0 %v388
  %551 = vmatprep.subr.bf16.mxu0 %v395
  %552 = vmatpush1.bf16.msra.mxu0 %v394
  %553 = vmatprep.subr.bf16.mxu0 %v401
  %554 = vmatpush1.bf16.msra.mxu0 %v400
  %555 = vmatprep.subr.bf16.mxu0 %v407
  %556 = vmatpush1.bf16.msra.mxu0 %v406
  %557 = vmatprep.subr.bf16.mxu0 %v413
  %558 = vmatpush1.bf16.msra.mxu0 %v412
  %559 = vmatprep.subr.bf16.mxu0 %v419
  %560 = vmatpush1.bf16.msra.mxu0 %v418
  %561 = vmatprep.subr.bf16.mxu0 %v425
  %562 = vmatpush1.bf16.msra.mxu0 %v424
  %563 = vmatprep.subr.bf16.mxu0 %v523
  %564 = vmatpush1.bf16.msra.mxu0 %v520
  %565 = vmatprep.subr.bf16.mxu0 0
  %566 = vmatpush1.bf16.msra.mxu0 0
  %567 = vmatprep.subr.bf16.mxu0 0
  %568 = vmatpush1.bf16.msra.mxu0 0
  %569 = vmatprep.mubr.bf16.mxu0 %v516
  %570 = vmatmul.mubr.bf16.gmra.mrb[0].mxu0 %v106
  %v571 = vpop.f32.mrb[0].mxu0
  %v572 = vadd.f32 %v101, %v571
  %v573 = vpop.f32.mrb[0].mxu0
  %v574 = vadd.f32 %v101, %v573
  %v575 = vpop.f32.mrb[0].mxu0
  %v576 = vpop.f32.mrb[0].mxu0
  %577 = vdwg.mxu0
  %578 = vmatprep.subr.bf16.mxu0 %v355
  %579 = vmatpush1.bf16.msra.mxu0 %v354
  %580 = vmatprep.subr.bf16.mxu0 %v361
  %581 = vmatpush1.bf16.msra.mxu0 %v360
  %582 = vmatprep.subr.bf16.mxu0 %v367
  %583 = vmatpush1.bf16.msra.mxu0 %v366
  %584 = vmatprep.subr.bf16.mxu0 %v373
  %585 = vmatpush1.bf16.msra.mxu0 %v372
  %586 = vmatprep.subr.bf16.mxu0 %v379
  %587 = vmatpush1.bf16.msra.mxu0 %v378
  %588 = vmatprep.subr.bf16.mxu0 %v385
  %589 = vmatpush1.bf16.msra.mxu0 %v384
  %590 = vmatprep.subr.bf16.mxu0 %v391
  %591 = vmatpush1.bf16.msra.mxu0 %v390
  %592 = vmatprep.subr.bf16.mxu0 %v397
  %593 = vmatpush1.bf16.msra.mxu0 %v396
  %594 = vmatprep.subr.bf16.mxu0 %v403
  %595 = vmatpush1.bf16.msra.mxu0 %v402
  %596 = vmatprep.subr.bf16.mxu0 %v409
  %597 = vmatpush1.bf16.msra.mxu0 %v408
  %598 = vmatprep.subr.bf16.mxu0 %v415
  %599 = vmatpush1.bf16.msra.mxu0 %v414
  %600 = vmatprep.subr.bf16.mxu0 %v421
  %601 = vmatpush1.bf16.msra.mxu0 %v420
  %602 = vmatprep.subr.bf16.mxu0 %v427
  %603 = vmatpush1.bf16.msra.mxu0 %v426
  %604 = vmatprep.subr.bf16.mxu0 %v529
  %605 = vmatpush1.bf16.msra.mxu0 %v526
  %606 = vmatprep.subr.bf16.mxu0 0
  %607 = vmatpush1.bf16.msra.mxu0 0
  %608 = vmatprep.subr.bf16.mxu0 0
  %609 = vmatpush1.bf16.msra.mxu0 0
  %610 = vmatprep.mubr.bf16.mxu0 %v516
  %611 = vmatmul.mubr.bf16.gmra.mrb[0].mxu0 %v106
  %v612 = vpop.f32.mrb[0].mxu0
  %v613 = vadd.f32 %v101, %v612
  %v614 = vpop.f32.mrb[0].mxu0
  %v615 = vadd.f32 %v101, %v614
  %v616 = vpop.f32.mrb[0].mxu0
  %v617 = vpop.f32.mrb[0].mxu0
  %618 = vdwg.mxu0
  %619 = vmatprep.subr.bf16.mxu0 %v357
  %620 = vmatpush1.bf16.msra.mxu0 %v356
  %621 = vmatprep.subr.bf16.mxu0 %v363
  %622 = vmatpush1.bf16.msra.mxu0 %v362
  %623 = vmatprep.subr.bf16.mxu0 %v369
  %624 = vmatpush1.bf16.msra.mxu0 %v368
  %625 = vmatprep.subr.bf16.mxu0 %v375
  %626 = vmatpush1.bf16.msra.mxu0 %v374
  %627 = vmatprep.subr.bf16.mxu0 %v381
  %628 = vmatpush1.bf16.msra.mxu0 %v380
  %629 = vmatprep.subr.bf16.mxu0 %v387
  %630 = vmatpush1.bf16.msra.mxu0 %v386
  %631 = vmatprep.subr.bf16.mxu0 %v393
  %632 = vmatpush1.bf16.msra.mxu0 %v392
  %633 = vmatprep.subr.bf16.mxu0 %v399
  %634 = vmatpush1.bf16.msra.mxu0 %v398
  %635 = vmatprep.subr.bf16.mxu0 %v405
  %636 = vmatpush1.bf16.msra.mxu0 %v404
  %637 = vmatprep.subr.bf16.mxu0 %v411
  %638 = vmatpush1.bf16.msra.mxu0 %v410
  %639 = vmatprep.subr.bf16.mxu0 %v417
  %640 = vmatpush1.bf16.msra.mxu0 %v416
  %641 = vmatprep.subr.bf16.mxu0 %v423
  %642 = vmatpush1.bf16.msra.mxu0 %v422
  %643 = vmatprep.subr.bf16.mxu0 %v429
  %644 = vmatpush1.bf16.msra.mxu0 %v428
  %645 = vmatprep.subr.bf16.mxu0 %v535
  %646 = vmatpush1.bf16.msra.mxu0 %v532
  %647 = vmatprep.subr.bf16.mxu0 0
  %648 = vmatpush1.bf16.msra.mxu0 0
  %649 = vmatprep.subr.bf16.mxu0 0
  %650 = vmatpush1.bf16.msra.mxu0 0
  %651 = vmatprep.mubr.bf16.mxu0 %v516
  %652 = vmatmul.mubr.bf16.gmra.mrb[0].mxu0 %v106
  %v653 = vpop.f32.mrb[0].mxu0
  %v654 = vadd.f32 %v101, %v653
  %v655 = vpop.f32.mrb[0].mxu0
  %v656 = vadd.f32 %v101, %v655
  %v657 = vpop.f32.mrb[0].mxu0
  %v658 = vpop.f32.mrb[0].mxu0
  %659 = vdwg.mxu0
  %vm660 = vcmp.ge.f32.partialorder %v572, 0.0
  %vm661 = vcmp.ge.f32.partialorder %v574, 0.0
  %vm662 = vcmp.ge.f32.partialorder %v613, 0.0
  %vm663 = vcmp.ge.f32.partialorder %v615, 0.0
  %vm664 = vcmp.ge.f32.partialorder %v654, 0.0
  %vm665 = vcmp.ge.f32.partialorder %v656, 0.0
  %v666 = vmul.f32 %v572, 0.2
  %v667 = vmul.f32 %v574, 0.2
  %v668 = vmul.f32 %v613, 0.2
  %v669 = vmul.f32 %v615, 0.2
  %v670 = vmul.f32 %v654, 0.2
  %v671 = vmul.f32 %v656, 0.2
  %v672 = vsel %vm660, %v572, %v666
  %v673 = vsel %vm661, %v574, %v667
  %v674 = vsel %vm662, %v613, %v668
  %v675 = vsel %vm663, %v615, %v669
  %v676 = vsel %vm664, %v654, %v670
  %v677 = vsel %vm665, %v656, %v671
  %v678 = vpack.c.bf16 %v672, %v672
  %v679 = vpack.c.bf16 %v673, %v673
  %v680 = vpack.c.bf16 %v674, %v674
  %v681 = vpack.c.bf16 %v675, %v675
  %v682 = vpack.c.bf16 %v676, %v676
  %v683 = vpack.c.bf16 %v677, %v677
  %v690 = vunpack.c.l.b16 %v678
  %v691 = vunpack.c.l.b16 %v679
  %v692 = vunpack.c.l.b16 %v680
  %v693 = vunpack.c.l.b16 %v681
  %v694 = vunpack.c.l.b16 %v682
  %v695 = vunpack.c.l.b16 %v683
  %v696 = vpack.c.b16 %v691, %v690
  %v697 = vpack.c.b16 %v693, %v692
  %v698 = vpack.c.b16 %v695, %v694
  %702 = vst [vmem:[%s3] sm:$0xff] %v696
  %703 = vst [vmem:[%s3 + $0x8] sm:$0xff] %v697
  %vm704 = vcmask 162820
  %vm705 = vmor %vm704, %vm518
  %706 = vst.msk [vmem:[%s3 + $0x10] sm:$0xff] %vm705, %v698
  // Predicated region
  $region14: #{ms_stft_discriminator_forward.30} parent=0 // pred_check
    _
  $region15: #{ms_stft_discriminator_forward.30} parent=0 // pred_check_branch
    %708 = sbr.rel (0) target = $region17
  $region16: #{ms_stft_discriminator_forward.30} parent=0 // pred_region
    _
  $region17: #{ms_stft_discriminator_forward.30} parent=0 // pred_fallthru
    _
  // Predicated region
  $region18: #{ms_stft_discriminator_forward.30} parent=0 // pred_check
    _
  $region19: #{ms_stft_discriminator_forward.30} parent=0 // pred_check_branch
    %710 = sbr.rel (0) target = $region21
  $region20: #{ms_stft_discriminator_forward.30} parent=0 // pred_region
    _
  $region21: #{ms_stft_discriminator_forward.30} parent=0 // pred_fallthru
    _

// kernel: ms_stft_discriminator_forward.31
$region0: #{ms_stft_discriminator_forward.31}
  #allocation0 [shape = 'u32[]', space=smem, size = 0x4, offset = 0x4, fixed_abs, tag = 'smem constant byte address 0x4 - core index']
  #allocation1 [shape = 'u32[144,128]{1,0:T(1,128)}', space=vmem, size = 0x12000, scoped, tag = 'internal scratch']
  %s0 = inlined_call_operand.vmem [shape: bf16[8,216], index: 0, kind: input, shape index: {}]
  %s1 = inlined_call_operand.vmem [shape: bf16[216,340], index: 1, kind: input, shape index: {}]
  %s2 = inlined_call_operand.vmem [shape: f32[8,1], index: 2, kind: input, shape index: {}]
  %s3 = inlined_call_operand.vmem [shape: bf16[8,340], index: 3, kind: output, shape index: {}]
  %s4 = sld [smem:[#allocation0]]
  $region22: #{ms_stft_discriminator_forward.31} parent=0
    _
  %s6 = ssub.s32 1, %s4
  %s7 = scalar_select 0, %s6, %s4
  // Predicated region
  $region2: #{ms_stft_discriminator_forward.31} parent=0 // pred_check
    _
  $region3: #{ms_stft_discriminator_forward.31} parent=0 // pred_check_branch
    %9 = sbr.rel (0) target = $region5
  $region4: #{ms_stft_discriminator_forward.31} parent=0 // pred_region
    _
  $region5: #{ms_stft_discriminator_forward.31} parent=0 // pred_fallthru
    _
  // Predicated region
  $region6: #{ms_stft_discriminator_forward.31} parent=0 // pred_check
    _
  $region7: #{ms_stft_discriminator_forward.31} parent=0 // pred_check_branch
    %11 = sbr.rel (0) target = $region9
  $region8: #{ms_stft_discriminator_forward.31} parent=0 // pred_region
    _
  $region9: #{ms_stft_discriminator_forward.31} parent=0 // pred_fallthru
    _
  // Predicated region
  $region10: #{ms_stft_discriminator_forward.31} parent=0 // pred_check
    _
  $region11: #{ms_stft_discriminator_forward.31} parent=0 // pred_check_branch
    %13 = sbr.rel (0) target = $region13
  $region12: #{ms_stft_discriminator_forward.31} parent=0 // pred_region
    _
  $region13: #{ms_stft_discriminator_forward.31} parent=0 // pred_fallthru
    _
  %v15 = vld [vmem:[%s0] sm:$0xff]
  %v16 = vld [vmem:[%s1] sm:$0xff]
  %v17 = vld [vmem:[%s1 + $0x8] sm:$0xf]
  %v18 = vld [vmem:[%s1 + $0xc] sm:$0xff]
  %v19 = vld [vmem:[%s1 + $0x14] sm:$0xf]
  %v20 = vld [vmem:[%s1 + $0x18] sm:$0xff]
  %v21 = vld [vmem:[%s1 + $0x20] sm:$0xf]
  %v22 = vld [vmem:[%s1 + $0x24] sm:$0xff]
  %v23 = vld [vmem:[%s1 + $0x2c] sm:$0xf]
  %v24 = vld [vmem:[%s1 + $0x30] sm:$0xff]
  %v25 = vld [vmem:[%s1 + $0x38] sm:$0xf]
  %v26 = vld [vmem:[%s1 + $0x3c] sm:$0xff]
  %v27 = vld [vmem:[%s1 + $0x44] sm:$0xf]
  %v28 = vld [vmem:[%s1 + $0x48] sm:$0xff]
  %v29 = vld [vmem:[%s1 + $0x50] sm:$0xf]
  %v30 = vld [vmem:[%s1 + $0x54] sm:$0xff]
  %v31 = vld [vmem:[%s1 + $0x5c] sm:$0xf]
  %v32 = vld [vmem:[%s1 + $0x60] sm:$0xff]
  %v33 = vld [vmem:[%s1 + $0x68] sm:$0xf]
  %v34 = vld [vmem:[%s1 + $0x6c] sm:$0xff]
  %v35 = vld [vmem:[%s1 + $0x74] sm:$0xf]
  %v36 = vld [vmem:[%s1 + $0x78] sm:$0xff]
  %v37 = vld [vmem:[%s1 + $0x80] sm:$0xf]
  %v38 = vld [vmem:[%s1 + $0x84] sm:$0xff]
  %v39 = vld [vmem:[%s1 + $0x8c] sm:$0xf]
  %v40 = vld [vmem:[%s1 + $0x90] sm:$0xff]
  %v41 = vld [vmem:[%s1 + $0x98] sm:$0xf]
  %v42 = vld [vmem:[%s1 + $0x9c] sm:$0xff]
  %v43 = vld [vmem:[%s1 + $0xa4] sm:$0xf]
  %v44 = vld [vmem:[%s1 + $0xa8] sm:$0xff]
  %v45 = vld [vmem:[%s1 + $0xb0] sm:$0xf]
  %v46 = vld [vmem:[%s1 + $0xb4] sm:$0xff]
  %v47 = vld [vmem:[%s1 + $0xbc] sm:$0xf]
  %v48 = vld [vmem:[%s1 + $0xc0] sm:$0xff]
  %v49 = vld [vmem:[%s1 + $0xc8] sm:$0xf]
  %v50 = vld [vmem:[%s1 + $0xcc] sm:$0xff]
  %v51 = vld [vmem:[%s1 + $0xd4] sm:$0xf]
  %v52 = vld [vmem:[%s1 + $0xd8] sm:$0xff]
  %v53 = vld [vmem:[%s1 + $0xe0] sm:$0xf]
  %v54 = vld [vmem:[%s1 + $0xe4] sm:$0xff]
  %v55 = vld [vmem:[%s1 + $0xec] sm:$0xf]
  %v56 = vld [vmem:[%s1 + $0xf0] sm:$0xff]
  %v57 = vld [vmem:[%s1 + $0xf8] sm:$0xf]
  %v58 = vld [vmem:[%s1 + $0xfc] sm:$0xff]
  %v59 = vld [vmem:[%s1 + $0x104] sm:$0xf]
  %v60 = vld [vmem:[%s1 + $0x108] sm:$0xff]
  %v61 = vld [vmem:[%s1 + $0x110] sm:$0xf]
  %v62 = vld [vmem:[%s1 + $0x114] sm:$0xff]
  %v63 = vld [vmem:[%s1 + $0x11c] sm:$0xf]
  %v64 = vld [vmem:[%s1 + $0x120] sm:$0xff]
  %v65 = vld [vmem:[%s1 + $0x128] sm:$0xf]
  %v66 = vld [vmem:[%s1 + $0x12c] sm:$0xff]
  %v67 = vld [vmem:[%s1 + $0x134] sm:$0xf]
  %v68 = vld [vmem:[%s1 + $0x138] sm:$0xff]
  %v69 = vld [vmem:[%s1 + $0x140] sm:$0xf]
  %v70 = vld [vmem:[%s2] sm:$0xff]
  %72 = vset.pattern.permute.xlu0 0
  %73 = vperm.xlu0 %72, %v70
  %v74 = vpop.permute.xlu0 %73
  %v77 = vunpack.c.l.b16 %v15
  %v78 = vunpack.c.h.b16 %v15
  %v79 = vpack.c.b16 %v77, %v77
  %v80 = vpack.c.b16 %v78, %v78
  %v136 = vunpack.c.l.b16 %v16
  %v137 = vunpack.c.h.b16 %v16
  %v138 = vunpack.c.l.b16 %v17
  %v139 = vunpack.c.l.b16 %v18
  %v140 = vunpack.c.h.b16 %v18
  %v141 = vunpack.c.l.b16 %v19
  %v142 = vunpack.c.l.b16 %v20
  %v143 = vunpack.c.h.b16 %v20
  %v144 = vunpack.c.l.b16 %v21
  %v145 = vunpack.c.l.b16 %v22
  %v146 = vunpack.c.h.b16 %v22
  %v147 = vunpack.c.l.b16 %v23
  %v148 = vunpack.c.l.b16 %v24
  %v149 = vunpack.c.h.b16 %v24
  %v150 = vunpack.c.l.b16 %v25
  %v151 = vunpack.c.l.b16 %v26
  %v152 = vunpack.c.h.b16 %v26
  %v153 = vunpack.c.l.b16 %v27
  %v154 = vunpack.c.l.b16 %v28
  %v155 = vunpack.c.h.b16 %v28
  %v156 = vunpack.c.l.b16 %v29
  %v157 = vunpack.c.l.b16 %v30
  %v158 = vunpack.c.h.b16 %v30
  %v159 = vunpack.c.l.b16 %v31
  %v160 = vunpack.c.l.b16 %v32
  %v161 = vunpack.c.h.b16 %v32
  %v162 = vunpack.c.l.b16 %v33
  %v163 = vunpack.c.l.b16 %v34
  %v164 = vunpack.c.h.b16 %v34
  %v165 = vunpack.c.l.b16 %v35
  %v166 = vunpack.c.l.b16 %v36
  %v167 = vunpack.c.h.b16 %v36
  %v168 = vunpack.c.l.b16 %v37
  %v169 = vunpack.c.l.b16 %v38
  %v170 = vunpack.c.h.b16 %v38
  %v171 = vunpack.c.l.b16 %v39
  %v172 = vunpack.c.l.b16 %v40
  %v173 = vunpack.c.h.b16 %v40
  %v174 = vunpack.c.l.b16 %v41
  %v175 = vunpack.c.l.b16 %v42
  %v176 = vunpack.c.h.b16 %v42
  %v177 = vunpack.c.l.b16 %v43
  %v178 = vunpack.c.l.b16 %v44
  %v179 = vunpack.c.h.b16 %v44
  %v180 = vunpack.c.l.b16 %v45
  %v181 = vunpack.c.l.b16 %v46
  %v182 = vunpack.c.h.b16 %v46
  %v183 = vunpack.c.l.b16 %v47
  %v184 = vunpack.c.l.b16 %v48
  %v185 = vunpack.c.h.b16 %v48
  %v186 = vunpack.c.l.b16 %v49
  %v187 = vunpack.c.l.b16 %v50
  %v188 = vunpack.c.h.b16 %v50
  %v189 = vunpack.c.l.b16 %v51
  %v190 = vunpack.c.l.b16 %v52
  %v191 = vunpack.c.h.b16 %v52
  %v192 = vunpack.c.l.b16 %v53
  %v193 = vunpack.c.l.b16 %v54
  %v194 = vunpack.c.h.b16 %v54
  %v195 = vunpack.c.l.b16 %v55
  %v196 = vunpack.c.l.b16 %v56
  %v197 = vunpack.c.h.b16 %v56
  %v198 = vunpack.c.l.b16 %v57
  %v199 = vunpack.c.l.b16 %v58
  %v200 = vunpack.c.h.b16 %v58
  %v201 = vunpack.c.l.b16 %v59
  %v202 = vunpack.c.l.b16 %v60
  %v203 = vunpack.c.h.b16 %v60
  %v204 = vunpack.c.l.b16 %v61
  %v205 = vunpack.c.l.b16 %v62
  %v206 = vunpack.c.h.b16 %v62
  %v207 = vunpack.c.l.b16 %v63
  %v208 = vunpack.c.l.b16 %v64
  %v209 = vunpack.c.h.b16 %v64
  %v210 = vunpack.c.l.b16 %v65
  %v211 = vunpack.c.l.b16 %v66
  %v212 = vunpack.c.h.b16 %v66
  %v213 = vunpack.c.l.b16 %v67
  %v214 = vunpack.c.l.b16 %v68
  %v215 = vunpack.c.h.b16 %v68
  %v216 = vunpack.c.l.b16 %v69
  %v217 = vpack.c.b16 %v139, %v136
  %v218 = vpack.c.b16 %v140, %v137
  %v219 = vpack.c.b16 %v141, %v138
  %v220 = vpack.c.b16 %v145, %v142
  %v221 = vpack.c.b16 %v146, %v143
  %v222 = vpack.c.b16 %v147, %v144
  %v223 = vpack.c.b16 %v151, %v148
  %v224 = vpack.c.b16 %v152, %v149
  %v225 = vpack.c.b16 %v153, %v150
  %v226 = vpack.c.b16 %v157, %v154
  %v227 = vpack.c.b16 %v158, %v155
  %v228 = vpack.c.b16 %v159, %v156
  %v229 = vpack.c.b16 %v163, %v160
  %v230 = vpack.c.b16 %v164, %v161
  %v231 = vpack.c.b16 %v165, %v162
  %v232 = vpack.c.b16 %v169, %v166
  %v233 = vpack.c.b16 %v170, %v167
  %v234 = vpack.c.b16 %v171, %v168
  %v235 = vpack.c.b16 %v175, %v172
  %v236 = vpack.c.b16 %v176, %v173
  %v237 = vpack.c.b16 %v177, %v174
  %v238 = vpack.c.b16 %v181, %v178
  %v239 = vpack.c.b16 %v182, %v179
  %v240 = vpack.c.b16 %v183, %v180
  %v241 = vpack.c.b16 %v187, %v184
  %v242 = vpack.c.b16 %v188, %v185
  %v243 = vpack.c.b16 %v189, %v186
  %v244 = vpack.c.b16 %v193, %v190
  %v245 = vpack.c.b16 %v194, %v191
  %v246 = vpack.c.b16 %v195, %v192
  %v247 = vpack.c.b16 %v199, %v196
  %v248 = vpack.c.b16 %v200, %v197
  %v249 = vpack.c.b16 %v201, %v198
  %v250 = vpack.c.b16 %v205, %v202
  %v251 = vpack.c.b16 %v206, %v203
  %v252 = vpack.c.b16 %v207, %v204
  %v253 = vpack.c.b16 %v211, %v208
  %v254 = vpack.c.b16 %v212, %v209
  %v255 = vpack.c.b16 %v213, %v210
  %v256 = vpack.c.b16 %v214, %v214
  %v257 = vpack.c.b16 %v215, %v215
  %v258 = vpack.c.b16 %v216, %v216
  %vm298 = vcmask 719872
  %v300 = vsel %vm298, %v80, 0
  %vm302 = vcmask 1043456
  %v304 = vsel %vm302, %v256, 0
  %v307 = vsel %vm302, %v257, 0
  %v310 = vsel %vm302, %v258, 0
  %312 = vmatprep.subr.bf16.mxu0 %v218
  %313 = vmatpush1.bf16.msra.mxu0 %v217
  %314 = vmatprep.subr.bf16.mxu0 %v221
  %315 = vmatpush1.bf16.msra.mxu0 %v220
  %316 = vmatprep.subr.bf16.mxu0 %v224
  %317 = vmatpush1.bf16.msra.mxu0 %v223
  %318 = vmatprep.subr.bf16.mxu0 %v227
  %319 = vmatpush1.bf16.msra.mxu0 %v226
  %320 = vmatprep.subr.bf16.mxu0 %v230
  %321 = vmatpush1.bf16.msra.mxu0 %v229
  %322 = vmatprep.subr.bf16.mxu0 %v233
  %323 = vmatpush1.bf16.msra.mxu0 %v232
  %324 = vmatprep.subr.bf16.mxu0 %v236
  %325 = vmatpush1.bf16.msra.mxu0 %v235
  %326 = vmatprep.subr.bf16.mxu0 %v239
  %327 = vmatpush1.bf16.msra.mxu0 %v238
  %328 = vmatprep.subr.bf16.mxu0 %v242
  %329 = vmatpush1.bf16.msra.mxu0 %v241
  %330 = vmatprep.subr.bf16.mxu0 %v245
  %331 = vmatpush1.bf16.msra.mxu0 %v244
  %332 = vmatprep.subr.bf16.mxu0 %v248
  %333 = vmatpush1.bf16.msra.mxu0 %v247
  %334 = vmatprep.subr.bf16.mxu0 %v251
  %335 = vmatpush1.bf16.msra.mxu0 %v250
  %336 = vmatprep.subr.bf16.mxu0 %v254
  %337 = vmatpush1.bf16.msra.mxu0 %v253
  %338 = vmatprep.subr.bf16.mxu0 %v307
  %339 = vmatpush1.bf16.msra.mxu0 %v304
  %340 = vmatprep.subr.bf16.mxu0 0
  %341 = vmatpush1.bf16.msra.mxu0 0
  %342 = vmatprep.subr.bf16.mxu0 0
  %343 = vmatpush1.bf16.msra.mxu0 0
  %344 = vmatprep.mubr.bf16.mxu0 %v300
  %345 = vmatmul.mubr.bf16.gmra.mrb[0].mxu0 %v79
  %v346 = vpop.f32.mrb[0].mxu0
  %v347 = vadd.f32 %v74, %v346
  %v348 = vpop.f32.mrb[0].mxu0
  %v349 = vadd.f32 %v74, %v348
  %v350 = vpop.f32.mrb[0].mxu0
  %v351 = vpop.f32.mrb[0].mxu0
  %352 = vdwg.mxu0
  %353 = vmatprep.subr.bf16.mxu0 0
  %354 = vmatpush1.bf16.msra.mxu0 %v219
  %355 = vmatprep.subr.bf16.mxu0 0
  %356 = vmatpush1.bf16.msra.mxu0 %v222
  %357 = vmatprep.subr.bf16.mxu0 0
  %358 = vmatpush1.bf16.msra.mxu0 %v225
  %359 = vmatprep.subr.bf16.mxu0 0
  %360 = vmatpush1.bf16.msra.mxu0 %v228
  %361 = vmatprep.subr.bf16.mxu0 0
  %362 = vmatpush1.bf16.msra.mxu0 %v231
  %363 = vmatprep.subr.bf16.mxu0 0
  %364 = vmatpush1.bf16.msra.mxu0 %v234
  %365 = vmatprep.subr.bf16.mxu0 0
  %366 = vmatpush1.bf16.msra.mxu0 %v237
  %367 = vmatprep.subr.bf16.mxu0 0
  %368 = vmatpush1.bf16.msra.mxu0 %v240
  %369 = vmatprep.subr.bf16.mxu0 0
  %370 = vmatpush1.bf16.msra.mxu0 %v243
  %371 = vmatprep.subr.bf16.mxu0 0
  %372 = vmatpush1.bf16.msra.mxu0 %v246
  %373 = vmatprep.subr.bf16.mxu0 0
  %374 = vmatpush1.bf16.msra.mxu0 %v249
  %375 = vmatprep.subr.bf16.mxu0 0
  %376 = vmatpush1.bf16.msra.mxu0 %v252
  %377 = vmatprep.subr.bf16.mxu0 0
  %378 = vmatpush1.bf16.msra.mxu0 %v255
  %379 = vmatprep.subr.bf16.mxu0 0
  %380 = vmatpush1.bf16.msra.mxu0 %v310
  %381 = vmatprep.subr.bf16.mxu0 0
  %382 = vmatpush1.bf16.msra.mxu0 0
  %383 = vmatprep.subr.bf16.mxu0 0
  %384 = vmatpush1.bf16.msra.mxu0 0
  %385 = vmatprep.mubr.bf16.mxu0 %v300
  %386 = vmatmul.mubr.bf16.gmra.mrb[0].mxu0 %v79
  %v387 = vpop.f32.mrb[0].mxu0
  %v388 = vadd.f32 %v74, %v387
  %v389 = vpop.f32.mrb[0].mxu0
  %v390 = vpop.f32.mrb[0].mxu0
  %v391 = vpop.f32.mrb[0].mxu0
  %392 = vdwg.mxu0
  %vm393 = vcmp.ge.f32.partialorder %v347, 0.0
  %vm394 = vcmp.ge.f32.partialorder %v349, 0.0
  %vm395 = vcmp.ge.f32.partialorder %v388, 0.0
  %v396 = vmul.f32 %v347, 0.2
  %v397 = vmul.f32 %v349, 0.2
  %v398 = vmul.f32 %v388, 0.2
  %v399 = vsel %vm393, %v347, %v396
  %v400 = vsel %vm394, %v349, %v397
  %v401 = vsel %vm395, %v388, %v398
  %v402 = vpack.c.bf16 %v399, %v399
  %v403 = vpack.c.bf16 %v400, %v400
  %v404 = vpack.c.bf16 %v401, %v401
  %v408 = vunpack.c.l.b16 %v402
  %v409 = vunpack.c.l.b16 %v403
  %v410 = vunpack.c.l.b16 %v404
  %v411 = vpack.c.b16 %v409, %v408
  %v412 = vpack.c.b16 %v410, %v410
  %415 = vst [vmem:[%s3] sm:$0xff] %v411
  %vm416 = vcmask 683008
  %417 = vst.msk [vmem:[%s3 + $0x8] sm:$0xf] %vm416, %v412
  // Predicated region
  $region14: #{ms_stft_discriminator_forward.31} parent=0 // pred_check
    _
  $region15: #{ms_stft_discriminator_forward.31} parent=0 // pred_check_branch
    %419 = sbr.rel (0) target = $region17
  $region16: #{ms_stft_discriminator_forward.31} parent=0 // pred_region
    _
  $region17: #{ms_stft_discriminator_forward.31} parent=0 // pred_fallthru
    _
  // Predicated region
  $region18: #{ms_stft_discriminator_forward.31} parent=0 // pred_check
    _
  $region19: #{ms_stft_discriminator_forward.31} parent=0 // pred_check_branch
    %421 = sbr.rel (0) target = $region21
  $region20: #{ms_stft_discriminator_forward.31} parent=0 // pred_region
    _
  $region21: #{ms_stft_discriminator_forward.31} parent=0 // pred_fallthru
    _

</llo_original>
